<compile_context>
chip_gen: v7x
topology: tpu7x:2x2x1
jax: 0.10.0
libtpu: 0.0.40
codegen_flags: <defaults>
</compile_context>

<pallas_src>
import functools
import jax
import jax.numpy as jnp
from jax.experimental import pallas as pl
from jax.experimental.pallas import tpu as pltpu

# ---------------- model hyper-parameters (small, consistent with the module) ----------------
VOCAB_SIZE = 101
VOCAB_PAD = 128          # one-hot / lm_head padded to lane-dense 128; sliced back to 101 outside
BLOCK_SIZE = 64          # max positions (toy; reference default is 500)
N_EMBD = 64
N_HEAD = 8
N_LAYER = 2
HEAD_DIM = N_EMBD // N_HEAD
QKV_BANK = 128           # q/k/v each occupy their own 128-lane bank in the fused QKV weight
EPS = 1e-5
NEG = -1e30              # finite "minus infinity" for masking (no NaN if a row is fully masked)


def _layernorm(x, w, b):
    mu = jnp.mean(x, axis=-1, keepdims=True)
    var = jnp.mean((x - mu) ** 2, axis=-1, keepdims=True)
    return (x - mu) * jax.lax.rsqrt(var + EPS) * w + b


# ---------------- Pallas kernel: embeddings + blocks + ln_f + lm_head ----------------
def gpt_kernel(B, T,
               idx_ref, mask_ref, tok_ref, pos_ref,
               wqkv_ref, wp_ref, bp_ref,
               w1_ref, b1_ref, w2_ref, b2_ref,
               ln1w_ref, ln1b_ref, ln2w_ref, ln2b_ref,
               lnfw_ref, lnfb_ref, lmw_ref, lmb_ref,
               o_ref,
               qg_ref, kg_ref, vg_ref, att_ref):
    C, H, hs = N_EMBD, N_HEAD, HEAD_DIM
    BT = B * T
    scale = C ** (-0.5)   # matches reference (uses n_embd, not head_size)

    # ---- token embedding as a one-hot matmul (in-kernel gather, table is VMEM-resident) ----
    lanes = jax.lax.broadcasted_iota(jnp.int32, (BT, VOCAB_PAD), 1)
    onehot = (lanes == idx_ref[...]).astype(jnp.float32)                      # (BT, 128)
    x = jnp.dot(onehot, tok_ref[...], preferred_element_type=jnp.float32)     # (BT, C)
    x = (x.reshape(B, T, C) + pos_ref[...][None, :, :]).reshape(BT, C)        # + positional embedding

    addmask = mask_ref[...]                                                    # (BT, BT): 0 keep / -1e30 drop

    for l in range(N_LAYER):                      # static unroll; all weights already in VMEM
        # ---------------- multi-head causal self-attention on ln1(x) ----------------
        xn = _layernorm(x, ln1w_ref[l], ln1b_ref[l]).astype(jnp.bfloat16)
        # ONE fused QKV matmul; each tensor sits in its own 128-lane bank -> aligned slices.
        qkv = jnp.dot(xn, wqkv_ref[l], preferred_element_type=jnp.float32)     # (BT, 3*128)
        q = qkv[:, 0:C]
        k = qkv[:, QKV_BANK:QKV_BANK + C]
        v = qkv[:, 2 * QKV_BANK:2 * QKV_BANK + C]

        # Head split: pure layout staging through VMEM scratch (no matmuls, no lane concats).
        for h in range(H):
            qg_ref[h] = q[:, h * hs:(h + 1) * hs]
            kg_ref[h] = k[:, h * hs:(h + 1) * hs]
            vg_ref[h] = v[:, h * hs:(h + 1) * hs]
        qg = qg_ref[...].astype(jnp.bfloat16)                                  # (H, BT, hs)
        kg = kg_ref[...].astype(jnp.bfloat16)
        vg = vg_ref[...].astype(jnp.bfloat16)

        # All heads at once: one batched score matmul + one softmax + one batched AV matmul.
        s = jnp.einsum('hmd,hnd->hmn', qg, kg,
                       preferred_element_type=jnp.float32) * scale             # (H, BT, BT)
        s = s + addmask[None, :, :]                                            # block-diag causal mask
        s = s - jnp.max(s, axis=-1, keepdims=True)
        probs = jnp.exp(s)
        # EUP reciprocal (approx) — inference-quality softmax; use exact divide for bit-matching.
        probs = probs * pl.reciprocal(jnp.sum(probs, axis=-1, keepdims=True), approx=True)
        # dropout(probs) is identity in eval mode
        og = jnp.einsum('hmn,hnd->hmd', probs.astype(jnp.bfloat16), vg,
                        preferred_element_type=jnp.float32)                    # (H, BT, hs)

        # Head merge back to (BT, C) via scratch lane-slice stores, then ONE (BT,C)@(C,C) projection.
        for h in range(H):
            att_ref[:, h * hs:(h + 1) * hs] = og[h]
        x = x + jnp.dot(att_ref[...].astype(jnp.bfloat16), wp_ref[l],
                        preferred_element_type=jnp.float32) + bp_ref[l]        # residual 1

        # ---------------- feed-forward on ln2(x) ----------------
        xn2 = _layernorm(x, ln2w_ref[l], ln2b_ref[l]).astype(jnp.bfloat16)
        hid = jnp.dot(xn2, w1_ref[l], preferred_element_type=jnp.float32) + b1_ref[l]
        hid = jnp.maximum(hid, 0.0).astype(jnp.bfloat16)                       # ReLU
        x = x + jnp.dot(hid, w2_ref[l], preferred_element_type=jnp.float32) + b2_ref[l]

    # ---------------- final LayerNorm + lm_head (lane-dense: vocab padded to 128) ----------------
    xf = _layernorm(x, lnfw_ref[...], lnfb_ref[...]).astype(jnp.bfloat16)
    o_ref[...] = jnp.dot(xf, lmw_ref[...], preferred_element_type=jnp.float32) + lmb_ref[...]


# ---------------- wrapper ----------------
def _build_mask(B, T):
    """(B*T, B*T) additive mask: 0 where row may attend to col (same batch & causal), -1e30 otherwise."""
    r = jnp.arange(B * T)
    same_batch = (r[:, None] // T) == (r[None, :] // T)
    causal = (r[:, None] % T) >= (r[None, :] % T)
    return jnp.where(same_batch & causal, 0.0, NEG).astype(jnp.float32)


def heart_gpt_pallas(idx_flat, mask, params, B, T):
    BT = B * T
    ins = (idx_flat, mask, params["tok_emb"], params["pos_emb"][:T],
           params["wqkv"], params["wp"], params["bp"],
           params["w1"], params["b1"], params["w2"], params["b2"],
           params["ln1w"], params["ln1b"], params["ln2w"], params["ln2b"],
           params["ln_f_w"], params["ln_f_b"], params["lm_w"], params["lm_b"])
    vmem = lambda: pl.BlockSpec(memory_space=pltpu.MemorySpace.VMEM)
    return pl.pallas_call(
        functools.partial(gpt_kernel, B, T),
        out_shape=jax.ShapeDtypeStruct((BT, VOCAB_PAD), jnp.float32),
        in_specs=[vmem() for _ in ins],
        out_specs=vmem(),
        scratch_shapes=[
            pltpu.VMEM((N_HEAD, BT, HEAD_DIM), jnp.float32),   # q, head-major staging
            pltpu.VMEM((N_HEAD, BT, HEAD_DIM), jnp.float32),   # k
            pltpu.VMEM((N_HEAD, BT, HEAD_DIM), jnp.float32),   # v
            pltpu.VMEM((BT, N_EMBD), jnp.float32),             # merged attention output
        ],
        compiler_params=pltpu.CompilerParams(vmem_limit_bytes=32 * 1024 * 1024),
    )(*ins)


# ---------------- parameter init (deterministic, synthetic; per-layer params stacked) ----------------
def init_params(key):
    def normal(k, shape, std=0.02):
        return (std * jax.random.normal(k, shape)).astype(jnp.float32)

    keys = iter(jax.random.split(key, 16))
    L, C, V = N_LAYER, N_EMBD, VOCAB_SIZE

    tok = jnp.zeros((VOCAB_PAD, C), jnp.float32).at[:V].set(normal(next(keys), (V, C)))
    lm_w = jnp.zeros((C, VOCAB_PAD), jnp.float32).at[:, :V].set(normal(next(keys), (C, V)))

    # Fused QKV weight: Wq / Wk / Wv each zero-padded into its own 128-lane bank so the
    # in-kernel q/k/v slices start on lane-tile boundaries (no relayout).
    wq = normal(next(keys), (L, C, C))        # per-head Q linears concatenated (torch.cat order)
    wk = normal(next(keys), (L, C, C))
    wv = normal(next(keys), (L, C, C))
    wqkv = jnp.zeros((L, C, 3 * QKV_BANK), jnp.float32)
    wqkv = wqkv.at[:, :, 0:C].set(wq)
    wqkv = wqkv.at[:, :, QKV_BANK:QKV_BANK + C].set(wk)
    wqkv = wqkv.at[:, :, 2 * QKV_BANK:2 * QKV_BANK + C].set(wv)

    bf = lambda a: a.astype(jnp.bfloat16)     # MXU operands are fed in bf16; accumulation is f32
    params = {
        "tok_emb": tok,                                   # (128, C) f32, rows >= 101 zero
        "pos_emb": normal(next(keys), (BLOCK_SIZE, C)),   # (block_size, C) f32
        "wqkv": bf(wqkv),                                 # (L, C, 3*128) bf16
        "wp": bf(normal(next(keys), (L, C, C))),          # output projection (in, out) layout
        "bp": jnp.zeros((L, 1, C), jnp.float32),
        "w1": bf(normal(next(keys), (L, C, 4 * C))),
        "b1": jnp.zeros((L, 1, 4 * C), jnp.float32),
        "w2": bf(normal(next(keys), (L, 4 * C, C))),
        "b2": jnp.zeros((L, 1, C), jnp.float32),
        "ln1w": jnp.ones((L, 1, C), jnp.float32),
        "ln1b": jnp.zeros((L, 1, C), jnp.float32),
        "ln2w": jnp.ones((L, 1, C), jnp.float32),
        "ln2b": jnp.zeros((L, 1, C), jnp.float32),
        "ln_f_w": jnp.ones((1, C), jnp.float32),
        "ln_f_b": jnp.zeros((1, C), jnp.float32),
        "lm_w": bf(lm_w),                                 # (C, 128) bf16, cols >= 101 zero
        "lm_b": jnp.zeros((1, VOCAB_PAD), jnp.float32),
    }
    return params


# ---------------- full forward pass (targets=None path: loss is None) ----------------
@jax.jit
def heart_gpt_forward(idx, params):
    B, T = idx.shape
    # T=16 is sublane-aligned; pad general sequence lengths to a multiple of 8 before the kernel.
    assert T <= BLOCK_SIZE and T % 8 == 0, "pad T to a multiple of 8 (sublane alignment)"
    idx_flat = idx.reshape(B * T, 1).astype(jnp.int32)
    mask = _build_mask(B, T)                               # constant-folded by XLA
    logits = heart_gpt_pallas(idx_flat, mask, params, B, T)  # (B*T, 128), lane-dense store
    # TODO(synk): cross-entropy loss branch (targets is not None) not exercised here.
    return logits.reshape(B, T, VOCAB_PAD)[:, :, :VOCAB_SIZE]


if __name__ == "__main__":
    key = jax.random.PRNGKey(0)
    pkey, dkey = jax.random.split(key)
    params = init_params(pkey)

    B, T = 2, 16
    idx = jax.random.randint(dkey, (B, T), 0, VOCAB_SIZE, dtype=jnp.int32)

    logits = heart_gpt_forward(idx, params)
    logits = jax.block_until_ready(logits)

    assert logits.shape == (B, T, VOCAB_SIZE), logits.shape
    assert bool(jnp.all(jnp.isfinite(logits)))
    print("KERNEL_OK")
</pallas_src>

<mosaic_0001>
module attributes {stable_mosaic.version = 11 : i64} {
  func.func @gpt_kernel(%arg0: memref<32x1xi32, #tpu.memory_space<vmem>>, %arg1: memref<32x32xf32, #tpu.memory_space<vmem>>, %arg2: memref<128x64xf32, #tpu.memory_space<vmem>>, %arg3: memref<16x64xf32, #tpu.memory_space<vmem>>, %arg4: memref<2x64x384xbf16, #tpu.memory_space<vmem>>, %arg5: memref<2x64x64xbf16, #tpu.memory_space<vmem>>, %arg6: memref<2x1x64xf32, #tpu.memory_space<vmem>>, %arg7: memref<2x64x256xbf16, #tpu.memory_space<vmem>>, %arg8: memref<2x1x256xf32, #tpu.memory_space<vmem>>, %arg9: memref<2x256x64xbf16, #tpu.memory_space<vmem>>, %arg10: memref<2x1x64xf32, #tpu.memory_space<vmem>>, %arg11: memref<2x1x64xf32, #tpu.memory_space<vmem>>, %arg12: memref<2x1x64xf32, #tpu.memory_space<vmem>>, %arg13: memref<2x1x64xf32, #tpu.memory_space<vmem>>, %arg14: memref<2x1x64xf32, #tpu.memory_space<vmem>>, %arg15: memref<1x64xf32, #tpu.memory_space<vmem>>, %arg16: memref<1x64xf32, #tpu.memory_space<vmem>>, %arg17: memref<64x128xbf16, #tpu.memory_space<vmem>>, %arg18: memref<1x128xf32, #tpu.memory_space<vmem>>, %arg19: memref<32x128xf32, #tpu.memory_space<vmem>>, %arg20: memref<8x32x8xf32, #tpu.memory_space<vmem>>, %arg21: memref<8x32x8xf32, #tpu.memory_space<vmem>>, %arg22: memref<8x32x8xf32, #tpu.memory_space<vmem>>, %arg23: memref<32x64xf32, #tpu.memory_space<vmem>>) attributes {dimension_semantics = [], scalar_prefetch = 0 : i64, scratch_operands = 4 : i64, tpu.core_type = #tpu.core_type<tc>} {
    %0 = tpu.iota {dimensions = array<i32: 1>} : vector<32x128xi32>
    %c0 = arith.constant 0 : index
    %c0_0 = arith.constant 0 : index
    %1 = vector.load %arg0[%c0, %c0_0] : memref<32x1xi32, #tpu.memory_space<vmem>>, vector<32x1xi32>
    %2 = vector.broadcast %1 : vector<32x1xi32> to vector<32x128xi32>
    %3 = arith.cmpi eq, %0, %2 : vector<32x128xi32>
    %4 = arith.extui %3 : vector<32x128xi1> to vector<32x128xi32>
    %5 = arith.sitofp %4 : vector<32x128xi32> to vector<32x128xf32>
    %c0_1 = arith.constant 0 : index
    %c0_2 = arith.constant 0 : index
    %6 = vector.load %arg2[%c0_1, %c0_2] : memref<128x64xf32, #tpu.memory_space<vmem>>, vector<128x64xf32>
    %cst = arith.constant dense<0.000000e+00> : vector<32x64xf32>
    %7 = tpu.matmul %5, %6, %cst {dimension_numbers = #tpu.dot_dimension_numbers<[1], [0], [0], [1], [0, 0, 1, 1], [], []>} : vector<32x128xf32>, vector<128x64xf32>, vector<32x64xf32> -> vector<32x64xf32>
    %8 = vector.shape_cast %7 : vector<32x64xf32> to vector<2x16x64xf32>
    %c0_3 = arith.constant 0 : index
    %c0_4 = arith.constant 0 : index
    %9 = vector.load %arg3[%c0_3, %c0_4] : memref<16x64xf32, #tpu.memory_space<vmem>>, vector<16x64xf32>
    %10 = vector.shape_cast %9 : vector<16x64xf32> to vector<1x16x64xf32>
    %11 = vector.broadcast %10 : vector<1x16x64xf32> to vector<2x16x64xf32>
    %12 = arith.addf %8, %11 : vector<2x16x64xf32>
    %13 = vector.shape_cast %12 : vector<2x16x64xf32> to vector<32x64xf32>
    %c0_5 = arith.constant 0 : index
    %c0_6 = arith.constant 0 : index
    %14 = vector.load %arg1[%c0_5, %c0_6] : memref<32x32xf32, #tpu.memory_space<vmem>>, vector<32x32xf32>
    %c0_7 = arith.constant 0 : index
    %c0_8 = arith.constant 0 : index
    %c0_9 = arith.constant 0 : index
    %15 = vector.load %arg11[%c0_7, %c0_8, %c0_9] : memref<2x1x64xf32, #tpu.memory_space<vmem>>, vector<1x1x64xf32>
    %16 = vector.shape_cast %15 : vector<1x1x64xf32> to vector<1x64xf32>
    %c0_10 = arith.constant 0 : index
    %c0_11 = arith.constant 0 : index
    %c0_12 = arith.constant 0 : index
    %17 = vector.load %arg12[%c0_10, %c0_11, %c0_12] : memref<2x1x64xf32, #tpu.memory_space<vmem>>, vector<1x1x64xf32>
    %18 = vector.shape_cast %17 : vector<1x1x64xf32> to vector<1x64xf32>
    %cst_13 = arith.constant dense<0.000000e+00> : vector<32xf32>
    %19 = vector.multi_reduction <add>, %13, %cst_13 [1] : vector<32x64xf32> to vector<32xf32>
    %20 = vector.shape_cast %19 : vector<32xf32> to vector<32x1xf32>
    %cst_14 = arith.constant 6.400000e+01 : f32
    %21 = vector.broadcast %cst_14 : f32 to vector<32x1xf32>
    %22 = arith.divf %20, %21 : vector<32x1xf32>
    %23 = vector.broadcast %22 : vector<32x1xf32> to vector<32x64xf32>
    %24 = arith.subf %13, %23 : vector<32x64xf32>
    %25 = arith.mulf %24, %24 : vector<32x64xf32>
    %cst_15 = arith.constant dense<0.000000e+00> : vector<32xf32>
    %26 = vector.multi_reduction <add>, %25, %cst_15 [1] : vector<32x64xf32> to vector<32xf32>
    %27 = vector.shape_cast %26 : vector<32xf32> to vector<32x1xf32>
    %cst_16 = arith.constant 6.400000e+01 : f32
    %28 = vector.broadcast %cst_16 : f32 to vector<32x1xf32>
    %29 = arith.divf %27, %28 : vector<32x1xf32>
    %30 = vector.broadcast %22 : vector<32x1xf32> to vector<32x64xf32>
    %31 = arith.subf %13, %30 : vector<32x64xf32>
    %cst_17 = arith.constant 9.99999974E-6 : f32
    %32 = vector.broadcast %cst_17 : f32 to vector<32x1xf32>
    %33 = arith.addf %29, %32 : vector<32x1xf32>
    %34 = math.rsqrt %33 : vector<32x1xf32>
    %35 = vector.broadcast %34 : vector<32x1xf32> to vector<32x64xf32>
    %36 = arith.mulf %31, %35 : vector<32x64xf32>
    %37 = vector.broadcast %16 : vector<1x64xf32> to vector<32x64xf32>
    %38 = arith.mulf %36, %37 : vector<32x64xf32>
    %39 = vector.broadcast %18 : vector<1x64xf32> to vector<32x64xf32>
    %40 = arith.addf %38, %39 : vector<32x64xf32>
    %41 = arith.truncf %40 : vector<32x64xf32> to vector<32x64xbf16>
    %c0_18 = arith.constant 0 : index
    %c0_19 = arith.constant 0 : index
    %c0_20 = arith.constant 0 : index
    %42 = vector.load %arg4[%c0_18, %c0_19, %c0_20] : memref<2x64x384xbf16, #tpu.memory_space<vmem>>, vector<1x64x384xbf16>
    %43 = vector.shape_cast %42 : vector<1x64x384xbf16> to vector<64x384xbf16>
    %cst_21 = arith.constant dense<0.000000e+00> : vector<32x384xf32>
    %44 = tpu.matmul %41, %43, %cst_21 {dimension_numbers = #tpu.dot_dimension_numbers<[1], [0], [0], [1], [0, 0, 1, 1], [], []>} : vector<32x64xbf16>, vector<64x384xbf16>, vector<32x384xf32> -> vector<32x384xf32>
    %45 = vector.extract_strided_slice %44 {offsets = [0, 0], sizes = [32, 64], strides = [1, 1]} : vector<32x384xf32> to vector<32x64xf32>
    %46 = vector.extract_strided_slice %44 {offsets = [0, 128], sizes = [32, 64], strides = [1, 1]} : vector<32x384xf32> to vector<32x64xf32>
    %47 = vector.extract_strided_slice %44 {offsets = [0, 256], sizes = [32, 64], strides = [1, 1]} : vector<32x384xf32> to vector<32x64xf32>
    %48 = vector.extract_strided_slice %45 {offsets = [0, 0], sizes = [32, 8], strides = [1, 1]} : vector<32x64xf32> to vector<32x8xf32>
    %c0_22 = arith.constant 0 : index
    %c0_23 = arith.constant 0 : index
    %c0_24 = arith.constant 0 : index
    %49 = vector.load %arg20[%c0_22, %c0_23, %c0_24] : memref<8x32x8xf32, #tpu.memory_space<vmem>>, vector<1x32x8xf32>
    %50 = vector.shape_cast %49 : vector<1x32x8xf32> to vector<32x8xf32>
    %51 = vector.shape_cast %48 : vector<32x8xf32> to vector<1x32x8xf32>
    tpu.vector_store %arg20[%c0_22, %c0_23, %c0_24], %51 {strides = array<i32>} : memref<8x32x8xf32, #tpu.memory_space<vmem>>, vector<1x32x8xf32>,
    %52 = vector.extract_strided_slice %46 {offsets = [0, 0], sizes = [32, 8], strides = [1, 1]} : vector<32x64xf32> to vector<32x8xf32>
    %c0_25 = arith.constant 0 : index
    %c0_26 = arith.constant 0 : index
    %c0_27 = arith.constant 0 : index
    %53 = vector.load %arg21[%c0_25, %c0_26, %c0_27] : memref<8x32x8xf32, #tpu.memory_space<vmem>>, vector<1x32x8xf32>
    %54 = vector.shape_cast %53 : vector<1x32x8xf32> to vector<32x8xf32>
    %55 = vector.shape_cast %52 : vector<32x8xf32> to vector<1x32x8xf32>
    tpu.vector_store %arg21[%c0_25, %c0_26, %c0_27], %55 {strides = array<i32>} : memref<8x32x8xf32, #tpu.memory_space<vmem>>, vector<1x32x8xf32>,
    %56 = vector.extract_strided_slice %47 {offsets = [0, 0], sizes = [32, 8], strides = [1, 1]} : vector<32x64xf32> to vector<32x8xf32>
    %c0_28 = arith.constant 0 : index
    %c0_29 = arith.constant 0 : index
    %c0_30 = arith.constant 0 : index
    %57 = vector.load %arg22[%c0_28, %c0_29, %c0_30] : memref<8x32x8xf32, #tpu.memory_space<vmem>>, vector<1x32x8xf32>
    %58 = vector.shape_cast %57 : vector<1x32x8xf32> to vector<32x8xf32>
    %59 = vector.shape_cast %56 : vector<32x8xf32> to vector<1x32x8xf32>
    tpu.vector_store %arg22[%c0_28, %c0_29, %c0_30], %59 {strides = array<i32>} : memref<8x32x8xf32, #tpu.memory_space<vmem>>, vector<1x32x8xf32>,
    %60 = vector.extract_strided_slice %45 {offsets = [0, 8], sizes = [32, 8], strides = [1, 1]} : vector<32x64xf32> to vector<32x8xf32>
    %c1 = arith.constant 1 : index
    %c0_31 = arith.constant 0 : index
    %c0_32 = arith.constant 0 : index
    %61 = vector.load %arg20[%c1, %c0_31, %c0_32] : memref<8x32x8xf32, #tpu.memory_space<vmem>>, vector<1x32x8xf32>
    %62 = vector.shape_cast %61 : vector<1x32x8xf32> to vector<32x8xf32>
    %63 = vector.shape_cast %60 : vector<32x8xf32> to vector<1x32x8xf32>
    tpu.vector_store %arg20[%c1, %c0_31, %c0_32], %63 {strides = array<i32>} : memref<8x32x8xf32, #tpu.memory_space<vmem>>, vector<1x32x8xf32>,
    %64 = vector.extract_strided_slice %46 {offsets = [0, 8], sizes = [32, 8], strides = [1, 1]} : vector<32x64xf32> to vector<32x8xf32>
    %c1_33 = arith.constant 1 : index
    %c0_34 = arith.constant 0 : index
    %c0_35 = arith.constant 0 : index
    %65 = vector.load %arg21[%c1_33, %c0_34, %c0_35] : memref<8x32x8xf32, #tpu.memory_space<vmem>>, vector<1x32x8xf32>
    %66 = vector.shape_cast %65 : vector<1x32x8xf32> to vector<32x8xf32>
    %67 = vector.shape_cast %64 : vector<32x8xf32> to vector<1x32x8xf32>
    tpu.vector_store %arg21[%c1_33, %c0_34, %c0_35], %67 {strides = array<i32>} : memref<8x32x8xf32, #tpu.memory_space<vmem>>, vector<1x32x8xf32>,
    %68 = vector.extract_strided_slice %47 {offsets = [0, 8], sizes = [32, 8], strides = [1, 1]} : vector<32x64xf32> to vector<32x8xf32>
    %c1_36 = arith.constant 1 : index
    %c0_37 = arith.constant 0 : index
    %c0_38 = arith.constant 0 : index
    %69 = vector.load %arg22[%c1_36, %c0_37, %c0_38] : memref<8x32x8xf32, #tpu.memory_space<vmem>>, vector<1x32x8xf32>
    %70 = vector.shape_cast %69 : vector<1x32x8xf32> to vector<32x8xf32>
    %71 = vector.shape_cast %68 : vector<32x8xf32> to vector<1x32x8xf32>
    tpu.vector_store %arg22[%c1_36, %c0_37, %c0_38], %71 {strides = array<i32>} : memref<8x32x8xf32, #tpu.memory_space<vmem>>, vector<1x32x8xf32>,
    %72 = vector.extract_strided_slice %45 {offsets = [0, 16], sizes = [32, 8], strides = [1, 1]} : vector<32x64xf32> to vector<32x8xf32>
    %c2 = arith.constant 2 : index
    %c0_39 = arith.constant 0 : index
    %c0_40 = arith.constant 0 : index
    %73 = vector.load %arg20[%c2, %c0_39, %c0_40] : memref<8x32x8xf32, #tpu.memory_space<vmem>>, vector<1x32x8xf32>
    %74 = vector.shape_cast %73 : vector<1x32x8xf32> to vector<32x8xf32>
    %75 = vector.shape_cast %72 : vector<32x8xf32> to vector<1x32x8xf32>
    tpu.vector_store %arg20[%c2, %c0_39, %c0_40], %75 {strides = array<i32>} : memref<8x32x8xf32, #tpu.memory_space<vmem>>, vector<1x32x8xf32>,
    %76 = vector.extract_strided_slice %46 {offsets = [0, 16], sizes = [32, 8], strides = [1, 1]} : vector<32x64xf32> to vector<32x8xf32>
    %c2_41 = arith.constant 2 : index
    %c0_42 = arith.constant 0 : index
    %c0_43 = arith.constant 0 : index
    %77 = vector.load %arg21[%c2_41, %c0_42, %c0_43] : memref<8x32x8xf32, #tpu.memory_space<vmem>>, vector<1x32x8xf32>
    %78 = vector.shape_cast %77 : vector<1x32x8xf32> to vector<32x8xf32>
    %79 = vector.shape_cast %76 : vector<32x8xf32> to vector<1x32x8xf32>
    tpu.vector_store %arg21[%c2_41, %c0_42, %c0_43], %79 {strides = array<i32>} : memref<8x32x8xf32, #tpu.memory_space<vmem>>, vector<1x32x8xf32>,
    %80 = vector.extract_strided_slice %47 {offsets = [0, 16], sizes = [32, 8], strides = [1, 1]} : vector<32x64xf32> to vector<32x8xf32>
    %c2_44 = arith.constant 2 : index
    %c0_45 = arith.constant 0 : index
    %c0_46 = arith.constant 0 : index
    %81 = vector.load %arg22[%c2_44, %c0_45, %c0_46] : memref<8x32x8xf32, #tpu.memory_space<vmem>>, vector<1x32x8xf32>
    %82 = vector.shape_cast %81 : vector<1x32x8xf32> to vector<32x8xf32>
    %83 = vector.shape_cast %80 : vector<32x8xf32> to vector<1x32x8xf32>
    tpu.vector_store %arg22[%c2_44, %c0_45, %c0_46], %83 {strides = array<i32>} : memref<8x32x8xf32, #tpu.memory_space<vmem>>, vector<1x32x8xf32>,
    %84 = vector.extract_strided_slice %45 {offsets = [0, 24], sizes = [32, 8], strides = [1, 1]} : vector<32x64xf32> to vector<32x8xf32>
    %c3 = arith.constant 3 : index
    %c0_47 = arith.constant 0 : index
    %c0_48 = arith.constant 0 : index
    %85 = vector.load %arg20[%c3, %c0_47, %c0_48] : memref<8x32x8xf32, #tpu.memory_space<vmem>>, vector<1x32x8xf32>
    %86 = vector.shape_cast %85 : vector<1x32x8xf32> to vector<32x8xf32>
    %87 = vector.shape_cast %84 : vector<32x8xf32> to vector<1x32x8xf32>
    tpu.vector_store %arg20[%c3, %c0_47, %c0_48], %87 {strides = array<i32>} : memref<8x32x8xf32, #tpu.memory_space<vmem>>, vector<1x32x8xf32>,
    %88 = vector.extract_strided_slice %46 {offsets = [0, 24], sizes = [32, 8], strides = [1, 1]} : vector<32x64xf32> to vector<32x8xf32>
    %c3_49 = arith.constant 3 : index
    %c0_50 = arith.constant 0 : index
    %c0_51 = arith.constant 0 : index
    %89 = vector.load %arg21[%c3_49, %c0_50, %c0_51] : memref<8x32x8xf32, #tpu.memory_space<vmem>>, vector<1x32x8xf32>
    %90 = vector.shape_cast %89 : vector<1x32x8xf32> to vector<32x8xf32>
    %91 = vector.shape_cast %88 : vector<32x8xf32> to vector<1x32x8xf32>
    tpu.vector_store %arg21[%c3_49, %c0_50, %c0_51], %91 {strides = array<i32>} : memref<8x32x8xf32, #tpu.memory_space<vmem>>, vector<1x32x8xf32>,
    %92 = vector.extract_strided_slice %47 {offsets = [0, 24], sizes = [32, 8], strides = [1, 1]} : vector<32x64xf32> to vector<32x8xf32>
    %c3_52 = arith.constant 3 : index
    %c0_53 = arith.constant 0 : index
    %c0_54 = arith.constant 0 : index
    %93 = vector.load %arg22[%c3_52, %c0_53, %c0_54] : memref<8x32x8xf32, #tpu.memory_space<vmem>>, vector<1x32x8xf32>
    %94 = vector.shape_cast %93 : vector<1x32x8xf32> to vector<32x8xf32>
    %95 = vector.shape_cast %92 : vector<32x8xf32> to vector<1x32x8xf32>
    tpu.vector_store %arg22[%c3_52, %c0_53, %c0_54], %95 {strides = array<i32>} : memref<8x32x8xf32, #tpu.memory_space<vmem>>, vector<1x32x8xf32>,
    %96 = vector.extract_strided_slice %45 {offsets = [0, 32], sizes = [32, 8], strides = [1, 1]} : vector<32x64xf32> to vector<32x8xf32>
    %c4 = arith.constant 4 : index
    %c0_55 = arith.constant 0 : index
    %c0_56 = arith.constant 0 : index
    %97 = vector.load %arg20[%c4, %c0_55, %c0_56] : memref<8x32x8xf32, #tpu.memory_space<vmem>>, vector<1x32x8xf32>
    %98 = vector.shape_cast %97 : vector<1x32x8xf32> to vector<32x8xf32>
    %99 = vector.shape_cast %96 : vector<32x8xf32> to vector<1x32x8xf32>
    tpu.vector_store %arg20[%c4, %c0_55, %c0_56], %99 {strides = array<i32>} : memref<8x32x8xf32, #tpu.memory_space<vmem>>, vector<1x32x8xf32>,
    %100 = vector.extract_strided_slice %46 {offsets = [0, 32], sizes = [32, 8], strides = [1, 1]} : vector<32x64xf32> to vector<32x8xf32>
    %c4_57 = arith.constant 4 : index
    %c0_58 = arith.constant 0 : index
    %c0_59 = arith.constant 0 : index
    %101 = vector.load %arg21[%c4_57, %c0_58, %c0_59] : memref<8x32x8xf32, #tpu.memory_space<vmem>>, vector<1x32x8xf32>
    %102 = vector.shape_cast %101 : vector<1x32x8xf32> to vector<32x8xf32>
    %103 = vector.shape_cast %100 : vector<32x8xf32> to vector<1x32x8xf32>
    tpu.vector_store %arg21[%c4_57, %c0_58, %c0_59], %103 {strides = array<i32>} : memref<8x32x8xf32, #tpu.memory_space<vmem>>, vector<1x32x8xf32>,
    %104 = vector.extract_strided_slice %47 {offsets = [0, 32], sizes = [32, 8], strides = [1, 1]} : vector<32x64xf32> to vector<32x8xf32>
    %c4_60 = arith.constant 4 : index
    %c0_61 = arith.constant 0 : index
    %c0_62 = arith.constant 0 : index
    %105 = vector.load %arg22[%c4_60, %c0_61, %c0_62] : memref<8x32x8xf32, #tpu.memory_space<vmem>>, vector<1x32x8xf32>
    %106 = vector.shape_cast %105 : vector<1x32x8xf32> to vector<32x8xf32>
    %107 = vector.shape_cast %104 : vector<32x8xf32> to vector<1x32x8xf32>
    tpu.vector_store %arg22[%c4_60, %c0_61, %c0_62], %107 {strides = array<i32>} : memref<8x32x8xf32, #tpu.memory_space<vmem>>, vector<1x32x8xf32>,
    %108 = vector.extract_strided_slice %45 {offsets = [0, 40], sizes = [32, 8], strides = [1, 1]} : vector<32x64xf32> to vector<32x8xf32>
    %c5 = arith.constant 5 : index
    %c0_63 = arith.constant 0 : index
    %c0_64 = arith.constant 0 : index
    %109 = vector.load %arg20[%c5, %c0_63, %c0_64] : memref<8x32x8xf32, #tpu.memory_space<vmem>>, vector<1x32x8xf32>
    %110 = vector.shape_cast %109 : vector<1x32x8xf32> to vector<32x8xf32>
    %111 = vector.shape_cast %108 : vector<32x8xf32> to vector<1x32x8xf32>
    tpu.vector_store %arg20[%c5, %c0_63, %c0_64], %111 {strides = array<i32>} : memref<8x32x8xf32, #tpu.memory_space<vmem>>, vector<1x32x8xf32>,
    %112 = vector.extract_strided_slice %46 {offsets = [0, 40], sizes = [32, 8], strides = [1, 1]} : vector<32x64xf32> to vector<32x8xf32>
    %c5_65 = arith.constant 5 : index
    %c0_66 = arith.constant 0 : index
    %c0_67 = arith.constant 0 : index
    %113 = vector.load %arg21[%c5_65, %c0_66, %c0_67] : memref<8x32x8xf32, #tpu.memory_space<vmem>>, vector<1x32x8xf32>
    %114 = vector.shape_cast %113 : vector<1x32x8xf32> to vector<32x8xf32>
    %115 = vector.shape_cast %112 : vector<32x8xf32> to vector<1x32x8xf32>
    tpu.vector_store %arg21[%c5_65, %c0_66, %c0_67], %115 {strides = array<i32>} : memref<8x32x8xf32, #tpu.memory_space<vmem>>, vector<1x32x8xf32>,
    %116 = vector.extract_strided_slice %47 {offsets = [0, 40], sizes = [32, 8], strides = [1, 1]} : vector<32x64xf32> to vector<32x8xf32>
    %c5_68 = arith.constant 5 : index
    %c0_69 = arith.constant 0 : index
    %c0_70 = arith.constant 0 : index
    %117 = vector.load %arg22[%c5_68, %c0_69, %c0_70] : memref<8x32x8xf32, #tpu.memory_space<vmem>>, vector<1x32x8xf32>
    %118 = vector.shape_cast %117 : vector<1x32x8xf32> to vector<32x8xf32>
    %119 = vector.shape_cast %116 : vector<32x8xf32> to vector<1x32x8xf32>
    tpu.vector_store %arg22[%c5_68, %c0_69, %c0_70], %119 {strides = array<i32>} : memref<8x32x8xf32, #tpu.memory_space<vmem>>, vector<1x32x8xf32>,
    %120 = vector.extract_strided_slice %45 {offsets = [0, 48], sizes = [32, 8], strides = [1, 1]} : vector<32x64xf32> to vector<32x8xf32>
    %c6 = arith.constant 6 : index
    %c0_71 = arith.constant 0 : index
    %c0_72 = arith.constant 0 : index
    %121 = vector.load %arg20[%c6, %c0_71, %c0_72] : memref<8x32x8xf32, #tpu.memory_space<vmem>>, vector<1x32x8xf32>
    %122 = vector.shape_cast %121 : vector<1x32x8xf32> to vector<32x8xf32>
    %123 = vector.shape_cast %120 : vector<32x8xf32> to vector<1x32x8xf32>
    tpu.vector_store %arg20[%c6, %c0_71, %c0_72], %123 {strides = array<i32>} : memref<8x32x8xf32, #tpu.memory_space<vmem>>, vector<1x32x8xf32>,
    %124 = vector.extract_strided_slice %46 {offsets = [0, 48], sizes = [32, 8], strides = [1, 1]} : vector<32x64xf32> to vector<32x8xf32>
    %c6_73 = arith.constant 6 : index
    %c0_74 = arith.constant 0 : index
    %c0_75 = arith.constant 0 : index
    %125 = vector.load %arg21[%c6_73, %c0_74, %c0_75] : memref<8x32x8xf32, #tpu.memory_space<vmem>>, vector<1x32x8xf32>
    %126 = vector.shape_cast %125 : vector<1x32x8xf32> to vector<32x8xf32>
    %127 = vector.shape_cast %124 : vector<32x8xf32> to vector<1x32x8xf32>
    tpu.vector_store %arg21[%c6_73, %c0_74, %c0_75], %127 {strides = array<i32>} : memref<8x32x8xf32, #tpu.memory_space<vmem>>, vector<1x32x8xf32>,
    %128 = vector.extract_strided_slice %47 {offsets = [0, 48], sizes = [32, 8], strides = [1, 1]} : vector<32x64xf32> to vector<32x8xf32>
    %c6_76 = arith.constant 6 : index
    %c0_77 = arith.constant 0 : index
    %c0_78 = arith.constant 0 : index
    %129 = vector.load %arg22[%c6_76, %c0_77, %c0_78] : memref<8x32x8xf32, #tpu.memory_space<vmem>>, vector<1x32x8xf32>
    %130 = vector.shape_cast %129 : vector<1x32x8xf32> to vector<32x8xf32>
    %131 = vector.shape_cast %128 : vector<32x8xf32> to vector<1x32x8xf32>
    tpu.vector_store %arg22[%c6_76, %c0_77, %c0_78], %131 {strides = array<i32>} : memref<8x32x8xf32, #tpu.memory_space<vmem>>, vector<1x32x8xf32>,
    %132 = vector.extract_strided_slice %45 {offsets = [0, 56], sizes = [32, 8], strides = [1, 1]} : vector<32x64xf32> to vector<32x8xf32>
    %c7 = arith.constant 7 : index
    %c0_79 = arith.constant 0 : index
    %c0_80 = arith.constant 0 : index
    %133 = vector.load %arg20[%c7, %c0_79, %c0_80] : memref<8x32x8xf32, #tpu.memory_space<vmem>>, vector<1x32x8xf32>
    %134 = vector.shape_cast %133 : vector<1x32x8xf32> to vector<32x8xf32>
    %135 = vector.shape_cast %132 : vector<32x8xf32> to vector<1x32x8xf32>
    tpu.vector_store %arg20[%c7, %c0_79, %c0_80], %135 {strides = array<i32>} : memref<8x32x8xf32, #tpu.memory_space<vmem>>, vector<1x32x8xf32>,
    %136 = vector.extract_strided_slice %46 {offsets = [0, 56], sizes = [32, 8], strides = [1, 1]} : vector<32x64xf32> to vector<32x8xf32>
    %c7_81 = arith.constant 7 : index
    %c0_82 = arith.constant 0 : index
    %c0_83 = arith.constant 0 : index
    %137 = vector.load %arg21[%c7_81, %c0_82, %c0_83] : memref<8x32x8xf32, #tpu.memory_space<vmem>>, vector<1x32x8xf32>
    %138 = vector.shape_cast %137 : vector<1x32x8xf32> to vector<32x8xf32>
    %139 = vector.shape_cast %136 : vector<32x8xf32> to vector<1x32x8xf32>
    tpu.vector_store %arg21[%c7_81, %c0_82, %c0_83], %139 {strides = array<i32>} : memref<8x32x8xf32, #tpu.memory_space<vmem>>, vector<1x32x8xf32>,
    %140 = vector.extract_strided_slice %47 {offsets = [0, 56], sizes = [32, 8], strides = [1, 1]} : vector<32x64xf32> to vector<32x8xf32>
    %c7_84 = arith.constant 7 : index
    %c0_85 = arith.constant 0 : index
    %c0_86 = arith.constant 0 : index
    %141 = vector.load %arg22[%c7_84, %c0_85, %c0_86] : memref<8x32x8xf32, #tpu.memory_space<vmem>>, vector<1x32x8xf32>
    %142 = vector.shape_cast %141 : vector<1x32x8xf32> to vector<32x8xf32>
    %143 = vector.shape_cast %140 : vector<32x8xf32> to vector<1x32x8xf32>
    tpu.vector_store %arg22[%c7_84, %c0_85, %c0_86], %143 {strides = array<i32>} : memref<8x32x8xf32, #tpu.memory_space<vmem>>, vector<1x32x8xf32>,
    %c0_87 = arith.constant 0 : index
    %c0_88 = arith.constant 0 : index
    %c0_89 = arith.constant 0 : index
    %144 = vector.load %arg20[%c0_87, %c0_88, %c0_89] : memref<8x32x8xf32, #tpu.memory_space<vmem>>, vector<8x32x8xf32>
    %145 = arith.truncf %144 : vector<8x32x8xf32> to vector<8x32x8xbf16>
    %c0_90 = arith.constant 0 : index
    %c0_91 = arith.constant 0 : index
    %c0_92 = arith.constant 0 : index
    %146 = vector.load %arg21[%c0_90, %c0_91, %c0_92] : memref<8x32x8xf32, #tpu.memory_space<vmem>>, vector<8x32x8xf32>
    %147 = arith.truncf %146 : vector<8x32x8xf32> to vector<8x32x8xbf16>
    %c0_93 = arith.constant 0 : index
    %c0_94 = arith.constant 0 : index
    %c0_95 = arith.constant 0 : index
    %148 = vector.load %arg22[%c0_93, %c0_94, %c0_95] : memref<8x32x8xf32, #tpu.memory_space<vmem>>, vector<8x32x8xf32>
    %149 = arith.truncf %148 : vector<8x32x8xf32> to vector<8x32x8xbf16>
    "tpu.trace_start"() <{level = 10 : i32, message = "hmd,hnd->hmn"}> : () -> ()
    %cst_96 = arith.constant dense<0.000000e+00> : vector<8x32x32xf32>
    %150 = tpu.matmul %145, %147, %cst_96 {dimension_numbers = #tpu.dot_dimension_numbers<[2], [2], [1], [1], [0, 0, 0, 1, 1, 1], [0], [0]>} : vector<8x32x8xbf16>, vector<8x32x8xbf16>, vector<8x32x32xf32> -> vector<8x32x32xf32>
    "tpu.trace_stop"() : () -> ()
    %cst_97 = arith.constant 1.250000e-01 : f32
    %151 = vector.broadcast %cst_97 : f32 to vector<8x32x32xf32>
    %152 = arith.mulf %150, %151 : vector<8x32x32xf32>
    %153 = vector.shape_cast %14 : vector<32x32xf32> to vector<1x32x32xf32>
    %154 = vector.broadcast %153 : vector<1x32x32xf32> to vector<8x32x32xf32>
    %155 = arith.addf %152, %154 : vector<8x32x32xf32>
    %cst_98 = arith.constant dense<0xFF800000> : vector<8x32xf32>
    %156 = vector.multi_reduction <maximumf>, %155, %cst_98 [2] : vector<8x32x32xf32> to vector<8x32xf32>
    %157 = vector.shape_cast %156 : vector<8x32xf32> to vector<8x32x1xf32>
    %158 = vector.broadcast %157 : vector<8x32x1xf32> to vector<8x32x32xf32>
    %159 = arith.subf %155, %158 : vector<8x32x32xf32>
    %160 = math.exp %159 : vector<8x32x32xf32>
    %cst_99 = arith.constant dense<0.000000e+00> : vector<8x32xf32>
    %161 = vector.multi_reduction <add>, %160, %cst_99 [2] : vector<8x32x32xf32> to vector<8x32xf32>
    %162 = vector.shape_cast %161 : vector<8x32xf32> to vector<8x32x1xf32>
    %163 = tpu.reciprocal %162 {approx = true} : vector<8x32x1xf32> -> vector<8x32x1xf32>
    %164 = vector.broadcast %163 : vector<8x32x1xf32> to vector<8x32x32xf32>
    %165 = arith.mulf %160, %164 : vector<8x32x32xf32>
    %166 = arith.truncf %165 : vector<8x32x32xf32> to vector<8x32x32xbf16>
    "tpu.trace_start"() <{level = 10 : i32, message = "hmn,hnd->hmd"}> : () -> ()
    %cst_100 = arith.constant dense<0.000000e+00> : vector<8x32x8xf32>
    %167 = tpu.matmul %166, %149, %cst_100 {dimension_numbers = #tpu.dot_dimension_numbers<[2], [1], [1], [2], [0, 0, 0, 1, 1, 2], [0], [0]>} : vector<8x32x32xbf16>, vector<8x32x8xbf16>, vector<8x32x8xf32> -> vector<8x32x8xf32>
    "tpu.trace_stop"() : () -> ()
    %168 = vector.extract_strided_slice %167 {offsets = [0, 0, 0], sizes = [1, 32, 8], strides = [1, 1, 1]} : vector<8x32x8xf32> to vector<1x32x8xf32>
    %169 = vector.shape_cast %168 : vector<1x32x8xf32> to vector<32x8xf32>
    %c0_101 = arith.constant 0 : index
    %c0_102 = arith.constant 0 : index
    %170 = vector.load %arg23[%c0_101, %c0_102] : memref<32x64xf32, #tpu.memory_space<vmem>>, vector<32x8xf32>
    tpu.vector_store %arg23[%c0_101, %c0_102], %169 {strides = array<i32>} : memref<32x64xf32, #tpu.memory_space<vmem>>, vector<32x8xf32>,
    %171 = vector.extract_strided_slice %167 {offsets = [1, 0, 0], sizes = [1, 32, 8], strides = [1, 1, 1]} : vector<8x32x8xf32> to vector<1x32x8xf32>
    %172 = vector.shape_cast %171 : vector<1x32x8xf32> to vector<32x8xf32>
    %c0_103 = arith.constant 0 : index
    %c8 = arith.constant 8 : index
    %173 = vector.load %arg23[%c0_103, %c8] : memref<32x64xf32, #tpu.memory_space<vmem>>, vector<32x8xf32>
    tpu.vector_store %arg23[%c0_103, %c8], %172 {strides = array<i32>} : memref<32x64xf32, #tpu.memory_space<vmem>>, vector<32x8xf32>,
    %174 = vector.extract_strided_slice %167 {offsets = [2, 0, 0], sizes = [1, 32, 8], strides = [1, 1, 1]} : vector<8x32x8xf32> to vector<1x32x8xf32>
    %175 = vector.shape_cast %174 : vector<1x32x8xf32> to vector<32x8xf32>
    %c0_104 = arith.constant 0 : index
    %c16 = arith.constant 16 : index
    %176 = vector.load %arg23[%c0_104, %c16] : memref<32x64xf32, #tpu.memory_space<vmem>>, vector<32x8xf32>
    tpu.vector_store %arg23[%c0_104, %c16], %175 {strides = array<i32>} : memref<32x64xf32, #tpu.memory_space<vmem>>, vector<32x8xf32>,
    %177 = vector.extract_strided_slice %167 {offsets = [3, 0, 0], sizes = [1, 32, 8], strides = [1, 1, 1]} : vector<8x32x8xf32> to vector<1x32x8xf32>
    %178 = vector.shape_cast %177 : vector<1x32x8xf32> to vector<32x8xf32>
    %c0_105 = arith.constant 0 : index
    %c24 = arith.constant 24 : index
    %179 = vector.load %arg23[%c0_105, %c24] : memref<32x64xf32, #tpu.memory_space<vmem>>, vector<32x8xf32>
    tpu.vector_store %arg23[%c0_105, %c24], %178 {strides = array<i32>} : memref<32x64xf32, #tpu.memory_space<vmem>>, vector<32x8xf32>,
    %180 = vector.extract_strided_slice %167 {offsets = [4, 0, 0], sizes = [1, 32, 8], strides = [1, 1, 1]} : vector<8x32x8xf32> to vector<1x32x8xf32>
    %181 = vector.shape_cast %180 : vector<1x32x8xf32> to vector<32x8xf32>
    %c0_106 = arith.constant 0 : index
    %c32 = arith.constant 32 : index
    %182 = vector.load %arg23[%c0_106, %c32] : memref<32x64xf32, #tpu.memory_space<vmem>>, vector<32x8xf32>
    tpu.vector_store %arg23[%c0_106, %c32], %181 {strides = array<i32>} : memref<32x64xf32, #tpu.memory_space<vmem>>, vector<32x8xf32>,
    %183 = vector.extract_strided_slice %167 {offsets = [5, 0, 0], sizes = [1, 32, 8], strides = [1, 1, 1]} : vector<8x32x8xf32> to vector<1x32x8xf32>
    %184 = vector.shape_cast %183 : vector<1x32x8xf32> to vector<32x8xf32>
    %c0_107 = arith.constant 0 : index
    %c40 = arith.constant 40 : index
    %185 = vector.load %arg23[%c0_107, %c40] : memref<32x64xf32, #tpu.memory_space<vmem>>, vector<32x8xf32>
    tpu.vector_store %arg23[%c0_107, %c40], %184 {strides = array<i32>} : memref<32x64xf32, #tpu.memory_space<vmem>>, vector<32x8xf32>,
    %186 = vector.extract_strided_slice %167 {offsets = [6, 0, 0], sizes = [1, 32, 8], strides = [1, 1, 1]} : vector<8x32x8xf32> to vector<1x32x8xf32>
    %187 = vector.shape_cast %186 : vector<1x32x8xf32> to vector<32x8xf32>
    %c0_108 = arith.constant 0 : index
    %c48 = arith.constant 48 : index
    %188 = vector.load %arg23[%c0_108, %c48] : memref<32x64xf32, #tpu.memory_space<vmem>>, vector<32x8xf32>
    tpu.vector_store %arg23[%c0_108, %c48], %187 {strides = array<i32>} : memref<32x64xf32, #tpu.memory_space<vmem>>, vector<32x8xf32>,
    %189 = vector.extract_strided_slice %167 {offsets = [7, 0, 0], sizes = [1, 32, 8], strides = [1, 1, 1]} : vector<8x32x8xf32> to vector<1x32x8xf32>
    %190 = vector.shape_cast %189 : vector<1x32x8xf32> to vector<32x8xf32>
    %c0_109 = arith.constant 0 : index
    %c56 = arith.constant 56 : index
    %191 = vector.load %arg23[%c0_109, %c56] : memref<32x64xf32, #tpu.memory_space<vmem>>, vector<32x8xf32>
    tpu.vector_store %arg23[%c0_109, %c56], %190 {strides = array<i32>} : memref<32x64xf32, #tpu.memory_space<vmem>>, vector<32x8xf32>,
    %c0_110 = arith.constant 0 : index
    %c0_111 = arith.constant 0 : index
    %192 = vector.load %arg23[%c0_110, %c0_111] : memref<32x64xf32, #tpu.memory_space<vmem>>, vector<32x64xf32>
    %193 = arith.truncf %192 : vector<32x64xf32> to vector<32x64xbf16>
    %c0_112 = arith.constant 0 : index
    %c0_113 = arith.constant 0 : index
    %c0_114 = arith.constant 0 : index
    %194 = vector.load %arg5[%c0_112, %c0_113, %c0_114] : memref<2x64x64xbf16, #tpu.memory_space<vmem>>, vector<1x64x64xbf16>
    %195 = vector.shape_cast %194 : vector<1x64x64xbf16> to vector<64x64xbf16>
    %cst_115 = arith.constant dense<0.000000e+00> : vector<32x64xf32>
    %196 = tpu.matmul %193, %195, %cst_115 {dimension_numbers = #tpu.dot_dimension_numbers<[1], [0], [0], [1], [0, 0, 1, 1], [], []>} : vector<32x64xbf16>, vector<64x64xbf16>, vector<32x64xf32> -> vector<32x64xf32>
    %197 = arith.addf %13, %196 : vector<32x64xf32>
    %c0_116 = arith.constant 0 : index
    %c0_117 = arith.constant 0 : index
    %c0_118 = arith.constant 0 : index
    %198 = vector.load %arg6[%c0_116, %c0_117, %c0_118] : memref<2x1x64xf32, #tpu.memory_space<vmem>>, vector<1x1x64xf32>
    %199 = vector.shape_cast %198 : vector<1x1x64xf32> to vector<1x64xf32>
    %200 = vector.broadcast %199 : vector<1x64xf32> to vector<32x64xf32>
    %201 = arith.addf %197, %200 : vector<32x64xf32>
    %c0_119 = arith.constant 0 : index
    %c0_120 = arith.constant 0 : index
    %c0_121 = arith.constant 0 : index
    %202 = vector.load %arg13[%c0_119, %c0_120, %c0_121] : memref<2x1x64xf32, #tpu.memory_space<vmem>>, vector<1x1x64xf32>
    %203 = vector.shape_cast %202 : vector<1x1x64xf32> to vector<1x64xf32>
    %c0_122 = arith.constant 0 : index
    %c0_123 = arith.constant 0 : index
    %c0_124 = arith.constant 0 : index
    %204 = vector.load %arg14[%c0_122, %c0_123, %c0_124] : memref<2x1x64xf32, #tpu.memory_space<vmem>>, vector<1x1x64xf32>
    %205 = vector.shape_cast %204 : vector<1x1x64xf32> to vector<1x64xf32>
    %cst_125 = arith.constant dense<0.000000e+00> : vector<32xf32>
    %206 = vector.multi_reduction <add>, %201, %cst_125 [1] : vector<32x64xf32> to vector<32xf32>
    %207 = vector.shape_cast %206 : vector<32xf32> to vector<32x1xf32>
    %cst_126 = arith.constant 6.400000e+01 : f32
    %208 = vector.broadcast %cst_126 : f32 to vector<32x1xf32>
    %209 = arith.divf %207, %208 : vector<32x1xf32>
    %210 = vector.broadcast %209 : vector<32x1xf32> to vector<32x64xf32>
    %211 = arith.subf %201, %210 : vector<32x64xf32>
    %212 = arith.mulf %211, %211 : vector<32x64xf32>
    %cst_127 = arith.constant dense<0.000000e+00> : vector<32xf32>
    %213 = vector.multi_reduction <add>, %212, %cst_127 [1] : vector<32x64xf32> to vector<32xf32>
    %214 = vector.shape_cast %213 : vector<32xf32> to vector<32x1xf32>
    %cst_128 = arith.constant 6.400000e+01 : f32
    %215 = vector.broadcast %cst_128 : f32 to vector<32x1xf32>
    %216 = arith.divf %214, %215 : vector<32x1xf32>
    %217 = vector.broadcast %209 : vector<32x1xf32> to vector<32x64xf32>
    %218 = arith.subf %201, %217 : vector<32x64xf32>
    %cst_129 = arith.constant 9.99999974E-6 : f32
    %219 = vector.broadcast %cst_129 : f32 to vector<32x1xf32>
    %220 = arith.addf %216, %219 : vector<32x1xf32>
    %221 = math.rsqrt %220 : vector<32x1xf32>
    %222 = vector.broadcast %221 : vector<32x1xf32> to vector<32x64xf32>
    %223 = arith.mulf %218, %222 : vector<32x64xf32>
    %224 = vector.broadcast %203 : vector<1x64xf32> to vector<32x64xf32>
    %225 = arith.mulf %223, %224 : vector<32x64xf32>
    %226 = vector.broadcast %205 : vector<1x64xf32> to vector<32x64xf32>
    %227 = arith.addf %225, %226 : vector<32x64xf32>
    %228 = arith.truncf %227 : vector<32x64xf32> to vector<32x64xbf16>
    %c0_130 = arith.constant 0 : index
    %c0_131 = arith.constant 0 : index
    %c0_132 = arith.constant 0 : index
    %229 = vector.load %arg7[%c0_130, %c0_131, %c0_132] : memref<2x64x256xbf16, #tpu.memory_space<vmem>>, vector<1x64x256xbf16>
    %230 = vector.shape_cast %229 : vector<1x64x256xbf16> to vector<64x256xbf16>
    %cst_133 = arith.constant dense<0.000000e+00> : vector<32x256xf32>
    %231 = tpu.matmul %228, %230, %cst_133 {dimension_numbers = #tpu.dot_dimension_numbers<[1], [0], [0], [1], [0, 0, 1, 1], [], []>} : vector<32x64xbf16>, vector<64x256xbf16>, vector<32x256xf32> -> vector<32x256xf32>
    %c0_134 = arith.constant 0 : index
    %c0_135 = arith.constant 0 : index
    %c0_136 = arith.constant 0 : index
    %232 = vector.load %arg8[%c0_134, %c0_135, %c0_136] : memref<2x1x256xf32, #tpu.memory_space<vmem>>, vector<1x1x256xf32>
    %233 = vector.shape_cast %232 : vector<1x1x256xf32> to vector<1x256xf32>
    %234 = vector.broadcast %233 : vector<1x256xf32> to vector<32x256xf32>
    %235 = arith.addf %231, %234 : vector<32x256xf32>
    %cst_137 = arith.constant 0.000000e+00 : f32
    %236 = vector.broadcast %cst_137 : f32 to vector<32x256xf32>
    %237 = arith.maximumf %235, %236 : vector<32x256xf32>
    %238 = arith.truncf %237 : vector<32x256xf32> to vector<32x256xbf16>
    %c0_138 = arith.constant 0 : index
    %c0_139 = arith.constant 0 : index
    %c0_140 = arith.constant 0 : index
    %239 = vector.load %arg9[%c0_138, %c0_139, %c0_140] : memref<2x256x64xbf16, #tpu.memory_space<vmem>>, vector<1x256x64xbf16>
    %240 = vector.shape_cast %239 : vector<1x256x64xbf16> to vector<256x64xbf16>
    %cst_141 = arith.constant dense<0.000000e+00> : vector<32x64xf32>
    %241 = tpu.matmul %238, %240, %cst_141 {dimension_numbers = #tpu.dot_dimension_numbers<[1], [0], [0], [1], [0, 0, 1, 1], [], []>} : vector<32x256xbf16>, vector<256x64xbf16>, vector<32x64xf32> -> vector<32x64xf32>
    %242 = arith.addf %201, %241 : vector<32x64xf32>
    %c0_142 = arith.constant 0 : index
    %c0_143 = arith.constant 0 : index
    %c0_144 = arith.constant 0 : index
    %243 = vector.load %arg10[%c0_142, %c0_143, %c0_144] : memref<2x1x64xf32, #tpu.memory_space<vmem>>, vector<1x1x64xf32>
    %244 = vector.shape_cast %243 : vector<1x1x64xf32> to vector<1x64xf32>
    %245 = vector.broadcast %244 : vector<1x64xf32> to vector<32x64xf32>
    %246 = arith.addf %242, %245 : vector<32x64xf32>
    %c1_145 = arith.constant 1 : index
    %c0_146 = arith.constant 0 : index
    %c0_147 = arith.constant 0 : index
    %247 = vector.load %arg11[%c1_145, %c0_146, %c0_147] : memref<2x1x64xf32, #tpu.memory_space<vmem>>, vector<1x1x64xf32>
    %248 = vector.shape_cast %247 : vector<1x1x64xf32> to vector<1x64xf32>
    %c1_148 = arith.constant 1 : index
    %c0_149 = arith.constant 0 : index
    %c0_150 = arith.constant 0 : index
    %249 = vector.load %arg12[%c1_148, %c0_149, %c0_150] : memref<2x1x64xf32, #tpu.memory_space<vmem>>, vector<1x1x64xf32>
    %250 = vector.shape_cast %249 : vector<1x1x64xf32> to vector<1x64xf32>
    %cst_151 = arith.constant dense<0.000000e+00> : vector<32xf32>
    %251 = vector.multi_reduction <add>, %246, %cst_151 [1] : vector<32x64xf32> to vector<32xf32>
    %252 = vector.shape_cast %251 : vector<32xf32> to vector<32x1xf32>
    %cst_152 = arith.constant 6.400000e+01 : f32
    %253 = vector.broadcast %cst_152 : f32 to vector<32x1xf32>
    %254 = arith.divf %252, %253 : vector<32x1xf32>
    %255 = vector.broadcast %254 : vector<32x1xf32> to vector<32x64xf32>
    %256 = arith.subf %246, %255 : vector<32x64xf32>
    %257 = arith.mulf %256, %256 : vector<32x64xf32>
    %cst_153 = arith.constant dense<0.000000e+00> : vector<32xf32>
    %258 = vector.multi_reduction <add>, %257, %cst_153 [1] : vector<32x64xf32> to vector<32xf32>
    %259 = vector.shape_cast %258 : vector<32xf32> to vector<32x1xf32>
    %cst_154 = arith.constant 6.400000e+01 : f32
    %260 = vector.broadcast %cst_154 : f32 to vector<32x1xf32>
    %261 = arith.divf %259, %260 : vector<32x1xf32>
    %262 = vector.broadcast %254 : vector<32x1xf32> to vector<32x64xf32>
    %263 = arith.subf %246, %262 : vector<32x64xf32>
    %cst_155 = arith.constant 9.99999974E-6 : f32
    %264 = vector.broadcast %cst_155 : f32 to vector<32x1xf32>
    %265 = arith.addf %261, %264 : vector<32x1xf32>
    %266 = math.rsqrt %265 : vector<32x1xf32>
    %267 = vector.broadcast %266 : vector<32x1xf32> to vector<32x64xf32>
    %268 = arith.mulf %263, %267 : vector<32x64xf32>
    %269 = vector.broadcast %248 : vector<1x64xf32> to vector<32x64xf32>
    %270 = arith.mulf %268, %269 : vector<32x64xf32>
    %271 = vector.broadcast %250 : vector<1x64xf32> to vector<32x64xf32>
    %272 = arith.addf %270, %271 : vector<32x64xf32>
    %273 = arith.truncf %272 : vector<32x64xf32> to vector<32x64xbf16>
    %c1_156 = arith.constant 1 : index
    %c0_157 = arith.constant 0 : index
    %c0_158 = arith.constant 0 : index
    %274 = vector.load %arg4[%c1_156, %c0_157, %c0_158] : memref<2x64x384xbf16, #tpu.memory_space<vmem>>, vector<1x64x384xbf16>
    %275 = vector.shape_cast %274 : vector<1x64x384xbf16> to vector<64x384xbf16>
    %cst_159 = arith.constant dense<0.000000e+00> : vector<32x384xf32>
    %276 = tpu.matmul %273, %275, %cst_159 {dimension_numbers = #tpu.dot_dimension_numbers<[1], [0], [0], [1], [0, 0, 1, 1], [], []>} : vector<32x64xbf16>, vector<64x384xbf16>, vector<32x384xf32> -> vector<32x384xf32>
    %277 = vector.extract_strided_slice %276 {offsets = [0, 0], sizes = [32, 64], strides = [1, 1]} : vector<32x384xf32> to vector<32x64xf32>
    %278 = vector.extract_strided_slice %276 {offsets = [0, 128], sizes = [32, 64], strides = [1, 1]} : vector<32x384xf32> to vector<32x64xf32>
    %279 = vector.extract_strided_slice %276 {offsets = [0, 256], sizes = [32, 64], strides = [1, 1]} : vector<32x384xf32> to vector<32x64xf32>
    %280 = vector.extract_strided_slice %277 {offsets = [0, 0], sizes = [32, 8], strides = [1, 1]} : vector<32x64xf32> to vector<32x8xf32>
    %c0_160 = arith.constant 0 : index
    %c0_161 = arith.constant 0 : index
    %c0_162 = arith.constant 0 : index
    %281 = vector.load %arg20[%c0_160, %c0_161, %c0_162] : memref<8x32x8xf32, #tpu.memory_space<vmem>>, vector<1x32x8xf32>
    %282 = vector.shape_cast %281 : vector<1x32x8xf32> to vector<32x8xf32>
    %283 = vector.shape_cast %280 : vector<32x8xf32> to vector<1x32x8xf32>
    tpu.vector_store %arg20[%c0_160, %c0_161, %c0_162], %283 {strides = array<i32>} : memref<8x32x8xf32, #tpu.memory_space<vmem>>, vector<1x32x8xf32>,
    %284 = vector.extract_strided_slice %278 {offsets = [0, 0], sizes = [32, 8], strides = [1, 1]} : vector<32x64xf32> to vector<32x8xf32>
    %c0_163 = arith.constant 0 : index
    %c0_164 = arith.constant 0 : index
    %c0_165 = arith.constant 0 : index
    %285 = vector.load %arg21[%c0_163, %c0_164, %c0_165] : memref<8x32x8xf32, #tpu.memory_space<vmem>>, vector<1x32x8xf32>
    %286 = vector.shape_cast %285 : vector<1x32x8xf32> to vector<32x8xf32>
    %287 = vector.shape_cast %284 : vector<32x8xf32> to vector<1x32x8xf32>
    tpu.vector_store %arg21[%c0_163, %c0_164, %c0_165], %287 {strides = array<i32>} : memref<8x32x8xf32, #tpu.memory_space<vmem>>, vector<1x32x8xf32>,
    %288 = vector.extract_strided_slice %279 {offsets = [0, 0], sizes = [32, 8], strides = [1, 1]} : vector<32x64xf32> to vector<32x8xf32>
    %c0_166 = arith.constant 0 : index
    %c0_167 = arith.constant 0 : index
    %c0_168 = arith.constant 0 : index
    %289 = vector.load %arg22[%c0_166, %c0_167, %c0_168] : memref<8x32x8xf32, #tpu.memory_space<vmem>>, vector<1x32x8xf32>
    %290 = vector.shape_cast %289 : vector<1x32x8xf32> to vector<32x8xf32>
    %291 = vector.shape_cast %288 : vector<32x8xf32> to vector<1x32x8xf32>
    tpu.vector_store %arg22[%c0_166, %c0_167, %c0_168], %291 {strides = array<i32>} : memref<8x32x8xf32, #tpu.memory_space<vmem>>, vector<1x32x8xf32>,
    %292 = vector.extract_strided_slice %277 {offsets = [0, 8], sizes = [32, 8], strides = [1, 1]} : vector<32x64xf32> to vector<32x8xf32>
    %c1_169 = arith.constant 1 : index
    %c0_170 = arith.constant 0 : index
    %c0_171 = arith.constant 0 : index
    %293 = vector.load %arg20[%c1_169, %c0_170, %c0_171] : memref<8x32x8xf32, #tpu.memory_space<vmem>>, vector<1x32x8xf32>
    %294 = vector.shape_cast %293 : vector<1x32x8xf32> to vector<32x8xf32>
    %295 = vector.shape_cast %292 : vector<32x8xf32> to vector<1x32x8xf32>
    tpu.vector_store %arg20[%c1_169, %c0_170, %c0_171], %295 {strides = array<i32>} : memref<8x32x8xf32, #tpu.memory_space<vmem>>, vector<1x32x8xf32>,
    %296 = vector.extract_strided_slice %278 {offsets = [0, 8], sizes = [32, 8], strides = [1, 1]} : vector<32x64xf32> to vector<32x8xf32>
    %c1_172 = arith.constant 1 : index
    %c0_173 = arith.constant 0 : index
    %c0_174 = arith.constant 0 : index
    %297 = vector.load %arg21[%c1_172, %c0_173, %c0_174] : memref<8x32x8xf32, #tpu.memory_space<vmem>>, vector<1x32x8xf32>
    %298 = vector.shape_cast %297 : vector<1x32x8xf32> to vector<32x8xf32>
    %299 = vector.shape_cast %296 : vector<32x8xf32> to vector<1x32x8xf32>
    tpu.vector_store %arg21[%c1_172, %c0_173, %c0_174], %299 {strides = array<i32>} : memref<8x32x8xf32, #tpu.memory_space<vmem>>, vector<1x32x8xf32>,
    %300 = vector.extract_strided_slice %279 {offsets = [0, 8], sizes = [32, 8], strides = [1, 1]} : vector<32x64xf32> to vector<32x8xf32>
    %c1_175 = arith.constant 1 : index
    %c0_176 = arith.constant 0 : index
    %c0_177 = arith.constant 0 : index
    %301 = vector.load %arg22[%c1_175, %c0_176, %c0_177] : memref<8x32x8xf32, #tpu.memory_space<vmem>>, vector<1x32x8xf32>
    %302 = vector.shape_cast %301 : vector<1x32x8xf32> to vector<32x8xf32>
    %303 = vector.shape_cast %300 : vector<32x8xf32> to vector<1x32x8xf32>
    tpu.vector_store %arg22[%c1_175, %c0_176, %c0_177], %303 {strides = array<i32>} : memref<8x32x8xf32, #tpu.memory_space<vmem>>, vector<1x32x8xf32>,
    %304 = vector.extract_strided_slice %277 {offsets = [0, 16], sizes = [32, 8], strides = [1, 1]} : vector<32x64xf32> to vector<32x8xf32>
    %c2_178 = arith.constant 2 : index
    %c0_179 = arith.constant 0 : index
    %c0_180 = arith.constant 0 : index
    %305 = vector.load %arg20[%c2_178, %c0_179, %c0_180] : memref<8x32x8xf32, #tpu.memory_space<vmem>>, vector<1x32x8xf32>
    %306 = vector.shape_cast %305 : vector<1x32x8xf32> to vector<32x8xf32>
    %307 = vector.shape_cast %304 : vector<32x8xf32> to vector<1x32x8xf32>
    tpu.vector_store %arg20[%c2_178, %c0_179, %c0_180], %307 {strides = array<i32>} : memref<8x32x8xf32, #tpu.memory_space<vmem>>, vector<1x32x8xf32>,
    %308 = vector.extract_strided_slice %278 {offsets = [0, 16], sizes = [32, 8], strides = [1, 1]} : vector<32x64xf32> to vector<32x8xf32>
    %c2_181 = arith.constant 2 : index
    %c0_182 = arith.constant 0 : index
    %c0_183 = arith.constant 0 : index
    %309 = vector.load %arg21[%c2_181, %c0_182, %c0_183] : memref<8x32x8xf32, #tpu.memory_space<vmem>>, vector<1x32x8xf32>
    %310 = vector.shape_cast %309 : vector<1x32x8xf32> to vector<32x8xf32>
    %311 = vector.shape_cast %308 : vector<32x8xf32> to vector<1x32x8xf32>
    tpu.vector_store %arg21[%c2_181, %c0_182, %c0_183], %311 {strides = array<i32>} : memref<8x32x8xf32, #tpu.memory_space<vmem>>, vector<1x32x8xf32>,
    %312 = vector.extract_strided_slice %279 {offsets = [0, 16], sizes = [32, 8], strides = [1, 1]} : vector<32x64xf32> to vector<32x8xf32>
    %c2_184 = arith.constant 2 : index
    %c0_185 = arith.constant 0 : index
    %c0_186 = arith.constant 0 : index
    %313 = vector.load %arg22[%c2_184, %c0_185, %c0_186] : memref<8x32x8xf32, #tpu.memory_space<vmem>>, vector<1x32x8xf32>
    %314 = vector.shape_cast %313 : vector<1x32x8xf32> to vector<32x8xf32>
    %315 = vector.shape_cast %312 : vector<32x8xf32> to vector<1x32x8xf32>
    tpu.vector_store %arg22[%c2_184, %c0_185, %c0_186], %315 {strides = array<i32>} : memref<8x32x8xf32, #tpu.memory_space<vmem>>, vector<1x32x8xf32>,
    %316 = vector.extract_strided_slice %277 {offsets = [0, 24], sizes = [32, 8], strides = [1, 1]} : vector<32x64xf32> to vector<32x8xf32>
    %c3_187 = arith.constant 3 : index
    %c0_188 = arith.constant 0 : index
    %c0_189 = arith.constant 0 : index
    %317 = vector.load %arg20[%c3_187, %c0_188, %c0_189] : memref<8x32x8xf32, #tpu.memory_space<vmem>>, vector<1x32x8xf32>
    %318 = vector.shape_cast %317 : vector<1x32x8xf32> to vector<32x8xf32>
    %319 = vector.shape_cast %316 : vector<32x8xf32> to vector<1x32x8xf32>
    tpu.vector_store %arg20[%c3_187, %c0_188, %c0_189], %319 {strides = array<i32>} : memref<8x32x8xf32, #tpu.memory_space<vmem>>, vector<1x32x8xf32>,
    %320 = vector.extract_strided_slice %278 {offsets = [0, 24], sizes = [32, 8], strides = [1, 1]} : vector<32x64xf32> to vector<32x8xf32>
    %c3_190 = arith.constant 3 : index
    %c0_191 = arith.constant 0 : index
    %c0_192 = arith.constant 0 : index
    %321 = vector.load %arg21[%c3_190, %c0_191, %c0_192] : memref<8x32x8xf32, #tpu.memory_space<vmem>>, vector<1x32x8xf32>
    %322 = vector.shape_cast %321 : vector<1x32x8xf32> to vector<32x8xf32>
    %323 = vector.shape_cast %320 : vector<32x8xf32> to vector<1x32x8xf32>
    tpu.vector_store %arg21[%c3_190, %c0_191, %c0_192], %323 {strides = array<i32>} : memref<8x32x8xf32, #tpu.memory_space<vmem>>, vector<1x32x8xf32>,
    %324 = vector.extract_strided_slice %279 {offsets = [0, 24], sizes = [32, 8], strides = [1, 1]} : vector<32x64xf32> to vector<32x8xf32>
    %c3_193 = arith.constant 3 : index
    %c0_194 = arith.constant 0 : index
    %c0_195 = arith.constant 0 : index
    %325 = vector.load %arg22[%c3_193, %c0_194, %c0_195] : memref<8x32x8xf32, #tpu.memory_space<vmem>>, vector<1x32x8xf32>
    %326 = vector.shape_cast %325 : vector<1x32x8xf32> to vector<32x8xf32>
    %327 = vector.shape_cast %324 : vector<32x8xf32> to vector<1x32x8xf32>
    tpu.vector_store %arg22[%c3_193, %c0_194, %c0_195], %327 {strides = array<i32>} : memref<8x32x8xf32, #tpu.memory_space<vmem>>, vector<1x32x8xf32>,
    %328 = vector.extract_strided_slice %277 {offsets = [0, 32], sizes = [32, 8], strides = [1, 1]} : vector<32x64xf32> to vector<32x8xf32>
    %c4_196 = arith.constant 4 : index
    %c0_197 = arith.constant 0 : index
    %c0_198 = arith.constant 0 : index
    %329 = vector.load %arg20[%c4_196, %c0_197, %c0_198] : memref<8x32x8xf32, #tpu.memory_space<vmem>>, vector<1x32x8xf32>
    %330 = vector.shape_cast %329 : vector<1x32x8xf32> to vector<32x8xf32>
    %331 = vector.shape_cast %328 : vector<32x8xf32> to vector<1x32x8xf32>
    tpu.vector_store %arg20[%c4_196, %c0_197, %c0_198], %331 {strides = array<i32>} : memref<8x32x8xf32, #tpu.memory_space<vmem>>, vector<1x32x8xf32>,
    %332 = vector.extract_strided_slice %278 {offsets = [0, 32], sizes = [32, 8], strides = [1, 1]} : vector<32x64xf32> to vector<32x8xf32>
    %c4_199 = arith.constant 4 : index
    %c0_200 = arith.constant 0 : index
    %c0_201 = arith.constant 0 : index
    %333 = vector.load %arg21[%c4_199, %c0_200, %c0_201] : memref<8x32x8xf32, #tpu.memory_space<vmem>>, vector<1x32x8xf32>
    %334 = vector.shape_cast %333 : vector<1x32x8xf32> to vector<32x8xf32>
    %335 = vector.shape_cast %332 : vector<32x8xf32> to vector<1x32x8xf32>
    tpu.vector_store %arg21[%c4_199, %c0_200, %c0_201], %335 {strides = array<i32>} : memref<8x32x8xf32, #tpu.memory_space<vmem>>, vector<1x32x8xf32>,
    %336 = vector.extract_strided_slice %279 {offsets = [0, 32], sizes = [32, 8], strides = [1, 1]} : vector<32x64xf32> to vector<32x8xf32>
    %c4_202 = arith.constant 4 : index
    %c0_203 = arith.constant 0 : index
    %c0_204 = arith.constant 0 : index
    %337 = vector.load %arg22[%c4_202, %c0_203, %c0_204] : memref<8x32x8xf32, #tpu.memory_space<vmem>>, vector<1x32x8xf32>
    %338 = vector.shape_cast %337 : vector<1x32x8xf32> to vector<32x8xf32>
    %339 = vector.shape_cast %336 : vector<32x8xf32> to vector<1x32x8xf32>
    tpu.vector_store %arg22[%c4_202, %c0_203, %c0_204], %339 {strides = array<i32>} : memref<8x32x8xf32, #tpu.memory_space<vmem>>, vector<1x32x8xf32>,
    %340 = vector.extract_strided_slice %277 {offsets = [0, 40], sizes = [32, 8], strides = [1, 1]} : vector<32x64xf32> to vector<32x8xf32>
    %c5_205 = arith.constant 5 : index
    %c0_206 = arith.constant 0 : index
    %c0_207 = arith.constant 0 : index
    %341 = vector.load %arg20[%c5_205, %c0_206, %c0_207] : memref<8x32x8xf32, #tpu.memory_space<vmem>>, vector<1x32x8xf32>
    %342 = vector.shape_cast %341 : vector<1x32x8xf32> to vector<32x8xf32>
    %343 = vector.shape_cast %340 : vector<32x8xf32> to vector<1x32x8xf32>
    tpu.vector_store %arg20[%c5_205, %c0_206, %c0_207], %343 {strides = array<i32>} : memref<8x32x8xf32, #tpu.memory_space<vmem>>, vector<1x32x8xf32>,
    %344 = vector.extract_strided_slice %278 {offsets = [0, 40], sizes = [32, 8], strides = [1, 1]} : vector<32x64xf32> to vector<32x8xf32>
    %c5_208 = arith.constant 5 : index
    %c0_209 = arith.constant 0 : index
    %c0_210 = arith.constant 0 : index
    %345 = vector.load %arg21[%c5_208, %c0_209, %c0_210] : memref<8x32x8xf32, #tpu.memory_space<vmem>>, vector<1x32x8xf32>
    %346 = vector.shape_cast %345 : vector<1x32x8xf32> to vector<32x8xf32>
    %347 = vector.shape_cast %344 : vector<32x8xf32> to vector<1x32x8xf32>
    tpu.vector_store %arg21[%c5_208, %c0_209, %c0_210], %347 {strides = array<i32>} : memref<8x32x8xf32, #tpu.memory_space<vmem>>, vector<1x32x8xf32>,
    %348 = vector.extract_strided_slice %279 {offsets = [0, 40], sizes = [32, 8], strides = [1, 1]} : vector<32x64xf32> to vector<32x8xf32>
    %c5_211 = arith.constant 5 : index
    %c0_212 = arith.constant 0 : index
    %c0_213 = arith.constant 0 : index
    %349 = vector.load %arg22[%c5_211, %c0_212, %c0_213] : memref<8x32x8xf32, #tpu.memory_space<vmem>>, vector<1x32x8xf32>
    %350 = vector.shape_cast %349 : vector<1x32x8xf32> to vector<32x8xf32>
    %351 = vector.shape_cast %348 : vector<32x8xf32> to vector<1x32x8xf32>
    tpu.vector_store %arg22[%c5_211, %c0_212, %c0_213], %351 {strides = array<i32>} : memref<8x32x8xf32, #tpu.memory_space<vmem>>, vector<1x32x8xf32>,
    %352 = vector.extract_strided_slice %277 {offsets = [0, 48], sizes = [32, 8], strides = [1, 1]} : vector<32x64xf32> to vector<32x8xf32>
    %c6_214 = arith.constant 6 : index
    %c0_215 = arith.constant 0 : index
    %c0_216 = arith.constant 0 : index
    %353 = vector.load %arg20[%c6_214, %c0_215, %c0_216] : memref<8x32x8xf32, #tpu.memory_space<vmem>>, vector<1x32x8xf32>
    %354 = vector.shape_cast %353 : vector<1x32x8xf32> to vector<32x8xf32>
    %355 = vector.shape_cast %352 : vector<32x8xf32> to vector<1x32x8xf32>
    tpu.vector_store %arg20[%c6_214, %c0_215, %c0_216], %355 {strides = array<i32>} : memref<8x32x8xf32, #tpu.memory_space<vmem>>, vector<1x32x8xf32>,
    %356 = vector.extract_strided_slice %278 {offsets = [0, 48], sizes = [32, 8], strides = [1, 1]} : vector<32x64xf32> to vector<32x8xf32>
    %c6_217 = arith.constant 6 : index
    %c0_218 = arith.constant 0 : index
    %c0_219 = arith.constant 0 : index
    %357 = vector.load %arg21[%c6_217, %c0_218, %c0_219] : memref<8x32x8xf32, #tpu.memory_space<vmem>>, vector<1x32x8xf32>
    %358 = vector.shape_cast %357 : vector<1x32x8xf32> to vector<32x8xf32>
    %359 = vector.shape_cast %356 : vector<32x8xf32> to vector<1x32x8xf32>
    tpu.vector_store %arg21[%c6_217, %c0_218, %c0_219], %359 {strides = array<i32>} : memref<8x32x8xf32, #tpu.memory_space<vmem>>, vector<1x32x8xf32>,
    %360 = vector.extract_strided_slice %279 {offsets = [0, 48], sizes = [32, 8], strides = [1, 1]} : vector<32x64xf32> to vector<32x8xf32>
    %c6_220 = arith.constant 6 : index
    %c0_221 = arith.constant 0 : index
    %c0_222 = arith.constant 0 : index
    %361 = vector.load %arg22[%c6_220, %c0_221, %c0_222] : memref<8x32x8xf32, #tpu.memory_space<vmem>>, vector<1x32x8xf32>
    %362 = vector.shape_cast %361 : vector<1x32x8xf32> to vector<32x8xf32>
    %363 = vector.shape_cast %360 : vector<32x8xf32> to vector<1x32x8xf32>
    tpu.vector_store %arg22[%c6_220, %c0_221, %c0_222], %363 {strides = array<i32>} : memref<8x32x8xf32, #tpu.memory_space<vmem>>, vector<1x32x8xf32>,
    %364 = vector.extract_strided_slice %277 {offsets = [0, 56], sizes = [32, 8], strides = [1, 1]} : vector<32x64xf32> to vector<32x8xf32>
    %c7_223 = arith.constant 7 : index
    %c0_224 = arith.constant 0 : index
    %c0_225 = arith.constant 0 : index
    %365 = vector.load %arg20[%c7_223, %c0_224, %c0_225] : memref<8x32x8xf32, #tpu.memory_space<vmem>>, vector<1x32x8xf32>
    %366 = vector.shape_cast %365 : vector<1x32x8xf32> to vector<32x8xf32>
    %367 = vector.shape_cast %364 : vector<32x8xf32> to vector<1x32x8xf32>
    tpu.vector_store %arg20[%c7_223, %c0_224, %c0_225], %367 {strides = array<i32>} : memref<8x32x8xf32, #tpu.memory_space<vmem>>, vector<1x32x8xf32>,
    %368 = vector.extract_strided_slice %278 {offsets = [0, 56], sizes = [32, 8], strides = [1, 1]} : vector<32x64xf32> to vector<32x8xf32>
    %c7_226 = arith.constant 7 : index
    %c0_227 = arith.constant 0 : index
    %c0_228 = arith.constant 0 : index
    %369 = vector.load %arg21[%c7_226, %c0_227, %c0_228] : memref<8x32x8xf32, #tpu.memory_space<vmem>>, vector<1x32x8xf32>
    %370 = vector.shape_cast %369 : vector<1x32x8xf32> to vector<32x8xf32>
    %371 = vector.shape_cast %368 : vector<32x8xf32> to vector<1x32x8xf32>
    tpu.vector_store %arg21[%c7_226, %c0_227, %c0_228], %371 {strides = array<i32>} : memref<8x32x8xf32, #tpu.memory_space<vmem>>, vector<1x32x8xf32>,
    %372 = vector.extract_strided_slice %279 {offsets = [0, 56], sizes = [32, 8], strides = [1, 1]} : vector<32x64xf32> to vector<32x8xf32>
    %c7_229 = arith.constant 7 : index
    %c0_230 = arith.constant 0 : index
    %c0_231 = arith.constant 0 : index
    %373 = vector.load %arg22[%c7_229, %c0_230, %c0_231] : memref<8x32x8xf32, #tpu.memory_space<vmem>>, vector<1x32x8xf32>
    %374 = vector.shape_cast %373 : vector<1x32x8xf32> to vector<32x8xf32>
    %375 = vector.shape_cast %372 : vector<32x8xf32> to vector<1x32x8xf32>
    tpu.vector_store %arg22[%c7_229, %c0_230, %c0_231], %375 {strides = array<i32>} : memref<8x32x8xf32, #tpu.memory_space<vmem>>, vector<1x32x8xf32>,
    %c0_232 = arith.constant 0 : index
    %c0_233 = arith.constant 0 : index
    %c0_234 = arith.constant 0 : index
    %376 = vector.load %arg20[%c0_232, %c0_233, %c0_234] : memref<8x32x8xf32, #tpu.memory_space<vmem>>, vector<8x32x8xf32>
    %377 = arith.truncf %376 : vector<8x32x8xf32> to vector<8x32x8xbf16>
    %c0_235 = arith.constant 0 : index
    %c0_236 = arith.constant 0 : index
    %c0_237 = arith.constant 0 : index
    %378 = vector.load %arg21[%c0_235, %c0_236, %c0_237] : memref<8x32x8xf32, #tpu.memory_space<vmem>>, vector<8x32x8xf32>
    %379 = arith.truncf %378 : vector<8x32x8xf32> to vector<8x32x8xbf16>
    %c0_238 = arith.constant 0 : index
    %c0_239 = arith.constant 0 : index
    %c0_240 = arith.constant 0 : index
    %380 = vector.load %arg22[%c0_238, %c0_239, %c0_240] : memref<8x32x8xf32, #tpu.memory_space<vmem>>, vector<8x32x8xf32>
    %381 = arith.truncf %380 : vector<8x32x8xf32> to vector<8x32x8xbf16>
    "tpu.trace_start"() <{level = 10 : i32, message = "hmd,hnd->hmn"}> : () -> ()
    %cst_241 = arith.constant dense<0.000000e+00> : vector<8x32x32xf32>
    %382 = tpu.matmul %377, %379, %cst_241 {dimension_numbers = #tpu.dot_dimension_numbers<[2], [2], [1], [1], [0, 0, 0, 1, 1, 1], [0], [0]>} : vector<8x32x8xbf16>, vector<8x32x8xbf16>, vector<8x32x32xf32> -> vector<8x32x32xf32>
    "tpu.trace_stop"() : () -> ()
    %cst_242 = arith.constant 1.250000e-01 : f32
    %383 = vector.broadcast %cst_242 : f32 to vector<8x32x32xf32>
    %384 = arith.mulf %382, %383 : vector<8x32x32xf32>
    %385 = vector.shape_cast %14 : vector<32x32xf32> to vector<1x32x32xf32>
    %386 = vector.broadcast %385 : vector<1x32x32xf32> to vector<8x32x32xf32>
    %387 = arith.addf %384, %386 : vector<8x32x32xf32>
    %cst_243 = arith.constant dense<0xFF800000> : vector<8x32xf32>
    %388 = vector.multi_reduction <maximumf>, %387, %cst_243 [2] : vector<8x32x32xf32> to vector<8x32xf32>
    %389 = vector.shape_cast %388 : vector<8x32xf32> to vector<8x32x1xf32>
    %390 = vector.broadcast %389 : vector<8x32x1xf32> to vector<8x32x32xf32>
    %391 = arith.subf %387, %390 : vector<8x32x32xf32>
    %392 = math.exp %391 : vector<8x32x32xf32>
    %cst_244 = arith.constant dense<0.000000e+00> : vector<8x32xf32>
    %393 = vector.multi_reduction <add>, %392, %cst_244 [2] : vector<8x32x32xf32> to vector<8x32xf32>
    %394 = vector.shape_cast %393 : vector<8x32xf32> to vector<8x32x1xf32>
    %395 = tpu.reciprocal %394 {approx = true} : vector<8x32x1xf32> -> vector<8x32x1xf32>
    %396 = vector.broadcast %395 : vector<8x32x1xf32> to vector<8x32x32xf32>
    %397 = arith.mulf %392, %396 : vector<8x32x32xf32>
    %398 = arith.truncf %397 : vector<8x32x32xf32> to vector<8x32x32xbf16>
    "tpu.trace_start"() <{level = 10 : i32, message = "hmn,hnd->hmd"}> : () -> ()
    %cst_245 = arith.constant dense<0.000000e+00> : vector<8x32x8xf32>
    %399 = tpu.matmul %398, %381, %cst_245 {dimension_numbers = #tpu.dot_dimension_numbers<[2], [1], [1], [2], [0, 0, 0, 1, 1, 2], [0], [0]>} : vector<8x32x32xbf16>, vector<8x32x8xbf16>, vector<8x32x8xf32> -> vector<8x32x8xf32>
    "tpu.trace_stop"() : () -> ()
    %400 = vector.extract_strided_slice %399 {offsets = [0, 0, 0], sizes = [1, 32, 8], strides = [1, 1, 1]} : vector<8x32x8xf32> to vector<1x32x8xf32>
    %401 = vector.shape_cast %400 : vector<1x32x8xf32> to vector<32x8xf32>
    %c0_246 = arith.constant 0 : index
    %c0_247 = arith.constant 0 : index
    %402 = vector.load %arg23[%c0_246, %c0_247] : memref<32x64xf32, #tpu.memory_space<vmem>>, vector<32x8xf32>
    tpu.vector_store %arg23[%c0_246, %c0_247], %401 {strides = array<i32>} : memref<32x64xf32, #tpu.memory_space<vmem>>, vector<32x8xf32>,
    %403 = vector.extract_strided_slice %399 {offsets = [1, 0, 0], sizes = [1, 32, 8], strides = [1, 1, 1]} : vector<8x32x8xf32> to vector<1x32x8xf32>
    %404 = vector.shape_cast %403 : vector<1x32x8xf32> to vector<32x8xf32>
    %c0_248 = arith.constant 0 : index
    %c8_249 = arith.constant 8 : index
    %405 = vector.load %arg23[%c0_248, %c8_249] : memref<32x64xf32, #tpu.memory_space<vmem>>, vector<32x8xf32>
    tpu.vector_store %arg23[%c0_248, %c8_249], %404 {strides = array<i32>} : memref<32x64xf32, #tpu.memory_space<vmem>>, vector<32x8xf32>,
    %406 = vector.extract_strided_slice %399 {offsets = [2, 0, 0], sizes = [1, 32, 8], strides = [1, 1, 1]} : vector<8x32x8xf32> to vector<1x32x8xf32>
    %407 = vector.shape_cast %406 : vector<1x32x8xf32> to vector<32x8xf32>
    %c0_250 = arith.constant 0 : index
    %c16_251 = arith.constant 16 : index
    %408 = vector.load %arg23[%c0_250, %c16_251] : memref<32x64xf32, #tpu.memory_space<vmem>>, vector<32x8xf32>
    tpu.vector_store %arg23[%c0_250, %c16_251], %407 {strides = array<i32>} : memref<32x64xf32, #tpu.memory_space<vmem>>, vector<32x8xf32>,
    %409 = vector.extract_strided_slice %399 {offsets = [3, 0, 0], sizes = [1, 32, 8], strides = [1, 1, 1]} : vector<8x32x8xf32> to vector<1x32x8xf32>
    %410 = vector.shape_cast %409 : vector<1x32x8xf32> to vector<32x8xf32>
    %c0_252 = arith.constant 0 : index
    %c24_253 = arith.constant 24 : index
    %411 = vector.load %arg23[%c0_252, %c24_253] : memref<32x64xf32, #tpu.memory_space<vmem>>, vector<32x8xf32>
    tpu.vector_store %arg23[%c0_252, %c24_253], %410 {strides = array<i32>} : memref<32x64xf32, #tpu.memory_space<vmem>>, vector<32x8xf32>,
    %412 = vector.extract_strided_slice %399 {offsets = [4, 0, 0], sizes = [1, 32, 8], strides = [1, 1, 1]} : vector<8x32x8xf32> to vector<1x32x8xf32>
    %413 = vector.shape_cast %412 : vector<1x32x8xf32> to vector<32x8xf32>
    %c0_254 = arith.constant 0 : index
    %c32_255 = arith.constant 32 : index
    %414 = vector.load %arg23[%c0_254, %c32_255] : memref<32x64xf32, #tpu.memory_space<vmem>>, vector<32x8xf32>
    tpu.vector_store %arg23[%c0_254, %c32_255], %413 {strides = array<i32>} : memref<32x64xf32, #tpu.memory_space<vmem>>, vector<32x8xf32>,
    %415 = vector.extract_strided_slice %399 {offsets = [5, 0, 0], sizes = [1, 32, 8], strides = [1, 1, 1]} : vector<8x32x8xf32> to vector<1x32x8xf32>
    %416 = vector.shape_cast %415 : vector<1x32x8xf32> to vector<32x8xf32>
    %c0_256 = arith.constant 0 : index
    %c40_257 = arith.constant 40 : index
    %417 = vector.load %arg23[%c0_256, %c40_257] : memref<32x64xf32, #tpu.memory_space<vmem>>, vector<32x8xf32>
    tpu.vector_store %arg23[%c0_256, %c40_257], %416 {strides = array<i32>} : memref<32x64xf32, #tpu.memory_space<vmem>>, vector<32x8xf32>,
    %418 = vector.extract_strided_slice %399 {offsets = [6, 0, 0], sizes = [1, 32, 8], strides = [1, 1, 1]} : vector<8x32x8xf32> to vector<1x32x8xf32>
    %419 = vector.shape_cast %418 : vector<1x32x8xf32> to vector<32x8xf32>
    %c0_258 = arith.constant 0 : index
    %c48_259 = arith.constant 48 : index
    %420 = vector.load %arg23[%c0_258, %c48_259] : memref<32x64xf32, #tpu.memory_space<vmem>>, vector<32x8xf32>
    tpu.vector_store %arg23[%c0_258, %c48_259], %419 {strides = array<i32>} : memref<32x64xf32, #tpu.memory_space<vmem>>, vector<32x8xf32>,
    %421 = vector.extract_strided_slice %399 {offsets = [7, 0, 0], sizes = [1, 32, 8], strides = [1, 1, 1]} : vector<8x32x8xf32> to vector<1x32x8xf32>
    %422 = vector.shape_cast %421 : vector<1x32x8xf32> to vector<32x8xf32>
    %c0_260 = arith.constant 0 : index
    %c56_261 = arith.constant 56 : index
    %423 = vector.load %arg23[%c0_260, %c56_261] : memref<32x64xf32, #tpu.memory_space<vmem>>, vector<32x8xf32>
    tpu.vector_store %arg23[%c0_260, %c56_261], %422 {strides = array<i32>} : memref<32x64xf32, #tpu.memory_space<vmem>>, vector<32x8xf32>,
    %c0_262 = arith.constant 0 : index
    %c0_263 = arith.constant 0 : index
    %424 = vector.load %arg23[%c0_262, %c0_263] : memref<32x64xf32, #tpu.memory_space<vmem>>, vector<32x64xf32>
    %425 = arith.truncf %424 : vector<32x64xf32> to vector<32x64xbf16>
    %c1_264 = arith.constant 1 : index
    %c0_265 = arith.constant 0 : index
    %c0_266 = arith.constant 0 : index
    %426 = vector.load %arg5[%c1_264, %c0_265, %c0_266] : memref<2x64x64xbf16, #tpu.memory_space<vmem>>, vector<1x64x64xbf16>
    %427 = vector.shape_cast %426 : vector<1x64x64xbf16> to vector<64x64xbf16>
    %cst_267 = arith.constant dense<0.000000e+00> : vector<32x64xf32>
    %428 = tpu.matmul %425, %427, %cst_267 {dimension_numbers = #tpu.dot_dimension_numbers<[1], [0], [0], [1], [0, 0, 1, 1], [], []>} : vector<32x64xbf16>, vector<64x64xbf16>, vector<32x64xf32> -> vector<32x64xf32>
    %429 = arith.addf %246, %428 : vector<32x64xf32>
    %c1_268 = arith.constant 1 : index
    %c0_269 = arith.constant 0 : index
    %c0_270 = arith.constant 0 : index
    %430 = vector.load %arg6[%c1_268, %c0_269, %c0_270] : memref<2x1x64xf32, #tpu.memory_space<vmem>>, vector<1x1x64xf32>
    %431 = vector.shape_cast %430 : vector<1x1x64xf32> to vector<1x64xf32>
    %432 = vector.broadcast %431 : vector<1x64xf32> to vector<32x64xf32>
    %433 = arith.addf %429, %432 : vector<32x64xf32>
    %c1_271 = arith.constant 1 : index
    %c0_272 = arith.constant 0 : index
    %c0_273 = arith.constant 0 : index
    %434 = vector.load %arg13[%c1_271, %c0_272, %c0_273] : memref<2x1x64xf32, #tpu.memory_space<vmem>>, vector<1x1x64xf32>
    %435 = vector.shape_cast %434 : vector<1x1x64xf32> to vector<1x64xf32>
    %c1_274 = arith.constant 1 : index
    %c0_275 = arith.constant 0 : index
    %c0_276 = arith.constant 0 : index
    %436 = vector.load %arg14[%c1_274, %c0_275, %c0_276] : memref<2x1x64xf32, #tpu.memory_space<vmem>>, vector<1x1x64xf32>
    %437 = vector.shape_cast %436 : vector<1x1x64xf32> to vector<1x64xf32>
    %cst_277 = arith.constant dense<0.000000e+00> : vector<32xf32>
    %438 = vector.multi_reduction <add>, %433, %cst_277 [1] : vector<32x64xf32> to vector<32xf32>
    %439 = vector.shape_cast %438 : vector<32xf32> to vector<32x1xf32>
    %cst_278 = arith.constant 6.400000e+01 : f32
    %440 = vector.broadcast %cst_278 : f32 to vector<32x1xf32>
    %441 = arith.divf %439, %440 : vector<32x1xf32>
    %442 = vector.broadcast %441 : vector<32x1xf32> to vector<32x64xf32>
    %443 = arith.subf %433, %442 : vector<32x64xf32>
    %444 = arith.mulf %443, %443 : vector<32x64xf32>
    %cst_279 = arith.constant dense<0.000000e+00> : vector<32xf32>
    %445 = vector.multi_reduction <add>, %444, %cst_279 [1] : vector<32x64xf32> to vector<32xf32>
    %446 = vector.shape_cast %445 : vector<32xf32> to vector<32x1xf32>
    %cst_280 = arith.constant 6.400000e+01 : f32
    %447 = vector.broadcast %cst_280 : f32 to vector<32x1xf32>
    %448 = arith.divf %446, %447 : vector<32x1xf32>
    %449 = vector.broadcast %441 : vector<32x1xf32> to vector<32x64xf32>
    %450 = arith.subf %433, %449 : vector<32x64xf32>
    %cst_281 = arith.constant 9.99999974E-6 : f32
    %451 = vector.broadcast %cst_281 : f32 to vector<32x1xf32>
    %452 = arith.addf %448, %451 : vector<32x1xf32>
    %453 = math.rsqrt %452 : vector<32x1xf32>
    %454 = vector.broadcast %453 : vector<32x1xf32> to vector<32x64xf32>
    %455 = arith.mulf %450, %454 : vector<32x64xf32>
    %456 = vector.broadcast %435 : vector<1x64xf32> to vector<32x64xf32>
    %457 = arith.mulf %455, %456 : vector<32x64xf32>
    %458 = vector.broadcast %437 : vector<1x64xf32> to vector<32x64xf32>
    %459 = arith.addf %457, %458 : vector<32x64xf32>
    %460 = arith.truncf %459 : vector<32x64xf32> to vector<32x64xbf16>
    %c1_282 = arith.constant 1 : index
    %c0_283 = arith.constant 0 : index
    %c0_284 = arith.constant 0 : index
    %461 = vector.load %arg7[%c1_282, %c0_283, %c0_284] : memref<2x64x256xbf16, #tpu.memory_space<vmem>>, vector<1x64x256xbf16>
    %462 = vector.shape_cast %461 : vector<1x64x256xbf16> to vector<64x256xbf16>
    %cst_285 = arith.constant dense<0.000000e+00> : vector<32x256xf32>
    %463 = tpu.matmul %460, %462, %cst_285 {dimension_numbers = #tpu.dot_dimension_numbers<[1], [0], [0], [1], [0, 0, 1, 1], [], []>} : vector<32x64xbf16>, vector<64x256xbf16>, vector<32x256xf32> -> vector<32x256xf32>
    %c1_286 = arith.constant 1 : index
    %c0_287 = arith.constant 0 : index
    %c0_288 = arith.constant 0 : index
    %464 = vector.load %arg8[%c1_286, %c0_287, %c0_288] : memref<2x1x256xf32, #tpu.memory_space<vmem>>, vector<1x1x256xf32>
    %465 = vector.shape_cast %464 : vector<1x1x256xf32> to vector<1x256xf32>
    %466 = vector.broadcast %465 : vector<1x256xf32> to vector<32x256xf32>
    %467 = arith.addf %463, %466 : vector<32x256xf32>
    %cst_289 = arith.constant 0.000000e+00 : f32
    %468 = vector.broadcast %cst_289 : f32 to vector<32x256xf32>
    %469 = arith.maximumf %467, %468 : vector<32x256xf32>
    %470 = arith.truncf %469 : vector<32x256xf32> to vector<32x256xbf16>
    %c1_290 = arith.constant 1 : index
    %c0_291 = arith.constant 0 : index
    %c0_292 = arith.constant 0 : index
    %471 = vector.load %arg9[%c1_290, %c0_291, %c0_292] : memref<2x256x64xbf16, #tpu.memory_space<vmem>>, vector<1x256x64xbf16>
    %472 = vector.shape_cast %471 : vector<1x256x64xbf16> to vector<256x64xbf16>
    %cst_293 = arith.constant dense<0.000000e+00> : vector<32x64xf32>
    %473 = tpu.matmul %470, %472, %cst_293 {dimension_numbers = #tpu.dot_dimension_numbers<[1], [0], [0], [1], [0, 0, 1, 1], [], []>} : vector<32x256xbf16>, vector<256x64xbf16>, vector<32x64xf32> -> vector<32x64xf32>
    %474 = arith.addf %433, %473 : vector<32x64xf32>
    %c1_294 = arith.constant 1 : index
    %c0_295 = arith.constant 0 : index
    %c0_296 = arith.constant 0 : index
    %475 = vector.load %arg10[%c1_294, %c0_295, %c0_296] : memref<2x1x64xf32, #tpu.memory_space<vmem>>, vector<1x1x64xf32>
    %476 = vector.shape_cast %475 : vector<1x1x64xf32> to vector<1x64xf32>
    %477 = vector.broadcast %476 : vector<1x64xf32> to vector<32x64xf32>
    %478 = arith.addf %474, %477 : vector<32x64xf32>
    %c0_297 = arith.constant 0 : index
    %c0_298 = arith.constant 0 : index
    %479 = vector.load %arg15[%c0_297, %c0_298] : memref<1x64xf32, #tpu.memory_space<vmem>>, vector<1x64xf32>
    %c0_299 = arith.constant 0 : index
    %c0_300 = arith.constant 0 : index
    %480 = vector.load %arg16[%c0_299, %c0_300] : memref<1x64xf32, #tpu.memory_space<vmem>>, vector<1x64xf32>
    %cst_301 = arith.constant dense<0.000000e+00> : vector<32xf32>
    %481 = vector.multi_reduction <add>, %478, %cst_301 [1] : vector<32x64xf32> to vector<32xf32>
    %482 = vector.shape_cast %481 : vector<32xf32> to vector<32x1xf32>
    %cst_302 = arith.constant 6.400000e+01 : f32
    %483 = vector.broadcast %cst_302 : f32 to vector<32x1xf32>
    %484 = arith.divf %482, %483 : vector<32x1xf32>
    %485 = vector.broadcast %484 : vector<32x1xf32> to vector<32x64xf32>
    %486 = arith.subf %478, %485 : vector<32x64xf32>
    %487 = arith.mulf %486, %486 : vector<32x64xf32>
    %cst_303 = arith.constant dense<0.000000e+00> : vector<32xf32>
    %488 = vector.multi_reduction <add>, %487, %cst_303 [1] : vector<32x64xf32> to vector<32xf32>
    %489 = vector.shape_cast %488 : vector<32xf32> to vector<32x1xf32>
    %cst_304 = arith.constant 6.400000e+01 : f32
    %490 = vector.broadcast %cst_304 : f32 to vector<32x1xf32>
    %491 = arith.divf %489, %490 : vector<32x1xf32>
    %492 = vector.broadcast %484 : vector<32x1xf32> to vector<32x64xf32>
    %493 = arith.subf %478, %492 : vector<32x64xf32>
    %cst_305 = arith.constant 9.99999974E-6 : f32
    %494 = vector.broadcast %cst_305 : f32 to vector<32x1xf32>
    %495 = arith.addf %491, %494 : vector<32x1xf32>
    %496 = math.rsqrt %495 : vector<32x1xf32>
    %497 = vector.broadcast %496 : vector<32x1xf32> to vector<32x64xf32>
    %498 = arith.mulf %493, %497 : vector<32x64xf32>
    %499 = vector.broadcast %479 : vector<1x64xf32> to vector<32x64xf32>
    %500 = arith.mulf %498, %499 : vector<32x64xf32>
    %501 = vector.broadcast %480 : vector<1x64xf32> to vector<32x64xf32>
    %502 = arith.addf %500, %501 : vector<32x64xf32>
    %503 = arith.truncf %502 : vector<32x64xf32> to vector<32x64xbf16>
    %c0_306 = arith.constant 0 : index
    %c0_307 = arith.constant 0 : index
    %504 = vector.load %arg17[%c0_306, %c0_307] : memref<64x128xbf16, #tpu.memory_space<vmem>>, vector<64x128xbf16>
    %cst_308 = arith.constant dense<0.000000e+00> : vector<32x128xf32>
    %505 = tpu.matmul %503, %504, %cst_308 {dimension_numbers = #tpu.dot_dimension_numbers<[1], [0], [0], [1], [0, 0, 1, 1], [], []>} : vector<32x64xbf16>, vector<64x128xbf16>, vector<32x128xf32> -> vector<32x128xf32>
    %c0_309 = arith.constant 0 : index
    %c0_310 = arith.constant 0 : index
    %506 = vector.load %arg18[%c0_309, %c0_310] : memref<1x128xf32, #tpu.memory_space<vmem>>, vector<1x128xf32>
    %507 = vector.broadcast %506 : vector<1x128xf32> to vector<32x128xf32>
    %508 = arith.addf %505, %507 : vector<32x128xf32>
    %c0_311 = arith.constant 0 : index
    %c0_312 = arith.constant 0 : index
    %509 = vector.load %arg19[%c0_311, %c0_312] : memref<32x128xf32, #tpu.memory_space<vmem>>, vector<32x128xf32>
    tpu.vector_store %arg19[%c0_311, %c0_312], %508 {strides = array<i32>} : memref<32x128xf32, #tpu.memory_space<vmem>>, vector<32x128xf32>,
    return
  }
}

</mosaic_0001>

<llo_original>
// kernel: heart_gpt_forward.1
$region0: #{heart_gpt_forward.1}
  #allocation0 [shape = 'u32[]', space=smem, size = 0x4, offset = 0x4, fixed_abs, tag = 'smem constant byte address 0x4 - core index']
  #allocation1 [shape = 'u32[144,128]{1,0:T(1,128)}', space=vmem, size = 0x12000, scoped, tag = 'internal scratch']
  #allocation2 [shape = 'f32[8,32,8]{2,1,0:T(8,128)}', space=vmem, size = 0x20000, scoped, tag = 'scratch operand']
  #allocation3 [shape = 'f32[8,32,8]{2,1,0:T(8,128)}', space=vmem, size = 0x20000, scoped, tag = 'scratch operand']
  #allocation4 [shape = 'f32[8,32,8]{2,1,0:T(8,128)}', space=vmem, size = 0x20000, scoped, tag = 'scratch operand']
  #allocation5 [shape = 'f32[32,64]{1,0:T(8,128)}', space=vmem, size = 0x4000, scoped, tag = 'scratch operand']
  %s0 = inlined_call_operand.vmem [shape: s32[32,1], index: 0, kind: input, shape index: {}]
  %s1 = inlined_call_operand.vmem [shape: f32[32,32], index: 1, kind: input, shape index: {}]
  %s2 = inlined_call_operand.vmem [shape: f32[128,64], index: 2, kind: input, shape index: {}]
  %s3 = inlined_call_operand.vmem [shape: f32[16,64], index: 3, kind: input, shape index: {}]
  %s4 = inlined_call_operand.vmem [shape: bf16[2,64,384], index: 4, kind: input, shape index: {}]
  %s5 = inlined_call_operand.vmem [shape: bf16[2,64,64], index: 5, kind: input, shape index: {}]
  %s6 = inlined_call_operand.vmem [shape: f32[2,1,64], index: 6, kind: input, shape index: {}]
  %s7 = inlined_call_operand.vmem [shape: bf16[2,64,256], index: 7, kind: input, shape index: {}]
  %s8 = inlined_call_operand.vmem [shape: f32[2,1,256], index: 8, kind: input, shape index: {}]
  %s9 = inlined_call_operand.vmem [shape: bf16[2,256,64], index: 9, kind: input, shape index: {}]
  %s10 = inlined_call_operand.vmem [shape: f32[2,1,64], index: 10, kind: input, shape index: {}]
  %s11 = inlined_call_operand.vmem [shape: f32[2,1,64], index: 11, kind: input, shape index: {}]
  %s12 = inlined_call_operand.vmem [shape: f32[2,1,64], index: 12, kind: input, shape index: {}]
  %s13 = inlined_call_operand.vmem [shape: f32[2,1,64], index: 13, kind: input, shape index: {}]
  %s14 = inlined_call_operand.vmem [shape: f32[2,1,64], index: 14, kind: input, shape index: {}]
  %s15 = inlined_call_operand.vmem [shape: f32[1,64], index: 15, kind: input, shape index: {}]
  %s16 = inlined_call_operand.vmem [shape: f32[1,64], index: 16, kind: input, shape index: {}]
  %s17 = inlined_call_operand.vmem [shape: bf16[64,128], index: 17, kind: input, shape index: {}]
  %s18 = inlined_call_operand.vmem [shape: f32[1,128], index: 18, kind: input, shape index: {}]
  %s19 = inlined_call_operand.hbm [shape: f32[32,128], index: 19, kind: output, shape index: {}]
  %s20 = sld [smem:[#allocation0]]
  $region86: #{heart_gpt_forward.1} parent=0
    _
  %s22 = ssub.s32 1, %s20
  %s23 = scalar_select 0, %s22, %s20
  $region1: #{heart_gpt_forward.1} parent=0
    #allocation6 [shape = 'u8[16384]{0}', space=vmem, size = 0x4000, scoped, tag = 'output window, operand 0, single buffered']
    #allocation7 [shape = 's32[1]{0}', space=sflag, size = 0x4, scoped, tag = 'scoped memory for heart_gpt_forward.1']
    %24 = vsyncpa [#allocation7], 0
    // Predicated region
    $region2: #{heart_gpt_forward.1} parent=1 // pred_check
      _
    $region3: #{heart_gpt_forward.1} parent=1 // pred_check_branch
      %26 = sbr.rel (0) target = $region5
    $region4: #{heart_gpt_forward.1} parent=1 // pred_region
      _
    $region5: #{heart_gpt_forward.1} parent=1 // pred_fallthru
      _
    // Predicated region
    $region6: #{heart_gpt_forward.1} parent=1 // pred_check
      _
    $region7: #{heart_gpt_forward.1} parent=1 // pred_check_branch
      %28 = sbr.rel (0) target = $region9
    $region8: #{heart_gpt_forward.1} parent=1 // pred_region
      _
    $region9: #{heart_gpt_forward.1} parent=1 // pred_fallthru
      _
    // Predicated region
    $region10: #{heart_gpt_forward.1} parent=1 // pred_check
      _
    $region11: #{heart_gpt_forward.1} parent=1 // pred_check_branch
      %30 = sbr.rel (0) target = $region13
    $region12: #{heart_gpt_forward.1} parent=1 // pred_region
      _
    $region13: #{heart_gpt_forward.1} parent=1 // pred_fallthru
      _
    // Predicated region
    $region14: #{heart_gpt_forward.1} parent=1 // pred_check
      _
    $region15: #{heart_gpt_forward.1} parent=1 // pred_check_branch
      %32 = sbr.rel (0) target = $region17
    $region16: #{heart_gpt_forward.1} parent=1 // pred_region
      _
    $region17: #{heart_gpt_forward.1} parent=1 // pred_fallthru
      _
    // Predicated region
    $region18: #{heart_gpt_forward.1} parent=1 // pred_check
      _
    $region19: #{heart_gpt_forward.1} parent=1 // pred_check_branch
      %34 = sbr.rel (0) target = $region21
    $region20: #{heart_gpt_forward.1} parent=1 // pred_region
      _
    $region21: #{heart_gpt_forward.1} parent=1 // pred_fallthru
      _
    // Predicated region
    $region22: #{heart_gpt_forward.1} parent=1 // pred_check
      _
    $region23: #{heart_gpt_forward.1} parent=1 // pred_check_branch
      %36 = sbr.rel (0) target = $region25
    $region24: #{heart_gpt_forward.1} parent=1 // pred_region
      _
    $region25: #{heart_gpt_forward.1} parent=1 // pred_fallthru
      _
    // Predicated region
    $region26: #{heart_gpt_forward.1} parent=1 // pred_check
      _
    $region27: #{heart_gpt_forward.1} parent=1 // pred_check_branch
      %38 = sbr.rel (0) target = $region29
    $region28: #{heart_gpt_forward.1} parent=1 // pred_region
      _
    $region29: #{heart_gpt_forward.1} parent=1 // pred_fallthru
      _
    // Predicated region
    $region30: #{heart_gpt_forward.1} parent=1 // pred_check
      _
    $region31: #{heart_gpt_forward.1} parent=1 // pred_check_branch
      %40 = sbr.rel (0) target = $region33
    $region32: #{heart_gpt_forward.1} parent=1 // pred_region
      _
    $region33: #{heart_gpt_forward.1} parent=1 // pred_fallthru
      _
    // Predicated region
    $region34: #{heart_gpt_forward.1} parent=1 // pred_check
      _
    $region35: #{heart_gpt_forward.1} parent=1 // pred_check_branch
      %42 = sbr.rel (0) target = $region37
    $region36: #{heart_gpt_forward.1} parent=1 // pred_region
      _
    $region37: #{heart_gpt_forward.1} parent=1 // pred_fallthru
      _
    // Predicated region
    $region38: #{heart_gpt_forward.1} parent=1 // pred_check
      _
    $region39: #{heart_gpt_forward.1} parent=1 // pred_check_branch
      %44 = sbr.rel (0) target = $region41
    $region40: #{heart_gpt_forward.1} parent=1 // pred_region
      _
    $region41: #{heart_gpt_forward.1} parent=1 // pred_fallthru
      _
    // Predicated region
    $region42: #{heart_gpt_forward.1} parent=1 // pred_check
      _
    $region43: #{heart_gpt_forward.1} parent=1 // pred_check_branch
      %46 = sbr.rel (0) target = $region45
    $region44: #{heart_gpt_forward.1} parent=1 // pred_region
      _
    $region45: #{heart_gpt_forward.1} parent=1 // pred_fallthru
      _
    // Predicated region
    $region46: #{heart_gpt_forward.1} parent=1 // pred_check
      _
    $region47: #{heart_gpt_forward.1} parent=1 // pred_check_branch
      %48 = sbr.rel (0) target = $region49
    $region48: #{heart_gpt_forward.1} parent=1 // pred_region
      _
    $region49: #{heart_gpt_forward.1} parent=1 // pred_fallthru
      _
    // Predicated region
    $region50: #{heart_gpt_forward.1} parent=1 // pred_check
      _
    $region51: #{heart_gpt_forward.1} parent=1 // pred_check_branch
      %50 = sbr.rel (0) target = $region53
    $region52: #{heart_gpt_forward.1} parent=1 // pred_region
      _
    $region53: #{heart_gpt_forward.1} parent=1 // pred_fallthru
      _
    // Predicated region
    $region54: #{heart_gpt_forward.1} parent=1 // pred_check
      _
    $region55: #{heart_gpt_forward.1} parent=1 // pred_check_branch
      %52 = sbr.rel (0) target = $region57
    $region56: #{heart_gpt_forward.1} parent=1 // pred_region
      _
    $region57: #{heart_gpt_forward.1} parent=1 // pred_fallthru
      _
    // Predicated region
    $region58: #{heart_gpt_forward.1} parent=1 // pred_check
      _
    $region59: #{heart_gpt_forward.1} parent=1 // pred_check_branch
      %54 = sbr.rel (0) target = $region61
    $region60: #{heart_gpt_forward.1} parent=1 // pred_region
      _
    $region61: #{heart_gpt_forward.1} parent=1 // pred_fallthru
      _
    // Predicated region
    $region62: #{heart_gpt_forward.1} parent=1 // pred_check
      _
    $region63: #{heart_gpt_forward.1} parent=1 // pred_check_branch
      %56 = sbr.rel (0) target = $region65
    $region64: #{heart_gpt_forward.1} parent=1 // pred_region
      _
    $region65: #{heart_gpt_forward.1} parent=1 // pred_fallthru
      _
    // Predicated region
    $region66: #{heart_gpt_forward.1} parent=1 // pred_check
      _
    $region67: #{heart_gpt_forward.1} parent=1 // pred_check_branch
      %58 = sbr.rel (0) target = $region69
    $region68: #{heart_gpt_forward.1} parent=1 // pred_region
      _
    $region69: #{heart_gpt_forward.1} parent=1 // pred_fallthru
      _
    // Predicated region
    $region70: #{heart_gpt_forward.1} parent=1 // pred_check
      _
    $region71: #{heart_gpt_forward.1} parent=1 // pred_check_branch
      %60 = sbr.rel (0) target = $region73
    $region72: #{heart_gpt_forward.1} parent=1 // pred_region
      _
    $region73: #{heart_gpt_forward.1} parent=1 // pred_fallthru
      _
    // Predicated region
    $region74: #{heart_gpt_forward.1} parent=1 // pred_check
      _
    $region75: #{heart_gpt_forward.1} parent=1 // pred_check_branch
      %62 = sbr.rel (0) target = $region77
    $region76: #{heart_gpt_forward.1} parent=1 // pred_region
      _
    $region77: #{heart_gpt_forward.1} parent=1 // pred_fallthru
      _
    %v64 = vlaneseq
    %v65 = vand.u32 %v64, 127
    %v66 = vld [vmem:[%s0] sm:$0xff]
    %v67 = vld [vmem:[%s0 + $0x8] sm:$0xff]
    %v68 = vld [vmem:[%s0 + $0x10] sm:$0xff]
    %v69 = vld [vmem:[%s0 + $0x18] sm:$0xff]
    %70 = vset.pattern.permute.xlu0 0
    %71 = vperm.xlu0 %70, %v66
    %v72 = vpop.permute.xlu0 %71
    %73 = vset.pattern.permute.xlu0 0
    %74 = vperm.xlu0 %73, %v67
    %v75 = vpop.permute.xlu0 %74
    %76 = vset.pattern.permute.xlu0 0
    %77 = vperm.xlu0 %76, %v68
    %v78 = vpop.permute.xlu0 %77
    %79 = vset.pattern.permute.xlu0 0
    %80 = vperm.xlu0 %79, %v69
    %v81 = vpop.permute.xlu0 %80
    %vm82 = vcmp.eq.s32.totalorder %v65, %v72
    %vm83 = vcmp.eq.s32.totalorder %v65, %v75
    %vm84 = vcmp.eq.s32.totalorder %v65, %v78
    %vm85 = vcmp.eq.s32.totalorder %v65, %v81
    %v86 = vsel %vm82, 1, 0
    %v87 = vsel %vm83, 1, 0
    %v88 = vsel %vm84, 1, 0
    %v89 = vsel %vm85, 1, 0
    %v90 = vcvt.s32.f32 %v86
    %v91 = vcvt.s32.f32 %v87
    %v92 = vcvt.s32.f32 %v88
    %v93 = vcvt.s32.f32 %v89
    %v94 = vld [vmem:[%s2] sm:$0xff]
    %v95 = vld [vmem:[%s2 + $0x8] sm:$0xff]
    %v96 = vld [vmem:[%s2 + $0x10] sm:$0xff]
    %v97 = vld [vmem:[%s2 + $0x18] sm:$0xff]
    %v98 = vld [vmem:[%s2 + $0x20] sm:$0xff]
    %v99 = vld [vmem:[%s2 + $0x28] sm:$0xff]
    %v100 = vld [vmem:[%s2 + $0x30] sm:$0xff]
    %v101 = vld [vmem:[%s2 + $0x38] sm:$0xff]
    %v102 = vld [vmem:[%s2 + $0x40] sm:$0xff]
    %v103 = vld [vmem:[%s2 + $0x48] sm:$0xff]
    %v104 = vld [vmem:[%s2 + $0x50] sm:$0xff]
    %v105 = vld [vmem:[%s2 + $0x58] sm:$0xff]
    %v106 = vld [vmem:[%s2 + $0x60] sm:$0xff]
    %v107 = vld [vmem:[%s2 + $0x68] sm:$0xff]
    %v108 = vld [vmem:[%s2 + $0x70] sm:$0xff]
    %v109 = vld [vmem:[%s2 + $0x78] sm:$0xff]
    %110 = vmatprep.subr.mxu0 0.0
    %111 = vmatpush1.msra.mxu0 %v94
    %112 = vmatprep.subr.mxu0 0.0
    %113 = vmatpush1.msra.mxu0 %v95
    %114 = vmatprep.subr.mxu0 0.0
    %115 = vmatpush1.msra.mxu0 %v96
    %116 = vmatprep.subr.mxu0 0.0
    %117 = vmatpush1.msra.mxu0 %v97
    %118 = vmatprep.subr.mxu0 0.0
    %119 = vmatpush1.msra.mxu0 %v98
    %120 = vmatprep.subr.mxu0 0.0
    %121 = vmatpush1.msra.mxu0 %v99
    %122 = vmatprep.subr.mxu0 0.0
    %123 = vmatpush1.msra.mxu0 %v100
    %124 = vmatprep.subr.mxu0 0.0
    %125 = vmatpush1.msra.mxu0 %v101
    %126 = vmatprep.subr.mxu0 0.0
    %127 = vmatpush1.msra.mxu0 %v102
    %128 = vmatprep.subr.mxu0 0.0
    %129 = vmatpush1.msra.mxu0 %v103
    %130 = vmatprep.subr.mxu0 0.0
    %131 = vmatpush1.msra.mxu0 %v104
    %132 = vmatprep.subr.mxu0 0.0
    %133 = vmatpush1.msra.mxu0 %v105
    %134 = vmatprep.subr.mxu0 0.0
    %135 = vmatpush1.msra.mxu0 %v106
    %136 = vmatprep.subr.mxu0 0.0
    %137 = vmatpush1.msra.mxu0 %v107
    %138 = vmatprep.subr.mxu0 0.0
    %139 = vmatpush1.msra.mxu0 %v108
    %140 = vmatprep.subr.mxu0 0.0
    %141 = vmatpush1.msra.mxu0 %v109
    %142 = vmatprep.subr.mxu0 0.0
    %143 = vmatpush1.msra.mxu0 0.0
    %144 = vmatprep.subr.mxu0 0.0
    %145 = vmatpush1.msra.mxu0 0.0
    %146 = vmatprep.subr.mxu0 0.0
    %147 = vmatpush1.msra.mxu0 0.0
    %148 = vmatprep.subr.mxu0 0.0
    %149 = vmatpush1.msra.mxu0 0.0
    %150 = vmatprep.subr.mxu0 0.0
    %151 = vmatpush1.msra.mxu0 0.0
    %152 = vmatprep.subr.mxu0 0.0
    %153 = vmatpush1.msra.mxu0 0.0
    %154 = vmatprep.subr.mxu0 0.0
    %155 = vmatpush1.msra.mxu0 0.0
    %156 = vmatprep.subr.mxu0 0.0
    %157 = vmatpush1.msra.mxu0 0.0
    %158 = vmatprep.subr.mxu0 0.0
    %159 = vmatpush1.msra.mxu0 0.0
    %160 = vmatprep.subr.mxu0 0.0
    %161 = vmatpush1.msra.mxu0 0.0
    %162 = vmatprep.subr.mxu0 0.0
    %163 = vmatpush1.msra.mxu0 0.0
    %164 = vmatprep.subr.mxu0 0.0
    %165 = vmatpush1.msra.mxu0 0.0
    %166 = vmatprep.subr.mxu0 0.0
    %167 = vmatpush1.msra.mxu0 0.0
    %168 = vmatprep.subr.mxu0 0.0
    %169 = vmatpush1.msra.mxu0 0.0
    %170 = vmatprep.subr.mxu0 0.0
    %171 = vmatpush1.msra.mxu0 0.0
    %172 = vmatprep.subr.mxu0 0.0
    %173 = vmatpush1.msra.mxu0 0.0
    %174 = vmatprep.mubr.f32.mxu0 0.0
    %175 = vmatmul.mubr.f32.gmra.mrb[0].mxu0 %v90
    %v176 = vpop.f32.mrb[0].mxu0
    %v177 = vadd.f32 0.0, %v176
    %v178 = vpop.f32.mrb[0].mxu0
    %179 = vmatprep.mubr.f32.mxu0 0.0
    %180 = vmatmul.mubr.f32.gmra.mrb[0].mxu0 %v91
    %v181 = vpop.f32.mrb[0].mxu0
    %v182 = vadd.f32 0.0, %v181
    %v183 = vpop.f32.mrb[0].mxu0
    %184 = vmatprep.mubr.f32.mxu0 0.0
    %185 = vmatmul.mubr.f32.gmra.mrb[0].mxu0 %v92
    %v186 = vpop.f32.mrb[0].mxu0
    %v187 = vadd.f32 0.0, %v186
    %v188 = vpop.f32.mrb[0].mxu0
    %189 = vmatprep.mubr.f32.mxu0 0.0
    %190 = vmatmul.mubr.f32.gmra.mrb[0].mxu0 %v93
    %v191 = vpop.f32.mrb[0].mxu0
    %v192 = vadd.f32 0.0, %v191
    %v193 = vpop.f32.mrb[0].mxu0
    %194 = vdwg.mxu0
    %v195 = vld [vmem:[%s3] sm:$0xff]
    %v196 = vld [vmem:[%s3 + $0x8] sm:$0xff]
    %v197 = vadd.f32 %v177, %v195
    %v198 = vadd.f32 %v182, %v196
    %v199 = vadd.f32 %v187, %v195
    %v200 = vadd.f32 %v192, %v196
    %v201 = vld [vmem:[%s1] sm:$0xff]
    %v202 = vld [vmem:[%s1 + $0x8] sm:$0xff]
    %v203 = vld [vmem:[%s1 + $0x10] sm:$0xff]
    %v204 = vld [vmem:[%s1 + $0x18] sm:$0xff]
    %v205 = vld [vmem:[%s11] sm:$0x1]
    %v206 = vld [vmem:[%s12] sm:$0x1]
    %vm207 = vcmask 523264
    %v208 = vsel %vm207, %v197, 0.0
    %209 = vadd.xlane.f32.xlu0 %v208
    %v210 = vpop.xlane.xlu0 %209
    %v211 = vsel %vm207, %v198, 0.0
    %212 = vadd.xlane.f32.xlu0 %v211
    %v213 = vpop.xlane.xlu0 %212
    %v214 = vsel %vm207, %v199, 0.0
    %215 = vadd.xlane.f32.xlu0 %v214
    %v216 = vpop.xlane.xlu0 %215
    %v217 = vsel %vm207, %v200, 0.0
    %218 = vadd.xlane.f32.xlu0 %v217
    %v219 = vpop.xlane.xlu0 %218
    %v220 = vrcp.pop 64.0
    %v221 = vmul.f32 %v210, %v220
    %v222 = vmul.f32 %v213, %v220
    %v223 = vmul.f32 %v216, %v220
    %v224 = vmul.f32 %v219, %v220
    %v225 = vsub.f32 %v197, %v221
    %v226 = vsub.f32 %v198, %v222
    %v227 = vsub.f32 %v199, %v223
    %v228 = vsub.f32 %v200, %v224
    %v229 = vmul.f32 %v225, %v225
    %v230 = vmul.f32 %v226, %v226
    %v231 = vmul.f32 %v227, %v227
    %v232 = vmul.f32 %v228, %v228
    %v233 = vsel %vm207, %v229, 0.0
    %234 = vadd.xlane.f32.xlu0 %v233
    %v235 = vpop.xlane.xlu0 %234
    %v236 = vsel %vm207, %v230, 0.0
    %237 = vadd.xlane.f32.xlu0 %v236
    %v238 = vpop.xlane.xlu0 %237
    %v239 = vsel %vm207, %v231, 0.0
    %240 = vadd.xlane.f32.xlu0 %v239
    %v241 = vpop.xlane.xlu0 %240
    %v242 = vsel %vm207, %v232, 0.0
    %243 = vadd.xlane.f32.xlu0 %v242
    %v244 = vpop.xlane.xlu0 %243
    %v245 = vmul.f32 %v235, %v220
    %v246 = vmul.f32 %v238, %v220
    %v247 = vmul.f32 %v241, %v220
    %v248 = vmul.f32 %v244, %v220
    %v249 = vadd.f32 %v245, 1e-05
    %v250 = vadd.f32 %v246, 1e-05
    %v251 = vadd.f32 %v247, 1e-05
    %v252 = vadd.f32 %v248, 1e-05
    %v253 = vrsqrt.pop %v249
    %v254 = vrsqrt.pop %v250
    %v255 = vrsqrt.pop %v251
    %v256 = vrsqrt.pop %v252
    %v257 = vmul.f32 %v225, %v253
    %v258 = vmul.f32 %v226, %v254
    %v259 = vmul.f32 %v227, %v255
    %v260 = vmul.f32 %v228, %v256
    %v262 = vlaneseq
    %v263 = vshrl.u32 %v262, 7
    %v264 = vsub.s32 0, %v263
    %v265 = vrot.slane %v205, %v264
    %v267 = vmul.f32 %v257, %v265
    %v268 = vmul.f32 %v258, %v265
    %v269 = vmul.f32 %v259, %v265
    %v270 = vmul.f32 %v260, %v265
    %v272 = vlaneseq
    %v273 = vshrl.u32 %v272, 7
    %v274 = vsub.s32 0, %v273
    %v275 = vrot.slane %v206, %v274
    %v277 = vadd.f32 %v267, %v275
    %v278 = vadd.f32 %v268, %v275
    %v279 = vadd.f32 %v269, %v275
    %v280 = vadd.f32 %v270, %v275
    %v281 = vpack.c.bf16 %v278, %v277
    %v282 = vpack.c.bf16 %v280, %v279
    %v283 = vld [vmem:[%s4] sm:$0xff]
    %v284 = vld [vmem:[%s4 + $0x8] sm:$0xf]
    %v285 = vld [vmem:[%s4 + $0xc] sm:$0xff]
    %v286 = vld [vmem:[%s4 + $0x14] sm:$0xf]
    %v287 = vld [vmem:[%s4 + $0x18] sm:$0xff]
    %v288 = vld [vmem:[%s4 + $0x20] sm:$0xf]
    %v289 = vld [vmem:[%s4 + $0x24] sm:$0xff]
    %v290 = vld [vmem:[%s4 + $0x2c] sm:$0xf]
    %v291 = vld [vmem:[%s4 + $0x30] sm:$0xff]
    %v292 = vld [vmem:[%s4 + $0x38] sm:$0xf]
    %v293 = vld [vmem:[%s4 + $0x3c] sm:$0xff]
    %v294 = vld [vmem:[%s4 + $0x44] sm:$0xf]
    %v295 = vld [vmem:[%s4 + $0x48] sm:$0xff]
    %v296 = vld [vmem:[%s4 + $0x50] sm:$0xf]
    %v297 = vld [vmem:[%s4 + $0x54] sm:$0xff]
    %v298 = vld [vmem:[%s4 + $0x5c] sm:$0xf]
    %v315 = vunpack.c.l.b16 %v283
    %v316 = vunpack.c.h.b16 %v283
    %v317 = vunpack.c.l.b16 %v284
    %v318 = vunpack.c.l.b16 %v285
    %v319 = vunpack.c.h.b16 %v285
    %v320 = vunpack.c.l.b16 %v286
    %v321 = vunpack.c.l.b16 %v287
    %v322 = vunpack.c.h.b16 %v287
    %v323 = vunpack.c.l.b16 %v288
    %v324 = vunpack.c.l.b16 %v289
    %v325 = vunpack.c.h.b16 %v289
    %v326 = vunpack.c.l.b16 %v290
    %v327 = vunpack.c.l.b16 %v291
    %v328 = vunpack.c.h.b16 %v291
    %v329 = vunpack.c.l.b16 %v292
    %v330 = vunpack.c.l.b16 %v293
    %v331 = vunpack.c.h.b16 %v293
    %v332 = vunpack.c.l.b16 %v294
    %v333 = vunpack.c.l.b16 %v295
    %v334 = vunpack.c.h.b16 %v295
    %v335 = vunpack.c.l.b16 %v296
    %v336 = vunpack.c.l.b16 %v297
    %v337 = vunpack.c.h.b16 %v297
    %v338 = vunpack.c.l.b16 %v298
    %v339 = vpack.c.b16 %v318, %v315
    %v340 = vpack.c.b16 %v319, %v316
    %v341 = vpack.c.b16 %v320, %v317
    %v342 = vpack.c.b16 %v324, %v321
    %v343 = vpack.c.b16 %v325, %v322
    %v344 = vpack.c.b16 %v326, %v323
    %v345 = vpack.c.b16 %v330, %v327
    %v346 = vpack.c.b16 %v331, %v328
    %v347 = vpack.c.b16 %v332, %v329
    %v348 = vpack.c.b16 %v336, %v333
    %v349 = vpack.c.b16 %v337, %v334
    %v350 = vpack.c.b16 %v338, %v335
    %v364 = vsel %vm207, %v281, 0
    %v367 = vsel %vm207, %v282, 0
    %369 = vmatprep.subr.bf16.mxu0 %v340
    %370 = vmatpush1.bf16.msra.mxu0 %v339
    %371 = vmatprep.subr.bf16.mxu0 %v343
    %372 = vmatpush1.bf16.msra.mxu0 %v342
    %373 = vmatprep.subr.bf16.mxu0 %v346
    %374 = vmatpush1.bf16.msra.mxu0 %v345
    %375 = vmatprep.subr.bf16.mxu0 %v349
    %376 = vmatpush1.bf16.msra.mxu0 %v348
    %377 = vmatprep.subr.bf16.mxu0 0
    %378 = vmatpush1.bf16.msra.mxu0 0
    %379 = vmatprep.subr.bf16.mxu0 0
    %380 = vmatpush1.bf16.msra.mxu0 0
    %381 = vmatprep.subr.bf16.mxu0 0
    %382 = vmatpush1.bf16.msra.mxu0 0
    %383 = vmatprep.subr.bf16.mxu0 0
    %384 = vmatpush1.bf16.msra.mxu0 0
    %385 = vmatprep.subr.bf16.mxu0 0
    %386 = vmatpush1.bf16.msra.mxu0 0
    %387 = vmatprep.subr.bf16.mxu0 0
    %388 = vmatpush1.bf16.msra.mxu0 0
    %389 = vmatprep.subr.bf16.mxu0 0
    %390 = vmatpush1.bf16.msra.mxu0 0
    %391 = vmatprep.subr.bf16.mxu0 0
    %392 = vmatpush1.bf16.msra.mxu0 0
    %393 = vmatprep.subr.bf16.mxu0 0
    %394 = vmatpush1.bf16.msra.mxu0 0
    %395 = vmatprep.subr.bf16.mxu0 0
    %396 = vmatpush1.bf16.msra.mxu0 0
    %397 = vmatprep.subr.bf16.mxu0 0
    %398 = vmatpush1.bf16.msra.mxu0 0
    %399 = vmatprep.subr.bf16.mxu0 0
    %400 = vmatpush1.bf16.msra.mxu0 0
    %401 = vmatprep.mubr.bf16.mxu0 0
    %402 = vmatmul.mubr.bf16.gmra.mrb[0].mxu0 %v364
    %v403 = vpop.f32.mrb[0].mxu0
    %v404 = vadd.f32 0.0, %v403
    %v405 = vpop.f32.mrb[0].mxu0
    %v406 = vadd.f32 0.0, %v405
    %v407 = vpop.f32.mrb[0].mxu0
    %v408 = vadd.f32 0.0, %v407
    %v409 = vpop.f32.mrb[0].mxu0
    %v410 = vadd.f32 0.0, %v409
    %411 = vmatprep.mubr.bf16.mxu0 0
    %412 = vmatmul.mubr.bf16.gmra.mrb[0].mxu0 %v367
    %v413 = vpop.f32.mrb[0].mxu0
    %v414 = vadd.f32 0.0, %v413
    %v415 = vpop.f32.mrb[0].mxu0
    %v416 = vadd.f32 0.0, %v415
    %v417 = vpop.f32.mrb[0].mxu0
    %v418 = vadd.f32 0.0, %v417
    %v419 = vpop.f32.mrb[0].mxu0
    %v420 = vadd.f32 0.0, %v419
    %421 = vdwg.mxu0
    %422 = vmatprep.subr.bf16.mxu0 0
    %423 = vmatpush1.bf16.msra.mxu0 %v341
    %424 = vmatprep.subr.bf16.mxu0 0
    %425 = vmatpush1.bf16.msra.mxu0 %v344
    %426 = vmatprep.subr.bf16.mxu0 0
    %427 = vmatpush1.bf16.msra.mxu0 %v347
    %428 = vmatprep.subr.bf16.mxu0 0
    %429 = vmatpush1.bf16.msra.mxu0 %v350
    %430 = vmatprep.subr.bf16.mxu0 0
    %431 = vmatpush1.bf16.msra.mxu0 0
    %432 = vmatprep.subr.bf16.mxu0 0
    %433 = vmatpush1.bf16.msra.mxu0 0
    %434 = vmatprep.subr.bf16.mxu0 0
    %435 = vmatpush1.bf16.msra.mxu0 0
    %436 = vmatprep.subr.bf16.mxu0 0
    %437 = vmatpush1.bf16.msra.mxu0 0
    %438 = vmatprep.subr.bf16.mxu0 0
    %439 = vmatpush1.bf16.msra.mxu0 0
    %440 = vmatprep.subr.bf16.mxu0 0
    %441 = vmatpush1.bf16.msra.mxu0 0
    %442 = vmatprep.subr.bf16.mxu0 0
    %443 = vmatpush1.bf16.msra.mxu0 0
    %444 = vmatprep.subr.bf16.mxu0 0
    %445 = vmatpush1.bf16.msra.mxu0 0
    %446 = vmatprep.subr.bf16.mxu0 0
    %447 = vmatpush1.bf16.msra.mxu0 0
    %448 = vmatprep.subr.bf16.mxu0 0
    %449 = vmatpush1.bf16.msra.mxu0 0
    %450 = vmatprep.subr.bf16.mxu0 0
    %451 = vmatpush1.bf16.msra.mxu0 0
    %452 = vmatprep.subr.bf16.mxu0 0
    %453 = vmatpush1.bf16.msra.mxu0 0
    %454 = vmatprep.mubr.bf16.mxu0 0
    %455 = vmatmul.mubr.bf16.gmra.mrb[0].mxu0 %v364
    %v456 = vpop.f32.mrb[0].mxu0
    %v457 = vadd.f32 0.0, %v456
    %v458 = vpop.f32.mrb[0].mxu0
    %v459 = vpop.f32.mrb[0].mxu0
    %v460 = vadd.f32 0.0, %v459
    %v461 = vpop.f32.mrb[0].mxu0
    %462 = vmatprep.mubr.bf16.mxu0 0
    %463 = vmatmul.mubr.bf16.gmra.mrb[0].mxu0 %v367
    %v464 = vpop.f32.mrb[0].mxu0
    %v465 = vadd.f32 0.0, %v464
    %v466 = vpop.f32.mrb[0].mxu0
    %v467 = vpop.f32.mrb[0].mxu0
    %v468 = vadd.f32 0.0, %v467
    %v469 = vpop.f32.mrb[0].mxu0
    %470 = vdwg.mxu0
    %vm471 = vcmask 64512
    %472 = vst.msk [vmem:[#allocation2] sm:$0xff] %vm471, %v404
    %473 = vst.msk [vmem:[#allocation2 + $0x8] sm:$0xff] %vm471, %v408
    %474 = vst.msk [vmem:[#allocation2 + $0x10] sm:$0xff] %vm471, %v414
    %475 = vst.msk [vmem:[#allocation2 + $0x18] sm:$0xff] %vm471, %v418
    %476 = vst.msk [vmem:[#allocation3] sm:$0xff] %vm471, %v406
    %477 = vst.msk [vmem:[#allocation3 + $0x8] sm:$0xff] %vm471, %v410
    %478 = vst.msk [vmem:[#allocation3 + $0x10] sm:$0xff] %vm471, %v416
    %479 = vst.msk [vmem:[#allocation3 + $0x18] sm:$0xff] %vm471, %v420
    %480 = vst.msk [vmem:[#allocation4] sm:$0xff] %vm471, %v457
    %481 = vst.msk [vmem:[#allocation4 + $0x8] sm:$0xff] %vm471, %v460
    %482 = vst.msk [vmem:[#allocation4 + $0x10] sm:$0xff] %vm471, %v465
    %483 = vst.msk [vmem:[#allocation4 + $0x18] sm:$0xff] %vm471, %v468
    %488 = vrot.lane.b32.xlu0 %v404, 120
    %v489 = vpop.permute.xlu0 %488
    %490 = vrot.lane.b32.xlu0 %v408, 120
    %v491 = vpop.permute.xlu0 %490
    %492 = vrot.lane.b32.xlu0 %v414, 120
    %v493 = vpop.permute.xlu0 %492
    %494 = vrot.lane.b32.xlu0 %v418, 120
    %v495 = vpop.permute.xlu0 %494
    %s500 = scalar_lea.vmem [#allocation2], 32
    %501 = vst.msk [vmem:[%s500] sm:$0xff] %vm471, %v489
    %502 = vst.msk [vmem:[%s500 + $0x8] sm:$0xff] %vm471, %v491
    %503 = vst.msk [vmem:[%s500 + $0x10] sm:$0xff] %vm471, %v493
    %504 = vst.msk [vmem:[%s500 + $0x18] sm:$0xff] %vm471, %v495
    %509 = vrot.lane.b32.xlu0 %v406, 120
    %v510 = vpop.permute.xlu0 %509
    %511 = vrot.lane.b32.xlu0 %v410, 120
    %v512 = vpop.permute.xlu0 %511
    %513 = vrot.lane.b32.xlu0 %v416, 120
    %v514 = vpop.permute.xlu0 %513
    %515 = vrot.lane.b32.xlu0 %v420, 120
    %v516 = vpop.permute.xlu0 %515
    %s521 = scalar_lea.vmem [#allocation3], 32
    %522 = vst.msk [vmem:[%s521] sm:$0xff] %vm471, %v510
    %523 = vst.msk [vmem:[%s521 + $0x8] sm:$0xff] %vm471, %v512
    %524 = vst.msk [vmem:[%s521 + $0x10] sm:$0xff] %vm471, %v514
    %525 = vst.msk [vmem:[%s521 + $0x18] sm:$0xff] %vm471, %v516
    %530 = vrot.lane.b32.xlu0 %v457, 120
    %v531 = vpop.permute.xlu0 %530
    %532 = vrot.lane.b32.xlu0 %v460, 120
    %v533 = vpop.permute.xlu0 %532
    %534 = vrot.lane.b32.xlu0 %v465, 120
    %v535 = vpop.permute.xlu0 %534
    %536 = vrot.lane.b32.xlu0 %v468, 120
    %v537 = vpop.permute.xlu0 %536
    %s542 = scalar_lea.vmem [#allocation4], 32
    %543 = vst.msk [vmem:[%s542] sm:$0xff] %vm471, %v531
    %544 = vst.msk [vmem:[%s542 + $0x8] sm:$0xff] %vm471, %v533
    %545 = vst.msk [vmem:[%s542 + $0x10] sm:$0xff] %vm471, %v535
    %546 = vst.msk [vmem:[%s542 + $0x18] sm:$0xff] %vm471, %v537
    %547 = vrot.lane.b32.xlu0 %v404, 112
    %v548 = vpop.permute.xlu0 %547
    %549 = vrot.lane.b32.xlu0 %v408, 112
    %v550 = vpop.permute.xlu0 %549
    %551 = vrot.lane.b32.xlu0 %v414, 112
    %v552 = vpop.permute.xlu0 %551
    %553 = vrot.lane.b32.xlu0 %v418, 112
    %v554 = vpop.permute.xlu0 %553
    %s559 = scalar_lea.vmem [#allocation2], 64
    %560 = vst.msk [vmem:[%s559] sm:$0xff] %vm471, %v548
    %561 = vst.msk [vmem:[%s559 + $0x8] sm:$0xff] %vm471, %v550
    %562 = vst.msk [vmem:[%s559 + $0x10] sm:$0xff] %vm471, %v552
    %563 = vst.msk [vmem:[%s559 + $0x18] sm:$0xff] %vm471, %v554
    %564 = vrot.lane.b32.xlu0 %v406, 112
    %v565 = vpop.permute.xlu0 %564
    %566 = vrot.lane.b32.xlu0 %v410, 112
    %v567 = vpop.permute.xlu0 %566
    %568 = vrot.lane.b32.xlu0 %v416, 112
    %v569 = vpop.permute.xlu0 %568
    %570 = vrot.lane.b32.xlu0 %v420, 112
    %v571 = vpop.permute.xlu0 %570
    %s576 = scalar_lea.vmem [#allocation3], 64
    %577 = vst.msk [vmem:[%s576] sm:$0xff] %vm471, %v565
    %578 = vst.msk [vmem:[%s576 + $0x8] sm:$0xff] %vm471, %v567
    %579 = vst.msk [vmem:[%s576 + $0x10] sm:$0xff] %vm471, %v569
    %580 = vst.msk [vmem:[%s576 + $0x18] sm:$0xff] %vm471, %v571
    %581 = vrot.lane.b32.xlu0 %v457, 112
    %v582 = vpop.permute.xlu0 %581
    %583 = vrot.lane.b32.xlu0 %v460, 112
    %v584 = vpop.permute.xlu0 %583
    %585 = vrot.lane.b32.xlu0 %v465, 112
    %v586 = vpop.permute.xlu0 %585
    %587 = vrot.lane.b32.xlu0 %v468, 112
    %v588 = vpop.permute.xlu0 %587
    %s593 = scalar_lea.vmem [#allocation4], 64
    %594 = vst.msk [vmem:[%s593] sm:$0xff] %vm471, %v582
    %595 = vst.msk [vmem:[%s593 + $0x8] sm:$0xff] %vm471, %v584
    %596 = vst.msk [vmem:[%s593 + $0x10] sm:$0xff] %vm471, %v586
    %597 = vst.msk [vmem:[%s593 + $0x18] sm:$0xff] %vm471, %v588
    %598 = vrot.lane.b32.xlu0 %v404, 104
    %v599 = vpop.permute.xlu0 %598
    %600 = vrot.lane.b32.xlu0 %v408, 104
    %v601 = vpop.permute.xlu0 %600
    %602 = vrot.lane.b32.xlu0 %v414, 104
    %v603 = vpop.permute.xlu0 %602
    %604 = vrot.lane.b32.xlu0 %v418, 104
    %v605 = vpop.permute.xlu0 %604
    %s610 = scalar_lea.vmem [#allocation2], 96
    %611 = vst.msk [vmem:[%s610] sm:$0xff] %vm471, %v599
    %612 = vst.msk [vmem:[%s610 + $0x8] sm:$0xff] %vm471, %v601
    %613 = vst.msk [vmem:[%s610 + $0x10] sm:$0xff] %vm471, %v603
    %614 = vst.msk [vmem:[%s610 + $0x18] sm:$0xff] %vm471, %v605
    %615 = vrot.lane.b32.xlu0 %v406, 104
    %v616 = vpop.permute.xlu0 %615
    %617 = vrot.lane.b32.xlu0 %v410, 104
    %v618 = vpop.permute.xlu0 %617
    %619 = vrot.lane.b32.xlu0 %v416, 104
    %v620 = vpop.permute.xlu0 %619
    %621 = vrot.lane.b32.xlu0 %v420, 104
    %v622 = vpop.permute.xlu0 %621
    %s627 = scalar_lea.vmem [#allocation3], 96
    %628 = vst.msk [vmem:[%s627] sm:$0xff] %vm471, %v616
    %629 = vst.msk [vmem:[%s627 + $0x8] sm:$0xff] %vm471, %v618
    %630 = vst.msk [vmem:[%s627 + $0x10] sm:$0xff] %vm471, %v620
    %631 = vst.msk [vmem:[%s627 + $0x18] sm:$0xff] %vm471, %v622
    %632 = vrot.lane.b32.xlu0 %v457, 104
    %v633 = vpop.permute.xlu0 %632
    %634 = vrot.lane.b32.xlu0 %v460, 104
    %v635 = vpop.permute.xlu0 %634
    %636 = vrot.lane.b32.xlu0 %v465, 104
    %v637 = vpop.permute.xlu0 %636
    %638 = vrot.lane.b32.xlu0 %v468, 104
    %v639 = vpop.permute.xlu0 %638
    %s644 = scalar_lea.vmem [#allocation4], 96
    %645 = vst.msk [vmem:[%s644] sm:$0xff] %vm471, %v633
    %646 = vst.msk [vmem:[%s644 + $0x8] sm:$0xff] %vm471, %v635
    %647 = vst.msk [vmem:[%s644 + $0x10] sm:$0xff] %vm471, %v637
    %648 = vst.msk [vmem:[%s644 + $0x18] sm:$0xff] %vm471, %v639
    %649 = vrot.lane.b32.xlu0 %v404, 96
    %v650 = vpop.permute.xlu0 %649
    %651 = vrot.lane.b32.xlu0 %v408, 96
    %v652 = vpop.permute.xlu0 %651
    %653 = vrot.lane.b32.xlu0 %v414, 96
    %v654 = vpop.permute.xlu0 %653
    %655 = vrot.lane.b32.xlu0 %v418, 96
    %v656 = vpop.permute.xlu0 %655
    %s661 = scalar_lea.vmem [#allocation2], 128
    %662 = vst.msk [vmem:[%s661] sm:$0xff] %vm471, %v650
    %663 = vst.msk [vmem:[%s661 + $0x8] sm:$0xff] %vm471, %v652
    %664 = vst.msk [vmem:[%s661 + $0x10] sm:$0xff] %vm471, %v654
    %665 = vst.msk [vmem:[%s661 + $0x18] sm:$0xff] %vm471, %v656
    %666 = vrot.lane.b32.xlu0 %v406, 96
    %v667 = vpop.permute.xlu0 %666
    %668 = vrot.lane.b32.xlu0 %v410, 96
    %v669 = vpop.permute.xlu0 %668
    %670 = vrot.lane.b32.xlu0 %v416, 96
    %v671 = vpop.permute.xlu0 %670
    %672 = vrot.lane.b32.xlu0 %v420, 96
    %v673 = vpop.permute.xlu0 %672
    %s678 = scalar_lea.vmem [#allocation3], 128
    %679 = vst.msk [vmem:[%s678] sm:$0xff] %vm471, %v667
    %680 = vst.msk [vmem:[%s678 + $0x8] sm:$0xff] %vm471, %v669
    %681 = vst.msk [vmem:[%s678 + $0x10] sm:$0xff] %vm471, %v671
    %682 = vst.msk [vmem:[%s678 + $0x18] sm:$0xff] %vm471, %v673
    %683 = vrot.lane.b32.xlu0 %v457, 96
    %v684 = vpop.permute.xlu0 %683
    %685 = vrot.lane.b32.xlu0 %v460, 96
    %v686 = vpop.permute.xlu0 %685
    %687 = vrot.lane.b32.xlu0 %v465, 96
    %v688 = vpop.permute.xlu0 %687
    %689 = vrot.lane.b32.xlu0 %v468, 96
    %v690 = vpop.permute.xlu0 %689
    %s695 = scalar_lea.vmem [#allocation4], 128
    %696 = vst.msk [vmem:[%s695] sm:$0xff] %vm471, %v684
    %697 = vst.msk [vmem:[%s695 + $0x8] sm:$0xff] %vm471, %v686
    %698 = vst.msk [vmem:[%s695 + $0x10] sm:$0xff] %vm471, %v688
    %699 = vst.msk [vmem:[%s695 + $0x18] sm:$0xff] %vm471, %v690
    %700 = vrot.lane.b32.xlu0 %v404, 88
    %v701 = vpop.permute.xlu0 %700
    %702 = vrot.lane.b32.xlu0 %v408, 88
    %v703 = vpop.permute.xlu0 %702
    %704 = vrot.lane.b32.xlu0 %v414, 88
    %v705 = vpop.permute.xlu0 %704
    %706 = vrot.lane.b32.xlu0 %v418, 88
    %v707 = vpop.permute.xlu0 %706
    %s712 = scalar_lea.vmem [#allocation2], 160
    %713 = vst.msk [vmem:[%s712] sm:$0xff] %vm471, %v701
    %714 = vst.msk [vmem:[%s712 + $0x8] sm:$0xff] %vm471, %v703
    %715 = vst.msk [vmem:[%s712 + $0x10] sm:$0xff] %vm471, %v705
    %716 = vst.msk [vmem:[%s712 + $0x18] sm:$0xff] %vm471, %v707
    %717 = vrot.lane.b32.xlu0 %v406, 88
    %v718 = vpop.permute.xlu0 %717
    %719 = vrot.lane.b32.xlu0 %v410, 88
    %v720 = vpop.permute.xlu0 %719
    %721 = vrot.lane.b32.xlu0 %v416, 88
    %v722 = vpop.permute.xlu0 %721
    %723 = vrot.lane.b32.xlu0 %v420, 88
    %v724 = vpop.permute.xlu0 %723
    %s729 = scalar_lea.vmem [#allocation3], 160
    %730 = vst.msk [vmem:[%s729] sm:$0xff] %vm471, %v718
    %731 = vst.msk [vmem:[%s729 + $0x8] sm:$0xff] %vm471, %v720
    %732 = vst.msk [vmem:[%s729 + $0x10] sm:$0xff] %vm471, %v722
    %733 = vst.msk [vmem:[%s729 + $0x18] sm:$0xff] %vm471, %v724
    %734 = vrot.lane.b32.xlu0 %v457, 88
    %v735 = vpop.permute.xlu0 %734
    %736 = vrot.lane.b32.xlu0 %v460, 88
    %v737 = vpop.permute.xlu0 %736
    %738 = vrot.lane.b32.xlu0 %v465, 88
    %v739 = vpop.permute.xlu0 %738
    %740 = vrot.lane.b32.xlu0 %v468, 88
    %v741 = vpop.permute.xlu0 %740
    %s746 = scalar_lea.vmem [#allocation4], 160
    %747 = vst.msk [vmem:[%s746] sm:$0xff] %vm471, %v735
    %748 = vst.msk [vmem:[%s746 + $0x8] sm:$0xff] %vm471, %v737
    %749 = vst.msk [vmem:[%s746 + $0x10] sm:$0xff] %vm471, %v739
    %750 = vst.msk [vmem:[%s746 + $0x18] sm:$0xff] %vm471, %v741
    %751 = vrot.lane.b32.xlu0 %v404, 80
    %v752 = vpop.permute.xlu0 %751
    %753 = vrot.lane.b32.xlu0 %v408, 80
    %v754 = vpop.permute.xlu0 %753
    %755 = vrot.lane.b32.xlu0 %v414, 80
    %v756 = vpop.permute.xlu0 %755
    %757 = vrot.lane.b32.xlu0 %v418, 80
    %v758 = vpop.permute.xlu0 %757
    %s763 = scalar_lea.vmem [#allocation2], 192
    %764 = vst.msk [vmem:[%s763] sm:$0xff] %vm471, %v752
    %765 = vst.msk [vmem:[%s763 + $0x8] sm:$0xff] %vm471, %v754
    %766 = vst.msk [vmem:[%s763 + $0x10] sm:$0xff] %vm471, %v756
    %767 = vst.msk [vmem:[%s763 + $0x18] sm:$0xff] %vm471, %v758
    %768 = vrot.lane.b32.xlu0 %v406, 80
    %v769 = vpop.permute.xlu0 %768
    %770 = vrot.lane.b32.xlu0 %v410, 80
    %v771 = vpop.permute.xlu0 %770
    %772 = vrot.lane.b32.xlu0 %v416, 80
    %v773 = vpop.permute.xlu0 %772
    %774 = vrot.lane.b32.xlu0 %v420, 80
    %v775 = vpop.permute.xlu0 %774
    %s780 = scalar_lea.vmem [#allocation3], 192
    %781 = vst.msk [vmem:[%s780] sm:$0xff] %vm471, %v769
    %782 = vst.msk [vmem:[%s780 + $0x8] sm:$0xff] %vm471, %v771
    %783 = vst.msk [vmem:[%s780 + $0x10] sm:$0xff] %vm471, %v773
    %784 = vst.msk [vmem:[%s780 + $0x18] sm:$0xff] %vm471, %v775
    %785 = vrot.lane.b32.xlu0 %v457, 80
    %v786 = vpop.permute.xlu0 %785
    %787 = vrot.lane.b32.xlu0 %v460, 80
    %v788 = vpop.permute.xlu0 %787
    %789 = vrot.lane.b32.xlu0 %v465, 80
    %v790 = vpop.permute.xlu0 %789
    %791 = vrot.lane.b32.xlu0 %v468, 80
    %v792 = vpop.permute.xlu0 %791
    %s797 = scalar_lea.vmem [#allocation4], 192
    %798 = vst.msk [vmem:[%s797] sm:$0xff] %vm471, %v786
    %799 = vst.msk [vmem:[%s797 + $0x8] sm:$0xff] %vm471, %v788
    %800 = vst.msk [vmem:[%s797 + $0x10] sm:$0xff] %vm471, %v790
    %801 = vst.msk [vmem:[%s797 + $0x18] sm:$0xff] %vm471, %v792
    %802 = vrot.lane.b32.xlu0 %v404, 72
    %v803 = vpop.permute.xlu0 %802
    %804 = vrot.lane.b32.xlu0 %v408, 72
    %v805 = vpop.permute.xlu0 %804
    %806 = vrot.lane.b32.xlu0 %v414, 72
    %v807 = vpop.permute.xlu0 %806
    %808 = vrot.lane.b32.xlu0 %v418, 72
    %v809 = vpop.permute.xlu0 %808
    %s814 = scalar_lea.vmem [#allocation2], 224
    %815 = vst.msk [vmem:[%s814] sm:$0xff] %vm471, %v803
    %816 = vst.msk [vmem:[%s814 + $0x8] sm:$0xff] %vm471, %v805
    %817 = vst.msk [vmem:[%s814 + $0x10] sm:$0xff] %vm471, %v807
    %818 = vst.msk [vmem:[%s814 + $0x18] sm:$0xff] %vm471, %v809
    %819 = vrot.lane.b32.xlu0 %v406, 72
    %v820 = vpop.permute.xlu0 %819
    %821 = vrot.lane.b32.xlu0 %v410, 72
    %v822 = vpop.permute.xlu0 %821
    %823 = vrot.lane.b32.xlu0 %v416, 72
    %v824 = vpop.permute.xlu0 %823
    %825 = vrot.lane.b32.xlu0 %v420, 72
    %v826 = vpop.permute.xlu0 %825
    %s831 = scalar_lea.vmem [#allocation3], 224
    %832 = vst.msk [vmem:[%s831] sm:$0xff] %vm471, %v820
    %833 = vst.msk [vmem:[%s831 + $0x8] sm:$0xff] %vm471, %v822
    %834 = vst.msk [vmem:[%s831 + $0x10] sm:$0xff] %vm471, %v824
    %835 = vst.msk [vmem:[%s831 + $0x18] sm:$0xff] %vm471, %v826
    %836 = vrot.lane.b32.xlu0 %v457, 72
    %v837 = vpop.permute.xlu0 %836
    %838 = vrot.lane.b32.xlu0 %v460, 72
    %v839 = vpop.permute.xlu0 %838
    %840 = vrot.lane.b32.xlu0 %v465, 72
    %v841 = vpop.permute.xlu0 %840
    %842 = vrot.lane.b32.xlu0 %v468, 72
    %v843 = vpop.permute.xlu0 %842
    %s848 = scalar_lea.vmem [#allocation4], 224
    %849 = vst.msk [vmem:[%s848] sm:$0xff] %vm471, %v837
    %850 = vst.msk [vmem:[%s848 + $0x8] sm:$0xff] %vm471, %v839
    %851 = vst.msk [vmem:[%s848 + $0x10] sm:$0xff] %vm471, %v841
    %852 = vst.msk [vmem:[%s848 + $0x18] sm:$0xff] %vm471, %v843
    %v853 = vld [vmem:[#allocation2] sm:$0xff]
    %v854 = vld [vmem:[#allocation2 + $0x8] sm:$0xff]
    %v855 = vld [vmem:[#allocation2 + $0x10] sm:$0xff]
    %v856 = vld [vmem:[#allocation2 + $0x18] sm:$0xff]
    %v857 = vld [vmem:[#allocation2 + $0x20] sm:$0xff]
    %v858 = vld [vmem:[#allocation2 + $0x28] sm:$0xff]
    %v859 = vld [vmem:[#allocation2 + $0x30] sm:$0xff]
    %v860 = vld [vmem:[#allocation2 + $0x38] sm:$0xff]
    %v861 = vld [vmem:[#allocation2 + $0x40] sm:$0xff]
    %v862 = vld [vmem:[#allocation2 + $0x48] sm:$0xff]
    %v863 = vld [vmem:[#allocation2 + $0x50] sm:$0xff]
    %v864 = vld [vmem:[#allocation2 + $0x58] sm:$0xff]
    %v865 = vld [vmem:[#allocation2 + $0x60] sm:$0xff]
    %v866 = vld [vmem:[#allocation2 + $0x68] sm:$0xff]
    %v867 = vld [vmem:[#allocation2 + $0x70] sm:$0xff]
    %v868 = vld [vmem:[#allocation2 + $0x78] sm:$0xff]
    %v869 = vld [vmem:[#allocation2 + $0x80] sm:$0xff]
    %v870 = vld [vmem:[#allocation2 + $0x88] sm:$0xff]
    %v871 = vld [vmem:[#allocation2 + $0x90] sm:$0xff]
    %v872 = vld [vmem:[#allocation2 + $0x98] sm:$0xff]
    %v873 = vld [vmem:[#allocation2 + $0xa0] sm:$0xff]
    %v874 = vld [vmem:[#allocation2 + $0xa8] sm:$0xff]
    %v875 = vld [vmem:[#allocation2 + $0xb0] sm:$0xff]
    %v876 = vld [vmem:[#allocation2 + $0xb8] sm:$0xff]
    %v877 = vld [vmem:[#allocation2 + $0xc0] sm:$0xff]
    %v878 = vld [vmem:[#allocation2 + $0xc8] sm:$0xff]
    %v879 = vld [vmem:[#allocation2 + $0xd0] sm:$0xff]
    %v880 = vld [vmem:[#allocation2 + $0xd8] sm:$0xff]
    %v881 = vld [vmem:[#allocation2 + $0xe0] sm:$0xff]
    %v882 = vld [vmem:[#allocation2 + $0xe8] sm:$0xff]
    %v883 = vld [vmem:[#allocation2 + $0xf0] sm:$0xff]
    %v884 = vld [vmem:[#allocation2 + $0xf8] sm:$0xff]
    %v885 = vpack.c.bf16 %v854, %v853
    %v886 = vpack.c.bf16 %v856, %v855
    %v887 = vpack.c.bf16 %v858, %v857
    %v888 = vpack.c.bf16 %v860, %v859
    %v889 = vpack.c.bf16 %v862, %v861
    %v890 = vpack.c.bf16 %v864, %v863
    %v891 = vpack.c.bf16 %v866, %v865
    %v892 = vpack.c.bf16 %v868, %v867
    %v893 = vpack.c.bf16 %v870, %v869
    %v894 = vpack.c.bf16 %v872, %v871
    %v895 = vpack.c.bf16 %v874, %v873
    %v896 = vpack.c.bf16 %v876, %v875
    %v897 = vpack.c.bf16 %v878, %v877
    %v898 = vpack.c.bf16 %v880, %v879
    %v899 = vpack.c.bf16 %v882, %v881
    %v900 = vpack.c.bf16 %v884, %v883
    %v901 = vld [vmem:[#allocation3] sm:$0xff]
    %v902 = vld [vmem:[#allocation3 + $0x8] sm:$0xff]
    %v903 = vld [vmem:[#allocation3 + $0x10] sm:$0xff]
    %v904 = vld [vmem:[#allocation3 + $0x18] sm:$0xff]
    %v905 = vld [vmem:[#allocation3 + $0x20] sm:$0xff]
    %v906 = vld [vmem:[#allocation3 + $0x28] sm:$0xff]
    %v907 = vld [vmem:[#allocation3 + $0x30] sm:$0xff]
    %v908 = vld [vmem:[#allocation3 + $0x38] sm:$0xff]
    %v909 = vld [vmem:[#allocation3 + $0x40] sm:$0xff]
    %v910 = vld [vmem:[#allocation3 + $0x48] sm:$0xff]
    %v911 = vld [vmem:[#allocation3 + $0x50] sm:$0xff]
    %v912 = vld [vmem:[#allocation3 + $0x58] sm:$0xff]
    %v913 = vld [vmem:[#allocation3 + $0x60] sm:$0xff]
    %v914 = vld [vmem:[#allocation3 + $0x68] sm:$0xff]
    %v915 = vld [vmem:[#allocation3 + $0x70] sm:$0xff]
    %v916 = vld [vmem:[#allocation3 + $0x78] sm:$0xff]
    %v917 = vld [vmem:[#allocation3 + $0x80] sm:$0xff]
    %v918 = vld [vmem:[#allocation3 + $0x88] sm:$0xff]
    %v919 = vld [vmem:[#allocation3 + $0x90] sm:$0xff]
    %v920 = vld [vmem:[#allocation3 + $0x98] sm:$0xff]
    %v921 = vld [vmem:[#allocation3 + $0xa0] sm:$0xff]
    %v922 = vld [vmem:[#allocation3 + $0xa8] sm:$0xff]
    %v923 = vld [vmem:[#allocation3 + $0xb0] sm:$0xff]
    %v924 = vld [vmem:[#allocation3 + $0xb8] sm:$0xff]
    %v925 = vld [vmem:[#allocation3 + $0xc0] sm:$0xff]
    %v926 = vld [vmem:[#allocation3 + $0xc8] sm:$0xff]
    %v927 = vld [vmem:[#allocation3 + $0xd0] sm:$0xff]
    %v928 = vld [vmem:[#allocation3 + $0xd8] sm:$0xff]
    %v929 = vld [vmem:[#allocation3 + $0xe0] sm:$0xff]
    %v930 = vld [vmem:[#allocation3 + $0xe8] sm:$0xff]
    %v931 = vld [vmem:[#allocation3 + $0xf0] sm:$0xff]
    %v932 = vld [vmem:[#allocation3 + $0xf8] sm:$0xff]
    %v933 = vpack.c.bf16 %v902, %v901
    %v934 = vpack.c.bf16 %v904, %v903
    %v935 = vpack.c.bf16 %v906, %v905
    %v936 = vpack.c.bf16 %v908, %v907
    %v937 = vpack.c.bf16 %v910, %v909
    %v938 = vpack.c.bf16 %v912, %v911
    %v939 = vpack.c.bf16 %v914, %v913
    %v940 = vpack.c.bf16 %v916, %v915
    %v941 = vpack.c.bf16 %v918, %v917
    %v942 = vpack.c.bf16 %v920, %v919
    %v943 = vpack.c.bf16 %v922, %v921
    %v944 = vpack.c.bf16 %v924, %v923
    %v945 = vpack.c.bf16 %v926, %v925
    %v946 = vpack.c.bf16 %v928, %v927
    %v947 = vpack.c.bf16 %v930, %v929
    %v948 = vpack.c.bf16 %v932, %v931
    %v949 = vld [vmem:[#allocation4] sm:$0xff]
    %v950 = vld [vmem:[#allocation4 + $0x8] sm:$0xff]
    %v951 = vld [vmem:[#allocation4 + $0x10] sm:$0xff]
    %v952 = vld [vmem:[#allocation4 + $0x18] sm:$0xff]
    %v953 = vld [vmem:[#allocation4 + $0x20] sm:$0xff]
    %v954 = vld [vmem:[#allocation4 + $0x28] sm:$0xff]
    %v955 = vld [vmem:[#allocation4 + $0x30] sm:$0xff]
    %v956 = vld [vmem:[#allocation4 + $0x38] sm:$0xff]
    %v957 = vld [vmem:[#allocation4 + $0x40] sm:$0xff]
    %v958 = vld [vmem:[#allocation4 + $0x48] sm:$0xff]
    %v959 = vld [vmem:[#allocation4 + $0x50] sm:$0xff]
    %v960 = vld [vmem:[#allocation4 + $0x58] sm:$0xff]
    %v961 = vld [vmem:[#allocation4 + $0x60] sm:$0xff]
    %v962 = vld [vmem:[#allocation4 + $0x68] sm:$0xff]
    %v963 = vld [vmem:[#allocation4 + $0x70] sm:$0xff]
    %v964 = vld [vmem:[#allocation4 + $0x78] sm:$0xff]
    %v965 = vld [vmem:[#allocation4 + $0x80] sm:$0xff]
    %v966 = vld [vmem:[#allocation4 + $0x88] sm:$0xff]
    %v967 = vld [vmem:[#allocation4 + $0x90] sm:$0xff]
    %v968 = vld [vmem:[#allocation4 + $0x98] sm:$0xff]
    %v969 = vld [vmem:[#allocation4 + $0xa0] sm:$0xff]
    %v970 = vld [vmem:[#allocation4 + $0xa8] sm:$0xff]
    %v971 = vld [vmem:[#allocation4 + $0xb0] sm:$0xff]
    %v972 = vld [vmem:[#allocation4 + $0xb8] sm:$0xff]
    %v973 = vld [vmem:[#allocation4 + $0xc0] sm:$0xff]
    %v974 = vld [vmem:[#allocation4 + $0xc8] sm:$0xff]
    %v975 = vld [vmem:[#allocation4 + $0xd0] sm:$0xff]
    %v976 = vld [vmem:[#allocation4 + $0xd8] sm:$0xff]
    %v977 = vld [vmem:[#allocation4 + $0xe0] sm:$0xff]
    %v978 = vld [vmem:[#allocation4 + $0xe8] sm:$0xff]
    %v979 = vld [vmem:[#allocation4 + $0xf0] sm:$0xff]
    %v980 = vld [vmem:[#allocation4 + $0xf8] sm:$0xff]
    %v981 = vpack.c.bf16 %v950, %v949
    %v982 = vpack.c.bf16 %v952, %v951
    %v983 = vpack.c.bf16 %v954, %v953
    %v984 = vpack.c.bf16 %v956, %v955
    %v985 = vpack.c.bf16 %v958, %v957
    %v986 = vpack.c.bf16 %v960, %v959
    %v987 = vpack.c.bf16 %v962, %v961
    %v988 = vpack.c.bf16 %v964, %v963
    %v989 = vpack.c.bf16 %v966, %v965
    %v990 = vpack.c.bf16 %v968, %v967
    %v991 = vpack.c.bf16 %v970, %v969
    %v992 = vpack.c.bf16 %v972, %v971
    %v993 = vpack.c.bf16 %v974, %v973
    %v994 = vpack.c.bf16 %v976, %v975
    %v995 = vpack.c.bf16 %v978, %v977
    %v996 = vpack.c.bf16 %v980, %v979
    %v998 = vsel %vm471, %v885, 0
    %v1001 = vsel %vm471, %v886, 0
    %v1004 = vsel %vm471, %v933, 0
    %v1007 = vsel %vm471, %v934, 0
    %1009 = vmatprep.subr.bf16.mxu0 0
    %1010 = vmatpush1.bf16.xpose.msra.mxu0 %v1004
    %1011 = vmatprep.subr.bf16.mxu0 0
    %1012 = vmatpush1.bf16.xpose.msra.mxu0 %v1007
    %1013 = vmatprep.subr.bf16.mxu0 0
    %1014 = vmatpush1.bf16.xpose.msra.mxu0 0
    %1015 = vmatprep.subr.bf16.mxu0 0
    %1016 = vmatpush1.bf16.xpose.msra.mxu0 0
    %1017 = vmatprep.subr.bf16.mxu0 0
    %1018 = vmatpush1.bf16.xpose.msra.mxu0 0
    %1019 = vmatprep.subr.bf16.mxu0 0
    %1020 = vmatpush1.bf16.xpose.msra.mxu0 0
    %1021 = vmatprep.subr.bf16.mxu0 0
    %1022 = vmatpush1.bf16.xpose.msra.mxu0 0
    %1023 = vmatprep.subr.bf16.mxu0 0
    %1024 = vmatpush1.bf16.xpose.msra.mxu0 0
    %1025 = vmatprep.subr.bf16.mxu0 0
    %1026 = vmatpush1.bf16.xpose.msra.mxu0 0
    %1027 = vmatprep.subr.bf16.mxu0 0
    %1028 = vmatpush1.bf16.xpose.msra.mxu0 0
    %1029 = vmatprep.subr.bf16.mxu0 0
    %1030 = vmatpush1.bf16.xpose.msra.mxu0 0
    %1031 = vmatprep.subr.bf16.mxu0 0
    %1032 = vmatpush1.bf16.xpose.msra.mxu0 0
    %1033 = vmatprep.subr.bf16.mxu0 0
    %1034 = vmatpush1.bf16.xpose.msra.mxu0 0
    %1035 = vmatprep.subr.bf16.mxu0 0
    %1036 = vmatpush1.bf16.xpose.msra.mxu0 0
    %1037 = vmatprep.subr.bf16.mxu0 0
    %1038 = vmatpush1.bf16.xpose.msra.mxu0 0
    %1039 = vmatprep.subr.bf16.mxu0 0
    %1040 = vmatpush1.bf16.xpose.msra.mxu0 0
    %1041 = vmatprep.mubr.bf16.mxu0 0
    %1042 = vmatmul.mubr.bf16.gmra.mrb[0].mxu0 %v998
    %v1043 = vpop.f32.mrb[0].mxu0
    %v1044 = vadd.f32 0.0, %v1043
    %v1045 = vpop.f32.mrb[0].mxu0
    %v1046 = vpop.f32.mrb[0].mxu0
    %v1047 = vadd.f32 0.0, %v1046
    %v1048 = vpop.f32.mrb[0].mxu0
    %1049 = vmatprep.mubr.bf16.mxu0 0
    %1050 = vmatmul.mubr.bf16.gmra.mrb[0].mxu0 %v1001
    %v1051 = vpop.f32.mrb[0].mxu0
    %v1052 = vadd.f32 0.0, %v1051
    %v1053 = vpop.f32.mrb[0].mxu0
    %v1054 = vpop.f32.mrb[0].mxu0
    %v1055 = vadd.f32 0.0, %v1054
    %v1056 = vpop.f32.mrb[0].mxu0
    %1057 = vdwg.mxu0
    %v1059 = vsel %vm471, %v887, 0
    %v1062 = vsel %vm471, %v888, 0
    %v1065 = vsel %vm471, %v935, 0
    %v1068 = vsel %vm471, %v936, 0
    %1070 = vmatprep.subr.bf16.mxu0 0
    %1071 = vmatpush1.bf16.xpose.msra.mxu0 %v1065
    %1072 = vmatprep.subr.bf16.mxu0 0
    %1073 = vmatpush1.bf16.xpose.msra.mxu0 %v1068
    %1074 = vmatprep.subr.bf16.mxu0 0
    %1075 = vmatpush1.bf16.xpose.msra.mxu0 0
    %1076 = vmatprep.subr.bf16.mxu0 0
    %1077 = vmatpush1.bf16.xpose.msra.mxu0 0
    %1078 = vmatprep.subr.bf16.mxu0 0
    %1079 = vmatpush1.bf16.xpose.msra.mxu0 0
    %1080 = vmatprep.subr.bf16.mxu0 0
    %1081 = vmatpush1.bf16.xpose.msra.mxu0 0
    %1082 = vmatprep.subr.bf16.mxu0 0
    %1083 = vmatpush1.bf16.xpose.msra.mxu0 0
    %1084 = vmatprep.subr.bf16.mxu0 0
    %1085 = vmatpush1.bf16.xpose.msra.mxu0 0
    %1086 = vmatprep.subr.bf16.mxu0 0
    %1087 = vmatpush1.bf16.xpose.msra.mxu0 0
    %1088 = vmatprep.subr.bf16.mxu0 0
    %1089 = vmatpush1.bf16.xpose.msra.mxu0 0
    %1090 = vmatprep.subr.bf16.mxu0 0
    %1091 = vmatpush1.bf16.xpose.msra.mxu0 0
    %1092 = vmatprep.subr.bf16.mxu0 0
    %1093 = vmatpush1.bf16.xpose.msra.mxu0 0
    %1094 = vmatprep.subr.bf16.mxu0 0
    %1095 = vmatpush1.bf16.xpose.msra.mxu0 0
    %1096 = vmatprep.subr.bf16.mxu0 0
    %1097 = vmatpush1.bf16.xpose.msra.mxu0 0
    %1098 = vmatprep.subr.bf16.mxu0 0
    %1099 = vmatpush1.bf16.xpose.msra.mxu0 0
    %1100 = vmatprep.subr.bf16.mxu0 0
    %1101 = vmatpush1.bf16.xpose.msra.mxu0 0
    %1102 = vmatprep.mubr.bf16.mxu0 0
    %1103 = vmatmul.mubr.bf16.gmra.mrb[0].mxu0 %v1059
    %v1104 = vpop.f32.mrb[0].mxu0
    %v1105 = vadd.f32 0.0, %v1104
    %v1106 = vpop.f32.mrb[0].mxu0
    %v1107 = vpop.f32.mrb[0].mxu0
    %v1108 = vadd.f32 0.0, %v1107
    %v1109 = vpop.f32.mrb[0].mxu0
    %1110 = vmatprep.mubr.bf16.mxu0 0
    %1111 = vmatmul.mubr.bf16.gmra.mrb[0].mxu0 %v1062
    %v1112 = vpop.f32.mrb[0].mxu0
    %v1113 = vadd.f32 0.0, %v1112
    %v1114 = vpop.f32.mrb[0].mxu0
    %v1115 = vpop.f32.mrb[0].mxu0
    %v1116 = vadd.f32 0.0, %v1115
    %v1117 = vpop.f32.mrb[0].mxu0
    %1118 = vdwg.mxu0
    %v1120 = vsel %vm471, %v889, 0
    %v1123 = vsel %vm471, %v890, 0
    %v1126 = vsel %vm471, %v937, 0
    %v1129 = vsel %vm471, %v938, 0
    %1131 = vmatprep.subr.bf16.mxu0 0
    %1132 = vmatpush1.bf16.xpose.msra.mxu0 %v1126
    %1133 = vmatprep.subr.bf16.mxu0 0
    %1134 = vmatpush1.bf16.xpose.msra.mxu0 %v1129
    %1135 = vmatprep.subr.bf16.mxu0 0
    %1136 = vmatpush1.bf16.xpose.msra.mxu0 0
    %1137 = vmatprep.subr.bf16.mxu0 0
    %1138 = vmatpush1.bf16.xpose.msra.mxu0 0
    %1139 = vmatprep.subr.bf16.mxu0 0
    %1140 = vmatpush1.bf16.xpose.msra.mxu0 0
    %1141 = vmatprep.subr.bf16.mxu0 0
    %1142 = vmatpush1.bf16.xpose.msra.mxu0 0
    %1143 = vmatprep.subr.bf16.mxu0 0
    %1144 = vmatpush1.bf16.xpose.msra.mxu0 0
    %1145 = vmatprep.subr.bf16.mxu0 0
    %1146 = vmatpush1.bf16.xpose.msra.mxu0 0
    %1147 = vmatprep.subr.bf16.mxu0 0
    %1148 = vmatpush1.bf16.xpose.msra.mxu0 0
    %1149 = vmatprep.subr.bf16.mxu0 0
    %1150 = vmatpush1.bf16.xpose.msra.mxu0 0
    %1151 = vmatprep.subr.bf16.mxu0 0
    %1152 = vmatpush1.bf16.xpose.msra.mxu0 0
    %1153 = vmatprep.subr.bf16.mxu0 0
    %1154 = vmatpush1.bf16.xpose.msra.mxu0 0
    %1155 = vmatprep.subr.bf16.mxu0 0
    %1156 = vmatpush1.bf16.xpose.msra.mxu0 0
    %1157 = vmatprep.subr.bf16.mxu0 0
    %1158 = vmatpush1.bf16.xpose.msra.mxu0 0
    %1159 = vmatprep.subr.bf16.mxu0 0
    %1160 = vmatpush1.bf16.xpose.msra.mxu0 0
    %1161 = vmatprep.subr.bf16.mxu0 0
    %1162 = vmatpush1.bf16.xpose.msra.mxu0 0
    %1163 = vmatprep.mubr.bf16.mxu0 0
    %1164 = vmatmul.mubr.bf16.gmra.mrb[0].mxu0 %v1120
    %v1165 = vpop.f32.mrb[0].mxu0
    %v1166 = vadd.f32 0.0, %v1165
    %v1167 = vpop.f32.mrb[0].mxu0
    %v1168 = vpop.f32.mrb[0].mxu0
    %v1169 = vadd.f32 0.0, %v1168
    %v1170 = vpop.f32.mrb[0].mxu0
    %1171 = vmatprep.mubr.bf16.mxu0 0
    %1172 = vmatmul.mubr.bf16.gmra.mrb[0].mxu0 %v1123
    %v1173 = vpop.f32.mrb[0].mxu0
    %v1174 = vadd.f32 0.0, %v1173
    %v1175 = vpop.f32.mrb[0].mxu0
    %v1176 = vpop.f32.mrb[0].mxu0
    %v1177 = vadd.f32 0.0, %v1176
    %v1178 = vpop.f32.mrb[0].mxu0
    %1179 = vdwg.mxu0
    %v1181 = vsel %vm471, %v891, 0
    %v1184 = vsel %vm471, %v892, 0
    %v1187 = vsel %vm471, %v939, 0
    %v1190 = vsel %vm471, %v940, 0
    %1192 = vmatprep.subr.bf16.mxu0 0
    %1193 = vmatpush1.bf16.xpose.msra.mxu0 %v1187
    %1194 = vmatprep.subr.bf16.mxu0 0
    %1195 = vmatpush1.bf16.xpose.msra.mxu0 %v1190
    %1196 = vmatprep.subr.bf16.mxu0 0
    %1197 = vmatpush1.bf16.xpose.msra.mxu0 0
    %1198 = vmatprep.subr.bf16.mxu0 0
    %1199 = vmatpush1.bf16.xpose.msra.mxu0 0
    %1200 = vmatprep.subr.bf16.mxu0 0
    %1201 = vmatpush1.bf16.xpose.msra.mxu0 0
    %1202 = vmatprep.subr.bf16.mxu0 0
    %1203 = vmatpush1.bf16.xpose.msra.mxu0 0
    %1204 = vmatprep.subr.bf16.mxu0 0
    %1205 = vmatpush1.bf16.xpose.msra.mxu0 0
    %1206 = vmatprep.subr.bf16.mxu0 0
    %1207 = vmatpush1.bf16.xpose.msra.mxu0 0
    %1208 = vmatprep.subr.bf16.mxu0 0
    %1209 = vmatpush1.bf16.xpose.msra.mxu0 0
    %1210 = vmatprep.subr.bf16.mxu0 0
    %1211 = vmatpush1.bf16.xpose.msra.mxu0 0
    %1212 = vmatprep.subr.bf16.mxu0 0
    %1213 = vmatpush1.bf16.xpose.msra.mxu0 0
    %1214 = vmatprep.subr.bf16.mxu0 0
    %1215 = vmatpush1.bf16.xpose.msra.mxu0 0
    %1216 = vmatprep.subr.bf16.mxu0 0
    %1217 = vmatpush1.bf16.xpose.msra.mxu0 0
    %1218 = vmatprep.subr.bf16.mxu0 0
    %1219 = vmatpush1.bf16.xpose.msra.mxu0 0
    %1220 = vmatprep.subr.bf16.mxu0 0
    %1221 = vmatpush1.bf16.xpose.msra.mxu0 0
    %1222 = vmatprep.subr.bf16.mxu0 0
    %1223 = vmatpush1.bf16.xpose.msra.mxu0 0
    %1224 = vmatprep.mubr.bf16.mxu0 0
    %1225 = vmatmul.mubr.bf16.gmra.mrb[0].mxu0 %v1181
    %v1226 = vpop.f32.mrb[0].mxu0
    %v1227 = vadd.f32 0.0, %v1226
    %v1228 = vpop.f32.mrb[0].mxu0
    %v1229 = vpop.f32.mrb[0].mxu0
    %v1230 = vadd.f32 0.0, %v1229
    %v1231 = vpop.f32.mrb[0].mxu0
    %1232 = vmatprep.mubr.bf16.mxu0 0
    %1233 = vmatmul.mubr.bf16.gmra.mrb[0].mxu0 %v1184
    %v1234 = vpop.f32.mrb[0].mxu0
    %v1235 = vadd.f32 0.0, %v1234
    %v1236 = vpop.f32.mrb[0].mxu0
    %v1237 = vpop.f32.mrb[0].mxu0
    %v1238 = vadd.f32 0.0, %v1237
    %v1239 = vpop.f32.mrb[0].mxu0
    %1240 = vdwg.mxu0
    %v1242 = vsel %vm471, %v893, 0
    %v1245 = vsel %vm471, %v894, 0
    %v1248 = vsel %vm471, %v941, 0
    %v1251 = vsel %vm471, %v942, 0
    %1253 = vmatprep.subr.bf16.mxu0 0
    %1254 = vmatpush1.bf16.xpose.msra.mxu0 %v1248
    %1255 = vmatprep.subr.bf16.mxu0 0
    %1256 = vmatpush1.bf16.xpose.msra.mxu0 %v1251
    %1257 = vmatprep.subr.bf16.mxu0 0
    %1258 = vmatpush1.bf16.xpose.msra.mxu0 0
    %1259 = vmatprep.subr.bf16.mxu0 0
    %1260 = vmatpush1.bf16.xpose.msra.mxu0 0
    %1261 = vmatprep.subr.bf16.mxu0 0
    %1262 = vmatpush1.bf16.xpose.msra.mxu0 0
    %1263 = vmatprep.subr.bf16.mxu0 0
    %1264 = vmatpush1.bf16.xpose.msra.mxu0 0
    %1265 = vmatprep.subr.bf16.mxu0 0
    %1266 = vmatpush1.bf16.xpose.msra.mxu0 0
    %1267 = vmatprep.subr.bf16.mxu0 0
    %1268 = vmatpush1.bf16.xpose.msra.mxu0 0
    %1269 = vmatprep.subr.bf16.mxu0 0
    %1270 = vmatpush1.bf16.xpose.msra.mxu0 0
    %1271 = vmatprep.subr.bf16.mxu0 0
    %1272 = vmatpush1.bf16.xpose.msra.mxu0 0
    %1273 = vmatprep.subr.bf16.mxu0 0
    %1274 = vmatpush1.bf16.xpose.msra.mxu0 0
    %1275 = vmatprep.subr.bf16.mxu0 0
    %1276 = vmatpush1.bf16.xpose.msra.mxu0 0
    %1277 = vmatprep.subr.bf16.mxu0 0
    %1278 = vmatpush1.bf16.xpose.msra.mxu0 0
    %1279 = vmatprep.subr.bf16.mxu0 0
    %1280 = vmatpush1.bf16.xpose.msra.mxu0 0
    %1281 = vmatprep.subr.bf16.mxu0 0
    %1282 = vmatpush1.bf16.xpose.msra.mxu0 0
    %1283 = vmatprep.subr.bf16.mxu0 0
    %1284 = vmatpush1.bf16.xpose.msra.mxu0 0
    %1285 = vmatprep.mubr.bf16.mxu0 0
    %1286 = vmatmul.mubr.bf16.gmra.mrb[0].mxu0 %v1242
    %v1287 = vpop.f32.mrb[0].mxu0
    %v1288 = vadd.f32 0.0, %v1287
    %v1289 = vpop.f32.mrb[0].mxu0
    %v1290 = vpop.f32.mrb[0].mxu0
    %v1291 = vadd.f32 0.0, %v1290
    %v1292 = vpop.f32.mrb[0].mxu0
    %1293 = vmatprep.mubr.bf16.mxu0 0
    %1294 = vmatmul.mubr.bf16.gmra.mrb[0].mxu0 %v1245
    %v1295 = vpop.f32.mrb[0].mxu0
    %v1296 = vadd.f32 0.0, %v1295
    %v1297 = vpop.f32.mrb[0].mxu0
    %v1298 = vpop.f32.mrb[0].mxu0
    %v1299 = vadd.f32 0.0, %v1298
    %v1300 = vpop.f32.mrb[0].mxu0
    %1301 = vdwg.mxu0
    %v1303 = vsel %vm471, %v895, 0
    %v1306 = vsel %vm471, %v896, 0
    %v1309 = vsel %vm471, %v943, 0
    %v1312 = vsel %vm471, %v944, 0
    %1314 = vmatprep.subr.bf16.mxu0 0
    %1315 = vmatpush1.bf16.xpose.msra.mxu0 %v1309
    %1316 = vmatprep.subr.bf16.mxu0 0
    %1317 = vmatpush1.bf16.xpose.msra.mxu0 %v1312
    %1318 = vmatprep.subr.bf16.mxu0 0
    %1319 = vmatpush1.bf16.xpose.msra.mxu0 0
    %1320 = vmatprep.subr.bf16.mxu0 0
    %1321 = vmatpush1.bf16.xpose.msra.mxu0 0
    %1322 = vmatprep.subr.bf16.mxu0 0
    %1323 = vmatpush1.bf16.xpose.msra.mxu0 0
    %1324 = vmatprep.subr.bf16.mxu0 0
    %1325 = vmatpush1.bf16.xpose.msra.mxu0 0
    %1326 = vmatprep.subr.bf16.mxu0 0
    %1327 = vmatpush1.bf16.xpose.msra.mxu0 0
    %1328 = vmatprep.subr.bf16.mxu0 0
    %1329 = vmatpush1.bf16.xpose.msra.mxu0 0
    %1330 = vmatprep.subr.bf16.mxu0 0
    %1331 = vmatpush1.bf16.xpose.msra.mxu0 0
    %1332 = vmatprep.subr.bf16.mxu0 0
    %1333 = vmatpush1.bf16.xpose.msra.mxu0 0
    %1334 = vmatprep.subr.bf16.mxu0 0
    %1335 = vmatpush1.bf16.xpose.msra.mxu0 0
    %1336 = vmatprep.subr.bf16.mxu0 0
    %1337 = vmatpush1.bf16.xpose.msra.mxu0 0
    %1338 = vmatprep.subr.bf16.mxu0 0
    %1339 = vmatpush1.bf16.xpose.msra.mxu0 0
    %1340 = vmatprep.subr.bf16.mxu0 0
    %1341 = vmatpush1.bf16.xpose.msra.mxu0 0
    %1342 = vmatprep.subr.bf16.mxu0 0
    %1343 = vmatpush1.bf16.xpose.msra.mxu0 0
    %1344 = vmatprep.subr.bf16.mxu0 0
    %1345 = vmatpush1.bf16.xpose.msra.mxu0 0
    %1346 = vmatprep.mubr.bf16.mxu0 0
    %1347 = vmatmul.mubr.bf16.gmra.mrb[0].mxu0 %v1303
    %v1348 = vpop.f32.mrb[0].mxu0
    %v1349 = vadd.f32 0.0, %v1348
    %v1350 = vpop.f32.mrb[0].mxu0
    %v1351 = vpop.f32.mrb[0].mxu0
    %v1352 = vadd.f32 0.0, %v1351
    %v1353 = vpop.f32.mrb[0].mxu0
    %1354 = vmatprep.mubr.bf16.mxu0 0
    %1355 = vmatmul.mubr.bf16.gmra.mrb[0].mxu0 %v1306
    %v1356 = vpop.f32.mrb[0].mxu0
    %v1357 = vadd.f32 0.0, %v1356
    %v1358 = vpop.f32.mrb[0].mxu0
    %v1359 = vpop.f32.mrb[0].mxu0
    %v1360 = vadd.f32 0.0, %v1359
    %v1361 = vpop.f32.mrb[0].mxu0
    %1362 = vdwg.mxu0
    %v1364 = vsel %vm471, %v897, 0
    %v1367 = vsel %vm471, %v898, 0
    %v1370 = vsel %vm471, %v945, 0
    %v1373 = vsel %vm471, %v946, 0
    %1375 = vmatprep.subr.bf16.mxu0 0
    %1376 = vmatpush1.bf16.xpose.msra.mxu0 %v1370
    %1377 = vmatprep.subr.bf16.mxu0 0
    %1378 = vmatpush1.bf16.xpose.msra.mxu0 %v1373
    %1379 = vmatprep.subr.bf16.mxu0 0
    %1380 = vmatpush1.bf16.xpose.msra.mxu0 0
    %1381 = vmatprep.subr.bf16.mxu0 0
    %1382 = vmatpush1.bf16.xpose.msra.mxu0 0
    %1383 = vmatprep.subr.bf16.mxu0 0
    %1384 = vmatpush1.bf16.xpose.msra.mxu0 0
    %1385 = vmatprep.subr.bf16.mxu0 0
    %1386 = vmatpush1.bf16.xpose.msra.mxu0 0
    %1387 = vmatprep.subr.bf16.mxu0 0
    %1388 = vmatpush1.bf16.xpose.msra.mxu0 0
    %1389 = vmatprep.subr.bf16.mxu0 0
    %1390 = vmatpush1.bf16.xpose.msra.mxu0 0
    %1391 = vmatprep.subr.bf16.mxu0 0
    %1392 = vmatpush1.bf16.xpose.msra.mxu0 0
    %1393 = vmatprep.subr.bf16.mxu0 0
    %1394 = vmatpush1.bf16.xpose.msra.mxu0 0
    %1395 = vmatprep.subr.bf16.mxu0 0
    %1396 = vmatpush1.bf16.xpose.msra.mxu0 0
    %1397 = vmatprep.subr.bf16.mxu0 0
    %1398 = vmatpush1.bf16.xpose.msra.mxu0 0
    %1399 = vmatprep.subr.bf16.mxu0 0
    %1400 = vmatpush1.bf16.xpose.msra.mxu0 0
    %1401 = vmatprep.subr.bf16.mxu0 0
    %1402 = vmatpush1.bf16.xpose.msra.mxu0 0
    %1403 = vmatprep.subr.bf16.mxu0 0
    %1404 = vmatpush1.bf16.xpose.msra.mxu0 0
    %1405 = vmatprep.subr.bf16.mxu0 0
    %1406 = vmatpush1.bf16.xpose.msra.mxu0 0
    %1407 = vmatprep.mubr.bf16.mxu0 0
    %1408 = vmatmul.mubr.bf16.gmra.mrb[0].mxu0 %v1364
    %v1409 = vpop.f32.mrb[0].mxu0
    %v1410 = vadd.f32 0.0, %v1409
    %v1411 = vpop.f32.mrb[0].mxu0
    %v1412 = vpop.f32.mrb[0].mxu0
    %v1413 = vadd.f32 0.0, %v1412
    %v1414 = vpop.f32.mrb[0].mxu0
    %1415 = vmatprep.mubr.bf16.mxu0 0
    %1416 = vmatmul.mubr.bf16.gmra.mrb[0].mxu0 %v1367
    %v1417 = vpop.f32.mrb[0].mxu0
    %v1418 = vadd.f32 0.0, %v1417
    %v1419 = vpop.f32.mrb[0].mxu0
    %v1420 = vpop.f32.mrb[0].mxu0
    %v1421 = vadd.f32 0.0, %v1420
    %v1422 = vpop.f32.mrb[0].mxu0
    %1423 = vdwg.mxu0
    %v1425 = vsel %vm471, %v899, 0
    %v1428 = vsel %vm471, %v900, 0
    %v1431 = vsel %vm471, %v947, 0
    %v1434 = vsel %vm471, %v948, 0
    %1436 = vmatprep.subr.bf16.mxu0 0
    %1437 = vmatpush1.bf16.xpose.msra.mxu0 %v1431
    %1438 = vmatprep.subr.bf16.mxu0 0
    %1439 = vmatpush1.bf16.xpose.msra.mxu0 %v1434
    %1440 = vmatprep.subr.bf16.mxu0 0
    %1441 = vmatpush1.bf16.xpose.msra.mxu0 0
    %1442 = vmatprep.subr.bf16.mxu0 0
    %1443 = vmatpush1.bf16.xpose.msra.mxu0 0
    %1444 = vmatprep.subr.bf16.mxu0 0
    %1445 = vmatpush1.bf16.xpose.msra.mxu0 0
    %1446 = vmatprep.subr.bf16.mxu0 0
    %1447 = vmatpush1.bf16.xpose.msra.mxu0 0
    %1448 = vmatprep.subr.bf16.mxu0 0
    %1449 = vmatpush1.bf16.xpose.msra.mxu0 0
    %1450 = vmatprep.subr.bf16.mxu0 0
    %1451 = vmatpush1.bf16.xpose.msra.mxu0 0
    %1452 = vmatprep.subr.bf16.mxu0 0
    %1453 = vmatpush1.bf16.xpose.msra.mxu0 0
    %1454 = vmatprep.subr.bf16.mxu0 0
    %1455 = vmatpush1.bf16.xpose.msra.mxu0 0
    %1456 = vmatprep.subr.bf16.mxu0 0
    %1457 = vmatpush1.bf16.xpose.msra.mxu0 0
    %1458 = vmatprep.subr.bf16.mxu0 0
    %1459 = vmatpush1.bf16.xpose.msra.mxu0 0
    %1460 = vmatprep.subr.bf16.mxu0 0
    %1461 = vmatpush1.bf16.xpose.msra.mxu0 0
    %1462 = vmatprep.subr.bf16.mxu0 0
    %1463 = vmatpush1.bf16.xpose.msra.mxu0 0
    %1464 = vmatprep.subr.bf16.mxu0 0
    %1465 = vmatpush1.bf16.xpose.msra.mxu0 0
    %1466 = vmatprep.subr.bf16.mxu0 0
    %1467 = vmatpush1.bf16.xpose.msra.mxu0 0
    %1468 = vmatprep.mubr.bf16.mxu0 0
    %1469 = vmatmul.mubr.bf16.gmra.mrb[0].mxu0 %v1425
    %v1470 = vpop.f32.mrb[0].mxu0
    %v1471 = vadd.f32 0.0, %v1470
    %v1472 = vpop.f32.mrb[0].mxu0
    %v1473 = vpop.f32.mrb[0].mxu0
    %v1474 = vadd.f32 0.0, %v1473
    %v1475 = vpop.f32.mrb[0].mxu0
    %1476 = vmatprep.mubr.bf16.mxu0 0
    %1477 = vmatmul.mubr.bf16.gmra.mrb[0].mxu0 %v1428
    %v1478 = vpop.f32.mrb[0].mxu0
    %v1479 = vadd.f32 0.0, %v1478
    %v1480 = vpop.f32.mrb[0].mxu0
    %v1481 = vpop.f32.mrb[0].mxu0
    %v1482 = vadd.f32 0.0, %v1481
    %v1483 = vpop.f32.mrb[0].mxu0
    %1484 = vdwg.mxu0
    %v1485 = vmul.f32 %v1044, 0.125
    %v1486 = vmul.f32 %v1047, 0.125
    %v1487 = vmul.f32 %v1052, 0.125
    %v1488 = vmul.f32 %v1055, 0.125
    %v1489 = vmul.f32 %v1105, 0.125
    %v1490 = vmul.f32 %v1108, 0.125
    %v1491 = vmul.f32 %v1113, 0.125
    %v1492 = vmul.f32 %v1116, 0.125
    %v1493 = vmul.f32 %v1166, 0.125
    %v1494 = vmul.f32 %v1169, 0.125
    %v1495 = vmul.f32 %v1174, 0.125
    %v1496 = vmul.f32 %v1177, 0.125
    %v1497 = vmul.f32 %v1227, 0.125
    %v1498 = vmul.f32 %v1230, 0.125
    %v1499 = vmul.f32 %v1235, 0.125
    %v1500 = vmul.f32 %v1238, 0.125
    %v1501 = vmul.f32 %v1288, 0.125
    %v1502 = vmul.f32 %v1291, 0.125
    %v1503 = vmul.f32 %v1296, 0.125
    %v1504 = vmul.f32 %v1299, 0.125
    %v1505 = vmul.f32 %v1349, 0.125
    %v1506 = vmul.f32 %v1352, 0.125
    %v1507 = vmul.f32 %v1357, 0.125
    %v1508 = vmul.f32 %v1360, 0.125
    %v1509 = vmul.f32 %v1410, 0.125
    %v1510 = vmul.f32 %v1413, 0.125
    %v1511 = vmul.f32 %v1418, 0.125
    %v1512 = vmul.f32 %v1421, 0.125
    %v1513 = vmul.f32 %v1471, 0.125
    %v1514 = vmul.f32 %v1474, 0.125
    %v1515 = vmul.f32 %v1479, 0.125
    %v1516 = vmul.f32 %v1482, 0.125
    %v1517 = vadd.f32 %v1485, %v201
    %v1518 = vadd.f32 %v1486, %v202
    %v1519 = vadd.f32 %v1487, %v203
    %v1520 = vadd.f32 %v1488, %v204
    %v1521 = vadd.f32 %v1489, %v201
    %v1522 = vadd.f32 %v1490, %v202
    %v1523 = vadd.f32 %v1491, %v203
    %v1524 = vadd.f32 %v1492, %v204
    %v1525 = vadd.f32 %v1493, %v201
    %v1526 = vadd.f32 %v1494, %v202
    %v1527 = vadd.f32 %v1495, %v203
    %v1528 = vadd.f32 %v1496, %v204
    %v1529 = vadd.f32 %v1497, %v201
    %v1530 = vadd.f32 %v1498, %v202
    %v1531 = vadd.f32 %v1499, %v203
    %v1532 = vadd.f32 %v1500, %v204
    %v1533 = vadd.f32 %v1501, %v201
    %v1534 = vadd.f32 %v1502, %v202
    %v1535 = vadd.f32 %v1503, %v203
    %v1536 = vadd.f32 %v1504, %v204
    %v1537 = vadd.f32 %v1505, %v201
    %v1538 = vadd.f32 %v1506, %v202
    %v1539 = vadd.f32 %v1507, %v203
    %v1540 = vadd.f32 %v1508, %v204
    %v1541 = vadd.f32 %v1509, %v201
    %v1542 = vadd.f32 %v1510, %v202
    %v1543 = vadd.f32 %v1511, %v203
    %v1544 = vadd.f32 %v1512, %v204
    %v1545 = vadd.f32 %v1513, %v201
    %v1546 = vadd.f32 %v1514, %v202
    %v1547 = vadd.f32 %v1515, %v203
    %v1548 = vadd.f32 %v1516, %v204
    %vm1549 = vcmask 261120
    %v1550 = vsel %vm1549, %v1517, -inf
    %1551 = vmax.xlane.f32.xlu0 %v1550
    %v1552 = vpop.xlane.xlu0 %1551
    %v1553 = vsel %vm1549, %v1518, -inf
    %1554 = vmax.xlane.f32.xlu0 %v1553
    %v1555 = vpop.xlane.xlu0 %1554
    %v1556 = vsel %vm1549, %v1519, -inf
    %1557 = vmax.xlane.f32.xlu0 %v1556
    %v1558 = vpop.xlane.xlu0 %1557
    %v1559 = vsel %vm1549, %v1520, -inf
    %1560 = vmax.xlane.f32.xlu0 %v1559
    %v1561 = vpop.xlane.xlu0 %1560
    %v1562 = vsel %vm1549, %v1521, -inf
    %1563 = vmax.xlane.f32.xlu0 %v1562
    %v1564 = vpop.xlane.xlu0 %1563
    %v1565 = vsel %vm1549, %v1522, -inf
    %1566 = vmax.xlane.f32.xlu0 %v1565
    %v1567 = vpop.xlane.xlu0 %1566
    %v1568 = vsel %vm1549, %v1523, -inf
    %1569 = vmax.xlane.f32.xlu0 %v1568
    %v1570 = vpop.xlane.xlu0 %1569
    %v1571 = vsel %vm1549, %v1524, -inf
    %1572 = vmax.xlane.f32.xlu0 %v1571
    %v1573 = vpop.xlane.xlu0 %1572
    %v1574 = vsel %vm1549, %v1525, -inf
    %1575 = vmax.xlane.f32.xlu0 %v1574
    %v1576 = vpop.xlane.xlu0 %1575
    %v1577 = vsel %vm1549, %v1526, -inf
    %1578 = vmax.xlane.f32.xlu0 %v1577
    %v1579 = vpop.xlane.xlu0 %1578
    %v1580 = vsel %vm1549, %v1527, -inf
    %1581 = vmax.xlane.f32.xlu0 %v1580
    %v1582 = vpop.xlane.xlu0 %1581
    %v1583 = vsel %vm1549, %v1528, -inf
    %1584 = vmax.xlane.f32.xlu0 %v1583
    %v1585 = vpop.xlane.xlu0 %1584
    %v1586 = vsel %vm1549, %v1529, -inf
    %1587 = vmax.xlane.f32.xlu0 %v1586
    %v1588 = vpop.xlane.xlu0 %1587
    %v1589 = vsel %vm1549, %v1530, -inf
    %1590 = vmax.xlane.f32.xlu0 %v1589
    %v1591 = vpop.xlane.xlu0 %1590
    %v1592 = vsel %vm1549, %v1531, -inf
    %1593 = vmax.xlane.f32.xlu0 %v1592
    %v1594 = vpop.xlane.xlu0 %1593
    %v1595 = vsel %vm1549, %v1532, -inf
    %1596 = vmax.xlane.f32.xlu0 %v1595
    %v1597 = vpop.xlane.xlu0 %1596
    %v1598 = vsel %vm1549, %v1533, -inf
    %1599 = vmax.xlane.f32.xlu0 %v1598
    %v1600 = vpop.xlane.xlu0 %1599
    %v1601 = vsel %vm1549, %v1534, -inf
    %1602 = vmax.xlane.f32.xlu0 %v1601
    %v1603 = vpop.xlane.xlu0 %1602
    %v1604 = vsel %vm1549, %v1535, -inf
    %1605 = vmax.xlane.f32.xlu0 %v1604
    %v1606 = vpop.xlane.xlu0 %1605
    %v1607 = vsel %vm1549, %v1536, -inf
    %1608 = vmax.xlane.f32.xlu0 %v1607
    %v1609 = vpop.xlane.xlu0 %1608
    %v1610 = vsel %vm1549, %v1537, -inf
    %1611 = vmax.xlane.f32.xlu0 %v1610
    %v1612 = vpop.xlane.xlu0 %1611
    %v1613 = vsel %vm1549, %v1538, -inf
    %1614 = vmax.xlane.f32.xlu0 %v1613
    %v1615 = vpop.xlane.xlu0 %1614
    %v1616 = vsel %vm1549, %v1539, -inf
    %1617 = vmax.xlane.f32.xlu0 %v1616
    %v1618 = vpop.xlane.xlu0 %1617
    %v1619 = vsel %vm1549, %v1540, -inf
    %1620 = vmax.xlane.f32.xlu0 %v1619
    %v1621 = vpop.xlane.xlu0 %1620
    %v1622 = vsel %vm1549, %v1541, -inf
    %1623 = vmax.xlane.f32.xlu0 %v1622
    %v1624 = vpop.xlane.xlu0 %1623
    %v1625 = vsel %vm1549, %v1542, -inf
    %1626 = vmax.xlane.f32.xlu0 %v1625
    %v1627 = vpop.xlane.xlu0 %1626
    %v1628 = vsel %vm1549, %v1543, -inf
    %1629 = vmax.xlane.f32.xlu0 %v1628
    %v1630 = vpop.xlane.xlu0 %1629
    %v1631 = vsel %vm1549, %v1544, -inf
    %1632 = vmax.xlane.f32.xlu0 %v1631
    %v1633 = vpop.xlane.xlu0 %1632
    %v1634 = vsel %vm1549, %v1545, -inf
    %1635 = vmax.xlane.f32.xlu0 %v1634
    %v1636 = vpop.xlane.xlu0 %1635
    %v1637 = vsel %vm1549, %v1546, -inf
    %1638 = vmax.xlane.f32.xlu0 %v1637
    %v1639 = vpop.xlane.xlu0 %1638
    %v1640 = vsel %vm1549, %v1547, -inf
    %1641 = vmax.xlane.f32.xlu0 %v1640
    %v1642 = vpop.xlane.xlu0 %1641
    %v1643 = vsel %vm1549, %v1548, -inf
    %1644 = vmax.xlane.f32.xlu0 %v1643
    %v1645 = vpop.xlane.xlu0 %1644
    %v1646 = vsub.f32 %v1517, %v1552
    %v1647 = vsub.f32 %v1518, %v1555
    %v1648 = vsub.f32 %v1519, %v1558
    %v1649 = vsub.f32 %v1520, %v1561
    %v1650 = vsub.f32 %v1521, %v1564
    %v1651 = vsub.f32 %v1522, %v1567
    %v1652 = vsub.f32 %v1523, %v1570
    %v1653 = vsub.f32 %v1524, %v1573
    %v1654 = vsub.f32 %v1525, %v1576
    %v1655 = vsub.f32 %v1526, %v1579
    %v1656 = vsub.f32 %v1527, %v1582
    %v1657 = vsub.f32 %v1528, %v1585
    %v1658 = vsub.f32 %v1529, %v1588
    %v1659 = vsub.f32 %v1530, %v1591
    %v1660 = vsub.f32 %v1531, %v1594
    %v1661 = vsub.f32 %v1532, %v1597
    %v1662 = vsub.f32 %v1533, %v1600
    %v1663 = vsub.f32 %v1534, %v1603
    %v1664 = vsub.f32 %v1535, %v1606
    %v1665 = vsub.f32 %v1536, %v1609
    %v1666 = vsub.f32 %v1537, %v1612
    %v1667 = vsub.f32 %v1538, %v1615
    %v1668 = vsub.f32 %v1539, %v1618
    %v1669 = vsub.f32 %v1540, %v1621
    %v1670 = vsub.f32 %v1541, %v1624
    %v1671 = vsub.f32 %v1542, %v1627
    %v1672 = vsub.f32 %v1543, %v1630
    %v1673 = vsub.f32 %v1544, %v1633
    %v1674 = vsub.f32 %v1545, %v1636
    %v1675 = vsub.f32 %v1546, %v1639
    %v1676 = vsub.f32 %v1547, %v1642
    %v1677 = vsub.f32 %v1548, %v1645
    %v1678 = vmul.f32 %v1646, 1.442695
    %v1679 = vpow.pop %v1678
    %v1680 = vmul.f32 %v1647, 1.442695
    %v1681 = vpow.pop %v1680
    %v1682 = vmul.f32 %v1648, 1.442695
    %v1683 = vpow.pop %v1682
    %v1684 = vmul.f32 %v1649, 1.442695
    %v1685 = vpow.pop %v1684
    %v1686 = vmul.f32 %v1650, 1.442695
    %v1687 = vpow.pop %v1686
    %v1688 = vmul.f32 %v1651, 1.442695
    %v1689 = vpow.pop %v1688
    %v1690 = vmul.f32 %v1652, 1.442695
    %v1691 = vpow.pop %v1690
    %v1692 = vmul.f32 %v1653, 1.442695
    %v1693 = vpow.pop %v1692
    %v1694 = vmul.f32 %v1654, 1.442695
    %v1695 = vpow.pop %v1694
    %v1696 = vmul.f32 %v1655, 1.442695
    %v1697 = vpow.pop %v1696
    %v1698 = vmul.f32 %v1656, 1.442695
    %v1699 = vpow.pop %v1698
    %v1700 = vmul.f32 %v1657, 1.442695
    %v1701 = vpow.pop %v1700
    %v1702 = vmul.f32 %v1658, 1.442695
    %v1703 = vpow.pop %v1702
    %v1704 = vmul.f32 %v1659, 1.442695
    %v1705 = vpow.pop %v1704
    %v1706 = vmul.f32 %v1660, 1.442695
    %v1707 = vpow.pop %v1706
    %v1708 = vmul.f32 %v1661, 1.442695
    %v1709 = vpow.pop %v1708
    %v1710 = vmul.f32 %v1662, 1.442695
    %v1711 = vpow.pop %v1710
    %v1712 = vmul.f32 %v1663, 1.442695
    %v1713 = vpow.pop %v1712
    %v1714 = vmul.f32 %v1664, 1.442695
    %v1715 = vpow.pop %v1714
    %v1716 = vmul.f32 %v1665, 1.442695
    %v1717 = vpow.pop %v1716
    %v1718 = vmul.f32 %v1666, 1.442695
    %v1719 = vpow.pop %v1718
    %v1720 = vmul.f32 %v1667, 1.442695
    %v1721 = vpow.pop %v1720
    %v1722 = vmul.f32 %v1668, 1.442695
    %v1723 = vpow.pop %v1722
    %v1724 = vmul.f32 %v1669, 1.442695
    %v1725 = vpow.pop %v1724
    %v1726 = vmul.f32 %v1670, 1.442695
    %v1727 = vpow.pop %v1726
    %v1728 = vmul.f32 %v1671, 1.442695
    %v1729 = vpow.pop %v1728
    %v1730 = vmul.f32 %v1672, 1.442695
    %v1731 = vpow.pop %v1730
    %v1732 = vmul.f32 %v1673, 1.442695
    %v1733 = vpow.pop %v1732
    %v1734 = vmul.f32 %v1674, 1.442695
    %v1735 = vpow.pop %v1734
    %v1736 = vmul.f32 %v1675, 1.442695
    %v1737 = vpow.pop %v1736
    %v1738 = vmul.f32 %v1676, 1.442695
    %v1739 = vpow.pop %v1738
    %v1740 = vmul.f32 %v1677, 1.442695
    %v1741 = vpow.pop %v1740
    %v1742 = vsel %vm1549, %v1679, 0.0
    %1743 = vadd.xlane.f32.xlu0 %v1742
    %v1744 = vpop.xlane.xlu0 %1743
    %v1745 = vsel %vm1549, %v1681, 0.0
    %1746 = vadd.xlane.f32.xlu0 %v1745
    %v1747 = vpop.xlane.xlu0 %1746
    %v1748 = vsel %vm1549, %v1683, 0.0
    %1749 = vadd.xlane.f32.xlu0 %v1748
    %v1750 = vpop.xlane.xlu0 %1749
    %v1751 = vsel %vm1549, %v1685, 0.0
    %1752 = vadd.xlane.f32.xlu0 %v1751
    %v1753 = vpop.xlane.xlu0 %1752
    %v1754 = vsel %vm1549, %v1687, 0.0
    %1755 = vadd.xlane.f32.xlu0 %v1754
    %v1756 = vpop.xlane.xlu0 %1755
    %v1757 = vsel %vm1549, %v1689, 0.0
    %1758 = vadd.xlane.f32.xlu0 %v1757
    %v1759 = vpop.xlane.xlu0 %1758
    %v1760 = vsel %vm1549, %v1691, 0.0
    %1761 = vadd.xlane.f32.xlu0 %v1760
    %v1762 = vpop.xlane.xlu0 %1761
    %v1763 = vsel %vm1549, %v1693, 0.0
    %1764 = vadd.xlane.f32.xlu0 %v1763
    %v1765 = vpop.xlane.xlu0 %1764
    %v1766 = vsel %vm1549, %v1695, 0.0
    %1767 = vadd.xlane.f32.xlu0 %v1766
    %v1768 = vpop.xlane.xlu0 %1767
    %v1769 = vsel %vm1549, %v1697, 0.0
    %1770 = vadd.xlane.f32.xlu0 %v1769
    %v1771 = vpop.xlane.xlu0 %1770
    %v1772 = vsel %vm1549, %v1699, 0.0
    %1773 = vadd.xlane.f32.xlu0 %v1772
    %v1774 = vpop.xlane.xlu0 %1773
    %v1775 = vsel %vm1549, %v1701, 0.0
    %1776 = vadd.xlane.f32.xlu0 %v1775
    %v1777 = vpop.xlane.xlu0 %1776
    %v1778 = vsel %vm1549, %v1703, 0.0
    %1779 = vadd.xlane.f32.xlu0 %v1778
    %v1780 = vpop.xlane.xlu0 %1779
    %v1781 = vsel %vm1549, %v1705, 0.0
    %1782 = vadd.xlane.f32.xlu0 %v1781
    %v1783 = vpop.xlane.xlu0 %1782
    %v1784 = vsel %vm1549, %v1707, 0.0
    %1785 = vadd.xlane.f32.xlu0 %v1784
    %v1786 = vpop.xlane.xlu0 %1785
    %v1787 = vsel %vm1549, %v1709, 0.0
    %1788 = vadd.xlane.f32.xlu0 %v1787
    %v1789 = vpop.xlane.xlu0 %1788
    %v1790 = vsel %vm1549, %v1711, 0.0
    %1791 = vadd.xlane.f32.xlu0 %v1790
    %v1792 = vpop.xlane.xlu0 %1791
    %v1793 = vsel %vm1549, %v1713, 0.0
    %1794 = vadd.xlane.f32.xlu0 %v1793
    %v1795 = vpop.xlane.xlu0 %1794
    %v1796 = vsel %vm1549, %v1715, 0.0
    %1797 = vadd.xlane.f32.xlu0 %v1796
    %v1798 = vpop.xlane.xlu0 %1797
    %v1799 = vsel %vm1549, %v1717, 0.0
    %1800 = vadd.xlane.f32.xlu0 %v1799
    %v1801 = vpop.xlane.xlu0 %1800
    %v1802 = vsel %vm1549, %v1719, 0.0
    %1803 = vadd.xlane.f32.xlu0 %v1802
    %v1804 = vpop.xlane.xlu0 %1803
    %v1805 = vsel %vm1549, %v1721, 0.0
    %1806 = vadd.xlane.f32.xlu0 %v1805
    %v1807 = vpop.xlane.xlu0 %1806
    %v1808 = vsel %vm1549, %v1723, 0.0
    %1809 = vadd.xlane.f32.xlu0 %v1808
    %v1810 = vpop.xlane.xlu0 %1809
    %v1811 = vsel %vm1549, %v1725, 0.0
    %1812 = vadd.xlane.f32.xlu0 %v1811
    %v1813 = vpop.xlane.xlu0 %1812
    %v1814 = vsel %vm1549, %v1727, 0.0
    %1815 = vadd.xlane.f32.xlu0 %v1814
    %v1816 = vpop.xlane.xlu0 %1815
    %v1817 = vsel %vm1549, %v1729, 0.0
    %1818 = vadd.xlane.f32.xlu0 %v1817
    %v1819 = vpop.xlane.xlu0 %1818
    %v1820 = vsel %vm1549, %v1731, 0.0
    %1821 = vadd.xlane.f32.xlu0 %v1820
    %v1822 = vpop.xlane.xlu0 %1821
    %v1823 = vsel %vm1549, %v1733, 0.0
    %1824 = vadd.xlane.f32.xlu0 %v1823
    %v1825 = vpop.xlane.xlu0 %1824
    %v1826 = vsel %vm1549, %v1735, 0.0
    %1827 = vadd.xlane.f32.xlu0 %v1826
    %v1828 = vpop.xlane.xlu0 %1827
    %v1829 = vsel %vm1549, %v1737, 0.0
    %1830 = vadd.xlane.f32.xlu0 %v1829
    %v1831 = vpop.xlane.xlu0 %1830
    %v1832 = vsel %vm1549, %v1739, 0.0
    %1833 = vadd.xlane.f32.xlu0 %v1832
    %v1834 = vpop.xlane.xlu0 %1833
    %v1835 = vsel %vm1549, %v1741, 0.0
    %1836 = vadd.xlane.f32.xlu0 %v1835
    %v1837 = vpop.xlane.xlu0 %1836
    %v1838 = vrcp.pop %v1744
    %v1839 = vrcp.pop %v1747
    %v1840 = vrcp.pop %v1750
    %v1841 = vrcp.pop %v1753
    %v1842 = vrcp.pop %v1756
    %v1843 = vrcp.pop %v1759
    %v1844 = vrcp.pop %v1762
    %v1845 = vrcp.pop %v1765
    %v1846 = vrcp.pop %v1768
    %v1847 = vrcp.pop %v1771
    %v1848 = vrcp.pop %v1774
    %v1849 = vrcp.pop %v1777
    %v1850 = vrcp.pop %v1780
    %v1851 = vrcp.pop %v1783
    %v1852 = vrcp.pop %v1786
    %v1853 = vrcp.pop %v1789
    %v1854 = vrcp.pop %v1792
    %v1855 = vrcp.pop %v1795
    %v1856 = vrcp.pop %v1798
    %v1857 = vrcp.pop %v1801
    %v1858 = vrcp.pop %v1804
    %v1859 = vrcp.pop %v1807
    %v1860 = vrcp.pop %v1810
    %v1861 = vrcp.pop %v1813
    %v1862 = vrcp.pop %v1816
    %v1863 = vrcp.pop %v1819
    %v1864 = vrcp.pop %v1822
    %v1865 = vrcp.pop %v1825
    %v1866 = vrcp.pop %v1828
    %v1867 = vrcp.pop %v1831
    %v1868 = vrcp.pop %v1834
    %v1869 = vrcp.pop %v1837
    %v1870 = vmul.f32 %v1679, %v1838
    %v1871 = vmul.f32 %v1681, %v1839
    %v1872 = vmul.f32 %v1683, %v1840
    %v1873 = vmul.f32 %v1685, %v1841
    %v1874 = vmul.f32 %v1687, %v1842
    %v1875 = vmul.f32 %v1689, %v1843
    %v1876 = vmul.f32 %v1691, %v1844
    %v1877 = vmul.f32 %v1693, %v1845
    %v1878 = vmul.f32 %v1695, %v1846
    %v1879 = vmul.f32 %v1697, %v1847
    %v1880 = vmul.f32 %v1699, %v1848
    %v1881 = vmul.f32 %v1701, %v1849
    %v1882 = vmul.f32 %v1703, %v1850
    %v1883 = vmul.f32 %v1705, %v1851
    %v1884 = vmul.f32 %v1707, %v1852
    %v1885 = vmul.f32 %v1709, %v1853
    %v1886 = vmul.f32 %v1711, %v1854
    %v1887 = vmul.f32 %v1713, %v1855
    %v1888 = vmul.f32 %v1715, %v1856
    %v1889 = vmul.f32 %v1717, %v1857
    %v1890 = vmul.f32 %v1719, %v1858
    %v1891 = vmul.f32 %v1721, %v1859
    %v1892 = vmul.f32 %v1723, %v1860
    %v1893 = vmul.f32 %v1725, %v1861
    %v1894 = vmul.f32 %v1727, %v1862
    %v1895 = vmul.f32 %v1729, %v1863
    %v1896 = vmul.f32 %v1731, %v1864
    %v1897 = vmul.f32 %v1733, %v1865
    %v1898 = vmul.f32 %v1735, %v1866
    %v1899 = vmul.f32 %v1737, %v1867
    %v1900 = vmul.f32 %v1739, %v1868
    %v1901 = vmul.f32 %v1741, %v1869
    %v1902 = vpack.c.bf16 %v1871, %v1870
    %v1903 = vpack.c.bf16 %v1873, %v1872
    %v1904 = vpack.c.bf16 %v1875, %v1874
    %v1905 = vpack.c.bf16 %v1877, %v1876
    %v1906 = vpack.c.bf16 %v1879, %v1878
    %v1907 = vpack.c.bf16 %v1881, %v1880
    %v1908 = vpack.c.bf16 %v1883, %v1882
    %v1909 = vpack.c.bf16 %v1885, %v1884
    %v1910 = vpack.c.bf16 %v1887, %v1886
    %v1911 = vpack.c.bf16 %v1889, %v1888
    %v1912 = vpack.c.bf16 %v1891, %v1890
    %v1913 = vpack.c.bf16 %v1893, %v1892
    %v1914 = vpack.c.bf16 %v1895, %v1894
    %v1915 = vpack.c.bf16 %v1897, %v1896
    %v1916 = vpack.c.bf16 %v1899, %v1898
    %v1917 = vpack.c.bf16 %v1901, %v1900
    %v1919 = vsel %vm1549, %v1902, 0
    %v1922 = vsel %vm1549, %v1903, 0
    %1924 = vmatprep.subr.bf16.mxu0 0
    %1925 = vmatpush1.bf16.msra.mxu0 %v981
    %1926 = vmatprep.subr.bf16.mxu0 0
    %1927 = vmatpush1.bf16.msra.mxu0 %v982
    %1928 = vmatprep.subr.bf16.mxu0 0
    %1929 = vmatpush1.bf16.msra.mxu0 0
    %1930 = vmatprep.subr.bf16.mxu0 0
    %1931 = vmatpush1.bf16.msra.mxu0 0
    %1932 = vmatprep.subr.bf16.mxu0 0
    %1933 = vmatpush1.bf16.msra.mxu0 0
    %1934 = vmatprep.subr.bf16.mxu0 0
    %1935 = vmatpush1.bf16.msra.mxu0 0
    %1936 = vmatprep.subr.bf16.mxu0 0
    %1937 = vmatpush1.bf16.msra.mxu0 0
    %1938 = vmatprep.subr.bf16.mxu0 0
    %1939 = vmatpush1.bf16.msra.mxu0 0
    %1940 = vmatprep.subr.bf16.mxu0 0
    %1941 = vmatpush1.bf16.msra.mxu0 0
    %1942 = vmatprep.subr.bf16.mxu0 0
    %1943 = vmatpush1.bf16.msra.mxu0 0
    %1944 = vmatprep.subr.bf16.mxu0 0
    %1945 = vmatpush1.bf16.msra.mxu0 0
    %1946 = vmatprep.subr.bf16.mxu0 0
    %1947 = vmatpush1.bf16.msra.mxu0 0
    %1948 = vmatprep.subr.bf16.mxu0 0
    %1949 = vmatpush1.bf16.msra.mxu0 0
    %1950 = vmatprep.subr.bf16.mxu0 0
    %1951 = vmatpush1.bf16.msra.mxu0 0
    %1952 = vmatprep.subr.bf16.mxu0 0
    %1953 = vmatpush1.bf16.msra.mxu0 0
    %1954 = vmatprep.subr.bf16.mxu0 0
    %1955 = vmatpush1.bf16.msra.mxu0 0
    %1956 = vmatprep.mubr.bf16.mxu0 0
    %1957 = vmatmul.mubr.bf16.gmra.mrb[0].mxu0 %v1919
    %v1958 = vpop.f32.mrb[0].mxu0
    %v1959 = vadd.f32 0.0, %v1958
    %v1960 = vpop.f32.mrb[0].mxu0
    %v1961 = vpop.f32.mrb[0].mxu0
    %v1962 = vadd.f32 0.0, %v1961
    %v1963 = vpop.f32.mrb[0].mxu0
    %1964 = vmatprep.mubr.bf16.mxu0 0
    %1965 = vmatmul.mubr.bf16.gmra.mrb[0].mxu0 %v1922
    %v1966 = vpop.f32.mrb[0].mxu0
    %v1967 = vadd.f32 0.0, %v1966
    %v1968 = vpop.f32.mrb[0].mxu0
    %v1969 = vpop.f32.mrb[0].mxu0
    %v1970 = vadd.f32 0.0, %v1969
    %v1971 = vpop.f32.mrb[0].mxu0
    %1972 = vdwg.mxu0
    %v1974 = vsel %vm1549, %v1904, 0
    %v1977 = vsel %vm1549, %v1905, 0
    %1979 = vmatprep.subr.bf16.mxu0 0
    %1980 = vmatpush1.bf16.msra.mxu0 %v983
    %1981 = vmatprep.subr.bf16.mxu0 0
    %1982 = vmatpush1.bf16.msra.mxu0 %v984
    %1983 = vmatprep.subr.bf16.mxu0 0
    %1984 = vmatpush1.bf16.msra.mxu0 0
    %1985 = vmatprep.subr.bf16.mxu0 0
    %1986 = vmatpush1.bf16.msra.mxu0 0
    %1987 = vmatprep.subr.bf16.mxu0 0
    %1988 = vmatpush1.bf16.msra.mxu0 0
    %1989 = vmatprep.subr.bf16.mxu0 0
    %1990 = vmatpush1.bf16.msra.mxu0 0
    %1991 = vmatprep.subr.bf16.mxu0 0
    %1992 = vmatpush1.bf16.msra.mxu0 0
    %1993 = vmatprep.subr.bf16.mxu0 0
    %1994 = vmatpush1.bf16.msra.mxu0 0
    %1995 = vmatprep.subr.bf16.mxu0 0
    %1996 = vmatpush1.bf16.msra.mxu0 0
    %1997 = vmatprep.subr.bf16.mxu0 0
    %1998 = vmatpush1.bf16.msra.mxu0 0
    %1999 = vmatprep.subr.bf16.mxu0 0
    %2000 = vmatpush1.bf16.msra.mxu0 0
    %2001 = vmatprep.subr.bf16.mxu0 0
    %2002 = vmatpush1.bf16.msra.mxu0 0
    %2003 = vmatprep.subr.bf16.mxu0 0
    %2004 = vmatpush1.bf16.msra.mxu0 0
    %2005 = vmatprep.subr.bf16.mxu0 0
    %2006 = vmatpush1.bf16.msra.mxu0 0
    %2007 = vmatprep.subr.bf16.mxu0 0
    %2008 = vmatpush1.bf16.msra.mxu0 0
    %2009 = vmatprep.subr.bf16.mxu0 0
    %2010 = vmatpush1.bf16.msra.mxu0 0
    %2011 = vmatprep.mubr.bf16.mxu0 0
    %2012 = vmatmul.mubr.bf16.gmra.mrb[0].mxu0 %v1974
    %v2013 = vpop.f32.mrb[0].mxu0
    %v2014 = vadd.f32 0.0, %v2013
    %v2015 = vpop.f32.mrb[0].mxu0
    %v2016 = vpop.f32.mrb[0].mxu0
    %v2017 = vadd.f32 0.0, %v2016
    %v2018 = vpop.f32.mrb[0].mxu0
    %2019 = vmatprep.mubr.bf16.mxu0 0
    %2020 = vmatmul.mubr.bf16.gmra.mrb[0].mxu0 %v1977
    %v2021 = vpop.f32.mrb[0].mxu0
    %v2022 = vadd.f32 0.0, %v2021
    %v2023 = vpop.f32.mrb[0].mxu0
    %v2024 = vpop.f32.mrb[0].mxu0
    %v2025 = vadd.f32 0.0, %v2024
    %v2026 = vpop.f32.mrb[0].mxu0
    %2027 = vdwg.mxu0
    %v2029 = vsel %vm1549, %v1906, 0
    %v2032 = vsel %vm1549, %v1907, 0
    %2034 = vmatprep.subr.bf16.mxu0 0
    %2035 = vmatpush1.bf16.msra.mxu0 %v985
    %2036 = vmatprep.subr.bf16.mxu0 0
    %2037 = vmatpush1.bf16.msra.mxu0 %v986
    %2038 = vmatprep.subr.bf16.mxu0 0
    %2039 = vmatpush1.bf16.msra.mxu0 0
    %2040 = vmatprep.subr.bf16.mxu0 0
    %2041 = vmatpush1.bf16.msra.mxu0 0
    %2042 = vmatprep.subr.bf16.mxu0 0
    %2043 = vmatpush1.bf16.msra.mxu0 0
    %2044 = vmatprep.subr.bf16.mxu0 0
    %2045 = vmatpush1.bf16.msra.mxu0 0
    %2046 = vmatprep.subr.bf16.mxu0 0
    %2047 = vmatpush1.bf16.msra.mxu0 0
    %2048 = vmatprep.subr.bf16.mxu0 0
    %2049 = vmatpush1.bf16.msra.mxu0 0
    %2050 = vmatprep.subr.bf16.mxu0 0
    %2051 = vmatpush1.bf16.msra.mxu0 0
    %2052 = vmatprep.subr.bf16.mxu0 0
    %2053 = vmatpush1.bf16.msra.mxu0 0
    %2054 = vmatprep.subr.bf16.mxu0 0
    %2055 = vmatpush1.bf16.msra.mxu0 0
    %2056 = vmatprep.subr.bf16.mxu0 0
    %2057 = vmatpush1.bf16.msra.mxu0 0
    %2058 = vmatprep.subr.bf16.mxu0 0
    %2059 = vmatpush1.bf16.msra.mxu0 0
    %2060 = vmatprep.subr.bf16.mxu0 0
    %2061 = vmatpush1.bf16.msra.mxu0 0
    %2062 = vmatprep.subr.bf16.mxu0 0
    %2063 = vmatpush1.bf16.msra.mxu0 0
    %2064 = vmatprep.subr.bf16.mxu0 0
    %2065 = vmatpush1.bf16.msra.mxu0 0
    %2066 = vmatprep.mubr.bf16.mxu0 0
    %2067 = vmatmul.mubr.bf16.gmra.mrb[0].mxu0 %v2029
    %v2068 = vpop.f32.mrb[0].mxu0
    %v2069 = vadd.f32 0.0, %v2068
    %v2070 = vpop.f32.mrb[0].mxu0
    %v2071 = vpop.f32.mrb[0].mxu0
    %v2072 = vadd.f32 0.0, %v2071
    %v2073 = vpop.f32.mrb[0].mxu0
    %2074 = vmatprep.mubr.bf16.mxu0 0
    %2075 = vmatmul.mubr.bf16.gmra.mrb[0].mxu0 %v2032
    %v2076 = vpop.f32.mrb[0].mxu0
    %v2077 = vadd.f32 0.0, %v2076
    %v2078 = vpop.f32.mrb[0].mxu0
    %v2079 = vpop.f32.mrb[0].mxu0
    %v2080 = vadd.f32 0.0, %v2079
    %v2081 = vpop.f32.mrb[0].mxu0
    %2082 = vdwg.mxu0
    %v2084 = vsel %vm1549, %v1908, 0
    %v2087 = vsel %vm1549, %v1909, 0
    %2089 = vmatprep.subr.bf16.mxu0 0
    %2090 = vmatpush1.bf16.msra.mxu0 %v987
    %2091 = vmatprep.subr.bf16.mxu0 0
    %2092 = vmatpush1.bf16.msra.mxu0 %v988
    %2093 = vmatprep.subr.bf16.mxu0 0
    %2094 = vmatpush1.bf16.msra.mxu0 0
    %2095 = vmatprep.subr.bf16.mxu0 0
    %2096 = vmatpush1.bf16.msra.mxu0 0
    %2097 = vmatprep.subr.bf16.mxu0 0
    %2098 = vmatpush1.bf16.msra.mxu0 0
    %2099 = vmatprep.subr.bf16.mxu0 0
    %2100 = vmatpush1.bf16.msra.mxu0 0
    %2101 = vmatprep.subr.bf16.mxu0 0
    %2102 = vmatpush1.bf16.msra.mxu0 0
    %2103 = vmatprep.subr.bf16.mxu0 0
    %2104 = vmatpush1.bf16.msra.mxu0 0
    %2105 = vmatprep.subr.bf16.mxu0 0
    %2106 = vmatpush1.bf16.msra.mxu0 0
    %2107 = vmatprep.subr.bf16.mxu0 0
    %2108 = vmatpush1.bf16.msra.mxu0 0
    %2109 = vmatprep.subr.bf16.mxu0 0
    %2110 = vmatpush1.bf16.msra.mxu0 0
    %2111 = vmatprep.subr.bf16.mxu0 0
    %2112 = vmatpush1.bf16.msra.mxu0 0
    %2113 = vmatprep.subr.bf16.mxu0 0
    %2114 = vmatpush1.bf16.msra.mxu0 0
    %2115 = vmatprep.subr.bf16.mxu0 0
    %2116 = vmatpush1.bf16.msra.mxu0 0
    %2117 = vmatprep.subr.bf16.mxu0 0
    %2118 = vmatpush1.bf16.msra.mxu0 0
    %2119 = vmatprep.subr.bf16.mxu0 0
    %2120 = vmatpush1.bf16.msra.mxu0 0
    %2121 = vmatprep.mubr.bf16.mxu0 0
    %2122 = vmatmul.mubr.bf16.gmra.mrb[0].mxu0 %v2084
    %v2123 = vpop.f32.mrb[0].mxu0
    %v2124 = vadd.f32 0.0, %v2123
    %v2125 = vpop.f32.mrb[0].mxu0
    %v2126 = vpop.f32.mrb[0].mxu0
    %v2127 = vadd.f32 0.0, %v2126
    %v2128 = vpop.f32.mrb[0].mxu0
    %2129 = vmatprep.mubr.bf16.mxu0 0
    %2130 = vmatmul.mubr.bf16.gmra.mrb[0].mxu0 %v2087
    %v2131 = vpop.f32.mrb[0].mxu0
    %v2132 = vadd.f32 0.0, %v2131
    %v2133 = vpop.f32.mrb[0].mxu0
    %v2134 = vpop.f32.mrb[0].mxu0
    %v2135 = vadd.f32 0.0, %v2134
    %v2136 = vpop.f32.mrb[0].mxu0
    %2137 = vdwg.mxu0
    %v2139 = vsel %vm1549, %v1910, 0
    %v2142 = vsel %vm1549, %v1911, 0
    %2144 = vmatprep.subr.bf16.mxu0 0
    %2145 = vmatpush1.bf16.msra.mxu0 %v989
    %2146 = vmatprep.subr.bf16.mxu0 0
    %2147 = vmatpush1.bf16.msra.mxu0 %v990
    %2148 = vmatprep.subr.bf16.mxu0 0
    %2149 = vmatpush1.bf16.msra.mxu0 0
    %2150 = vmatprep.subr.bf16.mxu0 0
    %2151 = vmatpush1.bf16.msra.mxu0 0
    %2152 = vmatprep.subr.bf16.mxu0 0
    %2153 = vmatpush1.bf16.msra.mxu0 0
    %2154 = vmatprep.subr.bf16.mxu0 0
    %2155 = vmatpush1.bf16.msra.mxu0 0
    %2156 = vmatprep.subr.bf16.mxu0 0
    %2157 = vmatpush1.bf16.msra.mxu0 0
    %2158 = vmatprep.subr.bf16.mxu0 0
    %2159 = vmatpush1.bf16.msra.mxu0 0
    %2160 = vmatprep.subr.bf16.mxu0 0
    %2161 = vmatpush1.bf16.msra.mxu0 0
    %2162 = vmatprep.subr.bf16.mxu0 0
    %2163 = vmatpush1.bf16.msra.mxu0 0
    %2164 = vmatprep.subr.bf16.mxu0 0
    %2165 = vmatpush1.bf16.msra.mxu0 0
    %2166 = vmatprep.subr.bf16.mxu0 0
    %2167 = vmatpush1.bf16.msra.mxu0 0
    %2168 = vmatprep.subr.bf16.mxu0 0
    %2169 = vmatpush1.bf16.msra.mxu0 0
    %2170 = vmatprep.subr.bf16.mxu0 0
    %2171 = vmatpush1.bf16.msra.mxu0 0
    %2172 = vmatprep.subr.bf16.mxu0 0
    %2173 = vmatpush1.bf16.msra.mxu0 0
    %2174 = vmatprep.subr.bf16.mxu0 0
    %2175 = vmatpush1.bf16.msra.mxu0 0
    %2176 = vmatprep.mubr.bf16.mxu0 0
    %2177 = vmatmul.mubr.bf16.gmra.mrb[0].mxu0 %v2139
    %v2178 = vpop.f32.mrb[0].mxu0
    %v2179 = vadd.f32 0.0, %v2178
    %v2180 = vpop.f32.mrb[0].mxu0
    %v2181 = vpop.f32.mrb[0].mxu0
    %v2182 = vadd.f32 0.0, %v2181
    %v2183 = vpop.f32.mrb[0].mxu0
    %2184 = vmatprep.mubr.bf16.mxu0 0
    %2185 = vmatmul.mubr.bf16.gmra.mrb[0].mxu0 %v2142
    %v2186 = vpop.f32.mrb[0].mxu0
    %v2187 = vadd.f32 0.0, %v2186
    %v2188 = vpop.f32.mrb[0].mxu0
    %v2189 = vpop.f32.mrb[0].mxu0
    %v2190 = vadd.f32 0.0, %v2189
    %v2191 = vpop.f32.mrb[0].mxu0
    %2192 = vdwg.mxu0
    %v2194 = vsel %vm1549, %v1912, 0
    %v2197 = vsel %vm1549, %v1913, 0
    %2199 = vmatprep.subr.bf16.mxu0 0
    %2200 = vmatpush1.bf16.msra.mxu0 %v991
    %2201 = vmatprep.subr.bf16.mxu0 0
    %2202 = vmatpush1.bf16.msra.mxu0 %v992
    %2203 = vmatprep.subr.bf16.mxu0 0
    %2204 = vmatpush1.bf16.msra.mxu0 0
    %2205 = vmatprep.subr.bf16.mxu0 0
    %2206 = vmatpush1.bf16.msra.mxu0 0
    %2207 = vmatprep.subr.bf16.mxu0 0
    %2208 = vmatpush1.bf16.msra.mxu0 0
    %2209 = vmatprep.subr.bf16.mxu0 0
    %2210 = vmatpush1.bf16.msra.mxu0 0
    %2211 = vmatprep.subr.bf16.mxu0 0
    %2212 = vmatpush1.bf16.msra.mxu0 0
    %2213 = vmatprep.subr.bf16.mxu0 0
    %2214 = vmatpush1.bf16.msra.mxu0 0
    %2215 = vmatprep.subr.bf16.mxu0 0
    %2216 = vmatpush1.bf16.msra.mxu0 0
    %2217 = vmatprep.subr.bf16.mxu0 0
    %2218 = vmatpush1.bf16.msra.mxu0 0
    %2219 = vmatprep.subr.bf16.mxu0 0
    %2220 = vmatpush1.bf16.msra.mxu0 0
    %2221 = vmatprep.subr.bf16.mxu0 0
    %2222 = vmatpush1.bf16.msra.mxu0 0
    %2223 = vmatprep.subr.bf16.mxu0 0
    %2224 = vmatpush1.bf16.msra.mxu0 0
    %2225 = vmatprep.subr.bf16.mxu0 0
    %2226 = vmatpush1.bf16.msra.mxu0 0
    %2227 = vmatprep.subr.bf16.mxu0 0
    %2228 = vmatpush1.bf16.msra.mxu0 0
    %2229 = vmatprep.subr.bf16.mxu0 0
    %2230 = vmatpush1.bf16.msra.mxu0 0
    %2231 = vmatprep.mubr.bf16.mxu0 0
    %2232 = vmatmul.mubr.bf16.gmra.mrb[0].mxu0 %v2194
    %v2233 = vpop.f32.mrb[0].mxu0
    %v2234 = vadd.f32 0.0, %v2233
    %v2235 = vpop.f32.mrb[0].mxu0
    %v2236 = vpop.f32.mrb[0].mxu0
    %v2237 = vadd.f32 0.0, %v2236
    %v2238 = vpop.f32.mrb[0].mxu0
    %2239 = vmatprep.mubr.bf16.mxu0 0
    %2240 = vmatmul.mubr.bf16.gmra.mrb[0].mxu0 %v2197
    %v2241 = vpop.f32.mrb[0].mxu0
    %v2242 = vadd.f32 0.0, %v2241
    %v2243 = vpop.f32.mrb[0].mxu0
    %v2244 = vpop.f32.mrb[0].mxu0
    %v2245 = vadd.f32 0.0, %v2244
    %v2246 = vpop.f32.mrb[0].mxu0
    %2247 = vdwg.mxu0
    %v2249 = vsel %vm1549, %v1914, 0
    %v2252 = vsel %vm1549, %v1915, 0
    %2254 = vmatprep.subr.bf16.mxu0 0
    %2255 = vmatpush1.bf16.msra.mxu0 %v993
    %2256 = vmatprep.subr.bf16.mxu0 0
    %2257 = vmatpush1.bf16.msra.mxu0 %v994
    %2258 = vmatprep.subr.bf16.mxu0 0
    %2259 = vmatpush1.bf16.msra.mxu0 0
    %2260 = vmatprep.subr.bf16.mxu0 0
    %2261 = vmatpush1.bf16.msra.mxu0 0
    %2262 = vmatprep.subr.bf16.mxu0 0
    %2263 = vmatpush1.bf16.msra.mxu0 0
    %2264 = vmatprep.subr.bf16.mxu0 0
    %2265 = vmatpush1.bf16.msra.mxu0 0
    %2266 = vmatprep.subr.bf16.mxu0 0
    %2267 = vmatpush1.bf16.msra.mxu0 0
    %2268 = vmatprep.subr.bf16.mxu0 0
    %2269 = vmatpush1.bf16.msra.mxu0 0
    %2270 = vmatprep.subr.bf16.mxu0 0
    %2271 = vmatpush1.bf16.msra.mxu0 0
    %2272 = vmatprep.subr.bf16.mxu0 0
    %2273 = vmatpush1.bf16.msra.mxu0 0
    %2274 = vmatprep.subr.bf16.mxu0 0
    %2275 = vmatpush1.bf16.msra.mxu0 0
    %2276 = vmatprep.subr.bf16.mxu0 0
    %2277 = vmatpush1.bf16.msra.mxu0 0
    %2278 = vmatprep.subr.bf16.mxu0 0
    %2279 = vmatpush1.bf16.msra.mxu0 0
    %2280 = vmatprep.subr.bf16.mxu0 0
    %2281 = vmatpush1.bf16.msra.mxu0 0
    %2282 = vmatprep.subr.bf16.mxu0 0
    %2283 = vmatpush1.bf16.msra.mxu0 0
    %2284 = vmatprep.subr.bf16.mxu0 0
    %2285 = vmatpush1.bf16.msra.mxu0 0
    %2286 = vmatprep.mubr.bf16.mxu0 0
    %2287 = vmatmul.mubr.bf16.gmra.mrb[0].mxu0 %v2249
    %v2288 = vpop.f32.mrb[0].mxu0
    %v2289 = vadd.f32 0.0, %v2288
    %v2290 = vpop.f32.mrb[0].mxu0
    %v2291 = vpop.f32.mrb[0].mxu0
    %v2292 = vadd.f32 0.0, %v2291
    %v2293 = vpop.f32.mrb[0].mxu0
    %2294 = vmatprep.mubr.bf16.mxu0 0
    %2295 = vmatmul.mubr.bf16.gmra.mrb[0].mxu0 %v2252
    %v2296 = vpop.f32.mrb[0].mxu0
    %v2297 = vadd.f32 0.0, %v2296
    %v2298 = vpop.f32.mrb[0].mxu0
    %v2299 = vpop.f32.mrb[0].mxu0
    %v2300 = vadd.f32 0.0, %v2299
    %v2301 = vpop.f32.mrb[0].mxu0
    %2302 = vdwg.mxu0
    %v2304 = vsel %vm1549, %v1916, 0
    %v2307 = vsel %vm1549, %v1917, 0
    %2309 = vmatprep.subr.bf16.mxu0 0
    %2310 = vmatpush1.bf16.msra.mxu0 %v995
    %2311 = vmatprep.subr.bf16.mxu0 0
    %2312 = vmatpush1.bf16.msra.mxu0 %v996
    %2313 = vmatprep.subr.bf16.mxu0 0
    %2314 = vmatpush1.bf16.msra.mxu0 0
    %2315 = vmatprep.subr.bf16.mxu0 0
    %2316 = vmatpush1.bf16.msra.mxu0 0
    %2317 = vmatprep.subr.bf16.mxu0 0
    %2318 = vmatpush1.bf16.msra.mxu0 0
    %2319 = vmatprep.subr.bf16.mxu0 0
    %2320 = vmatpush1.bf16.msra.mxu0 0
    %2321 = vmatprep.subr.bf16.mxu0 0
    %2322 = vmatpush1.bf16.msra.mxu0 0
    %2323 = vmatprep.subr.bf16.mxu0 0
    %2324 = vmatpush1.bf16.msra.mxu0 0
    %2325 = vmatprep.subr.bf16.mxu0 0
    %2326 = vmatpush1.bf16.msra.mxu0 0
    %2327 = vmatprep.subr.bf16.mxu0 0
    %2328 = vmatpush1.bf16.msra.mxu0 0
    %2329 = vmatprep.subr.bf16.mxu0 0
    %2330 = vmatpush1.bf16.msra.mxu0 0
    %2331 = vmatprep.subr.bf16.mxu0 0
    %2332 = vmatpush1.bf16.msra.mxu0 0
    %2333 = vmatprep.subr.bf16.mxu0 0
    %2334 = vmatpush1.bf16.msra.mxu0 0
    %2335 = vmatprep.subr.bf16.mxu0 0
    %2336 = vmatpush1.bf16.msra.mxu0 0
    %2337 = vmatprep.subr.bf16.mxu0 0
    %2338 = vmatpush1.bf16.msra.mxu0 0
    %2339 = vmatprep.subr.bf16.mxu0 0
    %2340 = vmatpush1.bf16.msra.mxu0 0
    %2341 = vmatprep.mubr.bf16.mxu0 0
    %2342 = vmatmul.mubr.bf16.gmra.mrb[0].mxu0 %v2304
    %v2343 = vpop.f32.mrb[0].mxu0
    %v2344 = vadd.f32 0.0, %v2343
    %v2345 = vpop.f32.mrb[0].mxu0
    %v2346 = vpop.f32.mrb[0].mxu0
    %v2347 = vadd.f32 0.0, %v2346
    %v2348 = vpop.f32.mrb[0].mxu0
    %2349 = vmatprep.mubr.bf16.mxu0 0
    %2350 = vmatmul.mubr.bf16.gmra.mrb[0].mxu0 %v2307
    %v2351 = vpop.f32.mrb[0].mxu0
    %v2352 = vadd.f32 0.0, %v2351
    %v2353 = vpop.f32.mrb[0].mxu0
    %v2354 = vpop.f32.mrb[0].mxu0
    %v2355 = vadd.f32 0.0, %v2354
    %v2356 = vpop.f32.mrb[0].mxu0
    %2357 = vdwg.mxu0
    %2358 = vst.msk [vmem:[#allocation5] sm:$0xff] %vm471, %v1959
    %2359 = vst.msk [vmem:[#allocation5 + $0x8] sm:$0xff] %vm471, %v1962
    %2360 = vst.msk [vmem:[#allocation5 + $0x10] sm:$0xff] %vm471, %v1967
    %2361 = vst.msk [vmem:[#allocation5 + $0x18] sm:$0xff] %vm471, %v1970
    %2366 = vrot.lane.b32.xlu0 %v2014, 8
    %v2367 = vpop.permute.xlu0 %2366
    %2368 = vrot.lane.b32.xlu0 %v2017, 8
    %v2369 = vpop.permute.xlu0 %2368
    %2370 = vrot.lane.b32.xlu0 %v2022, 8
    %v2371 = vpop.permute.xlu0 %2370
    %2372 = vrot.lane.b32.xlu0 %v2025, 8
    %v2373 = vpop.permute.xlu0 %2372
    %vm2378 = vcmask 130112
    %2379 = vst.msk [vmem:[#allocation5] sm:$0xff] %vm2378, %v2367
    %2380 = vst.msk [vmem:[#allocation5 + $0x8] sm:$0xff] %vm2378, %v2369
    %2381 = vst.msk [vmem:[#allocation5 + $0x10] sm:$0xff] %vm2378, %v2371
    %2382 = vst.msk [vmem:[#allocation5 + $0x18] sm:$0xff] %vm2378, %v2373
    %2387 = vrot.lane.b32.xlu0 %v2069, 16
    %v2388 = vpop.permute.xlu0 %2387
    %2389 = vrot.lane.b32.xlu0 %v2072, 16
    %v2390 = vpop.permute.xlu0 %2389
    %2391 = vrot.lane.b32.xlu0 %v2077, 16
    %v2392 = vpop.permute.xlu0 %2391
    %2393 = vrot.lane.b32.xlu0 %v2080, 16
    %v2394 = vpop.permute.xlu0 %2393
    %vm2399 = vcmask 195712
    %2400 = vst.msk [vmem:[#allocation5] sm:$0xff] %vm2399, %v2388
    %2401 = vst.msk [vmem:[#allocation5 + $0x8] sm:$0xff] %vm2399, %v2390
    %2402 = vst.msk [vmem:[#allocation5 + $0x10] sm:$0xff] %vm2399, %v2392
    %2403 = vst.msk [vmem:[#allocation5 + $0x18] sm:$0xff] %vm2399, %v2394
    %2408 = vrot.lane.b32.xlu0 %v2124, 24
    %v2409 = vpop.permute.xlu0 %2408
    %2410 = vrot.lane.b32.xlu0 %v2127, 24
    %v2411 = vpop.permute.xlu0 %2410
    %2412 = vrot.lane.b32.xlu0 %v2132, 24
    %v2413 = vpop.permute.xlu0 %2412
    %2414 = vrot.lane.b32.xlu0 %v2135, 24
    %v2415 = vpop.permute.xlu0 %2414
    %vm2420 = vcmask 261312
    %2421 = vst.msk [vmem:[#allocation5] sm:$0xff] %vm2420, %v2409
    %2422 = vst.msk [vmem:[#allocation5 + $0x8] sm:$0xff] %vm2420, %v2411
    %2423 = vst.msk [vmem:[#allocation5 + $0x10] sm:$0xff] %vm2420, %v2413
    %2424 = vst.msk [vmem:[#allocation5 + $0x18] sm:$0xff] %vm2420, %v2415
    %2429 = vrot.lane.b32.xlu0 %v2179, 32
    %v2430 = vpop.permute.xlu0 %2429
    %2431 = vrot.lane.b32.xlu0 %v2182, 32
    %v2432 = vpop.permute.xlu0 %2431
    %2433 = vrot.lane.b32.xlu0 %v2187, 32
    %v2434 = vpop.permute.xlu0 %2433
    %2435 = vrot.lane.b32.xlu0 %v2190, 32
    %v2436 = vpop.permute.xlu0 %2435
    %vm2441 = vcmask 326912
    %2442 = vst.msk [vmem:[#allocation5] sm:$0xff] %vm2441, %v2430
    %2443 = vst.msk [vmem:[#allocation5 + $0x8] sm:$0xff] %vm2441, %v2432
    %2444 = vst.msk [vmem:[#allocation5 + $0x10] sm:$0xff] %vm2441, %v2434
    %2445 = vst.msk [vmem:[#allocation5 + $0x18] sm:$0xff] %vm2441, %v2436
    %2450 = vrot.lane.b32.xlu0 %v2234, 40
    %v2451 = vpop.permute.xlu0 %2450
    %2452 = vrot.lane.b32.xlu0 %v2237, 40
    %v2453 = vpop.permute.xlu0 %2452
    %2454 = vrot.lane.b32.xlu0 %v2242, 40
    %v2455 = vpop.permute.xlu0 %2454
    %2456 = vrot.lane.b32.xlu0 %v2245, 40
    %v2457 = vpop.permute.xlu0 %2456
    %vm2462 = vcmask 392512
    %2463 = vst.msk [vmem:[#allocation5] sm:$0xff] %vm2462, %v2451
    %2464 = vst.msk [vmem:[#allocation5 + $0x8] sm:$0xff] %vm2462, %v2453
    %2465 = vst.msk [vmem:[#allocation5 + $0x10] sm:$0xff] %vm2462, %v2455
    %2466 = vst.msk [vmem:[#allocation5 + $0x18] sm:$0xff] %vm2462, %v2457
    %2471 = vrot.lane.b32.xlu0 %v2289, 48
    %v2472 = vpop.permute.xlu0 %2471
    %2473 = vrot.lane.b32.xlu0 %v2292, 48
    %v2474 = vpop.permute.xlu0 %2473
    %2475 = vrot.lane.b32.xlu0 %v2297, 48
    %v2476 = vpop.permute.xlu0 %2475
    %2477 = vrot.lane.b32.xlu0 %v2300, 48
    %v2478 = vpop.permute.xlu0 %2477
    %vm2483 = vcmask 458112
    %2484 = vst.msk [vmem:[#allocation5] sm:$0xff] %vm2483, %v2472
    %2485 = vst.msk [vmem:[#allocation5 + $0x8] sm:$0xff] %vm2483, %v2474
    %2486 = vst.msk [vmem:[#allocation5 + $0x10] sm:$0xff] %vm2483, %v2476
    %2487 = vst.msk [vmem:[#allocation5 + $0x18] sm:$0xff] %vm2483, %v2478
    %2492 = vrot.lane.b32.xlu0 %v2344, 56
    %v2493 = vpop.permute.xlu0 %2492
    %2494 = vrot.lane.b32.xlu0 %v2347, 56
    %v2495 = vpop.permute.xlu0 %2494
    %2496 = vrot.lane.b32.xlu0 %v2352, 56
    %v2497 = vpop.permute.xlu0 %2496
    %2498 = vrot.lane.b32.xlu0 %v2355, 56
    %v2499 = vpop.permute.xlu0 %2498
    %vm2504 = vcmask 523712
    %2505 = vst.msk [vmem:[#allocation5] sm:$0xff] %vm2504, %v2493
    %2506 = vst.msk [vmem:[#allocation5 + $0x8] sm:$0xff] %vm2504, %v2495
    %2507 = vst.msk [vmem:[#allocation5 + $0x10] sm:$0xff] %vm2504, %v2497
    %2508 = vst.msk [vmem:[#allocation5 + $0x18] sm:$0xff] %vm2504, %v2499
    %v2509 = vld [vmem:[#allocation5] sm:$0xff]
    %v2510 = vld [vmem:[#allocation5 + $0x8] sm:$0xff]
    %v2511 = vld [vmem:[#allocation5 + $0x10] sm:$0xff]
    %v2512 = vld [vmem:[#allocation5 + $0x18] sm:$0xff]
    %v2513 = vpack.c.bf16 %v2510, %v2509
    %v2514 = vpack.c.bf16 %v2512, %v2511
    %v2515 = vld [vmem:[%s5] sm:$0xf]
    %v2516 = vld [vmem:[%s5 + $0x4] sm:$0xf]
    %v2517 = vld [vmem:[%s5 + $0x8] sm:$0xf]
    %v2518 = vld [vmem:[%s5 + $0xc] sm:$0xf]
    %v2519 = vld [vmem:[%s5 + $0x10] sm:$0xf]
    %v2520 = vld [vmem:[%s5 + $0x14] sm:$0xf]
    %v2521 = vld [vmem:[%s5 + $0x18] sm:$0xf]
    %v2522 = vld [vmem:[%s5 + $0x1c] sm:$0xf]
    %v2531 = vunpack.c.l.b16 %v2515
    %v2532 = vunpack.c.l.b16 %v2516
    %v2533 = vunpack.c.l.b16 %v2517
    %v2534 = vunpack.c.l.b16 %v2518
    %v2535 = vunpack.c.l.b16 %v2519
    %v2536 = vunpack.c.l.b16 %v2520
    %v2537 = vunpack.c.l.b16 %v2521
    %v2538 = vunpack.c.l.b16 %v2522
    %v2539 = vpack.c.b16 %v2532, %v2531
    %v2540 = vpack.c.b16 %v2534, %v2533
    %v2541 = vpack.c.b16 %v2536, %v2535
    %v2542 = vpack.c.b16 %v2538, %v2537
    %v2548 = vsel %vm207, %v2513, 0
    %v2551 = vsel %vm207, %v2514, 0
    %2553 = vmatprep.subr.bf16.mxu0 0
    %2554 = vmatpush1.bf16.msra.mxu0 %v2539
    %2555 = vmatprep.subr.bf16.mxu0 0
    %2556 = vmatpush1.bf16.msra.mxu0 %v2540
    %2557 = vmatprep.subr.bf16.mxu0 0
    %2558 = vmatpush1.bf16.msra.mxu0 %v2541
    %2559 = vmatprep.subr.bf16.mxu0 0
    %2560 = vmatpush1.bf16.msra.mxu0 %v2542
    %2561 = vmatprep.subr.bf16.mxu0 0
    %2562 = vmatpush1.bf16.msra.mxu0 0
    %2563 = vmatprep.subr.bf16.mxu0 0
    %2564 = vmatpush1.bf16.msra.mxu0 0
    %2565 = vmatprep.subr.bf16.mxu0 0
    %2566 = vmatpush1.bf16.msra.mxu0 0
    %2567 = vmatprep.subr.bf16.mxu0 0
    %2568 = vmatpush1.bf16.msra.mxu0 0
    %2569 = vmatprep.subr.bf16.mxu0 0
    %2570 = vmatpush1.bf16.msra.mxu0 0
    %2571 = vmatprep.subr.bf16.mxu0 0
    %2572 = vmatpush1.bf16.msra.mxu0 0
    %2573 = vmatprep.subr.bf16.mxu0 0
    %2574 = vmatpush1.bf16.msra.mxu0 0
    %2575 = vmatprep.subr.bf16.mxu0 0
    %2576 = vmatpush1.bf16.msra.mxu0 0
    %2577 = vmatprep.subr.bf16.mxu0 0
    %2578 = vmatpush1.bf16.msra.mxu0 0
    %2579 = vmatprep.subr.bf16.mxu0 0
    %2580 = vmatpush1.bf16.msra.mxu0 0
    %2581 = vmatprep.subr.bf16.mxu0 0
    %2582 = vmatpush1.bf16.msra.mxu0 0
    %2583 = vmatprep.subr.bf16.mxu0 0
    %2584 = vmatpush1.bf16.msra.mxu0 0
    %2585 = vmatprep.mubr.bf16.mxu0 0
    %2586 = vmatmul.mubr.bf16.gmra.mrb[0].mxu0 %v2548
    %v2587 = vpop.f32.mrb[0].mxu0
    %v2588 = vadd.f32 0.0, %v2587
    %v2589 = vpop.f32.mrb[0].mxu0
    %v2590 = vpop.f32.mrb[0].mxu0
    %v2591 = vadd.f32 0.0, %v2590
    %v2592 = vpop.f32.mrb[0].mxu0
    %2593 = vmatprep.mubr.bf16.mxu0 0
    %2594 = vmatmul.mubr.bf16.gmra.mrb[0].mxu0 %v2551
    %v2595 = vpop.f32.mrb[0].mxu0
    %v2596 = vadd.f32 0.0, %v2595
    %v2597 = vpop.f32.mrb[0].mxu0
    %v2598 = vpop.f32.mrb[0].mxu0
    %v2599 = vadd.f32 0.0, %v2598
    %v2600 = vpop.f32.mrb[0].mxu0
    %2601 = vdwg.mxu0
    %v2602 = vadd.f32 %v197, %v2588
    %v2603 = vadd.f32 %v198, %v2591
    %v2604 = vadd.f32 %v199, %v2596
    %v2605 = vadd.f32 %v200, %v2599
    %v2606 = vld [vmem:[%s6] sm:$0x1]
    %v2608 = vlaneseq
    %v2609 = vshrl.u32 %v2608, 7
    %v2610 = vsub.s32 0, %v2609
    %v2611 = vrot.slane %v2606, %v2610
    %v2613 = vadd.f32 %v2602, %v2611
    %v2614 = vadd.f32 %v2603, %v2611
    %v2615 = vadd.f32 %v2604, %v2611
    %v2616 = vadd.f32 %v2605, %v2611
    %v2617 = vld [vmem:[%s13] sm:$0x1]
    %v2618 = vld [vmem:[%s14] sm:$0x1]
    %v2619 = vsel %vm207, %v2613, 0.0
    %2620 = vadd.xlane.f32.xlu0 %v2619
    %v2621 = vpop.xlane.xlu0 %2620
    %v2622 = vsel %vm207, %v2614, 0.0
    %2623 = vadd.xlane.f32.xlu0 %v2622
    %v2624 = vpop.xlane.xlu0 %2623
    %v2625 = vsel %vm207, %v2615, 0.0
    %2626 = vadd.xlane.f32.xlu0 %v2625
    %v2627 = vpop.xlane.xlu0 %2626
    %v2628 = vsel %vm207, %v2616, 0.0
    %2629 = vadd.xlane.f32.xlu0 %v2628
    %v2630 = vpop.xlane.xlu0 %2629
    %v2631 = vmul.f32 %v2621, %v220
    %v2632 = vmul.f32 %v2624, %v220
    %v2633 = vmul.f32 %v2627, %v220
    %v2634 = vmul.f32 %v2630, %v220
    %v2635 = vsub.f32 %v2613, %v2631
    %v2636 = vsub.f32 %v2614, %v2632
    %v2637 = vsub.f32 %v2615, %v2633
    %v2638 = vsub.f32 %v2616, %v2634
    %v2639 = vmul.f32 %v2635, %v2635
    %v2640 = vmul.f32 %v2636, %v2636
    %v2641 = vmul.f32 %v2637, %v2637
    %v2642 = vmul.f32 %v2638, %v2638
    %v2643 = vsel %vm207, %v2639, 0.0
    %2644 = vadd.xlane.f32.xlu0 %v2643
    %v2645 = vpop.xlane.xlu0 %2644
    %v2646 = vsel %vm207, %v2640, 0.0
    %2647 = vadd.xlane.f32.xlu0 %v2646
    %v2648 = vpop.xlane.xlu0 %2647
    %v2649 = vsel %vm207, %v2641, 0.0
    %2650 = vadd.xlane.f32.xlu0 %v2649
    %v2651 = vpop.xlane.xlu0 %2650
    %v2652 = vsel %vm207, %v2642, 0.0
    %2653 = vadd.xlane.f32.xlu0 %v2652
    %v2654 = vpop.xlane.xlu0 %2653
    %v2655 = vmul.f32 %v2645, %v220
    %v2656 = vmul.f32 %v2648, %v220
    %v2657 = vmul.f32 %v2651, %v220
    %v2658 = vmul.f32 %v2654, %v220
    %v2659 = vadd.f32 %v2655, 1e-05
    %v2660 = vadd.f32 %v2656, 1e-05
    %v2661 = vadd.f32 %v2657, 1e-05
    %v2662 = vadd.f32 %v2658, 1e-05
    %v2663 = vrsqrt.pop %v2659
    %v2664 = vrsqrt.pop %v2660
    %v2665 = vrsqrt.pop %v2661
    %v2666 = vrsqrt.pop %v2662
    %v2667 = vmul.f32 %v2635, %v2663
    %v2668 = vmul.f32 %v2636, %v2664
    %v2669 = vmul.f32 %v2637, %v2665
    %v2670 = vmul.f32 %v2638, %v2666
    %v2672 = vlaneseq
    %v2673 = vshrl.u32 %v2672, 7
    %v2674 = vsub.s32 0, %v2673
    %v2675 = vrot.slane %v2617, %v2674
    %v2677 = vmul.f32 %v2667, %v2675
    %v2678 = vmul.f32 %v2668, %v2675
    %v2679 = vmul.f32 %v2669, %v2675
    %v2680 = vmul.f32 %v2670, %v2675
    %v2682 = vlaneseq
    %v2683 = vshrl.u32 %v2682, 7
    %v2684 = vsub.s32 0, %v2683
    %v2685 = vrot.slane %v2618, %v2684
    %v2687 = vadd.f32 %v2677, %v2685
    %v2688 = vadd.f32 %v2678, %v2685
    %v2689 = vadd.f32 %v2679, %v2685
    %v2690 = vadd.f32 %v2680, %v2685
    %v2691 = vpack.c.bf16 %v2688, %v2687
    %v2692 = vpack.c.bf16 %v2690, %v2689
    %v2693 = vld [vmem:[%s7] sm:$0xff]
    %v2694 = vld [vmem:[%s7 + $0x8] sm:$0xff]
    %v2695 = vld [vmem:[%s7 + $0x10] sm:$0xff]
    %v2696 = vld [vmem:[%s7 + $0x18] sm:$0xff]
    %v2697 = vld [vmem:[%s7 + $0x20] sm:$0xff]
    %v2698 = vld [vmem:[%s7 + $0x28] sm:$0xff]
    %v2699 = vld [vmem:[%s7 + $0x30] sm:$0xff]
    %v2700 = vld [vmem:[%s7 + $0x38] sm:$0xff]
    %v2701 = vld [vmem:[%s8] sm:$0x3]
    %v2703 = vlaneseq
    %v2704 = vshrl.u32 %v2703, 7
    %v2705 = vsub.s32 0, %v2704
    %v2706 = vrot.slane %v2701, %v2705
    %v2707 = vlaneseq
    %v2708 = vshrl.u32 %v2707, 7
    %v2709 = vsub.s32 1, %v2708
    %v2710 = vrot.slane %v2701, %v2709
    %v2721 = vunpack.c.l.b16 %v2693
    %v2722 = vunpack.c.h.b16 %v2693
    %v2723 = vunpack.c.l.b16 %v2694
    %v2724 = vunpack.c.h.b16 %v2694
    %v2725 = vunpack.c.l.b16 %v2695
    %v2726 = vunpack.c.h.b16 %v2695
    %v2727 = vunpack.c.l.b16 %v2696
    %v2728 = vunpack.c.h.b16 %v2696
    %v2729 = vunpack.c.l.b16 %v2697
    %v2730 = vunpack.c.h.b16 %v2697
    %v2731 = vunpack.c.l.b16 %v2698
    %v2732 = vunpack.c.h.b16 %v2698
    %v2733 = vunpack.c.l.b16 %v2699
    %v2734 = vunpack.c.h.b16 %v2699
    %v2735 = vunpack.c.l.b16 %v2700
    %v2736 = vunpack.c.h.b16 %v2700
    %v2737 = vpack.c.b16 %v2723, %v2721
    %v2738 = vpack.c.b16 %v2724, %v2722
    %v2739 = vpack.c.b16 %v2727, %v2725
    %v2740 = vpack.c.b16 %v2728, %v2726
    %v2741 = vpack.c.b16 %v2731, %v2729
    %v2742 = vpack.c.b16 %v2732, %v2730
    %v2743 = vpack.c.b16 %v2735, %v2733
    %v2744 = vpack.c.b16 %v2736, %v2734
    %v2754 = vsel %vm207, %v2691, 0
    %v2757 = vsel %vm207, %v2692, 0
    %2759 = vmatprep.subr.bf16.mxu0 %v2738
    %2760 = vmatpush1.bf16.msra.mxu0 %v2737
    %2761 = vmatprep.subr.bf16.mxu0 %v2740
    %2762 = vmatpush1.bf16.msra.mxu0 %v2739
    %2763 = vmatprep.subr.bf16.mxu0 %v2742
    %2764 = vmatpush1.bf16.msra.mxu0 %v2741
    %2765 = vmatprep.subr.bf16.mxu0 %v2744
    %2766 = vmatpush1.bf16.msra.mxu0 %v2743
    %2767 = vmatprep.subr.bf16.mxu0 0
    %2768 = vmatpush1.bf16.msra.mxu0 0
    %2769 = vmatprep.subr.bf16.mxu0 0
    %2770 = vmatpush1.bf16.msra.mxu0 0
    %2771 = vmatprep.subr.bf16.mxu0 0
    %2772 = vmatpush1.bf16.msra.mxu0 0
    %2773 = vmatprep.subr.bf16.mxu0 0
    %2774 = vmatpush1.bf16.msra.mxu0 0
    %2775 = vmatprep.subr.bf16.mxu0 0
    %2776 = vmatpush1.bf16.msra.mxu0 0
    %2777 = vmatprep.subr.bf16.mxu0 0
    %2778 = vmatpush1.bf16.msra.mxu0 0
    %2779 = vmatprep.subr.bf16.mxu0 0
    %2780 = vmatpush1.bf16.msra.mxu0 0
    %2781 = vmatprep.subr.bf16.mxu0 0
    %2782 = vmatpush1.bf16.msra.mxu0 0
    %2783 = vmatprep.subr.bf16.mxu0 0
    %2784 = vmatpush1.bf16.msra.mxu0 0
    %2785 = vmatprep.subr.bf16.mxu0 0
    %2786 = vmatpush1.bf16.msra.mxu0 0
    %2787 = vmatprep.subr.bf16.mxu0 0
    %2788 = vmatpush1.bf16.msra.mxu0 0
    %2789 = vmatprep.subr.bf16.mxu0 0
    %2790 = vmatpush1.bf16.msra.mxu0 0
    %2791 = vmatprep.mubr.bf16.mxu0 0
    %2792 = vmatmul.mubr.bf16.gmra.mrb[0].mxu0 %v2754
    %v2793 = vpop.f32.mrb[0].mxu0
    %v2794 = vadd.f32 %v2706, %v2793
    %v2795 = vpop.f32.mrb[0].mxu0
    %v2796 = vadd.f32 %v2710, %v2795
    %v2797 = vpop.f32.mrb[0].mxu0
    %v2798 = vadd.f32 %v2706, %v2797
    %v2799 = vpop.f32.mrb[0].mxu0
    %v2800 = vadd.f32 %v2710, %v2799
    %2801 = vmatprep.mubr.bf16.mxu0 0
    %2802 = vmatmul.mubr.bf16.gmra.mrb[0].mxu0 %v2757
    %v2803 = vpop.f32.mrb[0].mxu0
    %v2804 = vadd.f32 %v2706, %v2803
    %v2805 = vpop.f32.mrb[0].mxu0
    %v2806 = vadd.f32 %v2710, %v2805
    %v2807 = vpop.f32.mrb[0].mxu0
    %v2808 = vadd.f32 %v2706, %v2807
    %v2809 = vpop.f32.mrb[0].mxu0
    %v2810 = vadd.f32 %v2710, %v2809
    %2811 = vdwg.mxu0
    %v2812 = vmax.f32 %v2794, 0.0
    %v2813 = vmax.f32 %v2796, 0.0
    %v2814 = vmax.f32 %v2798, 0.0
    %v2815 = vmax.f32 %v2800, 0.0
    %v2816 = vmax.f32 %v2804, 0.0
    %v2817 = vmax.f32 %v2806, 0.0
    %v2818 = vmax.f32 %v2808, 0.0
    %v2819 = vmax.f32 %v2810, 0.0
    %v2820 = vpack.c.bf16 %v2814, %v2812
    %v2821 = vpack.c.bf16 %v2815, %v2813
    %v2822 = vpack.c.bf16 %v2818, %v2816
    %v2823 = vpack.c.bf16 %v2819, %v2817
    %v2824 = vld [vmem:[%s9] sm:$0xf]
    %v2825 = vld [vmem:[%s9 + $0x4] sm:$0xf]
    %v2826 = vld [vmem:[%s9 + $0x8] sm:$0xf]
    %v2827 = vld [vmem:[%s9 + $0xc] sm:$0xf]
    %v2828 = vld [vmem:[%s9 + $0x10] sm:$0xf]
    %v2829 = vld [vmem:[%s9 + $0x14] sm:$0xf]
    %v2830 = vld [vmem:[%s9 + $0x18] sm:$0xf]
    %v2831 = vld [vmem:[%s9 + $0x1c] sm:$0xf]
    %v2832 = vld [vmem:[%s9 + $0x20] sm:$0xf]
    %v2833 = vld [vmem:[%s9 + $0x24] sm:$0xf]
    %v2834 = vld [vmem:[%s9 + $0x28] sm:$0xf]
    %v2835 = vld [vmem:[%s9 + $0x2c] sm:$0xf]
    %v2836 = vld [vmem:[%s9 + $0x30] sm:$0xf]
    %v2837 = vld [vmem:[%s9 + $0x34] sm:$0xf]
    %v2838 = vld [vmem:[%s9 + $0x38] sm:$0xf]
    %v2839 = vld [vmem:[%s9 + $0x3c] sm:$0xf]
    %v2840 = vld [vmem:[%s9 + $0x40] sm:$0xf]
    %v2841 = vld [vmem:[%s9 + $0x44] sm:$0xf]
    %v2842 = vld [vmem:[%s9 + $0x48] sm:$0xf]
    %v2843 = vld [vmem:[%s9 + $0x4c] sm:$0xf]
    %v2844 = vld [vmem:[%s9 + $0x50] sm:$0xf]
    %v2845 = vld [vmem:[%s9 + $0x54] sm:$0xf]
    %v2846 = vld [vmem:[%s9 + $0x58] sm:$0xf]
    %v2847 = vld [vmem:[%s9 + $0x5c] sm:$0xf]
    %v2848 = vld [vmem:[%s9 + $0x60] sm:$0xf]
    %v2849 = vld [vmem:[%s9 + $0x64] sm:$0xf]
    %v2850 = vld [vmem:[%s9 + $0x68] sm:$0xf]
    %v2851 = vld [vmem:[%s9 + $0x6c] sm:$0xf]
    %v2852 = vld [vmem:[%s9 + $0x70] sm:$0xf]
    %v2853 = vld [vmem:[%s9 + $0x74] sm:$0xf]
    %v2854 = vld [vmem:[%s9 + $0x78] sm:$0xf]
    %v2855 = vld [vmem:[%s9 + $0x7c] sm:$0xf]
    %v2888 = vunpack.c.l.b16 %v2824
    %v2889 = vunpack.c.l.b16 %v2825
    %v2890 = vunpack.c.l.b16 %v2826
    %v2891 = vunpack.c.l.b16 %v2827
    %v2892 = vunpack.c.l.b16 %v2828
    %v2893 = vunpack.c.l.b16 %v2829
    %v2894 = vunpack.c.l.b16 %v2830
    %v2895 = vunpack.c.l.b16 %v2831
    %v2896 = vunpack.c.l.b16 %v2832
    %v2897 = vunpack.c.l.b16 %v2833
    %v2898 = vunpack.c.l.b16 %v2834
    %v2899 = vunpack.c.l.b16 %v2835
    %v2900 = vunpack.c.l.b16 %v2836
    %v2901 = vunpack.c.l.b16 %v2837
    %v2902 = vunpack.c.l.b16 %v2838
    %v2903 = vunpack.c.l.b16 %v2839
    %v2904 = vunpack.c.l.b16 %v2840
    %v2905 = vunpack.c.l.b16 %v2841
    %v2906 = vunpack.c.l.b16 %v2842
    %v2907 = vunpack.c.l.b16 %v2843
    %v2908 = vunpack.c.l.b16 %v2844
    %v2909 = vunpack.c.l.b16 %v2845
    %v2910 = vunpack.c.l.b16 %v2846
    %v2911 = vunpack.c.l.b16 %v2847
    %v2912 = vunpack.c.l.b16 %v2848
    %v2913 = vunpack.c.l.b16 %v2849
    %v2914 = vunpack.c.l.b16 %v2850
    %v2915 = vunpack.c.l.b16 %v2851
    %v2916 = vunpack.c.l.b16 %v2852
    %v2917 = vunpack.c.l.b16 %v2853
    %v2918 = vunpack.c.l.b16 %v2854
    %v2919 = vunpack.c.l.b16 %v2855
    %v2920 = vpack.c.b16 %v2889, %v2888
    %v2921 = vpack.c.b16 %v2891, %v2890
    %v2922 = vpack.c.b16 %v2893, %v2892
    %v2923 = vpack.c.b16 %v2895, %v2894
    %v2924 = vpack.c.b16 %v2897, %v2896
    %v2925 = vpack.c.b16 %v2899, %v2898
    %v2926 = vpack.c.b16 %v2901, %v2900
    %v2927 = vpack.c.b16 %v2903, %v2902
    %v2928 = vpack.c.b16 %v2905, %v2904
    %v2929 = vpack.c.b16 %v2907, %v2906
    %v2930 = vpack.c.b16 %v2909, %v2908
    %v2931 = vpack.c.b16 %v2911, %v2910
    %v2932 = vpack.c.b16 %v2913, %v2912
    %v2933 = vpack.c.b16 %v2915, %v2914
    %v2934 = vpack.c.b16 %v2917, %v2916
    %v2935 = vpack.c.b16 %v2919, %v2918
    %2952 = vmatprep.subr.bf16.mxu0 0
    %2953 = vmatpush1.bf16.msra.mxu0 %v2920
    %2954 = vmatprep.subr.bf16.mxu0 0
    %2955 = vmatpush1.bf16.msra.mxu0 %v2921
    %2956 = vmatprep.subr.bf16.mxu0 0
    %2957 = vmatpush1.bf16.msra.mxu0 %v2922
    %2958 = vmatprep.subr.bf16.mxu0 0
    %2959 = vmatpush1.bf16.msra.mxu0 %v2923
    %2960 = vmatprep.subr.bf16.mxu0 0
    %2961 = vmatpush1.bf16.msra.mxu0 %v2924
    %2962 = vmatprep.subr.bf16.mxu0 0
    %2963 = vmatpush1.bf16.msra.mxu0 %v2925
    %2964 = vmatprep.subr.bf16.mxu0 0
    %2965 = vmatpush1.bf16.msra.mxu0 %v2926
    %2966 = vmatprep.subr.bf16.mxu0 0
    %2967 = vmatpush1.bf16.msra.mxu0 %v2927
    %2968 = vmatprep.subr.bf16.mxu0 0
    %2969 = vmatpush1.bf16.msra.mxu0 %v2928
    %2970 = vmatprep.subr.bf16.mxu0 0
    %2971 = vmatpush1.bf16.msra.mxu0 %v2929
    %2972 = vmatprep.subr.bf16.mxu0 0
    %2973 = vmatpush1.bf16.msra.mxu0 %v2930
    %2974 = vmatprep.subr.bf16.mxu0 0
    %2975 = vmatpush1.bf16.msra.mxu0 %v2931
    %2976 = vmatprep.subr.bf16.mxu0 0
    %2977 = vmatpush1.bf16.msra.mxu0 %v2932
    %2978 = vmatprep.subr.bf16.mxu0 0
    %2979 = vmatpush1.bf16.msra.mxu0 %v2933
    %2980 = vmatprep.subr.bf16.mxu0 0
    %2981 = vmatpush1.bf16.msra.mxu0 %v2934
    %2982 = vmatprep.subr.bf16.mxu0 0
    %2983 = vmatpush1.bf16.msra.mxu0 %v2935
    %2984 = vmatprep.mubr.bf16.mxu0 %v2821
    %2985 = vmatmul.mubr.bf16.gmra.mrb[0].mxu0 %v2820
    %v2986 = vpop.f32.mrb[0].mxu0
    %v2987 = vadd.f32 0.0, %v2986
    %v2988 = vpop.f32.mrb[0].mxu0
    %v2989 = vpop.f32.mrb[0].mxu0
    %v2990 = vadd.f32 0.0, %v2989
    %v2991 = vpop.f32.mrb[0].mxu0
    %2992 = vmatprep.mubr.bf16.mxu0 %v2823
    %2993 = vmatmul.mubr.bf16.gmra.mrb[0].mxu0 %v2822
    %v2994 = vpop.f32.mrb[0].mxu0
    %v2995 = vadd.f32 0.0, %v2994
    %v2996 = vpop.f32.mrb[0].mxu0
    %v2997 = vpop.f32.mrb[0].mxu0
    %v2998 = vadd.f32 0.0, %v2997
    %v2999 = vpop.f32.mrb[0].mxu0
    %3000 = vdwg.mxu0
    %v3001 = vadd.f32 %v2613, %v2987
    %v3002 = vadd.f32 %v2614, %v2990
    %v3003 = vadd.f32 %v2615, %v2995
    %v3004 = vadd.f32 %v2616, %v2998
    %v3005 = vld [vmem:[%s10] sm:$0x1]
    %v3007 = vlaneseq
    %v3008 = vshrl.u32 %v3007, 7
    %v3009 = vsub.s32 0, %v3008
    %v3010 = vrot.slane %v3005, %v3009
    %v3012 = vadd.f32 %v3001, %v3010
    %v3013 = vadd.f32 %v3002, %v3010
    %v3014 = vadd.f32 %v3003, %v3010
    %v3015 = vadd.f32 %v3004, %v3010
    %s3016 = scalar_lea.vmem %s11, 1
    %v3017 = vld [vmem:[%s3016] sm:$0x1]
    %s3018 = scalar_lea.vmem %s12, 1
    %v3019 = vld [vmem:[%s3018] sm:$0x1]
    %v3020 = vsel %vm207, %v3012, 0.0
    %3021 = vadd.xlane.f32.xlu0 %v3020
    %v3022 = vpop.xlane.xlu0 %3021
    %v3023 = vsel %vm207, %v3013, 0.0
    %3024 = vadd.xlane.f32.xlu0 %v3023
    %v3025 = vpop.xlane.xlu0 %3024
    %v3026 = vsel %vm207, %v3014, 0.0
    %3027 = vadd.xlane.f32.xlu0 %v3026
    %v3028 = vpop.xlane.xlu0 %3027
    %v3029 = vsel %vm207, %v3015, 0.0
    %3030 = vadd.xlane.f32.xlu0 %v3029
    %v3031 = vpop.xlane.xlu0 %3030
    %v3032 = vmul.f32 %v3022, %v220
    %v3033 = vmul.f32 %v3025, %v220
    %v3034 = vmul.f32 %v3028, %v220
    %v3035 = vmul.f32 %v3031, %v220
    %v3036 = vsub.f32 %v3012, %v3032
    %v3037 = vsub.f32 %v3013, %v3033
    %v3038 = vsub.f32 %v3014, %v3034
    %v3039 = vsub.f32 %v3015, %v3035
    %v3040 = vmul.f32 %v3036, %v3036
    %v3041 = vmul.f32 %v3037, %v3037
    %v3042 = vmul.f32 %v3038, %v3038
    %v3043 = vmul.f32 %v3039, %v3039
    %v3044 = vsel %vm207, %v3040, 0.0
    %3045 = vadd.xlane.f32.xlu0 %v3044
    %v3046 = vpop.xlane.xlu0 %3045
    %v3047 = vsel %vm207, %v3041, 0.0
    %3048 = vadd.xlane.f32.xlu0 %v3047
    %v3049 = vpop.xlane.xlu0 %3048
    %v3050 = vsel %vm207, %v3042, 0.0
    %3051 = vadd.xlane.f32.xlu0 %v3050
    %v3052 = vpop.xlane.xlu0 %3051
    %v3053 = vsel %vm207, %v3043, 0.0
    %3054 = vadd.xlane.f32.xlu0 %v3053
    %v3055 = vpop.xlane.xlu0 %3054
    %v3056 = vmul.f32 %v3046, %v220
    %v3057 = vmul.f32 %v3049, %v220
    %v3058 = vmul.f32 %v3052, %v220
    %v3059 = vmul.f32 %v3055, %v220
    %v3060 = vadd.f32 %v3056, 1e-05
    %v3061 = vadd.f32 %v3057, 1e-05
    %v3062 = vadd.f32 %v3058, 1e-05
    %v3063 = vadd.f32 %v3059, 1e-05
    %v3064 = vrsqrt.pop %v3060
    %v3065 = vrsqrt.pop %v3061
    %v3066 = vrsqrt.pop %v3062
    %v3067 = vrsqrt.pop %v3063
    %v3068 = vmul.f32 %v3036, %v3064
    %v3069 = vmul.f32 %v3037, %v3065
    %v3070 = vmul.f32 %v3038, %v3066
    %v3071 = vmul.f32 %v3039, %v3067
    %v3073 = vlaneseq
    %v3074 = vshrl.u32 %v3073, 7
    %v3075 = vsub.s32 0, %v3074
    %v3076 = vrot.slane %v3017, %v3075
    %v3078 = vmul.f32 %v3068, %v3076
    %v3079 = vmul.f32 %v3069, %v3076
    %v3080 = vmul.f32 %v3070, %v3076
    %v3081 = vmul.f32 %v3071, %v3076
    %v3083 = vlaneseq
    %v3084 = vshrl.u32 %v3083, 7
    %v3085 = vsub.s32 0, %v3084
    %v3086 = vrot.slane %v3019, %v3085
    %v3088 = vadd.f32 %v3078, %v3086
    %v3089 = vadd.f32 %v3079, %v3086
    %v3090 = vadd.f32 %v3080, %v3086
    %v3091 = vadd.f32 %v3081, %v3086
    %v3092 = vpack.c.bf16 %v3089, %v3088
    %v3093 = vpack.c.bf16 %v3091, %v3090
    %s3094 = scalar_lea.vmem %s4, 96
    %v3095 = vld [vmem:[%s3094] sm:$0xff]
    %v3096 = vld [vmem:[%s3094 + $0x8] sm:$0xf]
    %v3097 = vld [vmem:[%s3094 + $0xc] sm:$0xff]
    %v3098 = vld [vmem:[%s3094 + $0x14] sm:$0xf]
    %v3099 = vld [vmem:[%s3094 + $0x18] sm:$0xff]
    %v3100 = vld [vmem:[%s3094 + $0x20] sm:$0xf]
    %v3101 = vld [vmem:[%s3094 + $0x24] sm:$0xff]
    %v3102 = vld [vmem:[%s3094 + $0x2c] sm:$0xf]
    %v3103 = vld [vmem:[%s3094 + $0x30] sm:$0xff]
    %v3104 = vld [vmem:[%s3094 + $0x38] sm:$0xf]
    %v3105 = vld [vmem:[%s3094 + $0x3c] sm:$0xff]
    %v3106 = vld [vmem:[%s3094 + $0x44] sm:$0xf]
    %v3107 = vld [vmem:[%s3094 + $0x48] sm:$0xff]
    %v3108 = vld [vmem:[%s3094 + $0x50] sm:$0xf]
    %v3109 = vld [vmem:[%s3094 + $0x54] sm:$0xff]
    %v3110 = vld [vmem:[%s3094 + $0x5c] sm:$0xf]
    %v3127 = vunpack.c.l.b16 %v3095
    %v3128 = vunpack.c.h.b16 %v3095
    %v3129 = vunpack.c.l.b16 %v3096
    %v3130 = vunpack.c.l.b16 %v3097
    %v3131 = vunpack.c.h.b16 %v3097
    %v3132 = vunpack.c.l.b16 %v3098
    %v3133 = vunpack.c.l.b16 %v3099
    %v3134 = vunpack.c.h.b16 %v3099
    %v3135 = vunpack.c.l.b16 %v3100
    %v3136 = vunpack.c.l.b16 %v3101
    %v3137 = vunpack.c.h.b16 %v3101
    %v3138 = vunpack.c.l.b16 %v3102
    %v3139 = vunpack.c.l.b16 %v3103
    %v3140 = vunpack.c.h.b16 %v3103
    %v3141 = vunpack.c.l.b16 %v3104
    %v3142 = vunpack.c.l.b16 %v3105
    %v3143 = vunpack.c.h.b16 %v3105
    %v3144 = vunpack.c.l.b16 %v3106
    %v3145 = vunpack.c.l.b16 %v3107
    %v3146 = vunpack.c.h.b16 %v3107
    %v3147 = vunpack.c.l.b16 %v3108
    %v3148 = vunpack.c.l.b16 %v3109
    %v3149 = vunpack.c.h.b16 %v3109
    %v3150 = vunpack.c.l.b16 %v3110
    %v3151 = vpack.c.b16 %v3130, %v3127
    %v3152 = vpack.c.b16 %v3131, %v3128
    %v3153 = vpack.c.b16 %v3132, %v3129
    %v3154 = vpack.c.b16 %v3136, %v3133
    %v3155 = vpack.c.b16 %v3137, %v3134
    %v3156 = vpack.c.b16 %v3138, %v3135
    %v3157 = vpack.c.b16 %v3142, %v3139
    %v3158 = vpack.c.b16 %v3143, %v3140
    %v3159 = vpack.c.b16 %v3144, %v3141
    %v3160 = vpack.c.b16 %v3148, %v3145
    %v3161 = vpack.c.b16 %v3149, %v3146
    %v3162 = vpack.c.b16 %v3150, %v3147
    %v3176 = vsel %vm207, %v3092, 0
    %v3179 = vsel %vm207, %v3093, 0
    %3181 = vmatprep.subr.bf16.mxu0 %v3152
    %3182 = vmatpush1.bf16.msra.mxu0 %v3151
    %3183 = vmatprep.subr.bf16.mxu0 %v3155
    %3184 = vmatpush1.bf16.msra.mxu0 %v3154
    %3185 = vmatprep.subr.bf16.mxu0 %v3158
    %3186 = vmatpush1.bf16.msra.mxu0 %v3157
    %3187 = vmatprep.subr.bf16.mxu0 %v3161
    %3188 = vmatpush1.bf16.msra.mxu0 %v3160
    %3189 = vmatprep.subr.bf16.mxu0 0
    %3190 = vmatpush1.bf16.msra.mxu0 0
    %3191 = vmatprep.subr.bf16.mxu0 0
    %3192 = vmatpush1.bf16.msra.mxu0 0
    %3193 = vmatprep.subr.bf16.mxu0 0
    %3194 = vmatpush1.bf16.msra.mxu0 0
    %3195 = vmatprep.subr.bf16.mxu0 0
    %3196 = vmatpush1.bf16.msra.mxu0 0
    %3197 = vmatprep.subr.bf16.mxu0 0
    %3198 = vmatpush1.bf16.msra.mxu0 0
    %3199 = vmatprep.subr.bf16.mxu0 0
    %3200 = vmatpush1.bf16.msra.mxu0 0
    %3201 = vmatprep.subr.bf16.mxu0 0
    %3202 = vmatpush1.bf16.msra.mxu0 0
    %3203 = vmatprep.subr.bf16.mxu0 0
    %3204 = vmatpush1.bf16.msra.mxu0 0
    %3205 = vmatprep.subr.bf16.mxu0 0
    %3206 = vmatpush1.bf16.msra.mxu0 0
    %3207 = vmatprep.subr.bf16.mxu0 0
    %3208 = vmatpush1.bf16.msra.mxu0 0
    %3209 = vmatprep.subr.bf16.mxu0 0
    %3210 = vmatpush1.bf16.msra.mxu0 0
    %3211 = vmatprep.subr.bf16.mxu0 0
    %3212 = vmatpush1.bf16.msra.mxu0 0
    %3213 = vmatprep.mubr.bf16.mxu0 0
    %3214 = vmatmul.mubr.bf16.gmra.mrb[0].mxu0 %v3176
    %v3215 = vpop.f32.mrb[0].mxu0
    %v3216 = vadd.f32 0.0, %v3215
    %v3217 = vpop.f32.mrb[0].mxu0
    %v3218 = vadd.f32 0.0, %v3217
    %v3219 = vpop.f32.mrb[0].mxu0
    %v3220 = vadd.f32 0.0, %v3219
    %v3221 = vpop.f32.mrb[0].mxu0
    %v3222 = vadd.f32 0.0, %v3221
    %3223 = vmatprep.mubr.bf16.mxu0 0
    %3224 = vmatmul.mubr.bf16.gmra.mrb[0].mxu0 %v3179
    %v3225 = vpop.f32.mrb[0].mxu0
    %v3226 = vadd.f32 0.0, %v3225
    %v3227 = vpop.f32.mrb[0].mxu0
    %v3228 = vadd.f32 0.0, %v3227
    %v3229 = vpop.f32.mrb[0].mxu0
    %v3230 = vadd.f32 0.0, %v3229
    %v3231 = vpop.f32.mrb[0].mxu0
    %v3232 = vadd.f32 0.0, %v3231
    %3233 = vdwg.mxu0
    %3234 = vmatprep.subr.bf16.mxu0 0
    %3235 = vmatpush1.bf16.msra.mxu0 %v3153
    %3236 = vmatprep.subr.bf16.mxu0 0
    %3237 = vmatpush1.bf16.msra.mxu0 %v3156
    %3238 = vmatprep.subr.bf16.mxu0 0
    %3239 = vmatpush1.bf16.msra.mxu0 %v3159
    %3240 = vmatprep.subr.bf16.mxu0 0
    %3241 = vmatpush1.bf16.msra.mxu0 %v3162
    %3242 = vmatprep.subr.bf16.mxu0 0
    %3243 = vmatpush1.bf16.msra.mxu0 0
    %3244 = vmatprep.subr.bf16.mxu0 0
    %3245 = vmatpush1.bf16.msra.mxu0 0
    %3246 = vmatprep.subr.bf16.mxu0 0
    %3247 = vmatpush1.bf16.msra.mxu0 0
    %3248 = vmatprep.subr.bf16.mxu0 0
    %3249 = vmatpush1.bf16.msra.mxu0 0
    %3250 = vmatprep.subr.bf16.mxu0 0
    %3251 = vmatpush1.bf16.msra.mxu0 0
    %3252 = vmatprep.subr.bf16.mxu0 0
    %3253 = vmatpush1.bf16.msra.mxu0 0
    %3254 = vmatprep.subr.bf16.mxu0 0
    %3255 = vmatpush1.bf16.msra.mxu0 0
    %3256 = vmatprep.subr.bf16.mxu0 0
    %3257 = vmatpush1.bf16.msra.mxu0 0
    %3258 = vmatprep.subr.bf16.mxu0 0
    %3259 = vmatpush1.bf16.msra.mxu0 0
    %3260 = vmatprep.subr.bf16.mxu0 0
    %3261 = vmatpush1.bf16.msra.mxu0 0
    %3262 = vmatprep.subr.bf16.mxu0 0
    %3263 = vmatpush1.bf16.msra.mxu0 0
    %3264 = vmatprep.subr.bf16.mxu0 0
    %3265 = vmatpush1.bf16.msra.mxu0 0
    %3266 = vmatprep.mubr.bf16.mxu0 0
    %3267 = vmatmul.mubr.bf16.gmra.mrb[0].mxu0 %v3176
    %v3268 = vpop.f32.mrb[0].mxu0
    %v3269 = vadd.f32 0.0, %v3268
    %v3270 = vpop.f32.mrb[0].mxu0
    %v3271 = vpop.f32.mrb[0].mxu0
    %v3272 = vadd.f32 0.0, %v3271
    %v3273 = vpop.f32.mrb[0].mxu0
    %3274 = vmatprep.mubr.bf16.mxu0 0
    %3275 = vmatmul.mubr.bf16.gmra.mrb[0].mxu0 %v3179
    %v3276 = vpop.f32.mrb[0].mxu0
    %v3277 = vadd.f32 0.0, %v3276
    %v3278 = vpop.f32.mrb[0].mxu0
    %v3279 = vpop.f32.mrb[0].mxu0
    %v3280 = vadd.f32 0.0, %v3279
    %v3281 = vpop.f32.mrb[0].mxu0
    %3282 = vdwg.mxu0
    %3283 = vst.msk [vmem:[#allocation2] sm:$0xff] %vm471, %v3216
    %3284 = vst.msk [vmem:[#allocation2 + $0x8] sm:$0xff] %vm471, %v3220
    %3285 = vst.msk [vmem:[#allocation2 + $0x10] sm:$0xff] %vm471, %v3226
    %3286 = vst.msk [vmem:[#allocation2 + $0x18] sm:$0xff] %vm471, %v3230
    %3287 = vst.msk [vmem:[#allocation3] sm:$0xff] %vm471, %v3218
    %3288 = vst.msk [vmem:[#allocation3 + $0x8] sm:$0xff] %vm471, %v3222
    %3289 = vst.msk [vmem:[#allocation3 + $0x10] sm:$0xff] %vm471, %v3228
    %3290 = vst.msk [vmem:[#allocation3 + $0x18] sm:$0xff] %vm471, %v3232
    %3291 = vst.msk [vmem:[#allocation4] sm:$0xff] %vm471, %v3269
    %3292 = vst.msk [vmem:[#allocation4 + $0x8] sm:$0xff] %vm471, %v3272
    %3293 = vst.msk [vmem:[#allocation4 + $0x10] sm:$0xff] %vm471, %v3277
    %3294 = vst.msk [vmem:[#allocation4 + $0x18] sm:$0xff] %vm471, %v3280
    %3299 = vrot.lane.b32.xlu0 %v3216, 120
    %v3300 = vpop.permute.xlu0 %3299
    %3301 = vrot.lane.b32.xlu0 %v3220, 120
    %v3302 = vpop.permute.xlu0 %3301
    %3303 = vrot.lane.b32.xlu0 %v3226, 120
    %v3304 = vpop.permute.xlu0 %3303
    %3305 = vrot.lane.b32.xlu0 %v3230, 120
    %v3306 = vpop.permute.xlu0 %3305
    %3311 = vst.msk [vmem:[%s500] sm:$0xff] %vm471, %v3300
    %3312 = vst.msk [vmem:[%s500 + $0x8] sm:$0xff] %vm471, %v3302
    %3313 = vst.msk [vmem:[%s500 + $0x10] sm:$0xff] %vm471, %v3304
    %3314 = vst.msk [vmem:[%s500 + $0x18] sm:$0xff] %vm471, %v3306
    %3319 = vrot.lane.b32.xlu0 %v3218, 120
    %v3320 = vpop.permute.xlu0 %3319
    %3321 = vrot.lane.b32.xlu0 %v3222, 120
    %v3322 = vpop.permute.xlu0 %3321
    %3323 = vrot.lane.b32.xlu0 %v3228, 120
    %v3324 = vpop.permute.xlu0 %3323
    %3325 = vrot.lane.b32.xlu0 %v3232, 120
    %v3326 = vpop.permute.xlu0 %3325
    %3331 = vst.msk [vmem:[%s521] sm:$0xff] %vm471, %v3320
    %3332 = vst.msk [vmem:[%s521 + $0x8] sm:$0xff] %vm471, %v3322
    %3333 = vst.msk [vmem:[%s521 + $0x10] sm:$0xff] %vm471, %v3324
    %3334 = vst.msk [vmem:[%s521 + $0x18] sm:$0xff] %vm471, %v3326
    %3339 = vrot.lane.b32.xlu0 %v3269, 120
    %v3340 = vpop.permute.xlu0 %3339
    %3341 = vrot.lane.b32.xlu0 %v3272, 120
    %v3342 = vpop.permute.xlu0 %3341
    %3343 = vrot.lane.b32.xlu0 %v3277, 120
    %v3344 = vpop.permute.xlu0 %3343
    %3345 = vrot.lane.b32.xlu0 %v3280, 120
    %v3346 = vpop.permute.xlu0 %3345
    %3351 = vst.msk [vmem:[%s542] sm:$0xff] %vm471, %v3340
    %3352 = vst.msk [vmem:[%s542 + $0x8] sm:$0xff] %vm471, %v3342
    %3353 = vst.msk [vmem:[%s542 + $0x10] sm:$0xff] %vm471, %v3344
    %3354 = vst.msk [vmem:[%s542 + $0x18] sm:$0xff] %vm471, %v3346
    %3355 = vrot.lane.b32.xlu0 %v3216, 112
    %v3356 = vpop.permute.xlu0 %3355
    %3357 = vrot.lane.b32.xlu0 %v3220, 112
    %v3358 = vpop.permute.xlu0 %3357
    %3359 = vrot.lane.b32.xlu0 %v3226, 112
    %v3360 = vpop.permute.xlu0 %3359
    %3361 = vrot.lane.b32.xlu0 %v3230, 112
    %v3362 = vpop.permute.xlu0 %3361
    %3367 = vst.msk [vmem:[%s559] sm:$0xff] %vm471, %v3356
    %3368 = vst.msk [vmem:[%s559 + $0x8] sm:$0xff] %vm471, %v3358
    %3369 = vst.msk [vmem:[%s559 + $0x10] sm:$0xff] %vm471, %v3360
    %3370 = vst.msk [vmem:[%s559 + $0x18] sm:$0xff] %vm471, %v3362
    %3371 = vrot.lane.b32.xlu0 %v3218, 112
    %v3372 = vpop.permute.xlu0 %3371
    %3373 = vrot.lane.b32.xlu0 %v3222, 112
    %v3374 = vpop.permute.xlu0 %3373
    %3375 = vrot.lane.b32.xlu0 %v3228, 112
    %v3376 = vpop.permute.xlu0 %3375
    %3377 = vrot.lane.b32.xlu0 %v3232, 112
    %v3378 = vpop.permute.xlu0 %3377
    %3383 = vst.msk [vmem:[%s576] sm:$0xff] %vm471, %v3372
    %3384 = vst.msk [vmem:[%s576 + $0x8] sm:$0xff] %vm471, %v3374
    %3385 = vst.msk [vmem:[%s576 + $0x10] sm:$0xff] %vm471, %v3376
    %3386 = vst.msk [vmem:[%s576 + $0x18] sm:$0xff] %vm471, %v3378
    %3387 = vrot.lane.b32.xlu0 %v3269, 112
    %v3388 = vpop.permute.xlu0 %3387
    %3389 = vrot.lane.b32.xlu0 %v3272, 112
    %v3390 = vpop.permute.xlu0 %3389
    %3391 = vrot.lane.b32.xlu0 %v3277, 112
    %v3392 = vpop.permute.xlu0 %3391
    %3393 = vrot.lane.b32.xlu0 %v3280, 112
    %v3394 = vpop.permute.xlu0 %3393
    %3399 = vst.msk [vmem:[%s593] sm:$0xff] %vm471, %v3388
    %3400 = vst.msk [vmem:[%s593 + $0x8] sm:$0xff] %vm471, %v3390
    %3401 = vst.msk [vmem:[%s593 + $0x10] sm:$0xff] %vm471, %v3392
    %3402 = vst.msk [vmem:[%s593 + $0x18] sm:$0xff] %vm471, %v3394
    %3403 = vrot.lane.b32.xlu0 %v3216, 104
    %v3404 = vpop.permute.xlu0 %3403
    %3405 = vrot.lane.b32.xlu0 %v3220, 104
    %v3406 = vpop.permute.xlu0 %3405
    %3407 = vrot.lane.b32.xlu0 %v3226, 104
    %v3408 = vpop.permute.xlu0 %3407
    %3409 = vrot.lane.b32.xlu0 %v3230, 104
    %v3410 = vpop.permute.xlu0 %3409
    %3415 = vst.msk [vmem:[%s610] sm:$0xff] %vm471, %v3404
    %3416 = vst.msk [vmem:[%s610 + $0x8] sm:$0xff] %vm471, %v3406
    %3417 = vst.msk [vmem:[%s610 + $0x10] sm:$0xff] %vm471, %v3408
    %3418 = vst.msk [vmem:[%s610 + $0x18] sm:$0xff] %vm471, %v3410
    %3419 = vrot.lane.b32.xlu0 %v3218, 104
    %v3420 = vpop.permute.xlu0 %3419
    %3421 = vrot.lane.b32.xlu0 %v3222, 104
    %v3422 = vpop.permute.xlu0 %3421
    %3423 = vrot.lane.b32.xlu0 %v3228, 104
    %v3424 = vpop.permute.xlu0 %3423
    %3425 = vrot.lane.b32.xlu0 %v3232, 104
    %v3426 = vpop.permute.xlu0 %3425
    %3431 = vst.msk [vmem:[%s627] sm:$0xff] %vm471, %v3420
    %3432 = vst.msk [vmem:[%s627 + $0x8] sm:$0xff] %vm471, %v3422
    %3433 = vst.msk [vmem:[%s627 + $0x10] sm:$0xff] %vm471, %v3424
    %3434 = vst.msk [vmem:[%s627 + $0x18] sm:$0xff] %vm471, %v3426
    %3435 = vrot.lane.b32.xlu0 %v3269, 104
    %v3436 = vpop.permute.xlu0 %3435
    %3437 = vrot.lane.b32.xlu0 %v3272, 104
    %v3438 = vpop.permute.xlu0 %3437
    %3439 = vrot.lane.b32.xlu0 %v3277, 104
    %v3440 = vpop.permute.xlu0 %3439
    %3441 = vrot.lane.b32.xlu0 %v3280, 104
    %v3442 = vpop.permute.xlu0 %3441
    %3447 = vst.msk [vmem:[%s644] sm:$0xff] %vm471, %v3436
    %3448 = vst.msk [vmem:[%s644 + $0x8] sm:$0xff] %vm471, %v3438
    %3449 = vst.msk [vmem:[%s644 + $0x10] sm:$0xff] %vm471, %v3440
    %3450 = vst.msk [vmem:[%s644 + $0x18] sm:$0xff] %vm471, %v3442
    %3451 = vrot.lane.b32.xlu0 %v3216, 96
    %v3452 = vpop.permute.xlu0 %3451
    %3453 = vrot.lane.b32.xlu0 %v3220, 96
    %v3454 = vpop.permute.xlu0 %3453
    %3455 = vrot.lane.b32.xlu0 %v3226, 96
    %v3456 = vpop.permute.xlu0 %3455
    %3457 = vrot.lane.b32.xlu0 %v3230, 96
    %v3458 = vpop.permute.xlu0 %3457
    %3463 = vst.msk [vmem:[%s661] sm:$0xff] %vm471, %v3452
    %3464 = vst.msk [vmem:[%s661 + $0x8] sm:$0xff] %vm471, %v3454
    %3465 = vst.msk [vmem:[%s661 + $0x10] sm:$0xff] %vm471, %v3456
    %3466 = vst.msk [vmem:[%s661 + $0x18] sm:$0xff] %vm471, %v3458
    %3467 = vrot.lane.b32.xlu0 %v3218, 96
    %v3468 = vpop.permute.xlu0 %3467
    %3469 = vrot.lane.b32.xlu0 %v3222, 96
    %v3470 = vpop.permute.xlu0 %3469
    %3471 = vrot.lane.b32.xlu0 %v3228, 96
    %v3472 = vpop.permute.xlu0 %3471
    %3473 = vrot.lane.b32.xlu0 %v3232, 96
    %v3474 = vpop.permute.xlu0 %3473
    %3479 = vst.msk [vmem:[%s678] sm:$0xff] %vm471, %v3468
    %3480 = vst.msk [vmem:[%s678 + $0x8] sm:$0xff] %vm471, %v3470
    %3481 = vst.msk [vmem:[%s678 + $0x10] sm:$0xff] %vm471, %v3472
    %3482 = vst.msk [vmem:[%s678 + $0x18] sm:$0xff] %vm471, %v3474
    %3483 = vrot.lane.b32.xlu0 %v3269, 96
    %v3484 = vpop.permute.xlu0 %3483
    %3485 = vrot.lane.b32.xlu0 %v3272, 96
    %v3486 = vpop.permute.xlu0 %3485
    %3487 = vrot.lane.b32.xlu0 %v3277, 96
    %v3488 = vpop.permute.xlu0 %3487
    %3489 = vrot.lane.b32.xlu0 %v3280, 96
    %v3490 = vpop.permute.xlu0 %3489
    %3495 = vst.msk [vmem:[%s695] sm:$0xff] %vm471, %v3484
    %3496 = vst.msk [vmem:[%s695 + $0x8] sm:$0xff] %vm471, %v3486
    %3497 = vst.msk [vmem:[%s695 + $0x10] sm:$0xff] %vm471, %v3488
    %3498 = vst.msk [vmem:[%s695 + $0x18] sm:$0xff] %vm471, %v3490
    %3499 = vrot.lane.b32.xlu0 %v3216, 88
    %v3500 = vpop.permute.xlu0 %3499
    %3501 = vrot.lane.b32.xlu0 %v3220, 88
    %v3502 = vpop.permute.xlu0 %3501
    %3503 = vrot.lane.b32.xlu0 %v3226, 88
    %v3504 = vpop.permute.xlu0 %3503
    %3505 = vrot.lane.b32.xlu0 %v3230, 88
    %v3506 = vpop.permute.xlu0 %3505
    %3511 = vst.msk [vmem:[%s712] sm:$0xff] %vm471, %v3500
    %3512 = vst.msk [vmem:[%s712 + $0x8] sm:$0xff] %vm471, %v3502
    %3513 = vst.msk [vmem:[%s712 + $0x10] sm:$0xff] %vm471, %v3504
    %3514 = vst.msk [vmem:[%s712 + $0x18] sm:$0xff] %vm471, %v3506
    %3515 = vrot.lane.b32.xlu0 %v3218, 88
    %v3516 = vpop.permute.xlu0 %3515
    %3517 = vrot.lane.b32.xlu0 %v3222, 88
    %v3518 = vpop.permute.xlu0 %3517
    %3519 = vrot.lane.b32.xlu0 %v3228, 88
    %v3520 = vpop.permute.xlu0 %3519
    %3521 = vrot.lane.b32.xlu0 %v3232, 88
    %v3522 = vpop.permute.xlu0 %3521
    %3527 = vst.msk [vmem:[%s729] sm:$0xff] %vm471, %v3516
    %3528 = vst.msk [vmem:[%s729 + $0x8] sm:$0xff] %vm471, %v3518
    %3529 = vst.msk [vmem:[%s729 + $0x10] sm:$0xff] %vm471, %v3520
    %3530 = vst.msk [vmem:[%s729 + $0x18] sm:$0xff] %vm471, %v3522
    %3531 = vrot.lane.b32.xlu0 %v3269, 88
    %v3532 = vpop.permute.xlu0 %3531
    %3533 = vrot.lane.b32.xlu0 %v3272, 88
    %v3534 = vpop.permute.xlu0 %3533
    %3535 = vrot.lane.b32.xlu0 %v3277, 88
    %v3536 = vpop.permute.xlu0 %3535
    %3537 = vrot.lane.b32.xlu0 %v3280, 88
    %v3538 = vpop.permute.xlu0 %3537
    %3543 = vst.msk [vmem:[%s746] sm:$0xff] %vm471, %v3532
    %3544 = vst.msk [vmem:[%s746 + $0x8] sm:$0xff] %vm471, %v3534
    %3545 = vst.msk [vmem:[%s746 + $0x10] sm:$0xff] %vm471, %v3536
    %3546 = vst.msk [vmem:[%s746 + $0x18] sm:$0xff] %vm471, %v3538
    %3547 = vrot.lane.b32.xlu0 %v3216, 80
    %v3548 = vpop.permute.xlu0 %3547
    %3549 = vrot.lane.b32.xlu0 %v3220, 80
    %v3550 = vpop.permute.xlu0 %3549
    %3551 = vrot.lane.b32.xlu0 %v3226, 80
    %v3552 = vpop.permute.xlu0 %3551
    %3553 = vrot.lane.b32.xlu0 %v3230, 80
    %v3554 = vpop.permute.xlu0 %3553
    %3559 = vst.msk [vmem:[%s763] sm:$0xff] %vm471, %v3548
    %3560 = vst.msk [vmem:[%s763 + $0x8] sm:$0xff] %vm471, %v3550
    %3561 = vst.msk [vmem:[%s763 + $0x10] sm:$0xff] %vm471, %v3552
    %3562 = vst.msk [vmem:[%s763 + $0x18] sm:$0xff] %vm471, %v3554
    %3563 = vrot.lane.b32.xlu0 %v3218, 80
    %v3564 = vpop.permute.xlu0 %3563
    %3565 = vrot.lane.b32.xlu0 %v3222, 80
    %v3566 = vpop.permute.xlu0 %3565
    %3567 = vrot.lane.b32.xlu0 %v3228, 80
    %v3568 = vpop.permute.xlu0 %3567
    %3569 = vrot.lane.b32.xlu0 %v3232, 80
    %v3570 = vpop.permute.xlu0 %3569
    %3575 = vst.msk [vmem:[%s780] sm:$0xff] %vm471, %v3564
    %3576 = vst.msk [vmem:[%s780 + $0x8] sm:$0xff] %vm471, %v3566
    %3577 = vst.msk [vmem:[%s780 + $0x10] sm:$0xff] %vm471, %v3568
    %3578 = vst.msk [vmem:[%s780 + $0x18] sm:$0xff] %vm471, %v3570
    %3579 = vrot.lane.b32.xlu0 %v3269, 80
    %v3580 = vpop.permute.xlu0 %3579
    %3581 = vrot.lane.b32.xlu0 %v3272, 80
    %v3582 = vpop.permute.xlu0 %3581
    %3583 = vrot.lane.b32.xlu0 %v3277, 80
    %v3584 = vpop.permute.xlu0 %3583
    %3585 = vrot.lane.b32.xlu0 %v3280, 80
    %v3586 = vpop.permute.xlu0 %3585
    %3591 = vst.msk [vmem:[%s797] sm:$0xff] %vm471, %v3580
    %3592 = vst.msk [vmem:[%s797 + $0x8] sm:$0xff] %vm471, %v3582
    %3593 = vst.msk [vmem:[%s797 + $0x10] sm:$0xff] %vm471, %v3584
    %3594 = vst.msk [vmem:[%s797 + $0x18] sm:$0xff] %vm471, %v3586
    %3595 = vrot.lane.b32.xlu0 %v3216, 72
    %v3596 = vpop.permute.xlu0 %3595
    %3597 = vrot.lane.b32.xlu0 %v3220, 72
    %v3598 = vpop.permute.xlu0 %3597
    %3599 = vrot.lane.b32.xlu0 %v3226, 72
    %v3600 = vpop.permute.xlu0 %3599
    %3601 = vrot.lane.b32.xlu0 %v3230, 72
    %v3602 = vpop.permute.xlu0 %3601
    %3607 = vst.msk [vmem:[%s814] sm:$0xff] %vm471, %v3596
    %3608 = vst.msk [vmem:[%s814 + $0x8] sm:$0xff] %vm471, %v3598
    %3609 = vst.msk [vmem:[%s814 + $0x10] sm:$0xff] %vm471, %v3600
    %3610 = vst.msk [vmem:[%s814 + $0x18] sm:$0xff] %vm471, %v3602
    %3611 = vrot.lane.b32.xlu0 %v3218, 72
    %v3612 = vpop.permute.xlu0 %3611
    %3613 = vrot.lane.b32.xlu0 %v3222, 72
    %v3614 = vpop.permute.xlu0 %3613
    %3615 = vrot.lane.b32.xlu0 %v3228, 72
    %v3616 = vpop.permute.xlu0 %3615
    %3617 = vrot.lane.b32.xlu0 %v3232, 72
    %v3618 = vpop.permute.xlu0 %3617
    %3623 = vst.msk [vmem:[%s831] sm:$0xff] %vm471, %v3612
    %3624 = vst.msk [vmem:[%s831 + $0x8] sm:$0xff] %vm471, %v3614
    %3625 = vst.msk [vmem:[%s831 + $0x10] sm:$0xff] %vm471, %v3616
    %3626 = vst.msk [vmem:[%s831 + $0x18] sm:$0xff] %vm471, %v3618
    %3627 = vrot.lane.b32.xlu0 %v3269, 72
    %v3628 = vpop.permute.xlu0 %3627
    %3629 = vrot.lane.b32.xlu0 %v3272, 72
    %v3630 = vpop.permute.xlu0 %3629
    %3631 = vrot.lane.b32.xlu0 %v3277, 72
    %v3632 = vpop.permute.xlu0 %3631
    %3633 = vrot.lane.b32.xlu0 %v3280, 72
    %v3634 = vpop.permute.xlu0 %3633
    %3639 = vst.msk [vmem:[%s848] sm:$0xff] %vm471, %v3628
    %3640 = vst.msk [vmem:[%s848 + $0x8] sm:$0xff] %vm471, %v3630
    %3641 = vst.msk [vmem:[%s848 + $0x10] sm:$0xff] %vm471, %v3632
    %3642 = vst.msk [vmem:[%s848 + $0x18] sm:$0xff] %vm471, %v3634
    %v3643 = vld [vmem:[#allocation2] sm:$0xff]
    %v3644 = vld [vmem:[#allocation2 + $0x8] sm:$0xff]
    %v3645 = vld [vmem:[#allocation2 + $0x10] sm:$0xff]
    %v3646 = vld [vmem:[#allocation2 + $0x18] sm:$0xff]
    %v3647 = vld [vmem:[#allocation2 + $0x20] sm:$0xff]
    %v3648 = vld [vmem:[#allocation2 + $0x28] sm:$0xff]
    %v3649 = vld [vmem:[#allocation2 + $0x30] sm:$0xff]
    %v3650 = vld [vmem:[#allocation2 + $0x38] sm:$0xff]
    %v3651 = vld [vmem:[#allocation2 + $0x40] sm:$0xff]
    %v3652 = vld [vmem:[#allocation2 + $0x48] sm:$0xff]
    %v3653 = vld [vmem:[#allocation2 + $0x50] sm:$0xff]
    %v3654 = vld [vmem:[#allocation2 + $0x58] sm:$0xff]
    %v3655 = vld [vmem:[#allocation2 + $0x60] sm:$0xff]
    %v3656 = vld [vmem:[#allocation2 + $0x68] sm:$0xff]
    %v3657 = vld [vmem:[#allocation2 + $0x70] sm:$0xff]
    %v3658 = vld [vmem:[#allocation2 + $0x78] sm:$0xff]
    %v3659 = vld [vmem:[#allocation2 + $0x80] sm:$0xff]
    %v3660 = vld [vmem:[#allocation2 + $0x88] sm:$0xff]
    %v3661 = vld [vmem:[#allocation2 + $0x90] sm:$0xff]
    %v3662 = vld [vmem:[#allocation2 + $0x98] sm:$0xff]
    %v3663 = vld [vmem:[#allocation2 + $0xa0] sm:$0xff]
    %v3664 = vld [vmem:[#allocation2 + $0xa8] sm:$0xff]
    %v3665 = vld [vmem:[#allocation2 + $0xb0] sm:$0xff]
    %v3666 = vld [vmem:[#allocation2 + $0xb8] sm:$0xff]
    %v3667 = vld [vmem:[#allocation2 + $0xc0] sm:$0xff]
    %v3668 = vld [vmem:[#allocation2 + $0xc8] sm:$0xff]
    %v3669 = vld [vmem:[#allocation2 + $0xd0] sm:$0xff]
    %v3670 = vld [vmem:[#allocation2 + $0xd8] sm:$0xff]
    %v3671 = vld [vmem:[#allocation2 + $0xe0] sm:$0xff]
    %v3672 = vld [vmem:[#allocation2 + $0xe8] sm:$0xff]
    %v3673 = vld [vmem:[#allocation2 + $0xf0] sm:$0xff]
    %v3674 = vld [vmem:[#allocation2 + $0xf8] sm:$0xff]
    %v3675 = vpack.c.bf16 %v3644, %v3643
    %v3676 = vpack.c.bf16 %v3646, %v3645
    %v3677 = vpack.c.bf16 %v3648, %v3647
    %v3678 = vpack.c.bf16 %v3650, %v3649
    %v3679 = vpack.c.bf16 %v3652, %v3651
    %v3680 = vpack.c.bf16 %v3654, %v3653
    %v3681 = vpack.c.bf16 %v3656, %v3655
    %v3682 = vpack.c.bf16 %v3658, %v3657
    %v3683 = vpack.c.bf16 %v3660, %v3659
    %v3684 = vpack.c.bf16 %v3662, %v3661
    %v3685 = vpack.c.bf16 %v3664, %v3663
    %v3686 = vpack.c.bf16 %v3666, %v3665
    %v3687 = vpack.c.bf16 %v3668, %v3667
    %v3688 = vpack.c.bf16 %v3670, %v3669
    %v3689 = vpack.c.bf16 %v3672, %v3671
    %v3690 = vpack.c.bf16 %v3674, %v3673
    %v3691 = vld [vmem:[#allocation3] sm:$0xff]
    %v3692 = vld [vmem:[#allocation3 + $0x8] sm:$0xff]
    %v3693 = vld [vmem:[#allocation3 + $0x10] sm:$0xff]
    %v3694 = vld [vmem:[#allocation3 + $0x18] sm:$0xff]
    %v3695 = vld [vmem:[#allocation3 + $0x20] sm:$0xff]
    %v3696 = vld [vmem:[#allocation3 + $0x28] sm:$0xff]
    %v3697 = vld [vmem:[#allocation3 + $0x30] sm:$0xff]
    %v3698 = vld [vmem:[#allocation3 + $0x38] sm:$0xff]
    %v3699 = vld [vmem:[#allocation3 + $0x40] sm:$0xff]
    %v3700 = vld [vmem:[#allocation3 + $0x48] sm:$0xff]
    %v3701 = vld [vmem:[#allocation3 + $0x50] sm:$0xff]
    %v3702 = vld [vmem:[#allocation3 + $0x58] sm:$0xff]
    %v3703 = vld [vmem:[#allocation3 + $0x60] sm:$0xff]
    %v3704 = vld [vmem:[#allocation3 + $0x68] sm:$0xff]
    %v3705 = vld [vmem:[#allocation3 + $0x70] sm:$0xff]
    %v3706 = vld [vmem:[#allocation3 + $0x78] sm:$0xff]
    %v3707 = vld [vmem:[#allocation3 + $0x80] sm:$0xff]
    %v3708 = vld [vmem:[#allocation3 + $0x88] sm:$0xff]
    %v3709 = vld [vmem:[#allocation3 + $0x90] sm:$0xff]
    %v3710 = vld [vmem:[#allocation3 + $0x98] sm:$0xff]
    %v3711 = vld [vmem:[#allocation3 + $0xa0] sm:$0xff]
    %v3712 = vld [vmem:[#allocation3 + $0xa8] sm:$0xff]
    %v3713 = vld [vmem:[#allocation3 + $0xb0] sm:$0xff]
    %v3714 = vld [vmem:[#allocation3 + $0xb8] sm:$0xff]
    %v3715 = vld [vmem:[#allocation3 + $0xc0] sm:$0xff]
    %v3716 = vld [vmem:[#allocation3 + $0xc8] sm:$0xff]
    %v3717 = vld [vmem:[#allocation3 + $0xd0] sm:$0xff]
    %v3718 = vld [vmem:[#allocation3 + $0xd8] sm:$0xff]
    %v3719 = vld [vmem:[#allocation3 + $0xe0] sm:$0xff]
    %v3720 = vld [vmem:[#allocation3 + $0xe8] sm:$0xff]
    %v3721 = vld [vmem:[#allocation3 + $0xf0] sm:$0xff]
    %v3722 = vld [vmem:[#allocation3 + $0xf8] sm:$0xff]
    %v3723 = vpack.c.bf16 %v3692, %v3691
    %v3724 = vpack.c.bf16 %v3694, %v3693
    %v3725 = vpack.c.bf16 %v3696, %v3695
    %v3726 = vpack.c.bf16 %v3698, %v3697
    %v3727 = vpack.c.bf16 %v3700, %v3699
    %v3728 = vpack.c.bf16 %v3702, %v3701
    %v3729 = vpack.c.bf16 %v3704, %v3703
    %v3730 = vpack.c.bf16 %v3706, %v3705
    %v3731 = vpack.c.bf16 %v3708, %v3707
    %v3732 = vpack.c.bf16 %v3710, %v3709
    %v3733 = vpack.c.bf16 %v3712, %v3711
    %v3734 = vpack.c.bf16 %v3714, %v3713
    %v3735 = vpack.c.bf16 %v3716, %v3715
    %v3736 = vpack.c.bf16 %v3718, %v3717
    %v3737 = vpack.c.bf16 %v3720, %v3719
    %v3738 = vpack.c.bf16 %v3722, %v3721
    %v3739 = vld [vmem:[#allocation4] sm:$0xff]
    %v3740 = vld [vmem:[#allocation4 + $0x8] sm:$0xff]
    %v3741 = vld [vmem:[#allocation4 + $0x10] sm:$0xff]
    %v3742 = vld [vmem:[#allocation4 + $0x18] sm:$0xff]
    %v3743 = vld [vmem:[#allocation4 + $0x20] sm:$0xff]
    %v3744 = vld [vmem:[#allocation4 + $0x28] sm:$0xff]
    %v3745 = vld [vmem:[#allocation4 + $0x30] sm:$0xff]
    %v3746 = vld [vmem:[#allocation4 + $0x38] sm:$0xff]
    %v3747 = vld [vmem:[#allocation4 + $0x40] sm:$0xff]
    %v3748 = vld [vmem:[#allocation4 + $0x48] sm:$0xff]
    %v3749 = vld [vmem:[#allocation4 + $0x50] sm:$0xff]
    %v3750 = vld [vmem:[#allocation4 + $0x58] sm:$0xff]
    %v3751 = vld [vmem:[#allocation4 + $0x60] sm:$0xff]
    %v3752 = vld [vmem:[#allocation4 + $0x68] sm:$0xff]
    %v3753 = vld [vmem:[#allocation4 + $0x70] sm:$0xff]
    %v3754 = vld [vmem:[#allocation4 + $0x78] sm:$0xff]
    %v3755 = vld [vmem:[#allocation4 + $0x80] sm:$0xff]
    %v3756 = vld [vmem:[#allocation4 + $0x88] sm:$0xff]
    %v3757 = vld [vmem:[#allocation4 + $0x90] sm:$0xff]
    %v3758 = vld [vmem:[#allocation4 + $0x98] sm:$0xff]
    %v3759 = vld [vmem:[#allocation4 + $0xa0] sm:$0xff]
    %v3760 = vld [vmem:[#allocation4 + $0xa8] sm:$0xff]
    %v3761 = vld [vmem:[#allocation4 + $0xb0] sm:$0xff]
    %v3762 = vld [vmem:[#allocation4 + $0xb8] sm:$0xff]
    %v3763 = vld [vmem:[#allocation4 + $0xc0] sm:$0xff]
    %v3764 = vld [vmem:[#allocation4 + $0xc8] sm:$0xff]
    %v3765 = vld [vmem:[#allocation4 + $0xd0] sm:$0xff]
    %v3766 = vld [vmem:[#allocation4 + $0xd8] sm:$0xff]
    %v3767 = vld [vmem:[#allocation4 + $0xe0] sm:$0xff]
    %v3768 = vld [vmem:[#allocation4 + $0xe8] sm:$0xff]
    %v3769 = vld [vmem:[#allocation4 + $0xf0] sm:$0xff]
    %v3770 = vld [vmem:[#allocation4 + $0xf8] sm:$0xff]
    %v3771 = vpack.c.bf16 %v3740, %v3739
    %v3772 = vpack.c.bf16 %v3742, %v3741
    %v3773 = vpack.c.bf16 %v3744, %v3743
    %v3774 = vpack.c.bf16 %v3746, %v3745
    %v3775 = vpack.c.bf16 %v3748, %v3747
    %v3776 = vpack.c.bf16 %v3750, %v3749
    %v3777 = vpack.c.bf16 %v3752, %v3751
    %v3778 = vpack.c.bf16 %v3754, %v3753
    %v3779 = vpack.c.bf16 %v3756, %v3755
    %v3780 = vpack.c.bf16 %v3758, %v3757
    %v3781 = vpack.c.bf16 %v3760, %v3759
    %v3782 = vpack.c.bf16 %v3762, %v3761
    %v3783 = vpack.c.bf16 %v3764, %v3763
    %v3784 = vpack.c.bf16 %v3766, %v3765
    %v3785 = vpack.c.bf16 %v3768, %v3767
    %v3786 = vpack.c.bf16 %v3770, %v3769
    %v3788 = vsel %vm471, %v3675, 0
    %v3791 = vsel %vm471, %v3676, 0
    %v3794 = vsel %vm471, %v3723, 0
    %v3797 = vsel %vm471, %v3724, 0
    %3799 = vmatprep.subr.bf16.mxu0 0
    %3800 = vmatpush1.bf16.xpose.msra.mxu0 %v3794
    %3801 = vmatprep.subr.bf16.mxu0 0
    %3802 = vmatpush1.bf16.xpose.msra.mxu0 %v3797
    %3803 = vmatprep.subr.bf16.mxu0 0
    %3804 = vmatpush1.bf16.xpose.msra.mxu0 0
    %3805 = vmatprep.subr.bf16.mxu0 0
    %3806 = vmatpush1.bf16.xpose.msra.mxu0 0
    %3807 = vmatprep.subr.bf16.mxu0 0
    %3808 = vmatpush1.bf16.xpose.msra.mxu0 0
    %3809 = vmatprep.subr.bf16.mxu0 0
    %3810 = vmatpush1.bf16.xpose.msra.mxu0 0
    %3811 = vmatprep.subr.bf16.mxu0 0
    %3812 = vmatpush1.bf16.xpose.msra.mxu0 0
    %3813 = vmatprep.subr.bf16.mxu0 0
    %3814 = vmatpush1.bf16.xpose.msra.mxu0 0
    %3815 = vmatprep.subr.bf16.mxu0 0
    %3816 = vmatpush1.bf16.xpose.msra.mxu0 0
    %3817 = vmatprep.subr.bf16.mxu0 0
    %3818 = vmatpush1.bf16.xpose.msra.mxu0 0
    %3819 = vmatprep.subr.bf16.mxu0 0
    %3820 = vmatpush1.bf16.xpose.msra.mxu0 0
    %3821 = vmatprep.subr.bf16.mxu0 0
    %3822 = vmatpush1.bf16.xpose.msra.mxu0 0
    %3823 = vmatprep.subr.bf16.mxu0 0
    %3824 = vmatpush1.bf16.xpose.msra.mxu0 0
    %3825 = vmatprep.subr.bf16.mxu0 0
    %3826 = vmatpush1.bf16.xpose.msra.mxu0 0
    %3827 = vmatprep.subr.bf16.mxu0 0
    %3828 = vmatpush1.bf16.xpose.msra.mxu0 0
    %3829 = vmatprep.subr.bf16.mxu0 0
    %3830 = vmatpush1.bf16.xpose.msra.mxu0 0
    %3831 = vmatprep.mubr.bf16.mxu0 0
    %3832 = vmatmul.mubr.bf16.gmra.mrb[0].mxu0 %v3788
    %v3833 = vpop.f32.mrb[0].mxu0
    %v3834 = vadd.f32 0.0, %v3833
    %v3835 = vpop.f32.mrb[0].mxu0
    %v3836 = vpop.f32.mrb[0].mxu0
    %v3837 = vadd.f32 0.0, %v3836
    %v3838 = vpop.f32.mrb[0].mxu0
    %3839 = vmatprep.mubr.bf16.mxu0 0
    %3840 = vmatmul.mubr.bf16.gmra.mrb[0].mxu0 %v3791
    %v3841 = vpop.f32.mrb[0].mxu0
    %v3842 = vadd.f32 0.0, %v3841
    %v3843 = vpop.f32.mrb[0].mxu0
    %v3844 = vpop.f32.mrb[0].mxu0
    %v3845 = vadd.f32 0.0, %v3844
    %v3846 = vpop.f32.mrb[0].mxu0
    %3847 = vdwg.mxu0
    %v3849 = vsel %vm471, %v3677, 0
    %v3852 = vsel %vm471, %v3678, 0
    %v3855 = vsel %vm471, %v3725, 0
    %v3858 = vsel %vm471, %v3726, 0
    %3860 = vmatprep.subr.bf16.mxu0 0
    %3861 = vmatpush1.bf16.xpose.msra.mxu0 %v3855
    %3862 = vmatprep.subr.bf16.mxu0 0
    %3863 = vmatpush1.bf16.xpose.msra.mxu0 %v3858
    %3864 = vmatprep.subr.bf16.mxu0 0
    %3865 = vmatpush1.bf16.xpose.msra.mxu0 0
    %3866 = vmatprep.subr.bf16.mxu0 0
    %3867 = vmatpush1.bf16.xpose.msra.mxu0 0
    %3868 = vmatprep.subr.bf16.mxu0 0
    %3869 = vmatpush1.bf16.xpose.msra.mxu0 0
    %3870 = vmatprep.subr.bf16.mxu0 0
    %3871 = vmatpush1.bf16.xpose.msra.mxu0 0
    %3872 = vmatprep.subr.bf16.mxu0 0
    %3873 = vmatpush1.bf16.xpose.msra.mxu0 0
    %3874 = vmatprep.subr.bf16.mxu0 0
    %3875 = vmatpush1.bf16.xpose.msra.mxu0 0
    %3876 = vmatprep.subr.bf16.mxu0 0
    %3877 = vmatpush1.bf16.xpose.msra.mxu0 0
    %3878 = vmatprep.subr.bf16.mxu0 0
    %3879 = vmatpush1.bf16.xpose.msra.mxu0 0
    %3880 = vmatprep.subr.bf16.mxu0 0
    %3881 = vmatpush1.bf16.xpose.msra.mxu0 0
    %3882 = vmatprep.subr.bf16.mxu0 0
    %3883 = vmatpush1.bf16.xpose.msra.mxu0 0
    %3884 = vmatprep.subr.bf16.mxu0 0
    %3885 = vmatpush1.bf16.xpose.msra.mxu0 0
    %3886 = vmatprep.subr.bf16.mxu0 0
    %3887 = vmatpush1.bf16.xpose.msra.mxu0 0
    %3888 = vmatprep.subr.bf16.mxu0 0
    %3889 = vmatpush1.bf16.xpose.msra.mxu0 0
    %3890 = vmatprep.subr.bf16.mxu0 0
    %3891 = vmatpush1.bf16.xpose.msra.mxu0 0
    %3892 = vmatprep.mubr.bf16.mxu0 0
    %3893 = vmatmul.mubr.bf16.gmra.mrb[0].mxu0 %v3849
    %v3894 = vpop.f32.mrb[0].mxu0
    %v3895 = vadd.f32 0.0, %v3894
    %v3896 = vpop.f32.mrb[0].mxu0
    %v3897 = vpop.f32.mrb[0].mxu0
    %v3898 = vadd.f32 0.0, %v3897
    %v3899 = vpop.f32.mrb[0].mxu0
    %3900 = vmatprep.mubr.bf16.mxu0 0
    %3901 = vmatmul.mubr.bf16.gmra.mrb[0].mxu0 %v3852
    %v3902 = vpop.f32.mrb[0].mxu0
    %v3903 = vadd.f32 0.0, %v3902
    %v3904 = vpop.f32.mrb[0].mxu0
    %v3905 = vpop.f32.mrb[0].mxu0
    %v3906 = vadd.f32 0.0, %v3905
    %v3907 = vpop.f32.mrb[0].mxu0
    %3908 = vdwg.mxu0
    %v3910 = vsel %vm471, %v3679, 0
    %v3913 = vsel %vm471, %v3680, 0
    %v3916 = vsel %vm471, %v3727, 0
    %v3919 = vsel %vm471, %v3728, 0
    %3921 = vmatprep.subr.bf16.mxu0 0
    %3922 = vmatpush1.bf16.xpose.msra.mxu0 %v3916
    %3923 = vmatprep.subr.bf16.mxu0 0
    %3924 = vmatpush1.bf16.xpose.msra.mxu0 %v3919
    %3925 = vmatprep.subr.bf16.mxu0 0
    %3926 = vmatpush1.bf16.xpose.msra.mxu0 0
    %3927 = vmatprep.subr.bf16.mxu0 0
    %3928 = vmatpush1.bf16.xpose.msra.mxu0 0
    %3929 = vmatprep.subr.bf16.mxu0 0
    %3930 = vmatpush1.bf16.xpose.msra.mxu0 0
    %3931 = vmatprep.subr.bf16.mxu0 0
    %3932 = vmatpush1.bf16.xpose.msra.mxu0 0
    %3933 = vmatprep.subr.bf16.mxu0 0
    %3934 = vmatpush1.bf16.xpose.msra.mxu0 0
    %3935 = vmatprep.subr.bf16.mxu0 0
    %3936 = vmatpush1.bf16.xpose.msra.mxu0 0
    %3937 = vmatprep.subr.bf16.mxu0 0
    %3938 = vmatpush1.bf16.xpose.msra.mxu0 0
    %3939 = vmatprep.subr.bf16.mxu0 0
    %3940 = vmatpush1.bf16.xpose.msra.mxu0 0
    %3941 = vmatprep.subr.bf16.mxu0 0
    %3942 = vmatpush1.bf16.xpose.msra.mxu0 0
    %3943 = vmatprep.subr.bf16.mxu0 0
    %3944 = vmatpush1.bf16.xpose.msra.mxu0 0
    %3945 = vmatprep.subr.bf16.mxu0 0
    %3946 = vmatpush1.bf16.xpose.msra.mxu0 0
    %3947 = vmatprep.subr.bf16.mxu0 0
    %3948 = vmatpush1.bf16.xpose.msra.mxu0 0
    %3949 = vmatprep.subr.bf16.mxu0 0
    %3950 = vmatpush1.bf16.xpose.msra.mxu0 0
    %3951 = vmatprep.subr.bf16.mxu0 0
    %3952 = vmatpush1.bf16.xpose.msra.mxu0 0
    %3953 = vmatprep.mubr.bf16.mxu0 0
    %3954 = vmatmul.mubr.bf16.gmra.mrb[0].mxu0 %v3910
    %v3955 = vpop.f32.mrb[0].mxu0
    %v3956 = vadd.f32 0.0, %v3955
    %v3957 = vpop.f32.mrb[0].mxu0
    %v3958 = vpop.f32.mrb[0].mxu0
    %v3959 = vadd.f32 0.0, %v3958
    %v3960 = vpop.f32.mrb[0].mxu0
    %3961 = vmatprep.mubr.bf16.mxu0 0
    %3962 = vmatmul.mubr.bf16.gmra.mrb[0].mxu0 %v3913
    %v3963 = vpop.f32.mrb[0].mxu0
    %v3964 = vadd.f32 0.0, %v3963
    %v3965 = vpop.f32.mrb[0].mxu0
    %v3966 = vpop.f32.mrb[0].mxu0
    %v3967 = vadd.f32 0.0, %v3966
    %v3968 = vpop.f32.mrb[0].mxu0
    %3969 = vdwg.mxu0
    %v3971 = vsel %vm471, %v3681, 0
    %v3974 = vsel %vm471, %v3682, 0
    %v3977 = vsel %vm471, %v3729, 0
    %v3980 = vsel %vm471, %v3730, 0
    %3982 = vmatprep.subr.bf16.mxu0 0
    %3983 = vmatpush1.bf16.xpose.msra.mxu0 %v3977
    %3984 = vmatprep.subr.bf16.mxu0 0
    %3985 = vmatpush1.bf16.xpose.msra.mxu0 %v3980
    %3986 = vmatprep.subr.bf16.mxu0 0
    %3987 = vmatpush1.bf16.xpose.msra.mxu0 0
    %3988 = vmatprep.subr.bf16.mxu0 0
    %3989 = vmatpush1.bf16.xpose.msra.mxu0 0
    %3990 = vmatprep.subr.bf16.mxu0 0
    %3991 = vmatpush1.bf16.xpose.msra.mxu0 0
    %3992 = vmatprep.subr.bf16.mxu0 0
    %3993 = vmatpush1.bf16.xpose.msra.mxu0 0
    %3994 = vmatprep.subr.bf16.mxu0 0
    %3995 = vmatpush1.bf16.xpose.msra.mxu0 0
    %3996 = vmatprep.subr.bf16.mxu0 0
    %3997 = vmatpush1.bf16.xpose.msra.mxu0 0
    %3998 = vmatprep.subr.bf16.mxu0 0
    %3999 = vmatpush1.bf16.xpose.msra.mxu0 0
    %4000 = vmatprep.subr.bf16.mxu0 0
    %4001 = vmatpush1.bf16.xpose.msra.mxu0 0
    %4002 = vmatprep.subr.bf16.mxu0 0
    %4003 = vmatpush1.bf16.xpose.msra.mxu0 0
    %4004 = vmatprep.subr.bf16.mxu0 0
    %4005 = vmatpush1.bf16.xpose.msra.mxu0 0
    %4006 = vmatprep.subr.bf16.mxu0 0
    %4007 = vmatpush1.bf16.xpose.msra.mxu0 0
    %4008 = vmatprep.subr.bf16.mxu0 0
    %4009 = vmatpush1.bf16.xpose.msra.mxu0 0
    %4010 = vmatprep.subr.bf16.mxu0 0
    %4011 = vmatpush1.bf16.xpose.msra.mxu0 0
    %4012 = vmatprep.subr.bf16.mxu0 0
    %4013 = vmatpush1.bf16.xpose.msra.mxu0 0
    %4014 = vmatprep.mubr.bf16.mxu0 0
    %4015 = vmatmul.mubr.bf16.gmra.mrb[0].mxu0 %v3971
    %v4016 = vpop.f32.mrb[0].mxu0
    %v4017 = vadd.f32 0.0, %v4016
    %v4018 = vpop.f32.mrb[0].mxu0
    %v4019 = vpop.f32.mrb[0].mxu0
    %v4020 = vadd.f32 0.0, %v4019
    %v4021 = vpop.f32.mrb[0].mxu0
    %4022 = vmatprep.mubr.bf16.mxu0 0
    %4023 = vmatmul.mubr.bf16.gmra.mrb[0].mxu0 %v3974
    %v4024 = vpop.f32.mrb[0].mxu0
    %v4025 = vadd.f32 0.0, %v4024
    %v4026 = vpop.f32.mrb[0].mxu0
    %v4027 = vpop.f32.mrb[0].mxu0
    %v4028 = vadd.f32 0.0, %v4027
    %v4029 = vpop.f32.mrb[0].mxu0
    %4030 = vdwg.mxu0
    %v4032 = vsel %vm471, %v3683, 0
    %v4035 = vsel %vm471, %v3684, 0
    %v4038 = vsel %vm471, %v3731, 0
    %v4041 = vsel %vm471, %v3732, 0
    %4043 = vmatprep.subr.bf16.mxu0 0
    %4044 = vmatpush1.bf16.xpose.msra.mxu0 %v4038
    %4045 = vmatprep.subr.bf16.mxu0 0
    %4046 = vmatpush1.bf16.xpose.msra.mxu0 %v4041
    %4047 = vmatprep.subr.bf16.mxu0 0
    %4048 = vmatpush1.bf16.xpose.msra.mxu0 0
    %4049 = vmatprep.subr.bf16.mxu0 0
    %4050 = vmatpush1.bf16.xpose.msra.mxu0 0
    %4051 = vmatprep.subr.bf16.mxu0 0
    %4052 = vmatpush1.bf16.xpose.msra.mxu0 0
    %4053 = vmatprep.subr.bf16.mxu0 0
    %4054 = vmatpush1.bf16.xpose.msra.mxu0 0
    %4055 = vmatprep.subr.bf16.mxu0 0
    %4056 = vmatpush1.bf16.xpose.msra.mxu0 0
    %4057 = vmatprep.subr.bf16.mxu0 0
    %4058 = vmatpush1.bf16.xpose.msra.mxu0 0
    %4059 = vmatprep.subr.bf16.mxu0 0
    %4060 = vmatpush1.bf16.xpose.msra.mxu0 0
    %4061 = vmatprep.subr.bf16.mxu0 0
    %4062 = vmatpush1.bf16.xpose.msra.mxu0 0
    %4063 = vmatprep.subr.bf16.mxu0 0
    %4064 = vmatpush1.bf16.xpose.msra.mxu0 0
    %4065 = vmatprep.subr.bf16.mxu0 0
    %4066 = vmatpush1.bf16.xpose.msra.mxu0 0
    %4067 = vmatprep.subr.bf16.mxu0 0
    %4068 = vmatpush1.bf16.xpose.msra.mxu0 0
    %4069 = vmatprep.subr.bf16.mxu0 0
    %4070 = vmatpush1.bf16.xpose.msra.mxu0 0
    %4071 = vmatprep.subr.bf16.mxu0 0
    %4072 = vmatpush1.bf16.xpose.msra.mxu0 0
    %4073 = vmatprep.subr.bf16.mxu0 0
    %4074 = vmatpush1.bf16.xpose.msra.mxu0 0
    %4075 = vmatprep.mubr.bf16.mxu0 0
    %4076 = vmatmul.mubr.bf16.gmra.mrb[0].mxu0 %v4032
    %v4077 = vpop.f32.mrb[0].mxu0
    %v4078 = vadd.f32 0.0, %v4077
    %v4079 = vpop.f32.mrb[0].mxu0
    %v4080 = vpop.f32.mrb[0].mxu0
    %v4081 = vadd.f32 0.0, %v4080
    %v4082 = vpop.f32.mrb[0].mxu0
    %4083 = vmatprep.mubr.bf16.mxu0 0
    %4084 = vmatmul.mubr.bf16.gmra.mrb[0].mxu0 %v4035
    %v4085 = vpop.f32.mrb[0].mxu0
    %v4086 = vadd.f32 0.0, %v4085
    %v4087 = vpop.f32.mrb[0].mxu0
    %v4088 = vpop.f32.mrb[0].mxu0
    %v4089 = vadd.f32 0.0, %v4088
    %v4090 = vpop.f32.mrb[0].mxu0
    %4091 = vdwg.mxu0
    %v4093 = vsel %vm471, %v3685, 0
    %v4096 = vsel %vm471, %v3686, 0
    %v4099 = vsel %vm471, %v3733, 0
    %v4102 = vsel %vm471, %v3734, 0
    %4104 = vmatprep.subr.bf16.mxu0 0
    %4105 = vmatpush1.bf16.xpose.msra.mxu0 %v4099
    %4106 = vmatprep.subr.bf16.mxu0 0
    %4107 = vmatpush1.bf16.xpose.msra.mxu0 %v4102
    %4108 = vmatprep.subr.bf16.mxu0 0
    %4109 = vmatpush1.bf16.xpose.msra.mxu0 0
    %4110 = vmatprep.subr.bf16.mxu0 0
    %4111 = vmatpush1.bf16.xpose.msra.mxu0 0
    %4112 = vmatprep.subr.bf16.mxu0 0
    %4113 = vmatpush1.bf16.xpose.msra.mxu0 0
    %4114 = vmatprep.subr.bf16.mxu0 0
    %4115 = vmatpush1.bf16.xpose.msra.mxu0 0
    %4116 = vmatprep.subr.bf16.mxu0 0
    %4117 = vmatpush1.bf16.xpose.msra.mxu0 0
    %4118 = vmatprep.subr.bf16.mxu0 0
    %4119 = vmatpush1.bf16.xpose.msra.mxu0 0
    %4120 = vmatprep.subr.bf16.mxu0 0
    %4121 = vmatpush1.bf16.xpose.msra.mxu0 0
    %4122 = vmatprep.subr.bf16.mxu0 0
    %4123 = vmatpush1.bf16.xpose.msra.mxu0 0
    %4124 = vmatprep.subr.bf16.mxu0 0
    %4125 = vmatpush1.bf16.xpose.msra.mxu0 0
    %4126 = vmatprep.subr.bf16.mxu0 0
    %4127 = vmatpush1.bf16.xpose.msra.mxu0 0
    %4128 = vmatprep.subr.bf16.mxu0 0
    %4129 = vmatpush1.bf16.xpose.msra.mxu0 0
    %4130 = vmatprep.subr.bf16.mxu0 0
    %4131 = vmatpush1.bf16.xpose.msra.mxu0 0
    %4132 = vmatprep.subr.bf16.mxu0 0
    %4133 = vmatpush1.bf16.xpose.msra.mxu0 0
    %4134 = vmatprep.subr.bf16.mxu0 0
    %4135 = vmatpush1.bf16.xpose.msra.mxu0 0
    %4136 = vmatprep.mubr.bf16.mxu0 0
    %4137 = vmatmul.mubr.bf16.gmra.mrb[0].mxu0 %v4093
    %v4138 = vpop.f32.mrb[0].mxu0
    %v4139 = vadd.f32 0.0, %v4138
    %v4140 = vpop.f32.mrb[0].mxu0
    %v4141 = vpop.f32.mrb[0].mxu0
    %v4142 = vadd.f32 0.0, %v4141
    %v4143 = vpop.f32.mrb[0].mxu0
    %4144 = vmatprep.mubr.bf16.mxu0 0
    %4145 = vmatmul.mubr.bf16.gmra.mrb[0].mxu0 %v4096
    %v4146 = vpop.f32.mrb[0].mxu0
    %v4147 = vadd.f32 0.0, %v4146
    %v4148 = vpop.f32.mrb[0].mxu0
    %v4149 = vpop.f32.mrb[0].mxu0
    %v4150 = vadd.f32 0.0, %v4149
    %v4151 = vpop.f32.mrb[0].mxu0
    %4152 = vdwg.mxu0
    %v4154 = vsel %vm471, %v3687, 0
    %v4157 = vsel %vm471, %v3688, 0
    %v4160 = vsel %vm471, %v3735, 0
    %v4163 = vsel %vm471, %v3736, 0
    %4165 = vmatprep.subr.bf16.mxu0 0
    %4166 = vmatpush1.bf16.xpose.msra.mxu0 %v4160
    %4167 = vmatprep.subr.bf16.mxu0 0
    %4168 = vmatpush1.bf16.xpose.msra.mxu0 %v4163
    %4169 = vmatprep.subr.bf16.mxu0 0
    %4170 = vmatpush1.bf16.xpose.msra.mxu0 0
    %4171 = vmatprep.subr.bf16.mxu0 0
    %4172 = vmatpush1.bf16.xpose.msra.mxu0 0
    %4173 = vmatprep.subr.bf16.mxu0 0
    %4174 = vmatpush1.bf16.xpose.msra.mxu0 0
    %4175 = vmatprep.subr.bf16.mxu0 0
    %4176 = vmatpush1.bf16.xpose.msra.mxu0 0
    %4177 = vmatprep.subr.bf16.mxu0 0
    %4178 = vmatpush1.bf16.xpose.msra.mxu0 0
    %4179 = vmatprep.subr.bf16.mxu0 0
    %4180 = vmatpush1.bf16.xpose.msra.mxu0 0
    %4181 = vmatprep.subr.bf16.mxu0 0
    %4182 = vmatpush1.bf16.xpose.msra.mxu0 0
    %4183 = vmatprep.subr.bf16.mxu0 0
    %4184 = vmatpush1.bf16.xpose.msra.mxu0 0
    %4185 = vmatprep.subr.bf16.mxu0 0
    %4186 = vmatpush1.bf16.xpose.msra.mxu0 0
    %4187 = vmatprep.subr.bf16.mxu0 0
    %4188 = vmatpush1.bf16.xpose.msra.mxu0 0
    %4189 = vmatprep.subr.bf16.mxu0 0
    %4190 = vmatpush1.bf16.xpose.msra.mxu0 0
    %4191 = vmatprep.subr.bf16.mxu0 0
    %4192 = vmatpush1.bf16.xpose.msra.mxu0 0
    %4193 = vmatprep.subr.bf16.mxu0 0
    %4194 = vmatpush1.bf16.xpose.msra.mxu0 0
    %4195 = vmatprep.subr.bf16.mxu0 0
    %4196 = vmatpush1.bf16.xpose.msra.mxu0 0
    %4197 = vmatprep.mubr.bf16.mxu0 0
    %4198 = vmatmul.mubr.bf16.gmra.mrb[0].mxu0 %v4154
    %v4199 = vpop.f32.mrb[0].mxu0
    %v4200 = vadd.f32 0.0, %v4199
    %v4201 = vpop.f32.mrb[0].mxu0
    %v4202 = vpop.f32.mrb[0].mxu0
    %v4203 = vadd.f32 0.0, %v4202
    %v4204 = vpop.f32.mrb[0].mxu0
    %4205 = vmatprep.mubr.bf16.mxu0 0
    %4206 = vmatmul.mubr.bf16.gmra.mrb[0].mxu0 %v4157
    %v4207 = vpop.f32.mrb[0].mxu0
    %v4208 = vadd.f32 0.0, %v4207
    %v4209 = vpop.f32.mrb[0].mxu0
    %v4210 = vpop.f32.mrb[0].mxu0
    %v4211 = vadd.f32 0.0, %v4210
    %v4212 = vpop.f32.mrb[0].mxu0
    %4213 = vdwg.mxu0
    %v4215 = vsel %vm471, %v3689, 0
    %v4218 = vsel %vm471, %v3690, 0
    %v4221 = vsel %vm471, %v3737, 0
    %v4224 = vsel %vm471, %v3738, 0
    %4226 = vmatprep.subr.bf16.mxu0 0
    %4227 = vmatpush1.bf16.xpose.msra.mxu0 %v4221
    %4228 = vmatprep.subr.bf16.mxu0 0
    %4229 = vmatpush1.bf16.xpose.msra.mxu0 %v4224
    %4230 = vmatprep.subr.bf16.mxu0 0
    %4231 = vmatpush1.bf16.xpose.msra.mxu0 0
    %4232 = vmatprep.subr.bf16.mxu0 0
    %4233 = vmatpush1.bf16.xpose.msra.mxu0 0
    %4234 = vmatprep.subr.bf16.mxu0 0
    %4235 = vmatpush1.bf16.xpose.msra.mxu0 0
    %4236 = vmatprep.subr.bf16.mxu0 0
    %4237 = vmatpush1.bf16.xpose.msra.mxu0 0
    %4238 = vmatprep.subr.bf16.mxu0 0
    %4239 = vmatpush1.bf16.xpose.msra.mxu0 0
    %4240 = vmatprep.subr.bf16.mxu0 0
    %4241 = vmatpush1.bf16.xpose.msra.mxu0 0
    %4242 = vmatprep.subr.bf16.mxu0 0
    %4243 = vmatpush1.bf16.xpose.msra.mxu0 0
    %4244 = vmatprep.subr.bf16.mxu0 0
    %4245 = vmatpush1.bf16.xpose.msra.mxu0 0
    %4246 = vmatprep.subr.bf16.mxu0 0
    %4247 = vmatpush1.bf16.xpose.msra.mxu0 0
    %4248 = vmatprep.subr.bf16.mxu0 0
    %4249 = vmatpush1.bf16.xpose.msra.mxu0 0
    %4250 = vmatprep.subr.bf16.mxu0 0
    %4251 = vmatpush1.bf16.xpose.msra.mxu0 0
    %4252 = vmatprep.subr.bf16.mxu0 0
    %4253 = vmatpush1.bf16.xpose.msra.mxu0 0
    %4254 = vmatprep.subr.bf16.mxu0 0
    %4255 = vmatpush1.bf16.xpose.msra.mxu0 0
    %4256 = vmatprep.subr.bf16.mxu0 0
    %4257 = vmatpush1.bf16.xpose.msra.mxu0 0
    %4258 = vmatprep.mubr.bf16.mxu0 0
    %4259 = vmatmul.mubr.bf16.gmra.mrb[0].mxu0 %v4215
    %v4260 = vpop.f32.mrb[0].mxu0
    %v4261 = vadd.f32 0.0, %v4260
    %v4262 = vpop.f32.mrb[0].mxu0
    %v4263 = vpop.f32.mrb[0].mxu0
    %v4264 = vadd.f32 0.0, %v4263
    %v4265 = vpop.f32.mrb[0].mxu0
    %4266 = vmatprep.mubr.bf16.mxu0 0
    %4267 = vmatmul.mubr.bf16.gmra.mrb[0].mxu0 %v4218
    %v4268 = vpop.f32.mrb[0].mxu0
    %v4269 = vadd.f32 0.0, %v4268
    %v4270 = vpop.f32.mrb[0].mxu0
    %v4271 = vpop.f32.mrb[0].mxu0
    %v4272 = vadd.f32 0.0, %v4271
    %v4273 = vpop.f32.mrb[0].mxu0
    %4274 = vdwg.mxu0
    %v4275 = vmul.f32 %v3834, 0.125
    %v4276 = vmul.f32 %v3837, 0.125
    %v4277 = vmul.f32 %v3842, 0.125
    %v4278 = vmul.f32 %v3845, 0.125
    %v4279 = vmul.f32 %v3895, 0.125
    %v4280 = vmul.f32 %v3898, 0.125
    %v4281 = vmul.f32 %v3903, 0.125
    %v4282 = vmul.f32 %v3906, 0.125
    %v4283 = vmul.f32 %v3956, 0.125
    %v4284 = vmul.f32 %v3959, 0.125
    %v4285 = vmul.f32 %v3964, 0.125
    %v4286 = vmul.f32 %v3967, 0.125
    %v4287 = vmul.f32 %v4017, 0.125
    %v4288 = vmul.f32 %v4020, 0.125
    %v4289 = vmul.f32 %v4025, 0.125
    %v4290 = vmul.f32 %v4028, 0.125
    %v4291 = vmul.f32 %v4078, 0.125
    %v4292 = vmul.f32 %v4081, 0.125
    %v4293 = vmul.f32 %v4086, 0.125
    %v4294 = vmul.f32 %v4089, 0.125
    %v4295 = vmul.f32 %v4139, 0.125
    %v4296 = vmul.f32 %v4142, 0.125
    %v4297 = vmul.f32 %v4147, 0.125
    %v4298 = vmul.f32 %v4150, 0.125
    %v4299 = vmul.f32 %v4200, 0.125
    %v4300 = vmul.f32 %v4203, 0.125
    %v4301 = vmul.f32 %v4208, 0.125
    %v4302 = vmul.f32 %v4211, 0.125
    %v4303 = vmul.f32 %v4261, 0.125
    %v4304 = vmul.f32 %v4264, 0.125
    %v4305 = vmul.f32 %v4269, 0.125
    %v4306 = vmul.f32 %v4272, 0.125
    %v4307 = vadd.f32 %v4275, %v201
    %v4308 = vadd.f32 %v4276, %v202
    %v4309 = vadd.f32 %v4277, %v203
    %v4310 = vadd.f32 %v4278, %v204
    %v4311 = vadd.f32 %v4279, %v201
    %v4312 = vadd.f32 %v4280, %v202
    %v4313 = vadd.f32 %v4281, %v203
    %v4314 = vadd.f32 %v4282, %v204
    %v4315 = vadd.f32 %v4283, %v201
    %v4316 = vadd.f32 %v4284, %v202
    %v4317 = vadd.f32 %v4285, %v203
    %v4318 = vadd.f32 %v4286, %v204
    %v4319 = vadd.f32 %v4287, %v201
    %v4320 = vadd.f32 %v4288, %v202
    %v4321 = vadd.f32 %v4289, %v203
    %v4322 = vadd.f32 %v4290, %v204
    %v4323 = vadd.f32 %v4291, %v201
    %v4324 = vadd.f32 %v4292, %v202
    %v4325 = vadd.f32 %v4293, %v203
    %v4326 = vadd.f32 %v4294, %v204
    %v4327 = vadd.f32 %v4295, %v201
    %v4328 = vadd.f32 %v4296, %v202
    %v4329 = vadd.f32 %v4297, %v203
    %v4330 = vadd.f32 %v4298, %v204
    %v4331 = vadd.f32 %v4299, %v201
    %v4332 = vadd.f32 %v4300, %v202
    %v4333 = vadd.f32 %v4301, %v203
    %v4334 = vadd.f32 %v4302, %v204
    %v4335 = vadd.f32 %v4303, %v201
    %v4336 = vadd.f32 %v4304, %v202
    %v4337 = vadd.f32 %v4305, %v203
    %v4338 = vadd.f32 %v4306, %v204
    %v4339 = vsel %vm1549, %v4307, -inf
    %4340 = vmax.xlane.f32.xlu0 %v4339
    %v4341 = vpop.xlane.xlu0 %4340
    %v4342 = vsel %vm1549, %v4308, -inf
    %4343 = vmax.xlane.f32.xlu0 %v4342
    %v4344 = vpop.xlane.xlu0 %4343
    %v4345 = vsel %vm1549, %v4309, -inf
    %4346 = vmax.xlane.f32.xlu0 %v4345
    %v4347 = vpop.xlane.xlu0 %4346
    %v4348 = vsel %vm1549, %v4310, -inf
    %4349 = vmax.xlane.f32.xlu0 %v4348
    %v4350 = vpop.xlane.xlu0 %4349
    %v4351 = vsel %vm1549, %v4311, -inf
    %4352 = vmax.xlane.f32.xlu0 %v4351
    %v4353 = vpop.xlane.xlu0 %4352
    %v4354 = vsel %vm1549, %v4312, -inf
    %4355 = vmax.xlane.f32.xlu0 %v4354
    %v4356 = vpop.xlane.xlu0 %4355
    %v4357 = vsel %vm1549, %v4313, -inf
    %4358 = vmax.xlane.f32.xlu0 %v4357
    %v4359 = vpop.xlane.xlu0 %4358
    %v4360 = vsel %vm1549, %v4314, -inf
    %4361 = vmax.xlane.f32.xlu0 %v4360
    %v4362 = vpop.xlane.xlu0 %4361
    %v4363 = vsel %vm1549, %v4315, -inf
    %4364 = vmax.xlane.f32.xlu0 %v4363
    %v4365 = vpop.xlane.xlu0 %4364
    %v4366 = vsel %vm1549, %v4316, -inf
    %4367 = vmax.xlane.f32.xlu0 %v4366
    %v4368 = vpop.xlane.xlu0 %4367
    %v4369 = vsel %vm1549, %v4317, -inf
    %4370 = vmax.xlane.f32.xlu0 %v4369
    %v4371 = vpop.xlane.xlu0 %4370
    %v4372 = vsel %vm1549, %v4318, -inf
    %4373 = vmax.xlane.f32.xlu0 %v4372
    %v4374 = vpop.xlane.xlu0 %4373
    %v4375 = vsel %vm1549, %v4319, -inf
    %4376 = vmax.xlane.f32.xlu0 %v4375
    %v4377 = vpop.xlane.xlu0 %4376
    %v4378 = vsel %vm1549, %v4320, -inf
    %4379 = vmax.xlane.f32.xlu0 %v4378
    %v4380 = vpop.xlane.xlu0 %4379
    %v4381 = vsel %vm1549, %v4321, -inf
    %4382 = vmax.xlane.f32.xlu0 %v4381
    %v4383 = vpop.xlane.xlu0 %4382
    %v4384 = vsel %vm1549, %v4322, -inf
    %4385 = vmax.xlane.f32.xlu0 %v4384
    %v4386 = vpop.xlane.xlu0 %4385
    %v4387 = vsel %vm1549, %v4323, -inf
    %4388 = vmax.xlane.f32.xlu0 %v4387
    %v4389 = vpop.xlane.xlu0 %4388
    %v4390 = vsel %vm1549, %v4324, -inf
    %4391 = vmax.xlane.f32.xlu0 %v4390
    %v4392 = vpop.xlane.xlu0 %4391
    %v4393 = vsel %vm1549, %v4325, -inf
    %4394 = vmax.xlane.f32.xlu0 %v4393
    %v4395 = vpop.xlane.xlu0 %4394
    %v4396 = vsel %vm1549, %v4326, -inf
    %4397 = vmax.xlane.f32.xlu0 %v4396
    %v4398 = vpop.xlane.xlu0 %4397
    %v4399 = vsel %vm1549, %v4327, -inf
    %4400 = vmax.xlane.f32.xlu0 %v4399
    %v4401 = vpop.xlane.xlu0 %4400
    %v4402 = vsel %vm1549, %v4328, -inf
    %4403 = vmax.xlane.f32.xlu0 %v4402
    %v4404 = vpop.xlane.xlu0 %4403
    %v4405 = vsel %vm1549, %v4329, -inf
    %4406 = vmax.xlane.f32.xlu0 %v4405
    %v4407 = vpop.xlane.xlu0 %4406
    %v4408 = vsel %vm1549, %v4330, -inf
    %4409 = vmax.xlane.f32.xlu0 %v4408
    %v4410 = vpop.xlane.xlu0 %4409
    %v4411 = vsel %vm1549, %v4331, -inf
    %4412 = vmax.xlane.f32.xlu0 %v4411
    %v4413 = vpop.xlane.xlu0 %4412
    %v4414 = vsel %vm1549, %v4332, -inf
    %4415 = vmax.xlane.f32.xlu0 %v4414
    %v4416 = vpop.xlane.xlu0 %4415
    %v4417 = vsel %vm1549, %v4333, -inf
    %4418 = vmax.xlane.f32.xlu0 %v4417
    %v4419 = vpop.xlane.xlu0 %4418
    %v4420 = vsel %vm1549, %v4334, -inf
    %4421 = vmax.xlane.f32.xlu0 %v4420
    %v4422 = vpop.xlane.xlu0 %4421
    %v4423 = vsel %vm1549, %v4335, -inf
    %4424 = vmax.xlane.f32.xlu0 %v4423
    %v4425 = vpop.xlane.xlu0 %4424
    %v4426 = vsel %vm1549, %v4336, -inf
    %4427 = vmax.xlane.f32.xlu0 %v4426
    %v4428 = vpop.xlane.xlu0 %4427
    %v4429 = vsel %vm1549, %v4337, -inf
    %4430 = vmax.xlane.f32.xlu0 %v4429
    %v4431 = vpop.xlane.xlu0 %4430
    %v4432 = vsel %vm1549, %v4338, -inf
    %4433 = vmax.xlane.f32.xlu0 %v4432
    %v4434 = vpop.xlane.xlu0 %4433
    %v4435 = vsub.f32 %v4307, %v4341
    %v4436 = vsub.f32 %v4308, %v4344
    %v4437 = vsub.f32 %v4309, %v4347
    %v4438 = vsub.f32 %v4310, %v4350
    %v4439 = vsub.f32 %v4311, %v4353
    %v4440 = vsub.f32 %v4312, %v4356
    %v4441 = vsub.f32 %v4313, %v4359
    %v4442 = vsub.f32 %v4314, %v4362
    %v4443 = vsub.f32 %v4315, %v4365
    %v4444 = vsub.f32 %v4316, %v4368
    %v4445 = vsub.f32 %v4317, %v4371
    %v4446 = vsub.f32 %v4318, %v4374
    %v4447 = vsub.f32 %v4319, %v4377
    %v4448 = vsub.f32 %v4320, %v4380
    %v4449 = vsub.f32 %v4321, %v4383
    %v4450 = vsub.f32 %v4322, %v4386
    %v4451 = vsub.f32 %v4323, %v4389
    %v4452 = vsub.f32 %v4324, %v4392
    %v4453 = vsub.f32 %v4325, %v4395
    %v4454 = vsub.f32 %v4326, %v4398
    %v4455 = vsub.f32 %v4327, %v4401
    %v4456 = vsub.f32 %v4328, %v4404
    %v4457 = vsub.f32 %v4329, %v4407
    %v4458 = vsub.f32 %v4330, %v4410
    %v4459 = vsub.f32 %v4331, %v4413
    %v4460 = vsub.f32 %v4332, %v4416
    %v4461 = vsub.f32 %v4333, %v4419
    %v4462 = vsub.f32 %v4334, %v4422
    %v4463 = vsub.f32 %v4335, %v4425
    %v4464 = vsub.f32 %v4336, %v4428
    %v4465 = vsub.f32 %v4337, %v4431
    %v4466 = vsub.f32 %v4338, %v4434
    %v4467 = vmul.f32 %v4435, 1.442695
    %v4468 = vpow.pop %v4467
    %v4469 = vmul.f32 %v4436, 1.442695
    %v4470 = vpow.pop %v4469
    %v4471 = vmul.f32 %v4437, 1.442695
    %v4472 = vpow.pop %v4471
    %v4473 = vmul.f32 %v4438, 1.442695
    %v4474 = vpow.pop %v4473
    %v4475 = vmul.f32 %v4439, 1.442695
    %v4476 = vpow.pop %v4475
    %v4477 = vmul.f32 %v4440, 1.442695
    %v4478 = vpow.pop %v4477
    %v4479 = vmul.f32 %v4441, 1.442695
    %v4480 = vpow.pop %v4479
    %v4481 = vmul.f32 %v4442, 1.442695
    %v4482 = vpow.pop %v4481
    %v4483 = vmul.f32 %v4443, 1.442695
    %v4484 = vpow.pop %v4483
    %v4485 = vmul.f32 %v4444, 1.442695
    %v4486 = vpow.pop %v4485
    %v4487 = vmul.f32 %v4445, 1.442695
    %v4488 = vpow.pop %v4487
    %v4489 = vmul.f32 %v4446, 1.442695
    %v4490 = vpow.pop %v4489
    %v4491 = vmul.f32 %v4447, 1.442695
    %v4492 = vpow.pop %v4491
    %v4493 = vmul.f32 %v4448, 1.442695
    %v4494 = vpow.pop %v4493
    %v4495 = vmul.f32 %v4449, 1.442695
    %v4496 = vpow.pop %v4495
    %v4497 = vmul.f32 %v4450, 1.442695
    %v4498 = vpow.pop %v4497
    %v4499 = vmul.f32 %v4451, 1.442695
    %v4500 = vpow.pop %v4499
    %v4501 = vmul.f32 %v4452, 1.442695
    %v4502 = vpow.pop %v4501
    %v4503 = vmul.f32 %v4453, 1.442695
    %v4504 = vpow.pop %v4503
    %v4505 = vmul.f32 %v4454, 1.442695
    %v4506 = vpow.pop %v4505
    %v4507 = vmul.f32 %v4455, 1.442695
    %v4508 = vpow.pop %v4507
    %v4509 = vmul.f32 %v4456, 1.442695
    %v4510 = vpow.pop %v4509
    %v4511 = vmul.f32 %v4457, 1.442695
    %v4512 = vpow.pop %v4511
    %v4513 = vmul.f32 %v4458, 1.442695
    %v4514 = vpow.pop %v4513
    %v4515 = vmul.f32 %v4459, 1.442695
    %v4516 = vpow.pop %v4515
    %v4517 = vmul.f32 %v4460, 1.442695
    %v4518 = vpow.pop %v4517
    %v4519 = vmul.f32 %v4461, 1.442695
    %v4520 = vpow.pop %v4519
    %v4521 = vmul.f32 %v4462, 1.442695
    %v4522 = vpow.pop %v4521
    %v4523 = vmul.f32 %v4463, 1.442695
    %v4524 = vpow.pop %v4523
    %v4525 = vmul.f32 %v4464, 1.442695
    %v4526 = vpow.pop %v4525
    %v4527 = vmul.f32 %v4465, 1.442695
    %v4528 = vpow.pop %v4527
    %v4529 = vmul.f32 %v4466, 1.442695
    %v4530 = vpow.pop %v4529
    %v4531 = vsel %vm1549, %v4468, 0.0
    %4532 = vadd.xlane.f32.xlu0 %v4531
    %v4533 = vpop.xlane.xlu0 %4532
    %v4534 = vsel %vm1549, %v4470, 0.0
    %4535 = vadd.xlane.f32.xlu0 %v4534
    %v4536 = vpop.xlane.xlu0 %4535
    %v4537 = vsel %vm1549, %v4472, 0.0
    %4538 = vadd.xlane.f32.xlu0 %v4537
    %v4539 = vpop.xlane.xlu0 %4538
    %v4540 = vsel %vm1549, %v4474, 0.0
    %4541 = vadd.xlane.f32.xlu0 %v4540
    %v4542 = vpop.xlane.xlu0 %4541
    %v4543 = vsel %vm1549, %v4476, 0.0
    %4544 = vadd.xlane.f32.xlu0 %v4543
    %v4545 = vpop.xlane.xlu0 %4544
    %v4546 = vsel %vm1549, %v4478, 0.0
    %4547 = vadd.xlane.f32.xlu0 %v4546
    %v4548 = vpop.xlane.xlu0 %4547
    %v4549 = vsel %vm1549, %v4480, 0.0
    %4550 = vadd.xlane.f32.xlu0 %v4549
    %v4551 = vpop.xlane.xlu0 %4550
    %v4552 = vsel %vm1549, %v4482, 0.0
    %4553 = vadd.xlane.f32.xlu0 %v4552
    %v4554 = vpop.xlane.xlu0 %4553
    %v4555 = vsel %vm1549, %v4484, 0.0
    %4556 = vadd.xlane.f32.xlu0 %v4555
    %v4557 = vpop.xlane.xlu0 %4556
    %v4558 = vsel %vm1549, %v4486, 0.0
    %4559 = vadd.xlane.f32.xlu0 %v4558
    %v4560 = vpop.xlane.xlu0 %4559
    %v4561 = vsel %vm1549, %v4488, 0.0
    %4562 = vadd.xlane.f32.xlu0 %v4561
    %v4563 = vpop.xlane.xlu0 %4562
    %v4564 = vsel %vm1549, %v4490, 0.0
    %4565 = vadd.xlane.f32.xlu0 %v4564
    %v4566 = vpop.xlane.xlu0 %4565
    %v4567 = vsel %vm1549, %v4492, 0.0
    %4568 = vadd.xlane.f32.xlu0 %v4567
    %v4569 = vpop.xlane.xlu0 %4568
    %v4570 = vsel %vm1549, %v4494, 0.0
    %4571 = vadd.xlane.f32.xlu0 %v4570
    %v4572 = vpop.xlane.xlu0 %4571
    %v4573 = vsel %vm1549, %v4496, 0.0
    %4574 = vadd.xlane.f32.xlu0 %v4573
    %v4575 = vpop.xlane.xlu0 %4574
    %v4576 = vsel %vm1549, %v4498, 0.0
    %4577 = vadd.xlane.f32.xlu0 %v4576
    %v4578 = vpop.xlane.xlu0 %4577
    %v4579 = vsel %vm1549, %v4500, 0.0
    %4580 = vadd.xlane.f32.xlu0 %v4579
    %v4581 = vpop.xlane.xlu0 %4580
    %v4582 = vsel %vm1549, %v4502, 0.0
    %4583 = vadd.xlane.f32.xlu0 %v4582
    %v4584 = vpop.xlane.xlu0 %4583
    %v4585 = vsel %vm1549, %v4504, 0.0
    %4586 = vadd.xlane.f32.xlu0 %v4585
    %v4587 = vpop.xlane.xlu0 %4586
    %v4588 = vsel %vm1549, %v4506, 0.0
    %4589 = vadd.xlane.f32.xlu0 %v4588
    %v4590 = vpop.xlane.xlu0 %4589
    %v4591 = vsel %vm1549, %v4508, 0.0
    %4592 = vadd.xlane.f32.xlu0 %v4591
    %v4593 = vpop.xlane.xlu0 %4592
    %v4594 = vsel %vm1549, %v4510, 0.0
    %4595 = vadd.xlane.f32.xlu0 %v4594
    %v4596 = vpop.xlane.xlu0 %4595
    %v4597 = vsel %vm1549, %v4512, 0.0
    %4598 = vadd.xlane.f32.xlu0 %v4597
    %v4599 = vpop.xlane.xlu0 %4598
    %v4600 = vsel %vm1549, %v4514, 0.0
    %4601 = vadd.xlane.f32.xlu0 %v4600
    %v4602 = vpop.xlane.xlu0 %4601
    %v4603 = vsel %vm1549, %v4516, 0.0
    %4604 = vadd.xlane.f32.xlu0 %v4603
    %v4605 = vpop.xlane.xlu0 %4604
    %v4606 = vsel %vm1549, %v4518, 0.0
    %4607 = vadd.xlane.f32.xlu0 %v4606
    %v4608 = vpop.xlane.xlu0 %4607
    %v4609 = vsel %vm1549, %v4520, 0.0
    %4610 = vadd.xlane.f32.xlu0 %v4609
    %v4611 = vpop.xlane.xlu0 %4610
    %v4612 = vsel %vm1549, %v4522, 0.0
    %4613 = vadd.xlane.f32.xlu0 %v4612
    %v4614 = vpop.xlane.xlu0 %4613
    %v4615 = vsel %vm1549, %v4524, 0.0
    %4616 = vadd.xlane.f32.xlu0 %v4615
    %v4617 = vpop.xlane.xlu0 %4616
    %v4618 = vsel %vm1549, %v4526, 0.0
    %4619 = vadd.xlane.f32.xlu0 %v4618
    %v4620 = vpop.xlane.xlu0 %4619
    %v4621 = vsel %vm1549, %v4528, 0.0
    %4622 = vadd.xlane.f32.xlu0 %v4621
    %v4623 = vpop.xlane.xlu0 %4622
    %v4624 = vsel %vm1549, %v4530, 0.0
    %4625 = vadd.xlane.f32.xlu0 %v4624
    %v4626 = vpop.xlane.xlu0 %4625
    %v4627 = vrcp.pop %v4533
    %v4628 = vrcp.pop %v4536
    %v4629 = vrcp.pop %v4539
    %v4630 = vrcp.pop %v4542
    %v4631 = vrcp.pop %v4545
    %v4632 = vrcp.pop %v4548
    %v4633 = vrcp.pop %v4551
    %v4634 = vrcp.pop %v4554
    %v4635 = vrcp.pop %v4557
    %v4636 = vrcp.pop %v4560
    %v4637 = vrcp.pop %v4563
    %v4638 = vrcp.pop %v4566
    %v4639 = vrcp.pop %v4569
    %v4640 = vrcp.pop %v4572
    %v4641 = vrcp.pop %v4575
    %v4642 = vrcp.pop %v4578
    %v4643 = vrcp.pop %v4581
    %v4644 = vrcp.pop %v4584
    %v4645 = vrcp.pop %v4587
    %v4646 = vrcp.pop %v4590
    %v4647 = vrcp.pop %v4593
    %v4648 = vrcp.pop %v4596
    %v4649 = vrcp.pop %v4599
    %v4650 = vrcp.pop %v4602
    %v4651 = vrcp.pop %v4605
    %v4652 = vrcp.pop %v4608
    %v4653 = vrcp.pop %v4611
    %v4654 = vrcp.pop %v4614
    %v4655 = vrcp.pop %v4617
    %v4656 = vrcp.pop %v4620
    %v4657 = vrcp.pop %v4623
    %v4658 = vrcp.pop %v4626
    %v4659 = vmul.f32 %v4468, %v4627
    %v4660 = vmul.f32 %v4470, %v4628
    %v4661 = vmul.f32 %v4472, %v4629
    %v4662 = vmul.f32 %v4474, %v4630
    %v4663 = vmul.f32 %v4476, %v4631
    %v4664 = vmul.f32 %v4478, %v4632
    %v4665 = vmul.f32 %v4480, %v4633
    %v4666 = vmul.f32 %v4482, %v4634
    %v4667 = vmul.f32 %v4484, %v4635
    %v4668 = vmul.f32 %v4486, %v4636
    %v4669 = vmul.f32 %v4488, %v4637
    %v4670 = vmul.f32 %v4490, %v4638
    %v4671 = vmul.f32 %v4492, %v4639
    %v4672 = vmul.f32 %v4494, %v4640
    %v4673 = vmul.f32 %v4496, %v4641
    %v4674 = vmul.f32 %v4498, %v4642
    %v4675 = vmul.f32 %v4500, %v4643
    %v4676 = vmul.f32 %v4502, %v4644
    %v4677 = vmul.f32 %v4504, %v4645
    %v4678 = vmul.f32 %v4506, %v4646
    %v4679 = vmul.f32 %v4508, %v4647
    %v4680 = vmul.f32 %v4510, %v4648
    %v4681 = vmul.f32 %v4512, %v4649
    %v4682 = vmul.f32 %v4514, %v4650
    %v4683 = vmul.f32 %v4516, %v4651
    %v4684 = vmul.f32 %v4518, %v4652
    %v4685 = vmul.f32 %v4520, %v4653
    %v4686 = vmul.f32 %v4522, %v4654
    %v4687 = vmul.f32 %v4524, %v4655
    %v4688 = vmul.f32 %v4526, %v4656
    %v4689 = vmul.f32 %v4528, %v4657
    %v4690 = vmul.f32 %v4530, %v4658
    %v4691 = vpack.c.bf16 %v4660, %v4659
    %v4692 = vpack.c.bf16 %v4662, %v4661
    %v4693 = vpack.c.bf16 %v4664, %v4663
    %v4694 = vpack.c.bf16 %v4666, %v4665
    %v4695 = vpack.c.bf16 %v4668, %v4667
    %v4696 = vpack.c.bf16 %v4670, %v4669
    %v4697 = vpack.c.bf16 %v4672, %v4671
    %v4698 = vpack.c.bf16 %v4674, %v4673
    %v4699 = vpack.c.bf16 %v4676, %v4675
    %v4700 = vpack.c.bf16 %v4678, %v4677
    %v4701 = vpack.c.bf16 %v4680, %v4679
    %v4702 = vpack.c.bf16 %v4682, %v4681
    %v4703 = vpack.c.bf16 %v4684, %v4683
    %v4704 = vpack.c.bf16 %v4686, %v4685
    %v4705 = vpack.c.bf16 %v4688, %v4687
    %v4706 = vpack.c.bf16 %v4690, %v4689
    %v4708 = vsel %vm1549, %v4691, 0
    %v4711 = vsel %vm1549, %v4692, 0
    %4713 = vmatprep.subr.bf16.mxu0 0
    %4714 = vmatpush1.bf16.msra.mxu0 %v3771
    %4715 = vmatprep.subr.bf16.mxu0 0
    %4716 = vmatpush1.bf16.msra.mxu0 %v3772
    %4717 = vmatprep.subr.bf16.mxu0 0
    %4718 = vmatpush1.bf16.msra.mxu0 0
    %4719 = vmatprep.subr.bf16.mxu0 0
    %4720 = vmatpush1.bf16.msra.mxu0 0
    %4721 = vmatprep.subr.bf16.mxu0 0
    %4722 = vmatpush1.bf16.msra.mxu0 0
    %4723 = vmatprep.subr.bf16.mxu0 0
    %4724 = vmatpush1.bf16.msra.mxu0 0
    %4725 = vmatprep.subr.bf16.mxu0 0
    %4726 = vmatpush1.bf16.msra.mxu0 0
    %4727 = vmatprep.subr.bf16.mxu0 0
    %4728 = vmatpush1.bf16.msra.mxu0 0
    %4729 = vmatprep.subr.bf16.mxu0 0
    %4730 = vmatpush1.bf16.msra.mxu0 0
    %4731 = vmatprep.subr.bf16.mxu0 0
    %4732 = vmatpush1.bf16.msra.mxu0 0
    %4733 = vmatprep.subr.bf16.mxu0 0
    %4734 = vmatpush1.bf16.msra.mxu0 0
    %4735 = vmatprep.subr.bf16.mxu0 0
    %4736 = vmatpush1.bf16.msra.mxu0 0
    %4737 = vmatprep.subr.bf16.mxu0 0
    %4738 = vmatpush1.bf16.msra.mxu0 0
    %4739 = vmatprep.subr.bf16.mxu0 0
    %4740 = vmatpush1.bf16.msra.mxu0 0
    %4741 = vmatprep.subr.bf16.mxu0 0
    %4742 = vmatpush1.bf16.msra.mxu0 0
    %4743 = vmatprep.subr.bf16.mxu0 0
    %4744 = vmatpush1.bf16.msra.mxu0 0
    %4745 = vmatprep.mubr.bf16.mxu0 0
    %4746 = vmatmul.mubr.bf16.gmra.mrb[0].mxu0 %v4708
    %v4747 = vpop.f32.mrb[0].mxu0
    %v4748 = vadd.f32 0.0, %v4747
    %v4749 = vpop.f32.mrb[0].mxu0
    %v4750 = vpop.f32.mrb[0].mxu0
    %v4751 = vadd.f32 0.0, %v4750
    %v4752 = vpop.f32.mrb[0].mxu0
    %4753 = vmatprep.mubr.bf16.mxu0 0
    %4754 = vmatmul.mubr.bf16.gmra.mrb[0].mxu0 %v4711
    %v4755 = vpop.f32.mrb[0].mxu0
    %v4756 = vadd.f32 0.0, %v4755
    %v4757 = vpop.f32.mrb[0].mxu0
    %v4758 = vpop.f32.mrb[0].mxu0
    %v4759 = vadd.f32 0.0, %v4758
    %v4760 = vpop.f32.mrb[0].mxu0
    %4761 = vdwg.mxu0
    %v4763 = vsel %vm1549, %v4693, 0
    %v4766 = vsel %vm1549, %v4694, 0
    %4768 = vmatprep.subr.bf16.mxu0 0
    %4769 = vmatpush1.bf16.msra.mxu0 %v3773
    %4770 = vmatprep.subr.bf16.mxu0 0
    %4771 = vmatpush1.bf16.msra.mxu0 %v3774
    %4772 = vmatprep.subr.bf16.mxu0 0
    %4773 = vmatpush1.bf16.msra.mxu0 0
    %4774 = vmatprep.subr.bf16.mxu0 0
    %4775 = vmatpush1.bf16.msra.mxu0 0
    %4776 = vmatprep.subr.bf16.mxu0 0
    %4777 = vmatpush1.bf16.msra.mxu0 0
    %4778 = vmatprep.subr.bf16.mxu0 0
    %4779 = vmatpush1.bf16.msra.mxu0 0
    %4780 = vmatprep.subr.bf16.mxu0 0
    %4781 = vmatpush1.bf16.msra.mxu0 0
    %4782 = vmatprep.subr.bf16.mxu0 0
    %4783 = vmatpush1.bf16.msra.mxu0 0
    %4784 = vmatprep.subr.bf16.mxu0 0
    %4785 = vmatpush1.bf16.msra.mxu0 0
    %4786 = vmatprep.subr.bf16.mxu0 0
    %4787 = vmatpush1.bf16.msra.mxu0 0
    %4788 = vmatprep.subr.bf16.mxu0 0
    %4789 = vmatpush1.bf16.msra.mxu0 0
    %4790 = vmatprep.subr.bf16.mxu0 0
    %4791 = vmatpush1.bf16.msra.mxu0 0
    %4792 = vmatprep.subr.bf16.mxu0 0
    %4793 = vmatpush1.bf16.msra.mxu0 0
    %4794 = vmatprep.subr.bf16.mxu0 0
    %4795 = vmatpush1.bf16.msra.mxu0 0
    %4796 = vmatprep.subr.bf16.mxu0 0
    %4797 = vmatpush1.bf16.msra.mxu0 0
    %4798 = vmatprep.subr.bf16.mxu0 0
    %4799 = vmatpush1.bf16.msra.mxu0 0
    %4800 = vmatprep.mubr.bf16.mxu0 0
    %4801 = vmatmul.mubr.bf16.gmra.mrb[0].mxu0 %v4763
    %v4802 = vpop.f32.mrb[0].mxu0
    %v4803 = vadd.f32 0.0, %v4802
    %v4804 = vpop.f32.mrb[0].mxu0
    %v4805 = vpop.f32.mrb[0].mxu0
    %v4806 = vadd.f32 0.0, %v4805
    %v4807 = vpop.f32.mrb[0].mxu0
    %4808 = vmatprep.mubr.bf16.mxu0 0
    %4809 = vmatmul.mubr.bf16.gmra.mrb[0].mxu0 %v4766
    %v4810 = vpop.f32.mrb[0].mxu0
    %v4811 = vadd.f32 0.0, %v4810
    %v4812 = vpop.f32.mrb[0].mxu0
    %v4813 = vpop.f32.mrb[0].mxu0
    %v4814 = vadd.f32 0.0, %v4813
    %v4815 = vpop.f32.mrb[0].mxu0
    %4816 = vdwg.mxu0
    %v4818 = vsel %vm1549, %v4695, 0
    %v4821 = vsel %vm1549, %v4696, 0
    %4823 = vmatprep.subr.bf16.mxu0 0
    %4824 = vmatpush1.bf16.msra.mxu0 %v3775
    %4825 = vmatprep.subr.bf16.mxu0 0
    %4826 = vmatpush1.bf16.msra.mxu0 %v3776
    %4827 = vmatprep.subr.bf16.mxu0 0
    %4828 = vmatpush1.bf16.msra.mxu0 0
    %4829 = vmatprep.subr.bf16.mxu0 0
    %4830 = vmatpush1.bf16.msra.mxu0 0
    %4831 = vmatprep.subr.bf16.mxu0 0
    %4832 = vmatpush1.bf16.msra.mxu0 0
    %4833 = vmatprep.subr.bf16.mxu0 0
    %4834 = vmatpush1.bf16.msra.mxu0 0
    %4835 = vmatprep.subr.bf16.mxu0 0
    %4836 = vmatpush1.bf16.msra.mxu0 0
    %4837 = vmatprep.subr.bf16.mxu0 0
    %4838 = vmatpush1.bf16.msra.mxu0 0
    %4839 = vmatprep.subr.bf16.mxu0 0
    %4840 = vmatpush1.bf16.msra.mxu0 0
    %4841 = vmatprep.subr.bf16.mxu0 0
    %4842 = vmatpush1.bf16.msra.mxu0 0
    %4843 = vmatprep.subr.bf16.mxu0 0
    %4844 = vmatpush1.bf16.msra.mxu0 0
    %4845 = vmatprep.subr.bf16.mxu0 0
    %4846 = vmatpush1.bf16.msra.mxu0 0
    %4847 = vmatprep.subr.bf16.mxu0 0
    %4848 = vmatpush1.bf16.msra.mxu0 0
    %4849 = vmatprep.subr.bf16.mxu0 0
    %4850 = vmatpush1.bf16.msra.mxu0 0
    %4851 = vmatprep.subr.bf16.mxu0 0
    %4852 = vmatpush1.bf16.msra.mxu0 0
    %4853 = vmatprep.subr.bf16.mxu0 0
    %4854 = vmatpush1.bf16.msra.mxu0 0
    %4855 = vmatprep.mubr.bf16.mxu0 0
    %4856 = vmatmul.mubr.bf16.gmra.mrb[0].mxu0 %v4818
    %v4857 = vpop.f32.mrb[0].mxu0
    %v4858 = vadd.f32 0.0, %v4857
    %v4859 = vpop.f32.mrb[0].mxu0
    %v4860 = vpop.f32.mrb[0].mxu0
    %v4861 = vadd.f32 0.0, %v4860
    %v4862 = vpop.f32.mrb[0].mxu0
    %4863 = vmatprep.mubr.bf16.mxu0 0
    %4864 = vmatmul.mubr.bf16.gmra.mrb[0].mxu0 %v4821
    %v4865 = vpop.f32.mrb[0].mxu0
    %v4866 = vadd.f32 0.0, %v4865
    %v4867 = vpop.f32.mrb[0].mxu0
    %v4868 = vpop.f32.mrb[0].mxu0
    %v4869 = vadd.f32 0.0, %v4868
    %v4870 = vpop.f32.mrb[0].mxu0
    %4871 = vdwg.mxu0
    %v4873 = vsel %vm1549, %v4697, 0
    %v4876 = vsel %vm1549, %v4698, 0
    %4878 = vmatprep.subr.bf16.mxu0 0
    %4879 = vmatpush1.bf16.msra.mxu0 %v3777
    %4880 = vmatprep.subr.bf16.mxu0 0
    %4881 = vmatpush1.bf16.msra.mxu0 %v3778
    %4882 = vmatprep.subr.bf16.mxu0 0
    %4883 = vmatpush1.bf16.msra.mxu0 0
    %4884 = vmatprep.subr.bf16.mxu0 0
    %4885 = vmatpush1.bf16.msra.mxu0 0
    %4886 = vmatprep.subr.bf16.mxu0 0
    %4887 = vmatpush1.bf16.msra.mxu0 0
    %4888 = vmatprep.subr.bf16.mxu0 0
    %4889 = vmatpush1.bf16.msra.mxu0 0
    %4890 = vmatprep.subr.bf16.mxu0 0
    %4891 = vmatpush1.bf16.msra.mxu0 0
    %4892 = vmatprep.subr.bf16.mxu0 0
    %4893 = vmatpush1.bf16.msra.mxu0 0
    %4894 = vmatprep.subr.bf16.mxu0 0
    %4895 = vmatpush1.bf16.msra.mxu0 0
    %4896 = vmatprep.subr.bf16.mxu0 0
    %4897 = vmatpush1.bf16.msra.mxu0 0
    %4898 = vmatprep.subr.bf16.mxu0 0
    %4899 = vmatpush1.bf16.msra.mxu0 0
    %4900 = vmatprep.subr.bf16.mxu0 0
    %4901 = vmatpush1.bf16.msra.mxu0 0
    %4902 = vmatprep.subr.bf16.mxu0 0
    %4903 = vmatpush1.bf16.msra.mxu0 0
    %4904 = vmatprep.subr.bf16.mxu0 0
    %4905 = vmatpush1.bf16.msra.mxu0 0
    %4906 = vmatprep.subr.bf16.mxu0 0
    %4907 = vmatpush1.bf16.msra.mxu0 0
    %4908 = vmatprep.subr.bf16.mxu0 0
    %4909 = vmatpush1.bf16.msra.mxu0 0
    %4910 = vmatprep.mubr.bf16.mxu0 0
    %4911 = vmatmul.mubr.bf16.gmra.mrb[0].mxu0 %v4873
    %v4912 = vpop.f32.mrb[0].mxu0
    %v4913 = vadd.f32 0.0, %v4912
    %v4914 = vpop.f32.mrb[0].mxu0
    %v4915 = vpop.f32.mrb[0].mxu0
    %v4916 = vadd.f32 0.0, %v4915
    %v4917 = vpop.f32.mrb[0].mxu0
    %4918 = vmatprep.mubr.bf16.mxu0 0
    %4919 = vmatmul.mubr.bf16.gmra.mrb[0].mxu0 %v4876
    %v4920 = vpop.f32.mrb[0].mxu0
    %v4921 = vadd.f32 0.0, %v4920
    %v4922 = vpop.f32.mrb[0].mxu0
    %v4923 = vpop.f32.mrb[0].mxu0
    %v4924 = vadd.f32 0.0, %v4923
    %v4925 = vpop.f32.mrb[0].mxu0
    %4926 = vdwg.mxu0
    %v4928 = vsel %vm1549, %v4699, 0
    %v4931 = vsel %vm1549, %v4700, 0
    %4933 = vmatprep.subr.bf16.mxu0 0
    %4934 = vmatpush1.bf16.msra.mxu0 %v3779
    %4935 = vmatprep.subr.bf16.mxu0 0
    %4936 = vmatpush1.bf16.msra.mxu0 %v3780
    %4937 = vmatprep.subr.bf16.mxu0 0
    %4938 = vmatpush1.bf16.msra.mxu0 0
    %4939 = vmatprep.subr.bf16.mxu0 0
    %4940 = vmatpush1.bf16.msra.mxu0 0
    %4941 = vmatprep.subr.bf16.mxu0 0
    %4942 = vmatpush1.bf16.msra.mxu0 0
    %4943 = vmatprep.subr.bf16.mxu0 0
    %4944 = vmatpush1.bf16.msra.mxu0 0
    %4945 = vmatprep.subr.bf16.mxu0 0
    %4946 = vmatpush1.bf16.msra.mxu0 0
    %4947 = vmatprep.subr.bf16.mxu0 0
    %4948 = vmatpush1.bf16.msra.mxu0 0
    %4949 = vmatprep.subr.bf16.mxu0 0
    %4950 = vmatpush1.bf16.msra.mxu0 0
    %4951 = vmatprep.subr.bf16.mxu0 0
    %4952 = vmatpush1.bf16.msra.mxu0 0
    %4953 = vmatprep.subr.bf16.mxu0 0
    %4954 = vmatpush1.bf16.msra.mxu0 0
    %4955 = vmatprep.subr.bf16.mxu0 0
    %4956 = vmatpush1.bf16.msra.mxu0 0
    %4957 = vmatprep.subr.bf16.mxu0 0
    %4958 = vmatpush1.bf16.msra.mxu0 0
    %4959 = vmatprep.subr.bf16.mxu0 0
    %4960 = vmatpush1.bf16.msra.mxu0 0
    %4961 = vmatprep.subr.bf16.mxu0 0
    %4962 = vmatpush1.bf16.msra.mxu0 0
    %4963 = vmatprep.subr.bf16.mxu0 0
    %4964 = vmatpush1.bf16.msra.mxu0 0
    %4965 = vmatprep.mubr.bf16.mxu0 0
    %4966 = vmatmul.mubr.bf16.gmra.mrb[0].mxu0 %v4928
    %v4967 = vpop.f32.mrb[0].mxu0
    %v4968 = vadd.f32 0.0, %v4967
    %v4969 = vpop.f32.mrb[0].mxu0
    %v4970 = vpop.f32.mrb[0].mxu0
    %v4971 = vadd.f32 0.0, %v4970
    %v4972 = vpop.f32.mrb[0].mxu0
    %4973 = vmatprep.mubr.bf16.mxu0 0
    %4974 = vmatmul.mubr.bf16.gmra.mrb[0].mxu0 %v4931
    %v4975 = vpop.f32.mrb[0].mxu0
    %v4976 = vadd.f32 0.0, %v4975
    %v4977 = vpop.f32.mrb[0].mxu0
    %v4978 = vpop.f32.mrb[0].mxu0
    %v4979 = vadd.f32 0.0, %v4978
    %v4980 = vpop.f32.mrb[0].mxu0
    %4981 = vdwg.mxu0
    %v4983 = vsel %vm1549, %v4701, 0
    %v4986 = vsel %vm1549, %v4702, 0
    %4988 = vmatprep.subr.bf16.mxu0 0
    %4989 = vmatpush1.bf16.msra.mxu0 %v3781
    %4990 = vmatprep.subr.bf16.mxu0 0
    %4991 = vmatpush1.bf16.msra.mxu0 %v3782
    %4992 = vmatprep.subr.bf16.mxu0 0
    %4993 = vmatpush1.bf16.msra.mxu0 0
    %4994 = vmatprep.subr.bf16.mxu0 0
    %4995 = vmatpush1.bf16.msra.mxu0 0
    %4996 = vmatprep.subr.bf16.mxu0 0
    %4997 = vmatpush1.bf16.msra.mxu0 0
    %4998 = vmatprep.subr.bf16.mxu0 0
    %4999 = vmatpush1.bf16.msra.mxu0 0
    %5000 = vmatprep.subr.bf16.mxu0 0
    %5001 = vmatpush1.bf16.msra.mxu0 0
    %5002 = vmatprep.subr.bf16.mxu0 0
    %5003 = vmatpush1.bf16.msra.mxu0 0
    %5004 = vmatprep.subr.bf16.mxu0 0
    %5005 = vmatpush1.bf16.msra.mxu0 0
    %5006 = vmatprep.subr.bf16.mxu0 0
    %5007 = vmatpush1.bf16.msra.mxu0 0
    %5008 = vmatprep.subr.bf16.mxu0 0
    %5009 = vmatpush1.bf16.msra.mxu0 0
    %5010 = vmatprep.subr.bf16.mxu0 0
    %5011 = vmatpush1.bf16.msra.mxu0 0
    %5012 = vmatprep.subr.bf16.mxu0 0
    %5013 = vmatpush1.bf16.msra.mxu0 0
    %5014 = vmatprep.subr.bf16.mxu0 0
    %5015 = vmatpush1.bf16.msra.mxu0 0
    %5016 = vmatprep.subr.bf16.mxu0 0
    %5017 = vmatpush1.bf16.msra.mxu0 0
    %5018 = vmatprep.subr.bf16.mxu0 0
    %5019 = vmatpush1.bf16.msra.mxu0 0
    %5020 = vmatprep.mubr.bf16.mxu0 0
    %5021 = vmatmul.mubr.bf16.gmra.mrb[0].mxu0 %v4983
    %v5022 = vpop.f32.mrb[0].mxu0
    %v5023 = vadd.f32 0.0, %v5022
    %v5024 = vpop.f32.mrb[0].mxu0
    %v5025 = vpop.f32.mrb[0].mxu0
    %v5026 = vadd.f32 0.0, %v5025
    %v5027 = vpop.f32.mrb[0].mxu0
    %5028 = vmatprep.mubr.bf16.mxu0 0
    %5029 = vmatmul.mubr.bf16.gmra.mrb[0].mxu0 %v4986
    %v5030 = vpop.f32.mrb[0].mxu0
    %v5031 = vadd.f32 0.0, %v5030
    %v5032 = vpop.f32.mrb[0].mxu0
    %v5033 = vpop.f32.mrb[0].mxu0
    %v5034 = vadd.f32 0.0, %v5033
    %v5035 = vpop.f32.mrb[0].mxu0
    %5036 = vdwg.mxu0
    %v5038 = vsel %vm1549, %v4703, 0
    %v5041 = vsel %vm1549, %v4704, 0
    %5043 = vmatprep.subr.bf16.mxu0 0
    %5044 = vmatpush1.bf16.msra.mxu0 %v3783
    %5045 = vmatprep.subr.bf16.mxu0 0
    %5046 = vmatpush1.bf16.msra.mxu0 %v3784
    %5047 = vmatprep.subr.bf16.mxu0 0
    %5048 = vmatpush1.bf16.msra.mxu0 0
    %5049 = vmatprep.subr.bf16.mxu0 0
    %5050 = vmatpush1.bf16.msra.mxu0 0
    %5051 = vmatprep.subr.bf16.mxu0 0
    %5052 = vmatpush1.bf16.msra.mxu0 0
    %5053 = vmatprep.subr.bf16.mxu0 0
    %5054 = vmatpush1.bf16.msra.mxu0 0
    %5055 = vmatprep.subr.bf16.mxu0 0
    %5056 = vmatpush1.bf16.msra.mxu0 0
    %5057 = vmatprep.subr.bf16.mxu0 0
    %5058 = vmatpush1.bf16.msra.mxu0 0
    %5059 = vmatprep.subr.bf16.mxu0 0
    %5060 = vmatpush1.bf16.msra.mxu0 0
    %5061 = vmatprep.subr.bf16.mxu0 0
    %5062 = vmatpush1.bf16.msra.mxu0 0
    %5063 = vmatprep.subr.bf16.mxu0 0
    %5064 = vmatpush1.bf16.msra.mxu0 0
    %5065 = vmatprep.subr.bf16.mxu0 0
    %5066 = vmatpush1.bf16.msra.mxu0 0
    %5067 = vmatprep.subr.bf16.mxu0 0
    %5068 = vmatpush1.bf16.msra.mxu0 0
    %5069 = vmatprep.subr.bf16.mxu0 0
    %5070 = vmatpush1.bf16.msra.mxu0 0
    %5071 = vmatprep.subr.bf16.mxu0 0
    %5072 = vmatpush1.bf16.msra.mxu0 0
    %5073 = vmatprep.subr.bf16.mxu0 0
    %5074 = vmatpush1.bf16.msra.mxu0 0
    %5075 = vmatprep.mubr.bf16.mxu0 0
    %5076 = vmatmul.mubr.bf16.gmra.mrb[0].mxu0 %v5038
    %v5077 = vpop.f32.mrb[0].mxu0
    %v5078 = vadd.f32 0.0, %v5077
    %v5079 = vpop.f32.mrb[0].mxu0
    %v5080 = vpop.f32.mrb[0].mxu0
    %v5081 = vadd.f32 0.0, %v5080
    %v5082 = vpop.f32.mrb[0].mxu0
    %5083 = vmatprep.mubr.bf16.mxu0 0
    %5084 = vmatmul.mubr.bf16.gmra.mrb[0].mxu0 %v5041
    %v5085 = vpop.f32.mrb[0].mxu0
    %v5086 = vadd.f32 0.0, %v5085
    %v5087 = vpop.f32.mrb[0].mxu0
    %v5088 = vpop.f32.mrb[0].mxu0
    %v5089 = vadd.f32 0.0, %v5088
    %v5090 = vpop.f32.mrb[0].mxu0
    %5091 = vdwg.mxu0
    %v5093 = vsel %vm1549, %v4705, 0
    %v5096 = vsel %vm1549, %v4706, 0
    %5098 = vmatprep.subr.bf16.mxu0 0
    %5099 = vmatpush1.bf16.msra.mxu0 %v3785
    %5100 = vmatprep.subr.bf16.mxu0 0
    %5101 = vmatpush1.bf16.msra.mxu0 %v3786
    %5102 = vmatprep.subr.bf16.mxu0 0
    %5103 = vmatpush1.bf16.msra.mxu0 0
    %5104 = vmatprep.subr.bf16.mxu0 0
    %5105 = vmatpush1.bf16.msra.mxu0 0
    %5106 = vmatprep.subr.bf16.mxu0 0
    %5107 = vmatpush1.bf16.msra.mxu0 0
    %5108 = vmatprep.subr.bf16.mxu0 0
    %5109 = vmatpush1.bf16.msra.mxu0 0
    %5110 = vmatprep.subr.bf16.mxu0 0
    %5111 = vmatpush1.bf16.msra.mxu0 0
    %5112 = vmatprep.subr.bf16.mxu0 0
    %5113 = vmatpush1.bf16.msra.mxu0 0
    %5114 = vmatprep.subr.bf16.mxu0 0
    %5115 = vmatpush1.bf16.msra.mxu0 0
    %5116 = vmatprep.subr.bf16.mxu0 0
    %5117 = vmatpush1.bf16.msra.mxu0 0
    %5118 = vmatprep.subr.bf16.mxu0 0
    %5119 = vmatpush1.bf16.msra.mxu0 0
    %5120 = vmatprep.subr.bf16.mxu0 0
    %5121 = vmatpush1.bf16.msra.mxu0 0
    %5122 = vmatprep.subr.bf16.mxu0 0
    %5123 = vmatpush1.bf16.msra.mxu0 0
    %5124 = vmatprep.subr.bf16.mxu0 0
    %5125 = vmatpush1.bf16.msra.mxu0 0
    %5126 = vmatprep.subr.bf16.mxu0 0
    %5127 = vmatpush1.bf16.msra.mxu0 0
    %5128 = vmatprep.subr.bf16.mxu0 0
    %5129 = vmatpush1.bf16.msra.mxu0 0
    %5130 = vmatprep.mubr.bf16.mxu0 0
    %5131 = vmatmul.mubr.bf16.gmra.mrb[0].mxu0 %v5093
    %v5132 = vpop.f32.mrb[0].mxu0
    %v5133 = vadd.f32 0.0, %v5132
    %v5134 = vpop.f32.mrb[0].mxu0
    %v5135 = vpop.f32.mrb[0].mxu0
    %v5136 = vadd.f32 0.0, %v5135
    %v5137 = vpop.f32.mrb[0].mxu0
    %5138 = vmatprep.mubr.bf16.mxu0 0
    %5139 = vmatmul.mubr.bf16.gmra.mrb[0].mxu0 %v5096
    %v5140 = vpop.f32.mrb[0].mxu0
    %v5141 = vadd.f32 0.0, %v5140
    %v5142 = vpop.f32.mrb[0].mxu0
    %v5143 = vpop.f32.mrb[0].mxu0
    %v5144 = vadd.f32 0.0, %v5143
    %v5145 = vpop.f32.mrb[0].mxu0
    %5146 = vdwg.mxu0
    %5147 = vst.msk [vmem:[#allocation5] sm:$0xff] %vm471, %v4748
    %5148 = vst.msk [vmem:[#allocation5 + $0x8] sm:$0xff] %vm471, %v4751
    %5149 = vst.msk [vmem:[#allocation5 + $0x10] sm:$0xff] %vm471, %v4756
    %5150 = vst.msk [vmem:[#allocation5 + $0x18] sm:$0xff] %vm471, %v4759
    %5155 = vrot.lane.b32.xlu0 %v4803, 8
    %v5156 = vpop.permute.xlu0 %5155
    %5157 = vrot.lane.b32.xlu0 %v4806, 8
    %v5158 = vpop.permute.xlu0 %5157
    %5159 = vrot.lane.b32.xlu0 %v4811, 8
    %v5160 = vpop.permute.xlu0 %5159
    %5161 = vrot.lane.b32.xlu0 %v4814, 8
    %v5162 = vpop.permute.xlu0 %5161
    %5167 = vst.msk [vmem:[#allocation5] sm:$0xff] %vm2378, %v5156
    %5168 = vst.msk [vmem:[#allocation5 + $0x8] sm:$0xff] %vm2378, %v5158
    %5169 = vst.msk [vmem:[#allocation5 + $0x10] sm:$0xff] %vm2378, %v5160
    %5170 = vst.msk [vmem:[#allocation5 + $0x18] sm:$0xff] %vm2378, %v5162
    %5175 = vrot.lane.b32.xlu0 %v4858, 16
    %v5176 = vpop.permute.xlu0 %5175
    %5177 = vrot.lane.b32.xlu0 %v4861, 16
    %v5178 = vpop.permute.xlu0 %5177
    %5179 = vrot.lane.b32.xlu0 %v4866, 16
    %v5180 = vpop.permute.xlu0 %5179
    %5181 = vrot.lane.b32.xlu0 %v4869, 16
    %v5182 = vpop.permute.xlu0 %5181
    %5187 = vst.msk [vmem:[#allocation5] sm:$0xff] %vm2399, %v5176
    %5188 = vst.msk [vmem:[#allocation5 + $0x8] sm:$0xff] %vm2399, %v5178
    %5189 = vst.msk [vmem:[#allocation5 + $0x10] sm:$0xff] %vm2399, %v5180
    %5190 = vst.msk [vmem:[#allocation5 + $0x18] sm:$0xff] %vm2399, %v5182
    %5195 = vrot.lane.b32.xlu0 %v4913, 24
    %v5196 = vpop.permute.xlu0 %5195
    %5197 = vrot.lane.b32.xlu0 %v4916, 24
    %v5198 = vpop.permute.xlu0 %5197
    %5199 = vrot.lane.b32.xlu0 %v4921, 24
    %v5200 = vpop.permute.xlu0 %5199
    %5201 = vrot.lane.b32.xlu0 %v4924, 24
    %v5202 = vpop.permute.xlu0 %5201
    %5207 = vst.msk [vmem:[#allocation5] sm:$0xff] %vm2420, %v5196
    %5208 = vst.msk [vmem:[#allocation5 + $0x8] sm:$0xff] %vm2420, %v5198
    %5209 = vst.msk [vmem:[#allocation5 + $0x10] sm:$0xff] %vm2420, %v5200
    %5210 = vst.msk [vmem:[#allocation5 + $0x18] sm:$0xff] %vm2420, %v5202
    %5215 = vrot.lane.b32.xlu0 %v4968, 32
    %v5216 = vpop.permute.xlu0 %5215
    %5217 = vrot.lane.b32.xlu0 %v4971, 32
    %v5218 = vpop.permute.xlu0 %5217
    %5219 = vrot.lane.b32.xlu0 %v4976, 32
    %v5220 = vpop.permute.xlu0 %5219
    %5221 = vrot.lane.b32.xlu0 %v4979, 32
    %v5222 = vpop.permute.xlu0 %5221
    %5227 = vst.msk [vmem:[#allocation5] sm:$0xff] %vm2441, %v5216
    %5228 = vst.msk [vmem:[#allocation5 + $0x8] sm:$0xff] %vm2441, %v5218
    %5229 = vst.msk [vmem:[#allocation5 + $0x10] sm:$0xff] %vm2441, %v5220
    %5230 = vst.msk [vmem:[#allocation5 + $0x18] sm:$0xff] %vm2441, %v5222
    %5235 = vrot.lane.b32.xlu0 %v5023, 40
    %v5236 = vpop.permute.xlu0 %5235
    %5237 = vrot.lane.b32.xlu0 %v5026, 40
    %v5238 = vpop.permute.xlu0 %5237
    %5239 = vrot.lane.b32.xlu0 %v5031, 40
    %v5240 = vpop.permute.xlu0 %5239
    %5241 = vrot.lane.b32.xlu0 %v5034, 40
    %v5242 = vpop.permute.xlu0 %5241
    %5247 = vst.msk [vmem:[#allocation5] sm:$0xff] %vm2462, %v5236
    %5248 = vst.msk [vmem:[#allocation5 + $0x8] sm:$0xff] %vm2462, %v5238
    %5249 = vst.msk [vmem:[#allocation5 + $0x10] sm:$0xff] %vm2462, %v5240
    %5250 = vst.msk [vmem:[#allocation5 + $0x18] sm:$0xff] %vm2462, %v5242
    %5255 = vrot.lane.b32.xlu0 %v5078, 48
    %v5256 = vpop.permute.xlu0 %5255
    %5257 = vrot.lane.b32.xlu0 %v5081, 48
    %v5258 = vpop.permute.xlu0 %5257
    %5259 = vrot.lane.b32.xlu0 %v5086, 48
    %v5260 = vpop.permute.xlu0 %5259
    %5261 = vrot.lane.b32.xlu0 %v5089, 48
    %v5262 = vpop.permute.xlu0 %5261
    %5267 = vst.msk [vmem:[#allocation5] sm:$0xff] %vm2483, %v5256
    %5268 = vst.msk [vmem:[#allocation5 + $0x8] sm:$0xff] %vm2483, %v5258
    %5269 = vst.msk [vmem:[#allocation5 + $0x10] sm:$0xff] %vm2483, %v5260
    %5270 = vst.msk [vmem:[#allocation5 + $0x18] sm:$0xff] %vm2483, %v5262
    %5275 = vrot.lane.b32.xlu0 %v5133, 56
    %v5276 = vpop.permute.xlu0 %5275
    %5277 = vrot.lane.b32.xlu0 %v5136, 56
    %v5278 = vpop.permute.xlu0 %5277
    %5279 = vrot.lane.b32.xlu0 %v5141, 56
    %v5280 = vpop.permute.xlu0 %5279
    %5281 = vrot.lane.b32.xlu0 %v5144, 56
    %v5282 = vpop.permute.xlu0 %5281
    %5287 = vst.msk [vmem:[#allocation5] sm:$0xff] %vm2504, %v5276
    %5288 = vst.msk [vmem:[#allocation5 + $0x8] sm:$0xff] %vm2504, %v5278
    %5289 = vst.msk [vmem:[#allocation5 + $0x10] sm:$0xff] %vm2504, %v5280
    %5290 = vst.msk [vmem:[#allocation5 + $0x18] sm:$0xff] %vm2504, %v5282
    %v5291 = vld [vmem:[#allocation5] sm:$0xff]
    %v5292 = vld [vmem:[#allocation5 + $0x8] sm:$0xff]
    %v5293 = vld [vmem:[#allocation5 + $0x10] sm:$0xff]
    %v5294 = vld [vmem:[#allocation5 + $0x18] sm:$0xff]
    %v5295 = vpack.c.bf16 %v5292, %v5291
    %v5296 = vpack.c.bf16 %v5294, %v5293
    %s5297 = scalar_lea.vmem %s5, 32
    %v5298 = vld [vmem:[%s5297] sm:$0xf]
    %v5299 = vld [vmem:[%s5297 + $0x4] sm:$0xf]
    %v5300 = vld [vmem:[%s5297 + $0x8] sm:$0xf]
    %v5301 = vld [vmem:[%s5297 + $0xc] sm:$0xf]
    %v5302 = vld [vmem:[%s5297 + $0x10] sm:$0xf]
    %v5303 = vld [vmem:[%s5297 + $0x14] sm:$0xf]
    %v5304 = vld [vmem:[%s5297 + $0x18] sm:$0xf]
    %v5305 = vld [vmem:[%s5297 + $0x1c] sm:$0xf]
    %v5314 = vunpack.c.l.b16 %v5298
    %v5315 = vunpack.c.l.b16 %v5299
    %v5316 = vunpack.c.l.b16 %v5300
    %v5317 = vunpack.c.l.b16 %v5301
    %v5318 = vunpack.c.l.b16 %v5302
    %v5319 = vunpack.c.l.b16 %v5303
    %v5320 = vunpack.c.l.b16 %v5304
    %v5321 = vunpack.c.l.b16 %v5305
    %v5322 = vpack.c.b16 %v5315, %v5314
    %v5323 = vpack.c.b16 %v5317, %v5316
    %v5324 = vpack.c.b16 %v5319, %v5318
    %v5325 = vpack.c.b16 %v5321, %v5320
    %v5331 = vsel %vm207, %v5295, 0
    %v5334 = vsel %vm207, %v5296, 0
    %5336 = vmatprep.subr.bf16.mxu0 0
    %5337 = vmatpush1.bf16.msra.mxu0 %v5322
    %5338 = vmatprep.subr.bf16.mxu0 0
    %5339 = vmatpush1.bf16.msra.mxu0 %v5323
    %5340 = vmatprep.subr.bf16.mxu0 0
    %5341 = vmatpush1.bf16.msra.mxu0 %v5324
    %5342 = vmatprep.subr.bf16.mxu0 0
    %5343 = vmatpush1.bf16.msra.mxu0 %v5325
    %5344 = vmatprep.subr.bf16.mxu0 0
    %5345 = vmatpush1.bf16.msra.mxu0 0
    %5346 = vmatprep.subr.bf16.mxu0 0
    %5347 = vmatpush1.bf16.msra.mxu0 0
    %5348 = vmatprep.subr.bf16.mxu0 0
    %5349 = vmatpush1.bf16.msra.mxu0 0
    %5350 = vmatprep.subr.bf16.mxu0 0
    %5351 = vmatpush1.bf16.msra.mxu0 0
    %5352 = vmatprep.subr.bf16.mxu0 0
    %5353 = vmatpush1.bf16.msra.mxu0 0
    %5354 = vmatprep.subr.bf16.mxu0 0
    %5355 = vmatpush1.bf16.msra.mxu0 0
    %5356 = vmatprep.subr.bf16.mxu0 0
    %5357 = vmatpush1.bf16.msra.mxu0 0
    %5358 = vmatprep.subr.bf16.mxu0 0
    %5359 = vmatpush1.bf16.msra.mxu0 0
    %5360 = vmatprep.subr.bf16.mxu0 0
    %5361 = vmatpush1.bf16.msra.mxu0 0
    %5362 = vmatprep.subr.bf16.mxu0 0
    %5363 = vmatpush1.bf16.msra.mxu0 0
    %5364 = vmatprep.subr.bf16.mxu0 0
    %5365 = vmatpush1.bf16.msra.mxu0 0
    %5366 = vmatprep.subr.bf16.mxu0 0
    %5367 = vmatpush1.bf16.msra.mxu0 0
    %5368 = vmatprep.mubr.bf16.mxu0 0
    %5369 = vmatmul.mubr.bf16.gmra.mrb[0].mxu0 %v5331
    %v5370 = vpop.f32.mrb[0].mxu0
    %v5371 = vadd.f32 0.0, %v5370
    %v5372 = vpop.f32.mrb[0].mxu0
    %v5373 = vpop.f32.mrb[0].mxu0
    %v5374 = vadd.f32 0.0, %v5373
    %v5375 = vpop.f32.mrb[0].mxu0
    %5376 = vmatprep.mubr.bf16.mxu0 0
    %5377 = vmatmul.mubr.bf16.gmra.mrb[0].mxu0 %v5334
    %v5378 = vpop.f32.mrb[0].mxu0
    %v5379 = vadd.f32 0.0, %v5378
    %v5380 = vpop.f32.mrb[0].mxu0
    %v5381 = vpop.f32.mrb[0].mxu0
    %v5382 = vadd.f32 0.0, %v5381
    %v5383 = vpop.f32.mrb[0].mxu0
    %5384 = vdwg.mxu0
    %v5385 = vadd.f32 %v3012, %v5371
    %v5386 = vadd.f32 %v3013, %v5374
    %v5387 = vadd.f32 %v3014, %v5379
    %v5388 = vadd.f32 %v3015, %v5382
    %s5389 = scalar_lea.vmem %s6, 1
    %v5390 = vld [vmem:[%s5389] sm:$0x1]
    %v5392 = vlaneseq
    %v5393 = vshrl.u32 %v5392, 7
    %v5394 = vsub.s32 0, %v5393
    %v5395 = vrot.slane %v5390, %v5394
    %v5397 = vadd.f32 %v5385, %v5395
    %v5398 = vadd.f32 %v5386, %v5395
    %v5399 = vadd.f32 %v5387, %v5395
    %v5400 = vadd.f32 %v5388, %v5395
    %s5401 = scalar_lea.vmem %s13, 1
    %v5402 = vld [vmem:[%s5401] sm:$0x1]
    %s5403 = scalar_lea.vmem %s14, 1
    %v5404 = vld [vmem:[%s5403] sm:$0x1]
    %v5405 = vsel %vm207, %v5397, 0.0
    %5406 = vadd.xlane.f32.xlu0 %v5405
    %v5407 = vpop.xlane.xlu0 %5406
    %v5408 = vsel %vm207, %v5398, 0.0
    %5409 = vadd.xlane.f32.xlu0 %v5408
    %v5410 = vpop.xlane.xlu0 %5409
    %v5411 = vsel %vm207, %v5399, 0.0
    %5412 = vadd.xlane.f32.xlu0 %v5411
    %v5413 = vpop.xlane.xlu0 %5412
    %v5414 = vsel %vm207, %v5400, 0.0
    %5415 = vadd.xlane.f32.xlu0 %v5414
    %v5416 = vpop.xlane.xlu0 %5415
    %v5417 = vmul.f32 %v5407, %v220
    %v5418 = vmul.f32 %v5410, %v220
    %v5419 = vmul.f32 %v5413, %v220
    %v5420 = vmul.f32 %v5416, %v220
    %v5421 = vsub.f32 %v5397, %v5417
    %v5422 = vsub.f32 %v5398, %v5418
    %v5423 = vsub.f32 %v5399, %v5419
    %v5424 = vsub.f32 %v5400, %v5420
    %v5425 = vmul.f32 %v5421, %v5421
    %v5426 = vmul.f32 %v5422, %v5422
    %v5427 = vmul.f32 %v5423, %v5423
    %v5428 = vmul.f32 %v5424, %v5424
    %v5429 = vsel %vm207, %v5425, 0.0
    %5430 = vadd.xlane.f32.xlu0 %v5429
    %v5431 = vpop.xlane.xlu0 %5430
    %v5432 = vsel %vm207, %v5426, 0.0
    %5433 = vadd.xlane.f32.xlu0 %v5432
    %v5434 = vpop.xlane.xlu0 %5433
    %v5435 = vsel %vm207, %v5427, 0.0
    %5436 = vadd.xlane.f32.xlu0 %v5435
    %v5437 = vpop.xlane.xlu0 %5436
    %v5438 = vsel %vm207, %v5428, 0.0
    %5439 = vadd.xlane.f32.xlu0 %v5438
    %v5440 = vpop.xlane.xlu0 %5439
    %v5441 = vmul.f32 %v5431, %v220
    %v5442 = vmul.f32 %v5434, %v220
    %v5443 = vmul.f32 %v5437, %v220
    %v5444 = vmul.f32 %v5440, %v220
    %v5445 = vadd.f32 %v5441, 1e-05
    %v5446 = vadd.f32 %v5442, 1e-05
    %v5447 = vadd.f32 %v5443, 1e-05
    %v5448 = vadd.f32 %v5444, 1e-05
    %v5449 = vrsqrt.pop %v5445
    %v5450 = vrsqrt.pop %v5446
    %v5451 = vrsqrt.pop %v5447
    %v5452 = vrsqrt.pop %v5448
    %v5453 = vmul.f32 %v5421, %v5449
    %v5454 = vmul.f32 %v5422, %v5450
    %v5455 = vmul.f32 %v5423, %v5451
    %v5456 = vmul.f32 %v5424, %v5452
    %v5458 = vlaneseq
    %v5459 = vshrl.u32 %v5458, 7
    %v5460 = vsub.s32 0, %v5459
    %v5461 = vrot.slane %v5402, %v5460
    %v5463 = vmul.f32 %v5453, %v5461
    %v5464 = vmul.f32 %v5454, %v5461
    %v5465 = vmul.f32 %v5455, %v5461
    %v5466 = vmul.f32 %v5456, %v5461
    %v5468 = vlaneseq
    %v5469 = vshrl.u32 %v5468, 7
    %v5470 = vsub.s32 0, %v5469
    %v5471 = vrot.slane %v5404, %v5470
    %v5473 = vadd.f32 %v5463, %v5471
    %v5474 = vadd.f32 %v5464, %v5471
    %v5475 = vadd.f32 %v5465, %v5471
    %v5476 = vadd.f32 %v5466, %v5471
    %v5477 = vpack.c.bf16 %v5474, %v5473
    %v5478 = vpack.c.bf16 %v5476, %v5475
    %s5479 = scalar_lea.vmem %s7, 64
    %v5480 = vld [vmem:[%s5479] sm:$0xff]
    %v5481 = vld [vmem:[%s5479 + $0x8] sm:$0xff]
    %v5482 = vld [vmem:[%s5479 + $0x10] sm:$0xff]
    %v5483 = vld [vmem:[%s5479 + $0x18] sm:$0xff]
    %v5484 = vld [vmem:[%s5479 + $0x20] sm:$0xff]
    %v5485 = vld [vmem:[%s5479 + $0x28] sm:$0xff]
    %v5486 = vld [vmem:[%s5479 + $0x30] sm:$0xff]
    %v5487 = vld [vmem:[%s5479 + $0x38] sm:$0xff]
    %s5488 = scalar_lea.vmem %s8, 2
    %v5489 = vld [vmem:[%s5488] sm:$0x3]
    %v5491 = vlaneseq
    %v5492 = vshrl.u32 %v5491, 7
    %v5493 = vsub.s32 0, %v5492
    %v5494 = vrot.slane %v5489, %v5493
    %v5495 = vlaneseq
    %v5496 = vshrl.u32 %v5495, 7
    %v5497 = vsub.s32 1, %v5496
    %v5498 = vrot.slane %v5489, %v5497
    %v5509 = vunpack.c.l.b16 %v5480
    %v5510 = vunpack.c.h.b16 %v5480
    %v5511 = vunpack.c.l.b16 %v5481
    %v5512 = vunpack.c.h.b16 %v5481
    %v5513 = vunpack.c.l.b16 %v5482
    %v5514 = vunpack.c.h.b16 %v5482
    %v5515 = vunpack.c.l.b16 %v5483
    %v5516 = vunpack.c.h.b16 %v5483
    %v5517 = vunpack.c.l.b16 %v5484
    %v5518 = vunpack.c.h.b16 %v5484
    %v5519 = vunpack.c.l.b16 %v5485
    %v5520 = vunpack.c.h.b16 %v5485
    %v5521 = vunpack.c.l.b16 %v5486
    %v5522 = vunpack.c.h.b16 %v5486
    %v5523 = vunpack.c.l.b16 %v5487
    %v5524 = vunpack.c.h.b16 %v5487
    %v5525 = vpack.c.b16 %v5511, %v5509
    %v5526 = vpack.c.b16 %v5512, %v5510
    %v5527 = vpack.c.b16 %v5515, %v5513
    %v5528 = vpack.c.b16 %v5516, %v5514
    %v5529 = vpack.c.b16 %v5519, %v5517
    %v5530 = vpack.c.b16 %v5520, %v5518
    %v5531 = vpack.c.b16 %v5523, %v5521
    %v5532 = vpack.c.b16 %v5524, %v5522
    %v5542 = vsel %vm207, %v5477, 0
    %v5545 = vsel %vm207, %v5478, 0
    %5547 = vmatprep.subr.bf16.mxu0 %v5526
    %5548 = vmatpush1.bf16.msra.mxu0 %v5525
    %5549 = vmatprep.subr.bf16.mxu0 %v5528
    %5550 = vmatpush1.bf16.msra.mxu0 %v5527
    %5551 = vmatprep.subr.bf16.mxu0 %v5530
    %5552 = vmatpush1.bf16.msra.mxu0 %v5529
    %5553 = vmatprep.subr.bf16.mxu0 %v5532
    %5554 = vmatpush1.bf16.msra.mxu0 %v5531
    %5555 = vmatprep.subr.bf16.mxu0 0
    %5556 = vmatpush1.bf16.msra.mxu0 0
    %5557 = vmatprep.subr.bf16.mxu0 0
    %5558 = vmatpush1.bf16.msra.mxu0 0
    %5559 = vmatprep.subr.bf16.mxu0 0
    %5560 = vmatpush1.bf16.msra.mxu0 0
    %5561 = vmatprep.subr.bf16.mxu0 0
    %5562 = vmatpush1.bf16.msra.mxu0 0
    %5563 = vmatprep.subr.bf16.mxu0 0
    %5564 = vmatpush1.bf16.msra.mxu0 0
    %5565 = vmatprep.subr.bf16.mxu0 0
    %5566 = vmatpush1.bf16.msra.mxu0 0
    %5567 = vmatprep.subr.bf16.mxu0 0
    %5568 = vmatpush1.bf16.msra.mxu0 0
    %5569 = vmatprep.subr.bf16.mxu0 0
    %5570 = vmatpush1.bf16.msra.mxu0 0
    %5571 = vmatprep.subr.bf16.mxu0 0
    %5572 = vmatpush1.bf16.msra.mxu0 0
    %5573 = vmatprep.subr.bf16.mxu0 0
    %5574 = vmatpush1.bf16.msra.mxu0 0
    %5575 = vmatprep.subr.bf16.mxu0 0
    %5576 = vmatpush1.bf16.msra.mxu0 0
    %5577 = vmatprep.subr.bf16.mxu0 0
    %5578 = vmatpush1.bf16.msra.mxu0 0
    %5579 = vmatprep.mubr.bf16.mxu0 0
    %5580 = vmatmul.mubr.bf16.gmra.mrb[0].mxu0 %v5542
    %v5581 = vpop.f32.mrb[0].mxu0
    %v5582 = vadd.f32 %v5494, %v5581
    %v5583 = vpop.f32.mrb[0].mxu0
    %v5584 = vadd.f32 %v5498, %v5583
    %v5585 = vpop.f32.mrb[0].mxu0
    %v5586 = vadd.f32 %v5494, %v5585
    %v5587 = vpop.f32.mrb[0].mxu0
    %v5588 = vadd.f32 %v5498, %v5587
    %5589 = vmatprep.mubr.bf16.mxu0 0
    %5590 = vmatmul.mubr.bf16.gmra.mrb[0].mxu0 %v5545
    %v5591 = vpop.f32.mrb[0].mxu0
    %v5592 = vadd.f32 %v5494, %v5591
    %v5593 = vpop.f32.mrb[0].mxu0
    %v5594 = vadd.f32 %v5498, %v5593
    %v5595 = vpop.f32.mrb[0].mxu0
    %v5596 = vadd.f32 %v5494, %v5595
    %v5597 = vpop.f32.mrb[0].mxu0
    %v5598 = vadd.f32 %v5498, %v5597
    %5599 = vdwg.mxu0
    %v5600 = vmax.f32 %v5582, 0.0
    %v5601 = vmax.f32 %v5584, 0.0
    %v5602 = vmax.f32 %v5586, 0.0
    %v5603 = vmax.f32 %v5588, 0.0
    %v5604 = vmax.f32 %v5592, 0.0
    %v5605 = vmax.f32 %v5594, 0.0
    %v5606 = vmax.f32 %v5596, 0.0
    %v5607 = vmax.f32 %v5598, 0.0
    %v5608 = vpack.c.bf16 %v5602, %v5600
    %v5609 = vpack.c.bf16 %v5603, %v5601
    %v5610 = vpack.c.bf16 %v5606, %v5604
    %v5611 = vpack.c.bf16 %v5607, %v5605
    %s5612 = scalar_lea.vmem %s9, 128
    %v5613 = vld [vmem:[%s5612] sm:$0xf]
    %v5614 = vld [vmem:[%s5612 + $0x4] sm:$0xf]
    %v5615 = vld [vmem:[%s5612 + $0x8] sm:$0xf]
    %v5616 = vld [vmem:[%s5612 + $0xc] sm:$0xf]
    %v5617 = vld [vmem:[%s5612 + $0x10] sm:$0xf]
    %v5618 = vld [vmem:[%s5612 + $0x14] sm:$0xf]
    %v5619 = vld [vmem:[%s5612 + $0x18] sm:$0xf]
    %v5620 = vld [vmem:[%s5612 + $0x1c] sm:$0xf]
    %v5621 = vld [vmem:[%s5612 + $0x20] sm:$0xf]
    %v5622 = vld [vmem:[%s5612 + $0x24] sm:$0xf]
    %v5623 = vld [vmem:[%s5612 + $0x28] sm:$0xf]
    %v5624 = vld [vmem:[%s5612 + $0x2c] sm:$0xf]
    %v5625 = vld [vmem:[%s5612 + $0x30] sm:$0xf]
    %v5626 = vld [vmem:[%s5612 + $0x34] sm:$0xf]
    %v5627 = vld [vmem:[%s5612 + $0x38] sm:$0xf]
    %v5628 = vld [vmem:[%s5612 + $0x3c] sm:$0xf]
    %v5629 = vld [vmem:[%s5612 + $0x40] sm:$0xf]
    %v5630 = vld [vmem:[%s5612 + $0x44] sm:$0xf]
    %v5631 = vld [vmem:[%s5612 + $0x48] sm:$0xf]
    %v5632 = vld [vmem:[%s5612 + $0x4c] sm:$0xf]
    %v5633 = vld [vmem:[%s5612 + $0x50] sm:$0xf]
    %v5634 = vld [vmem:[%s5612 + $0x54] sm:$0xf]
    %v5635 = vld [vmem:[%s5612 + $0x58] sm:$0xf]
    %v5636 = vld [vmem:[%s5612 + $0x5c] sm:$0xf]
    %v5637 = vld [vmem:[%s5612 + $0x60] sm:$0xf]
    %v5638 = vld [vmem:[%s5612 + $0x64] sm:$0xf]
    %v5639 = vld [vmem:[%s5612 + $0x68] sm:$0xf]
    %v5640 = vld [vmem:[%s5612 + $0x6c] sm:$0xf]
    %v5641 = vld [vmem:[%s5612 + $0x70] sm:$0xf]
    %v5642 = vld [vmem:[%s5612 + $0x74] sm:$0xf]
    %v5643 = vld [vmem:[%s5612 + $0x78] sm:$0xf]
    %v5644 = vld [vmem:[%s5612 + $0x7c] sm:$0xf]
    %v5677 = vunpack.c.l.b16 %v5613
    %v5678 = vunpack.c.l.b16 %v5614
    %v5679 = vunpack.c.l.b16 %v5615
    %v5680 = vunpack.c.l.b16 %v5616
    %v5681 = vunpack.c.l.b16 %v5617
    %v5682 = vunpack.c.l.b16 %v5618
    %v5683 = vunpack.c.l.b16 %v5619
    %v5684 = vunpack.c.l.b16 %v5620
    %v5685 = vunpack.c.l.b16 %v5621
    %v5686 = vunpack.c.l.b16 %v5622
    %v5687 = vunpack.c.l.b16 %v5623
    %v5688 = vunpack.c.l.b16 %v5624
    %v5689 = vunpack.c.l.b16 %v5625
    %v5690 = vunpack.c.l.b16 %v5626
    %v5691 = vunpack.c.l.b16 %v5627
    %v5692 = vunpack.c.l.b16 %v5628
    %v5693 = vunpack.c.l.b16 %v5629
    %v5694 = vunpack.c.l.b16 %v5630
    %v5695 = vunpack.c.l.b16 %v5631
    %v5696 = vunpack.c.l.b16 %v5632
    %v5697 = vunpack.c.l.b16 %v5633
    %v5698 = vunpack.c.l.b16 %v5634
    %v5699 = vunpack.c.l.b16 %v5635
    %v5700 = vunpack.c.l.b16 %v5636
    %v5701 = vunpack.c.l.b16 %v5637
    %v5702 = vunpack.c.l.b16 %v5638
    %v5703 = vunpack.c.l.b16 %v5639
    %v5704 = vunpack.c.l.b16 %v5640
    %v5705 = vunpack.c.l.b16 %v5641
    %v5706 = vunpack.c.l.b16 %v5642
    %v5707 = vunpack.c.l.b16 %v5643
    %v5708 = vunpack.c.l.b16 %v5644
    %v5709 = vpack.c.b16 %v5678, %v5677
    %v5710 = vpack.c.b16 %v5680, %v5679
    %v5711 = vpack.c.b16 %v5682, %v5681
    %v5712 = vpack.c.b16 %v5684, %v5683
    %v5713 = vpack.c.b16 %v5686, %v5685
    %v5714 = vpack.c.b16 %v5688, %v5687
    %v5715 = vpack.c.b16 %v5690, %v5689
    %v5716 = vpack.c.b16 %v5692, %v5691
    %v5717 = vpack.c.b16 %v5694, %v5693
    %v5718 = vpack.c.b16 %v5696, %v5695
    %v5719 = vpack.c.b16 %v5698, %v5697
    %v5720 = vpack.c.b16 %v5700, %v5699
    %v5721 = vpack.c.b16 %v5702, %v5701
    %v5722 = vpack.c.b16 %v5704, %v5703
    %v5723 = vpack.c.b16 %v5706, %v5705
    %v5724 = vpack.c.b16 %v5708, %v5707
    %5741 = vmatprep.subr.bf16.mxu0 0
    %5742 = vmatpush1.bf16.msra.mxu0 %v5709
    %5743 = vmatprep.subr.bf16.mxu0 0
    %5744 = vmatpush1.bf16.msra.mxu0 %v5710
    %5745 = vmatprep.subr.bf16.mxu0 0
    %5746 = vmatpush1.bf16.msra.mxu0 %v5711
    %5747 = vmatprep.subr.bf16.mxu0 0
    %5748 = vmatpush1.bf16.msra.mxu0 %v5712
    %5749 = vmatprep.subr.bf16.mxu0 0
    %5750 = vmatpush1.bf16.msra.mxu0 %v5713
    %5751 = vmatprep.subr.bf16.mxu0 0
    %5752 = vmatpush1.bf16.msra.mxu0 %v5714
    %5753 = vmatprep.subr.bf16.mxu0 0
    %5754 = vmatpush1.bf16.msra.mxu0 %v5715
    %5755 = vmatprep.subr.bf16.mxu0 0
    %5756 = vmatpush1.bf16.msra.mxu0 %v5716
    %5757 = vmatprep.subr.bf16.mxu0 0
    %5758 = vmatpush1.bf16.msra.mxu0 %v5717
    %5759 = vmatprep.subr.bf16.mxu0 0
    %5760 = vmatpush1.bf16.msra.mxu0 %v5718
    %5761 = vmatprep.subr.bf16.mxu0 0
    %5762 = vmatpush1.bf16.msra.mxu0 %v5719
    %5763 = vmatprep.subr.bf16.mxu0 0
    %5764 = vmatpush1.bf16.msra.mxu0 %v5720
    %5765 = vmatprep.subr.bf16.mxu0 0
    %5766 = vmatpush1.bf16.msra.mxu0 %v5721
    %5767 = vmatprep.subr.bf16.mxu0 0
    %5768 = vmatpush1.bf16.msra.mxu0 %v5722
    %5769 = vmatprep.subr.bf16.mxu0 0
    %5770 = vmatpush1.bf16.msra.mxu0 %v5723
    %5771 = vmatprep.subr.bf16.mxu0 0
    %5772 = vmatpush1.bf16.msra.mxu0 %v5724
    %5773 = vmatprep.mubr.bf16.mxu0 %v5609
    %5774 = vmatmul.mubr.bf16.gmra.mrb[0].mxu0 %v5608
    %v5775 = vpop.f32.mrb[0].mxu0
    %v5776 = vadd.f32 0.0, %v5775
    %v5777 = vpop.f32.mrb[0].mxu0
    %v5778 = vpop.f32.mrb[0].mxu0
    %v5779 = vadd.f32 0.0, %v5778
    %v5780 = vpop.f32.mrb[0].mxu0
    %5781 = vmatprep.mubr.bf16.mxu0 %v5611
    %5782 = vmatmul.mubr.bf16.gmra.mrb[0].mxu0 %v5610
    %v5783 = vpop.f32.mrb[0].mxu0
    %v5784 = vadd.f32 0.0, %v5783
    %v5785 = vpop.f32.mrb[0].mxu0
    %v5786 = vpop.f32.mrb[0].mxu0
    %v5787 = vadd.f32 0.0, %v5786
    %v5788 = vpop.f32.mrb[0].mxu0
    %5789 = vdwg.mxu0
    %v5790 = vadd.f32 %v5397, %v5776
    %v5791 = vadd.f32 %v5398, %v5779
    %v5792 = vadd.f32 %v5399, %v5784
    %v5793 = vadd.f32 %v5400, %v5787
    %s5794 = scalar_lea.vmem %s10, 1
    %v5795 = vld [vmem:[%s5794] sm:$0x1]
    %v5797 = vlaneseq
    %v5798 = vshrl.u32 %v5797, 7
    %v5799 = vsub.s32 0, %v5798
    %v5800 = vrot.slane %v5795, %v5799
    %v5802 = vadd.f32 %v5790, %v5800
    %v5803 = vadd.f32 %v5791, %v5800
    %v5804 = vadd.f32 %v5792, %v5800
    %v5805 = vadd.f32 %v5793, %v5800
    %v5806 = vld [vmem:[%s15] sm:$0x1]
    %v5807 = vld [vmem:[%s16] sm:$0x1]
    %v5808 = vsel %vm207, %v5802, 0.0
    %5809 = vadd.xlane.f32.xlu0 %v5808
    %v5810 = vpop.xlane.xlu0 %5809
    %v5811 = vsel %vm207, %v5803, 0.0
    %5812 = vadd.xlane.f32.xlu0 %v5811
    %v5813 = vpop.xlane.xlu0 %5812
    %v5814 = vsel %vm207, %v5804, 0.0
    %5815 = vadd.xlane.f32.xlu0 %v5814
    %v5816 = vpop.xlane.xlu0 %5815
    %v5817 = vsel %vm207, %v5805, 0.0
    %5818 = vadd.xlane.f32.xlu0 %v5817
    %v5819 = vpop.xlane.xlu0 %5818
    %v5820 = vmul.f32 %v5810, %v220
    %v5821 = vmul.f32 %v5813, %v220
    %v5822 = vmul.f32 %v5816, %v220
    %v5823 = vmul.f32 %v5819, %v220
    %v5824 = vsub.f32 %v5802, %v5820
    %v5825 = vsub.f32 %v5803, %v5821
    %v5826 = vsub.f32 %v5804, %v5822
    %v5827 = vsub.f32 %v5805, %v5823
    %v5828 = vmul.f32 %v5824, %v5824
    %v5829 = vmul.f32 %v5825, %v5825
    %v5830 = vmul.f32 %v5826, %v5826
    %v5831 = vmul.f32 %v5827, %v5827
    %v5832 = vsel %vm207, %v5828, 0.0
    %5833 = vadd.xlane.f32.xlu0 %v5832
    %v5834 = vpop.xlane.xlu0 %5833
    %v5835 = vsel %vm207, %v5829, 0.0
    %5836 = vadd.xlane.f32.xlu0 %v5835
    %v5837 = vpop.xlane.xlu0 %5836
    %v5838 = vsel %vm207, %v5830, 0.0
    %5839 = vadd.xlane.f32.xlu0 %v5838
    %v5840 = vpop.xlane.xlu0 %5839
    %v5841 = vsel %vm207, %v5831, 0.0
    %5842 = vadd.xlane.f32.xlu0 %v5841
    %v5843 = vpop.xlane.xlu0 %5842
    %v5844 = vmul.f32 %v5834, %v220
    %v5845 = vmul.f32 %v5837, %v220
    %v5846 = vmul.f32 %v5840, %v220
    %v5847 = vmul.f32 %v5843, %v220
    %v5848 = vadd.f32 %v5844, 1e-05
    %v5849 = vadd.f32 %v5845, 1e-05
    %v5850 = vadd.f32 %v5846, 1e-05
    %v5851 = vadd.f32 %v5847, 1e-05
    %v5852 = vrsqrt.pop %v5848
    %v5853 = vrsqrt.pop %v5849
    %v5854 = vrsqrt.pop %v5850
    %v5855 = vrsqrt.pop %v5851
    %v5856 = vmul.f32 %v5824, %v5852
    %v5857 = vmul.f32 %v5825, %v5853
    %v5858 = vmul.f32 %v5826, %v5854
    %v5859 = vmul.f32 %v5827, %v5855
    %v5861 = vlaneseq
    %v5862 = vshrl.u32 %v5861, 7
    %v5863 = vsub.s32 0, %v5862
    %v5864 = vrot.slane %v5806, %v5863
    %v5866 = vmul.f32 %v5856, %v5864
    %v5867 = vmul.f32 %v5857, %v5864
    %v5868 = vmul.f32 %v5858, %v5864
    %v5869 = vmul.f32 %v5859, %v5864
    %v5871 = vlaneseq
    %v5872 = vshrl.u32 %v5871, 7
    %v5873 = vsub.s32 0, %v5872
    %v5874 = vrot.slane %v5807, %v5873
    %v5876 = vadd.f32 %v5866, %v5874
    %v5877 = vadd.f32 %v5867, %v5874
    %v5878 = vadd.f32 %v5868, %v5874
    %v5879 = vadd.f32 %v5869, %v5874
    %v5880 = vpack.c.bf16 %v5877, %v5876
    %v5881 = vpack.c.bf16 %v5879, %v5878
    %v5882 = vld [vmem:[%s17] sm:$0xf]
    %v5883 = vld [vmem:[%s17 + $0x4] sm:$0xf]
    %v5884 = vld [vmem:[%s17 + $0x8] sm:$0xf]
    %v5885 = vld [vmem:[%s17 + $0xc] sm:$0xf]
    %v5886 = vld [vmem:[%s17 + $0x10] sm:$0xf]
    %v5887 = vld [vmem:[%s17 + $0x14] sm:$0xf]
    %v5888 = vld [vmem:[%s17 + $0x18] sm:$0xf]
    %v5889 = vld [vmem:[%s17 + $0x1c] sm:$0xf]
    %v5890 = vld [vmem:[%s18] sm:$0x1]
    %v5892 = vlaneseq
    %v5893 = vshrl.u32 %v5892, 7
    %v5894 = vsub.s32 0, %v5893
    %v5895 = vrot.slane %v5890, %v5894
    %v5905 = vunpack.c.l.b16 %v5882
    %v5906 = vunpack.c.l.b16 %v5883
    %v5907 = vunpack.c.l.b16 %v5884
    %v5908 = vunpack.c.l.b16 %v5885
    %v5909 = vunpack.c.l.b16 %v5886
    %v5910 = vunpack.c.l.b16 %v5887
    %v5911 = vunpack.c.l.b16 %v5888
    %v5912 = vunpack.c.l.b16 %v5889
    %v5913 = vpack.c.b16 %v5906, %v5905
    %v5914 = vpack.c.b16 %v5908, %v5907
    %v5915 = vpack.c.b16 %v5910, %v5909
    %v5916 = vpack.c.b16 %v5912, %v5911
    %v5922 = vsel %vm207, %v5880, 0
    %v5925 = vsel %vm207, %v5881, 0
    %5927 = vmatprep.subr.bf16.mxu0 0
    %5928 = vmatpush1.bf16.msra.mxu0 %v5913
    %5929 = vmatprep.subr.bf16.mxu0 0
    %5930 = vmatpush1.bf16.msra.mxu0 %v5914
    %5931 = vmatprep.subr.bf16.mxu0 0
    %5932 = vmatpush1.bf16.msra.mxu0 %v5915
    %5933 = vmatprep.subr.bf16.mxu0 0
    %5934 = vmatpush1.bf16.msra.mxu0 %v5916
    %5935 = vmatprep.subr.bf16.mxu0 0
    %5936 = vmatpush1.bf16.msra.mxu0 0
    %5937 = vmatprep.subr.bf16.mxu0 0
    %5938 = vmatpush1.bf16.msra.mxu0 0
    %5939 = vmatprep.subr.bf16.mxu0 0
    %5940 = vmatpush1.bf16.msra.mxu0 0
    %5941 = vmatprep.subr.bf16.mxu0 0
    %5942 = vmatpush1.bf16.msra.mxu0 0
    %5943 = vmatprep.subr.bf16.mxu0 0
    %5944 = vmatpush1.bf16.msra.mxu0 0
    %5945 = vmatprep.subr.bf16.mxu0 0
    %5946 = vmatpush1.bf16.msra.mxu0 0
    %5947 = vmatprep.subr.bf16.mxu0 0
    %5948 = vmatpush1.bf16.msra.mxu0 0
    %5949 = vmatprep.subr.bf16.mxu0 0
    %5950 = vmatpush1.bf16.msra.mxu0 0
    %5951 = vmatprep.subr.bf16.mxu0 0
    %5952 = vmatpush1.bf16.msra.mxu0 0
    %5953 = vmatprep.subr.bf16.mxu0 0
    %5954 = vmatpush1.bf16.msra.mxu0 0
    %5955 = vmatprep.subr.bf16.mxu0 0
    %5956 = vmatpush1.bf16.msra.mxu0 0
    %5957 = vmatprep.subr.bf16.mxu0 0
    %5958 = vmatpush1.bf16.msra.mxu0 0
    %5959 = vmatprep.mubr.bf16.mxu0 0
    %5960 = vmatmul.mubr.bf16.gmra.mrb[0].mxu0 %v5922
    %v5961 = vpop.f32.mrb[0].mxu0
    %v5962 = vadd.f32 %v5895, %v5961
    %v5963 = vpop.f32.mrb[0].mxu0
    %v5964 = vpop.f32.mrb[0].mxu0
    %v5965 = vadd.f32 %v5895, %v5964
    %v5966 = vpop.f32.mrb[0].mxu0
    %5967 = vmatprep.mubr.bf16.mxu0 0
    %5968 = vmatmul.mubr.bf16.gmra.mrb[0].mxu0 %v5925
    %v5969 = vpop.f32.mrb[0].mxu0
    %v5970 = vadd.f32 %v5895, %v5969
    %v5971 = vpop.f32.mrb[0].mxu0
    %v5972 = vpop.f32.mrb[0].mxu0
    %v5973 = vadd.f32 %v5895, %v5972
    %v5974 = vpop.f32.mrb[0].mxu0
    %5975 = vdwg.mxu0
    %5976 = vst [vmem:[#allocation6] sm:$0xff] %v5962
    %5977 = vst [vmem:[#allocation6 + $0x8] sm:$0xff] %v5965
    %5978 = vst [vmem:[#allocation6 + $0x10] sm:$0xff] %v5970
    %5979 = vst [vmem:[#allocation6 + $0x18] sm:$0xff] %v5973
    // Predicated region
    $region78: #{heart_gpt_forward.1} parent=1 // pred_check
      _
    $region79: #{heart_gpt_forward.1} parent=1 // pred_check_branch
      %5981 = sbr.rel (0) target = $region81
    $region80: #{heart_gpt_forward.1} parent=1 // pred_region
      %s5983 = ssub.s32 512, 512
      %5984 = vsyncadd [#allocation7], %s5983
      %s5985 = sshll.u32 [#allocation6], 4
      %s5986 = int_to_ptr.vmem [resolvable:$true] %s5985
      %5991 = dma.vmem_to_hbm [thread:$0]  %s5986, 512, %s19, [#allocation7], 128, 128, 8
    $region81: #{heart_gpt_forward.1} parent=1 // pred_fallthru
      _
    // Predicated region
    $region82: #{heart_gpt_forward.1} parent=1 // pred_check
      _
    $region83: #{heart_gpt_forward.1} parent=1 // pred_check_branch
      %5993 = sbr.rel (0) target = $region85
    $region84: #{heart_gpt_forward.1} parent=1 // pred_region
      %5994 = dma.done [#allocation7], 512
    $region85: #{heart_gpt_forward.1} parent=1 // pred_fallthru
      _
    %5995 = vsyncpa [#allocation7], 1

</llo_original>
